<compile_context>
chip_gen: v5e
topology: v5e:2x2
jax: 0.10.0
libtpu: 0.0.40
codegen_flags: <defaults>
</compile_context>

<pallas_src>
import math
from functools import partial

import jax
import jax.numpy as jnp
from jax.experimental import pallas as pl
from jax.experimental.pallas import tpu as pltpu  # noqa: F401  (TPU backend)

F32 = jnp.float32
BF16 = jnp.bfloat16
LN_EPS = 1e-5
NEG_INF = -1e30  # large finite negative (avoids -inf - -inf NaN pitfalls)


# ----------------------------------------------------------------------------
# In-kernel helpers (traced inside Pallas kernel bodies)
# ----------------------------------------------------------------------------
def _layer_norm(x, g, b):
    m = jnp.mean(x, axis=-1, keepdims=True)
    c = x - m
    v = jnp.mean(c * c, axis=-1, keepdims=True)
    return c * jax.lax.rsqrt(v + LN_EPS) * g + b


def _softmax_last(s):
    s = s - jnp.max(s, axis=-1, keepdims=True)
    p = jnp.exp(s)
    return p * pl.reciprocal(jnp.sum(p, axis=-1, keepdims=True), approx=True)


def _mha(q, k, v, batch, sq, sk, num_heads, dh, mask):
    """Multi-head attention core.

    q: (batch*sq, H*dh), k/v: (batch*sk, H*dh), all f32 (Q already pre-scaled
    by 1/sqrt(dh) via the folded projection weights).  mask: (sq, sk) additive
    or None.  Returns concat-heads context of shape (batch*sq, H*dh).
    """
    heads = []
    for h in range(num_heads):
        qh = q[:, h * dh:(h + 1) * dh].reshape(batch, sq, dh)
        kh = k[:, h * dh:(h + 1) * dh].reshape(batch, sk, dh)
        vh = v[:, h * dh:(h + 1) * dh].reshape(batch, sk, dh)
        s = jnp.einsum('bqd,bkd->bqk', qh, kh,
                       preferred_element_type=jnp.float32)      # (b, sq, sk)
        if mask is not None:
            s = s + mask[None, :, :]
        p = _softmax_last(s)
        o = jnp.einsum('bqk,bkd->bqd', p, vh,
                       preferred_element_type=jnp.float32)      # (b, sq, dh)
        heads.append(o.reshape(batch * sq, dh))
    return jnp.concatenate(heads, axis=-1)                      # (b*sq, H*dh)


# ----------------------------------------------------------------------------
# Fused whole-stack kernels (one pallas_call each)
# ----------------------------------------------------------------------------
def _encoder_stack_kernel(x_ref, wqkv_ref, bqkv_ref, wo_ref, w1_ref, b1_ref,
                          w2_ref, vec_ref, fnorm_ref, o_ref,
                          *, num_heads, num_layers, batch, seq):
    E = x_ref.shape[-1]
    dh = E // num_heads
    x = x_ref[...].astype(F32)                                   # (T, E)

    for l in range(num_layers):
        vec = vec_ref[l]                                         # (6, E)
        bo, b2 = vec[0:1], vec[1:2]
        ln1g, ln1b, ln2g, ln2b = vec[2:3], vec[3:4], vec[4:5], vec[5:6]

        # ---- self-attention (packed QKV, Q pre-scaled) ----
        qkv = (jnp.dot(x.astype(BF16), wqkv_ref[l],
                       preferred_element_type=jnp.float32) + bqkv_ref[l])
        ctx = _mha(qkv[:, :E], qkv[:, E:2 * E], qkv[:, 2 * E:],
                   batch, seq, seq, num_heads, dh, None)
        attn = (jnp.dot(ctx.astype(BF16), wo_ref[l],
                        preferred_element_type=jnp.float32) + bo)
        x = _layer_norm(x + attn, ln1g, ln1b)

        # ---- feed-forward ----
        h = jnp.maximum(
            jnp.dot(x.astype(BF16), w1_ref[l],
                    preferred_element_type=jnp.float32) + b1_ref[l], 0.0)
        ff = jnp.dot(h.astype(BF16), w2_ref[l],
                     preferred_element_type=jnp.float32) + b2
        x = _layer_norm(x + ff, ln2g, ln2b)

    fn = fnorm_ref[...]
    o_ref[...] = _layer_norm(x, fn[0:1], fn[1:2]).astype(o_ref.dtype)


def _decoder_stack_kernel(y_ref, mem_ref,
                          s_wqkv_ref, s_bqkv_ref, s_wo_ref,
                          c_wq_ref, c_wkv_ref, c_bkv_ref, c_wo_ref,
                          w1_ref, b1_ref, w2_ref, vec_ref,
                          fnorm_ref, fcw_ref, fcb_ref, o_ref,
                          *, num_heads, num_layers, batch, seq_t, seq_s):
    E = y_ref.shape[-1]
    dh = E // num_heads
    y = y_ref[...].astype(F32)                                   # (Tt, E)
    mem = mem_ref[...].astype(F32)                               # (Ts, E)

    # causal (square subsequent) mask built in-kernel
    row = jax.lax.broadcasted_iota(jnp.int32, (seq_t, seq_t), 0)
    col = jax.lax.broadcasted_iota(jnp.int32, (seq_t, seq_t), 1)
    mask = jnp.where(row >= col, 0.0, NEG_INF).astype(F32)

    for l in range(num_layers):
        vec = vec_ref[l]                                         # (10, E)
        s_bo, c_bq, c_bo, b2 = vec[0:1], vec[1:2], vec[2:3], vec[3:4]
        ln1g, ln1b = vec[4:5], vec[5:6]
        ln2g, ln2b = vec[6:7], vec[7:8]
        ln3g, ln3b = vec[8:9], vec[9:10]

        # ---- masked self-attention ----
        qkv = (jnp.dot(y.astype(BF16), s_wqkv_ref[l],
                       preferred_element_type=jnp.float32) + s_bqkv_ref[l])
        ctx = _mha(qkv[:, :E], qkv[:, E:2 * E], qkv[:, 2 * E:],
                   batch, seq_t, seq_t, num_heads, dh, mask)
        sa = (jnp.dot(ctx.astype(BF16), s_wo_ref[l],
                      preferred_element_type=jnp.float32) + s_bo)
        y = _layer_norm(y + sa, ln1g, ln1b)

        # ---- cross-attention over encoder memory ----
        q = (jnp.dot(y.astype(BF16), c_wq_ref[l],
                     preferred_element_type=jnp.float32) + c_bq)
        kv = (jnp.dot(mem.astype(BF16), c_wkv_ref[l],
                      preferred_element_type=jnp.float32) + c_bkv_ref[l])
        ctx = _mha(q, kv[:, :E], kv[:, E:],
                   batch, seq_t, seq_s, num_heads, dh, None)
        ca = (jnp.dot(ctx.astype(BF16), c_wo_ref[l],
                      preferred_element_type=jnp.float32) + c_bo)
        y = _layer_norm(y + ca, ln2g, ln2b)

        # ---- feed-forward ----
        h = jnp.maximum(
            jnp.dot(y.astype(BF16), w1_ref[l],
                    preferred_element_type=jnp.float32) + b1_ref[l], 0.0)
        ff = jnp.dot(h.astype(BF16), w2_ref[l],
                     preferred_element_type=jnp.float32) + b2
        y = _layer_norm(y + ff, ln3g, ln3b)

    fn = fnorm_ref[...]
    y = _layer_norm(y, fn[0:1], fn[1:2])
    # final projection to the 128-padded vocab (lane-dense store)
    o_ref[...] = (jnp.dot(y, fcw_ref[...], preferred_element_type=jnp.float32)
                  + fcb_ref[...]).astype(o_ref.dtype)


# ----------------------------------------------------------------------------
# pallas_call wrappers (grid-less: whole arrays resident in VMEM)
# ----------------------------------------------------------------------------
def encoder_stack(x_flat, enc, *, num_heads, num_layers, batch, seq):
    return pl.pallas_call(
        partial(_encoder_stack_kernel, num_heads=num_heads,
                num_layers=num_layers, batch=batch, seq=seq),
        out_shape=jax.ShapeDtypeStruct(x_flat.shape, F32),
    )(x_flat, enc["wqkv"], enc["bqkv"], enc["wo"], enc["w1"], enc["b1"],
      enc["w2"], enc["vecs"], enc["fnorm"])


def decoder_stack(y_flat, mem_flat, dec, *, num_heads, num_layers,
                  batch, seq_t, seq_s):
    vocab_pad = dec["fc_w"].shape[1]
    return pl.pallas_call(
        partial(_decoder_stack_kernel, num_heads=num_heads,
                num_layers=num_layers, batch=batch, seq_t=seq_t, seq_s=seq_s),
        out_shape=jax.ShapeDtypeStruct((y_flat.shape[0], vocab_pad), F32),
    )(y_flat, mem_flat,
      dec["s_wqkv"], dec["s_bqkv"], dec["s_wo"],
      dec["c_wq"], dec["c_wkv"], dec["c_bkv"], dec["c_wo"],
      dec["w1"], dec["b1"], dec["w2"], dec["vecs"],
      dec["fnorm"], dec["fc_w"], dec["fc_b"])


# ----------------------------------------------------------------------------
# Full forward pass
# ----------------------------------------------------------------------------
def transformer_forward(params, src, trg, *, num_heads, num_layers, trg_vocab):
    S_src, N = src.shape
    S_trg, _ = trg.shape
    E = params["src_word_emb"].shape[1]

    # Embedding gathers stay in plain JAX (tiny tables; no clean Pallas gather).
    embed_src = (jnp.take(params["src_word_emb"], src.T, axis=0)
                 + params["src_pos_emb"][:S_src][None, :, :])    # (N, Ss, E)
    embed_trg = (jnp.take(params["trg_word_emb"], trg.T, axis=0)
                 + params["trg_pos_emb"][:S_trg][None, :, :])    # (N, St, E)
    # TODO(synk): nn.Dropout is identity in eval mode; training dropout not modeled.

    # Pad target length to a multiple of 8 sublanes (causal mask keeps real
    # rows from attending to the padded key positions, so results are exact).
    St_pad = ((S_trg + 7) // 8) * 8
    if St_pad != S_trg:
        embed_trg = jnp.pad(embed_trg, ((0, 0), (0, St_pad - S_trg), (0, 0)))

    x_flat = embed_src.reshape(N * S_src, E).astype(F32)
    y_flat = embed_trg.reshape(N * St_pad, E).astype(F32)

    memory = encoder_stack(x_flat, params["enc"], num_heads=num_heads,
                           num_layers=num_layers, batch=N, seq=S_src)
    logits = decoder_stack(y_flat, memory, params["dec"], num_heads=num_heads,
                           num_layers=num_layers, batch=N,
                           seq_t=St_pad, seq_s=S_src)            # (N*St_pad, Vp)

    Vp = logits.shape[-1]
    out = logits.reshape(N, St_pad, Vp)[:, :S_trg, :trg_vocab]   # (N, St, V)
    return jnp.transpose(out, (1, 0, 2))                         # (St, N, V)


# ----------------------------------------------------------------------------
# Deterministic parameter init (synthetic; shapes match nn.Transformer defaults)
# ----------------------------------------------------------------------------
def init_params(key, E, src_vocab, trg_vocab, max_len, num_layers, dff,
                num_heads, vocab_pad):
    dh = E // num_heads
    qscale = 1.0 / math.sqrt(dh)          # folded into Q projection weights
    keys = iter(jax.random.split(key, 512))
    nk = lambda: next(keys)

    def w_init(shape, fan_in):
        return jax.random.normal(nk(), shape, F32) / math.sqrt(fan_in)

    ones, zeros = jnp.ones((E,), F32), jnp.zeros((E,), F32)

    def encoder_params():
        wqkv, bqkv, wo, w1, b1, w2, vecs = [], [], [], [], [], [], []
        for _ in range(num_layers):
            wq = w_init((E, E), E) * qscale
            wk = w_init((E, E), E)
            wv = w_init((E, E), E)
            wqkv.append(jnp.concatenate([wq, wk, wv], axis=1).astype(BF16))
            bqkv.append(jnp.zeros((1, 3 * E), F32))
            wo.append(w_init((E, E), E).astype(BF16))
            w1.append(w_init((E, dff), E).astype(BF16))
            b1.append(jnp.zeros((1, dff), F32))
            w2.append(w_init((dff, E), dff).astype(BF16))
            # rows: [bo, b2, ln1_g, ln1_b, ln2_g, ln2_b]
            vecs.append(jnp.stack([zeros, zeros, ones, zeros, ones, zeros]))
        return {"wqkv": jnp.stack(wqkv), "bqkv": jnp.stack(bqkv),
                "wo": jnp.stack(wo), "w1": jnp.stack(w1), "b1": jnp.stack(b1),
                "w2": jnp.stack(w2), "vecs": jnp.stack(vecs),
                "fnorm": jnp.stack([ones, zeros])}

    def decoder_params():
        s_wqkv, s_bqkv, s_wo = [], [], []
        c_wq, c_wkv, c_bkv, c_wo = [], [], [], []
        w1, b1, w2, vecs = [], [], [], []
        for _ in range(num_layers):
            wq = w_init((E, E), E) * qscale
            wk = w_init((E, E), E)
            wv = w_init((E, E), E)
            s_wqkv.append(jnp.concatenate([wq, wk, wv], axis=1).astype(BF16))
            s_bqkv.append(jnp.zeros((1, 3 * E), F32))
            s_wo.append(w_init((E, E), E).astype(BF16))
            c_wq.append((w_init((E, E), E) * qscale).astype(BF16))
            c_wkv.append(jnp.concatenate([w_init((E, E), E),
                                          w_init((E, E), E)], axis=1).astype(BF16))
            c_bkv.append(jnp.zeros((1, 2 * E), F32))
            c_wo.append(w_init((E, E), E).astype(BF16))
            w1.append(w_init((E, dff), E).astype(BF16))
            b1.append(jnp.zeros((1, dff), F32))
            w2.append(w_init((dff, E), dff).astype(BF16))
            # rows: [s_bo, c_bq, c_bo, b2, ln1g, ln1b, ln2g, ln2b, ln3g, ln3b]
            vecs.append(jnp.stack([zeros, zeros, zeros, zeros,
                                   ones, zeros, ones, zeros, ones, zeros]))
        fc_w = jnp.pad(w_init((E, trg_vocab), E),
                       ((0, 0), (0, vocab_pad - trg_vocab)))     # lane-dense
        return {"s_wqkv": jnp.stack(s_wqkv), "s_bqkv": jnp.stack(s_bqkv),
                "s_wo": jnp.stack(s_wo),
                "c_wq": jnp.stack(c_wq), "c_wkv": jnp.stack(c_wkv),
                "c_bkv": jnp.stack(c_bkv), "c_wo": jnp.stack(c_wo),
                "w1": jnp.stack(w1), "b1": jnp.stack(b1), "w2": jnp.stack(w2),
                "vecs": jnp.stack(vecs), "fnorm": jnp.stack([ones, zeros]),
                "fc_w": fc_w, "fc_b": jnp.zeros((1, vocab_pad), F32)}

    return {
        "src_word_emb": jax.random.normal(nk(), (src_vocab, E), F32),
        "src_pos_emb":  jax.random.normal(nk(), (max_len, E), F32),
        "trg_word_emb": jax.random.normal(nk(), (trg_vocab, E), F32),
        "trg_pos_emb":  jax.random.normal(nk(), (max_len, E), F32),
        "enc": encoder_params(),
        "dec": decoder_params(),
    }


# ----------------------------------------------------------------------------
if __name__ == "__main__":
    embedding_size = 32
    src_vocab_size = 50
    trg_vocab_size = 60
    num_heads = 4
    num_layers = 2
    max_len = 16
    dim_feedforward = 2048      # nn.Transformer default
    vocab_pad = 128             # lane-dense final store
    src_seq, trg_seq, batch = 8, 6, 2

    key = jax.random.PRNGKey(0)
    kp, ks, kt = jax.random.split(key, 3)
    params = init_params(kp, embedding_size, src_vocab_size, trg_vocab_size,
                         max_len, num_layers, dim_feedforward, num_heads,
                         vocab_pad)

    src = jax.random.randint(ks, (src_seq, batch), 0, src_vocab_size,
                             dtype=jnp.int32)
    trg = jax.random.randint(kt, (trg_seq, batch), 0, trg_vocab_size,
                             dtype=jnp.int32)

    fwd = jax.jit(partial(transformer_forward, num_heads=num_heads,
                          num_layers=num_layers, trg_vocab=trg_vocab_size))
    out = jax.block_until_ready(fwd(params, src, trg))

    assert out.shape == (trg_seq, batch, trg_vocab_size), out.shape
    assert bool(jnp.all(jnp.isfinite(out)))
    print("KERNEL_OK")
</pallas_src>

<mosaic_0001>
module attributes {stable_mosaic.version = 11 : i64} {
  func.func @_encoder_stack_kernel(%arg0: memref<16x32xf32, #tpu.memory_space<vmem>>, %arg1: memref<2x32x96xbf16, #tpu.memory_space<vmem>>, %arg2: memref<2x1x96xf32, #tpu.memory_space<vmem>>, %arg3: memref<2x32x32xbf16, #tpu.memory_space<vmem>>, %arg4: memref<2x32x2048xbf16, #tpu.memory_space<vmem>>, %arg5: memref<2x1x2048xf32, #tpu.memory_space<vmem>>, %arg6: memref<2x2048x32xbf16, #tpu.memory_space<vmem>>, %arg7: memref<2x6x32xf32, #tpu.memory_space<vmem>>, %arg8: memref<2x32xf32, #tpu.memory_space<vmem>>, %arg9: memref<16x32xf32, #tpu.memory_space<vmem>>) attributes {dimension_semantics = [], scalar_prefetch = 0 : i64, scratch_operands = 0 : i64, tpu.core_type = #tpu.core_type<tc>} {
    %c0 = arith.constant 0 : index
    %c0_0 = arith.constant 0 : index
    %0 = vector.load %arg0[%c0, %c0_0] : memref<16x32xf32, #tpu.memory_space<vmem>>, vector<16x32xf32>
    %c0_1 = arith.constant 0 : index
    %c0_2 = arith.constant 0 : index
    %c0_3 = arith.constant 0 : index
    %1 = vector.load %arg7[%c0_1, %c0_2, %c0_3] : memref<2x6x32xf32, #tpu.memory_space<vmem>>, vector<1x6x32xf32>
    %2 = vector.shape_cast %1 : vector<1x6x32xf32> to vector<6x32xf32>
    %3 = vector.extract_strided_slice %2 {offsets = [0, 0], sizes = [1, 32], strides = [1, 1]} : vector<6x32xf32> to vector<1x32xf32>
    %4 = vector.extract_strided_slice %2 {offsets = [1, 0], sizes = [1, 32], strides = [1, 1]} : vector<6x32xf32> to vector<1x32xf32>
    %5 = vector.extract_strided_slice %2 {offsets = [2, 0], sizes = [1, 32], strides = [1, 1]} : vector<6x32xf32> to vector<1x32xf32>
    %6 = vector.extract_strided_slice %2 {offsets = [3, 0], sizes = [1, 32], strides = [1, 1]} : vector<6x32xf32> to vector<1x32xf32>
    %7 = vector.extract_strided_slice %2 {offsets = [4, 0], sizes = [1, 32], strides = [1, 1]} : vector<6x32xf32> to vector<1x32xf32>
    %8 = vector.extract_strided_slice %2 {offsets = [5, 0], sizes = [1, 32], strides = [1, 1]} : vector<6x32xf32> to vector<1x32xf32>
    %9 = arith.truncf %0 : vector<16x32xf32> to vector<16x32xbf16>
    %c0_4 = arith.constant 0 : index
    %c0_5 = arith.constant 0 : index
    %c0_6 = arith.constant 0 : index
    %10 = vector.load %arg1[%c0_4, %c0_5, %c0_6] : memref<2x32x96xbf16, #tpu.memory_space<vmem>>, vector<1x32x96xbf16>
    %11 = vector.shape_cast %10 : vector<1x32x96xbf16> to vector<32x96xbf16>
    %cst = arith.constant dense<0.000000e+00> : vector<16x96xf32>
    %12 = tpu.matmul %9, %11, %cst {dimension_numbers = #tpu.dot_dimension_numbers<[1], [0], [0], [1], [0, 0, 1, 1], [], []>} : vector<16x32xbf16>, vector<32x96xbf16>, vector<16x96xf32> -> vector<16x96xf32>
    %c0_7 = arith.constant 0 : index
    %c0_8 = arith.constant 0 : index
    %c0_9 = arith.constant 0 : index
    %13 = vector.load %arg2[%c0_7, %c0_8, %c0_9] : memref<2x1x96xf32, #tpu.memory_space<vmem>>, vector<1x1x96xf32>
    %14 = vector.shape_cast %13 : vector<1x1x96xf32> to vector<1x96xf32>
    %15 = vector.broadcast %14 : vector<1x96xf32> to vector<16x96xf32>
    %16 = arith.addf %12, %15 : vector<16x96xf32>
    %17 = vector.extract_strided_slice %16 {offsets = [0, 0], sizes = [16, 32], strides = [1, 1]} : vector<16x96xf32> to vector<16x32xf32>
    %18 = vector.extract_strided_slice %16 {offsets = [0, 32], sizes = [16, 32], strides = [1, 1]} : vector<16x96xf32> to vector<16x32xf32>
    %19 = vector.extract_strided_slice %16 {offsets = [0, 64], sizes = [16, 32], strides = [1, 1]} : vector<16x96xf32> to vector<16x32xf32>
    %20 = vector.extract_strided_slice %17 {offsets = [0, 0], sizes = [16, 8], strides = [1, 1]} : vector<16x32xf32> to vector<16x8xf32>
    %21 = vector.shape_cast %20 : vector<16x8xf32> to vector<2x8x8xf32>
    %22 = vector.extract_strided_slice %18 {offsets = [0, 0], sizes = [16, 8], strides = [1, 1]} : vector<16x32xf32> to vector<16x8xf32>
    %23 = vector.shape_cast %22 : vector<16x8xf32> to vector<2x8x8xf32>
    %24 = vector.extract_strided_slice %19 {offsets = [0, 0], sizes = [16, 8], strides = [1, 1]} : vector<16x32xf32> to vector<16x8xf32>
    %25 = vector.shape_cast %24 : vector<16x8xf32> to vector<2x8x8xf32>
    "tpu.trace_start"() <{level = 10 : i32, message = "bqd,bkd->bqk"}> : () -> ()
    %cst_10 = arith.constant dense<0.000000e+00> : vector<2x8x8xf32>
    %26 = tpu.matmul %21, %23, %cst_10 {dimension_numbers = #tpu.dot_dimension_numbers<[2], [2], [1], [1], [0, 0, 0, 1, 1, 1], [0], [0]>} : vector<2x8x8xf32>, vector<2x8x8xf32>, vector<2x8x8xf32> -> vector<2x8x8xf32>
    "tpu.trace_stop"() : () -> ()
    %cst_11 = arith.constant dense<0xFF800000> : vector<2x8xf32>
    %27 = vector.multi_reduction <maximumf>, %26, %cst_11 [2] : vector<2x8x8xf32> to vector<2x8xf32>
    %28 = vector.shape_cast %27 : vector<2x8xf32> to vector<2x8x1xf32>
    %29 = vector.broadcast %28 : vector<2x8x1xf32> to vector<2x8x8xf32>
    %30 = arith.subf %26, %29 : vector<2x8x8xf32>
    %31 = math.exp %30 : vector<2x8x8xf32>
    %cst_12 = arith.constant dense<0.000000e+00> : vector<2x8xf32>
    %32 = vector.multi_reduction <add>, %31, %cst_12 [2] : vector<2x8x8xf32> to vector<2x8xf32>
    %33 = vector.shape_cast %32 : vector<2x8xf32> to vector<2x8x1xf32>
    %34 = tpu.reciprocal %33 {approx = true} : vector<2x8x1xf32> -> vector<2x8x1xf32>
    %35 = vector.broadcast %34 : vector<2x8x1xf32> to vector<2x8x8xf32>
    %36 = arith.mulf %31, %35 : vector<2x8x8xf32>
    "tpu.trace_start"() <{level = 10 : i32, message = "bqk,bkd->bqd"}> : () -> ()
    %cst_13 = arith.constant dense<0.000000e+00> : vector<2x8x8xf32>
    %37 = tpu.matmul %36, %25, %cst_13 {dimension_numbers = #tpu.dot_dimension_numbers<[2], [1], [1], [2], [0, 0, 0, 1, 1, 2], [0], [0]>} : vector<2x8x8xf32>, vector<2x8x8xf32>, vector<2x8x8xf32> -> vector<2x8x8xf32>
    "tpu.trace_stop"() : () -> ()
    %38 = vector.shape_cast %37 : vector<2x8x8xf32> to vector<16x8xf32>
    %39 = vector.extract_strided_slice %17 {offsets = [0, 8], sizes = [16, 8], strides = [1, 1]} : vector<16x32xf32> to vector<16x8xf32>
    %40 = vector.shape_cast %39 : vector<16x8xf32> to vector<2x8x8xf32>
    %41 = vector.extract_strided_slice %18 {offsets = [0, 8], sizes = [16, 8], strides = [1, 1]} : vector<16x32xf32> to vector<16x8xf32>
    %42 = vector.shape_cast %41 : vector<16x8xf32> to vector<2x8x8xf32>
    %43 = vector.extract_strided_slice %19 {offsets = [0, 8], sizes = [16, 8], strides = [1, 1]} : vector<16x32xf32> to vector<16x8xf32>
    %44 = vector.shape_cast %43 : vector<16x8xf32> to vector<2x8x8xf32>
    "tpu.trace_start"() <{level = 10 : i32, message = "bqd,bkd->bqk"}> : () -> ()
    %cst_14 = arith.constant dense<0.000000e+00> : vector<2x8x8xf32>
    %45 = tpu.matmul %40, %42, %cst_14 {dimension_numbers = #tpu.dot_dimension_numbers<[2], [2], [1], [1], [0, 0, 0, 1, 1, 1], [0], [0]>} : vector<2x8x8xf32>, vector<2x8x8xf32>, vector<2x8x8xf32> -> vector<2x8x8xf32>
    "tpu.trace_stop"() : () -> ()
    %cst_15 = arith.constant dense<0xFF800000> : vector<2x8xf32>
    %46 = vector.multi_reduction <maximumf>, %45, %cst_15 [2] : vector<2x8x8xf32> to vector<2x8xf32>
    %47 = vector.shape_cast %46 : vector<2x8xf32> to vector<2x8x1xf32>
    %48 = vector.broadcast %47 : vector<2x8x1xf32> to vector<2x8x8xf32>
    %49 = arith.subf %45, %48 : vector<2x8x8xf32>
    %50 = math.exp %49 : vector<2x8x8xf32>
    %cst_16 = arith.constant dense<0.000000e+00> : vector<2x8xf32>
    %51 = vector.multi_reduction <add>, %50, %cst_16 [2] : vector<2x8x8xf32> to vector<2x8xf32>
    %52 = vector.shape_cast %51 : vector<2x8xf32> to vector<2x8x1xf32>
    %53 = tpu.reciprocal %52 {approx = true} : vector<2x8x1xf32> -> vector<2x8x1xf32>
    %54 = vector.broadcast %53 : vector<2x8x1xf32> to vector<2x8x8xf32>
    %55 = arith.mulf %50, %54 : vector<2x8x8xf32>
    "tpu.trace_start"() <{level = 10 : i32, message = "bqk,bkd->bqd"}> : () -> ()
    %cst_17 = arith.constant dense<0.000000e+00> : vector<2x8x8xf32>
    %56 = tpu.matmul %55, %44, %cst_17 {dimension_numbers = #tpu.dot_dimension_numbers<[2], [1], [1], [2], [0, 0, 0, 1, 1, 2], [0], [0]>} : vector<2x8x8xf32>, vector<2x8x8xf32>, vector<2x8x8xf32> -> vector<2x8x8xf32>
    "tpu.trace_stop"() : () -> ()
    %57 = vector.shape_cast %56 : vector<2x8x8xf32> to vector<16x8xf32>
    %58 = vector.extract_strided_slice %17 {offsets = [0, 16], sizes = [16, 8], strides = [1, 1]} : vector<16x32xf32> to vector<16x8xf32>
    %59 = vector.shape_cast %58 : vector<16x8xf32> to vector<2x8x8xf32>
    %60 = vector.extract_strided_slice %18 {offsets = [0, 16], sizes = [16, 8], strides = [1, 1]} : vector<16x32xf32> to vector<16x8xf32>
    %61 = vector.shape_cast %60 : vector<16x8xf32> to vector<2x8x8xf32>
    %62 = vector.extract_strided_slice %19 {offsets = [0, 16], sizes = [16, 8], strides = [1, 1]} : vector<16x32xf32> to vector<16x8xf32>
    %63 = vector.shape_cast %62 : vector<16x8xf32> to vector<2x8x8xf32>
    "tpu.trace_start"() <{level = 10 : i32, message = "bqd,bkd->bqk"}> : () -> ()
    %cst_18 = arith.constant dense<0.000000e+00> : vector<2x8x8xf32>
    %64 = tpu.matmul %59, %61, %cst_18 {dimension_numbers = #tpu.dot_dimension_numbers<[2], [2], [1], [1], [0, 0, 0, 1, 1, 1], [0], [0]>} : vector<2x8x8xf32>, vector<2x8x8xf32>, vector<2x8x8xf32> -> vector<2x8x8xf32>
    "tpu.trace_stop"() : () -> ()
    %cst_19 = arith.constant dense<0xFF800000> : vector<2x8xf32>
    %65 = vector.multi_reduction <maximumf>, %64, %cst_19 [2] : vector<2x8x8xf32> to vector<2x8xf32>
    %66 = vector.shape_cast %65 : vector<2x8xf32> to vector<2x8x1xf32>
    %67 = vector.broadcast %66 : vector<2x8x1xf32> to vector<2x8x8xf32>
    %68 = arith.subf %64, %67 : vector<2x8x8xf32>
    %69 = math.exp %68 : vector<2x8x8xf32>
    %cst_20 = arith.constant dense<0.000000e+00> : vector<2x8xf32>
    %70 = vector.multi_reduction <add>, %69, %cst_20 [2] : vector<2x8x8xf32> to vector<2x8xf32>
    %71 = vector.shape_cast %70 : vector<2x8xf32> to vector<2x8x1xf32>
    %72 = tpu.reciprocal %71 {approx = true} : vector<2x8x1xf32> -> vector<2x8x1xf32>
    %73 = vector.broadcast %72 : vector<2x8x1xf32> to vector<2x8x8xf32>
    %74 = arith.mulf %69, %73 : vector<2x8x8xf32>
    "tpu.trace_start"() <{level = 10 : i32, message = "bqk,bkd->bqd"}> : () -> ()
    %cst_21 = arith.constant dense<0.000000e+00> : vector<2x8x8xf32>
    %75 = tpu.matmul %74, %63, %cst_21 {dimension_numbers = #tpu.dot_dimension_numbers<[2], [1], [1], [2], [0, 0, 0, 1, 1, 2], [0], [0]>} : vector<2x8x8xf32>, vector<2x8x8xf32>, vector<2x8x8xf32> -> vector<2x8x8xf32>
    "tpu.trace_stop"() : () -> ()
    %76 = vector.shape_cast %75 : vector<2x8x8xf32> to vector<16x8xf32>
    %77 = vector.extract_strided_slice %17 {offsets = [0, 24], sizes = [16, 8], strides = [1, 1]} : vector<16x32xf32> to vector<16x8xf32>
    %78 = vector.shape_cast %77 : vector<16x8xf32> to vector<2x8x8xf32>
    %79 = vector.extract_strided_slice %18 {offsets = [0, 24], sizes = [16, 8], strides = [1, 1]} : vector<16x32xf32> to vector<16x8xf32>
    %80 = vector.shape_cast %79 : vector<16x8xf32> to vector<2x8x8xf32>
    %81 = vector.extract_strided_slice %19 {offsets = [0, 24], sizes = [16, 8], strides = [1, 1]} : vector<16x32xf32> to vector<16x8xf32>
    %82 = vector.shape_cast %81 : vector<16x8xf32> to vector<2x8x8xf32>
    "tpu.trace_start"() <{level = 10 : i32, message = "bqd,bkd->bqk"}> : () -> ()
    %cst_22 = arith.constant dense<0.000000e+00> : vector<2x8x8xf32>
    %83 = tpu.matmul %78, %80, %cst_22 {dimension_numbers = #tpu.dot_dimension_numbers<[2], [2], [1], [1], [0, 0, 0, 1, 1, 1], [0], [0]>} : vector<2x8x8xf32>, vector<2x8x8xf32>, vector<2x8x8xf32> -> vector<2x8x8xf32>
    "tpu.trace_stop"() : () -> ()
    %cst_23 = arith.constant dense<0xFF800000> : vector<2x8xf32>
    %84 = vector.multi_reduction <maximumf>, %83, %cst_23 [2] : vector<2x8x8xf32> to vector<2x8xf32>
    %85 = vector.shape_cast %84 : vector<2x8xf32> to vector<2x8x1xf32>
    %86 = vector.broadcast %85 : vector<2x8x1xf32> to vector<2x8x8xf32>
    %87 = arith.subf %83, %86 : vector<2x8x8xf32>
    %88 = math.exp %87 : vector<2x8x8xf32>
    %cst_24 = arith.constant dense<0.000000e+00> : vector<2x8xf32>
    %89 = vector.multi_reduction <add>, %88, %cst_24 [2] : vector<2x8x8xf32> to vector<2x8xf32>
    %90 = vector.shape_cast %89 : vector<2x8xf32> to vector<2x8x1xf32>
    %91 = tpu.reciprocal %90 {approx = true} : vector<2x8x1xf32> -> vector<2x8x1xf32>
    %92 = vector.broadcast %91 : vector<2x8x1xf32> to vector<2x8x8xf32>
    %93 = arith.mulf %88, %92 : vector<2x8x8xf32>
    "tpu.trace_start"() <{level = 10 : i32, message = "bqk,bkd->bqd"}> : () -> ()
    %cst_25 = arith.constant dense<0.000000e+00> : vector<2x8x8xf32>
    %94 = tpu.matmul %93, %82, %cst_25 {dimension_numbers = #tpu.dot_dimension_numbers<[2], [1], [1], [2], [0, 0, 0, 1, 1, 2], [0], [0]>} : vector<2x8x8xf32>, vector<2x8x8xf32>, vector<2x8x8xf32> -> vector<2x8x8xf32>
    "tpu.trace_stop"() : () -> ()
    %95 = vector.shape_cast %94 : vector<2x8x8xf32> to vector<16x8xf32>
    %96 = tpu.concatenate %38, %57, %76, %95 in 1 : vector<16x8xf32>, vector<16x8xf32>, vector<16x8xf32>, vector<16x8xf32> -> vector<16x32xf32>
    %97 = arith.truncf %96 : vector<16x32xf32> to vector<16x32xbf16>
    %c0_26 = arith.constant 0 : index
    %c0_27 = arith.constant 0 : index
    %c0_28 = arith.constant 0 : index
    %98 = vector.load %arg3[%c0_26, %c0_27, %c0_28] : memref<2x32x32xbf16, #tpu.memory_space<vmem>>, vector<1x32x32xbf16>
    %99 = vector.shape_cast %98 : vector<1x32x32xbf16> to vector<32x32xbf16>
    %cst_29 = arith.constant dense<0.000000e+00> : vector<16x32xf32>
    %100 = tpu.matmul %97, %99, %cst_29 {dimension_numbers = #tpu.dot_dimension_numbers<[1], [0], [0], [1], [0, 0, 1, 1], [], []>} : vector<16x32xbf16>, vector<32x32xbf16>, vector<16x32xf32> -> vector<16x32xf32>
    %101 = vector.broadcast %3 : vector<1x32xf32> to vector<16x32xf32>
    %102 = arith.addf %100, %101 : vector<16x32xf32>
    %103 = arith.addf %0, %102 : vector<16x32xf32>
    %cst_30 = arith.constant dense<0.000000e+00> : vector<16xf32>
    %104 = vector.multi_reduction <add>, %103, %cst_30 [1] : vector<16x32xf32> to vector<16xf32>
    %105 = vector.shape_cast %104 : vector<16xf32> to vector<16x1xf32>
    %cst_31 = arith.constant 3.200000e+01 : f32
    %106 = vector.broadcast %cst_31 : f32 to vector<16x1xf32>
    %107 = arith.divf %105, %106 : vector<16x1xf32>
    %108 = vector.broadcast %107 : vector<16x1xf32> to vector<16x32xf32>
    %109 = arith.subf %103, %108 : vector<16x32xf32>
    %110 = arith.mulf %109, %109 : vector<16x32xf32>
    %cst_32 = arith.constant dense<0.000000e+00> : vector<16xf32>
    %111 = vector.multi_reduction <add>, %110, %cst_32 [1] : vector<16x32xf32> to vector<16xf32>
    %112 = vector.shape_cast %111 : vector<16xf32> to vector<16x1xf32>
    %cst_33 = arith.constant 3.200000e+01 : f32
    %113 = vector.broadcast %cst_33 : f32 to vector<16x1xf32>
    %114 = arith.divf %112, %113 : vector<16x1xf32>
    %cst_34 = arith.constant 9.99999974E-6 : f32
    %115 = vector.broadcast %cst_34 : f32 to vector<16x1xf32>
    %116 = arith.addf %114, %115 : vector<16x1xf32>
    %117 = math.rsqrt %116 : vector<16x1xf32>
    %118 = vector.broadcast %117 : vector<16x1xf32> to vector<16x32xf32>
    %119 = arith.mulf %109, %118 : vector<16x32xf32>
    %120 = vector.broadcast %5 : vector<1x32xf32> to vector<16x32xf32>
    %121 = arith.mulf %119, %120 : vector<16x32xf32>
    %122 = vector.broadcast %6 : vector<1x32xf32> to vector<16x32xf32>
    %123 = arith.addf %121, %122 : vector<16x32xf32>
    %124 = arith.truncf %123 : vector<16x32xf32> to vector<16x32xbf16>
    %c0_35 = arith.constant 0 : index
    %c0_36 = arith.constant 0 : index
    %c0_37 = arith.constant 0 : index
    %125 = vector.load %arg4[%c0_35, %c0_36, %c0_37] : memref<2x32x2048xbf16, #tpu.memory_space<vmem>>, vector<1x32x2048xbf16>
    %126 = vector.shape_cast %125 : vector<1x32x2048xbf16> to vector<32x2048xbf16>
    %cst_38 = arith.constant dense<0.000000e+00> : vector<16x2048xf32>
    %127 = tpu.matmul %124, %126, %cst_38 {dimension_numbers = #tpu.dot_dimension_numbers<[1], [0], [0], [1], [0, 0, 1, 1], [], []>} : vector<16x32xbf16>, vector<32x2048xbf16>, vector<16x2048xf32> -> vector<16x2048xf32>
    %c0_39 = arith.constant 0 : index
    %c0_40 = arith.constant 0 : index
    %c0_41 = arith.constant 0 : index
    %128 = vector.load %arg5[%c0_39, %c0_40, %c0_41] : memref<2x1x2048xf32, #tpu.memory_space<vmem>>, vector<1x1x2048xf32>
    %129 = vector.shape_cast %128 : vector<1x1x2048xf32> to vector<1x2048xf32>
    %130 = vector.broadcast %129 : vector<1x2048xf32> to vector<16x2048xf32>
    %131 = arith.addf %127, %130 : vector<16x2048xf32>
    %cst_42 = arith.constant 0.000000e+00 : f32
    %132 = vector.broadcast %cst_42 : f32 to vector<16x2048xf32>
    %133 = arith.maximumf %131, %132 : vector<16x2048xf32>
    %134 = arith.truncf %133 : vector<16x2048xf32> to vector<16x2048xbf16>
    %c0_43 = arith.constant 0 : index
    %c0_44 = arith.constant 0 : index
    %c0_45 = arith.constant 0 : index
    %135 = vector.load %arg6[%c0_43, %c0_44, %c0_45] : memref<2x2048x32xbf16, #tpu.memory_space<vmem>>, vector<1x2048x32xbf16>
    %136 = vector.shape_cast %135 : vector<1x2048x32xbf16> to vector<2048x32xbf16>
    %cst_46 = arith.constant dense<0.000000e+00> : vector<16x32xf32>
    %137 = tpu.matmul %134, %136, %cst_46 {dimension_numbers = #tpu.dot_dimension_numbers<[1], [0], [0], [1], [0, 0, 1, 1], [], []>} : vector<16x2048xbf16>, vector<2048x32xbf16>, vector<16x32xf32> -> vector<16x32xf32>
    %138 = vector.broadcast %4 : vector<1x32xf32> to vector<16x32xf32>
    %139 = arith.addf %137, %138 : vector<16x32xf32>
    %140 = arith.addf %123, %139 : vector<16x32xf32>
    %cst_47 = arith.constant dense<0.000000e+00> : vector<16xf32>
    %141 = vector.multi_reduction <add>, %140, %cst_47 [1] : vector<16x32xf32> to vector<16xf32>
    %142 = vector.shape_cast %141 : vector<16xf32> to vector<16x1xf32>
    %cst_48 = arith.constant 3.200000e+01 : f32
    %143 = vector.broadcast %cst_48 : f32 to vector<16x1xf32>
    %144 = arith.divf %142, %143 : vector<16x1xf32>
    %145 = vector.broadcast %144 : vector<16x1xf32> to vector<16x32xf32>
    %146 = arith.subf %140, %145 : vector<16x32xf32>
    %147 = arith.mulf %146, %146 : vector<16x32xf32>
    %cst_49 = arith.constant dense<0.000000e+00> : vector<16xf32>
    %148 = vector.multi_reduction <add>, %147, %cst_49 [1] : vector<16x32xf32> to vector<16xf32>
    %149 = vector.shape_cast %148 : vector<16xf32> to vector<16x1xf32>
    %cst_50 = arith.constant 3.200000e+01 : f32
    %150 = vector.broadcast %cst_50 : f32 to vector<16x1xf32>
    %151 = arith.divf %149, %150 : vector<16x1xf32>
    %cst_51 = arith.constant 9.99999974E-6 : f32
    %152 = vector.broadcast %cst_51 : f32 to vector<16x1xf32>
    %153 = arith.addf %151, %152 : vector<16x1xf32>
    %154 = math.rsqrt %153 : vector<16x1xf32>
    %155 = vector.broadcast %154 : vector<16x1xf32> to vector<16x32xf32>
    %156 = arith.mulf %146, %155 : vector<16x32xf32>
    %157 = vector.broadcast %7 : vector<1x32xf32> to vector<16x32xf32>
    %158 = arith.mulf %156, %157 : vector<16x32xf32>
    %159 = vector.broadcast %8 : vector<1x32xf32> to vector<16x32xf32>
    %160 = arith.addf %158, %159 : vector<16x32xf32>
    %c1 = arith.constant 1 : index
    %c0_52 = arith.constant 0 : index
    %c0_53 = arith.constant 0 : index
    %161 = vector.load %arg7[%c1, %c0_52, %c0_53] : memref<2x6x32xf32, #tpu.memory_space<vmem>>, vector<1x6x32xf32>
    %162 = vector.shape_cast %161 : vector<1x6x32xf32> to vector<6x32xf32>
    %163 = vector.extract_strided_slice %162 {offsets = [0, 0], sizes = [1, 32], strides = [1, 1]} : vector<6x32xf32> to vector<1x32xf32>
    %164 = vector.extract_strided_slice %162 {offsets = [1, 0], sizes = [1, 32], strides = [1, 1]} : vector<6x32xf32> to vector<1x32xf32>
    %165 = vector.extract_strided_slice %162 {offsets = [2, 0], sizes = [1, 32], strides = [1, 1]} : vector<6x32xf32> to vector<1x32xf32>
    %166 = vector.extract_strided_slice %162 {offsets = [3, 0], sizes = [1, 32], strides = [1, 1]} : vector<6x32xf32> to vector<1x32xf32>
    %167 = vector.extract_strided_slice %162 {offsets = [4, 0], sizes = [1, 32], strides = [1, 1]} : vector<6x32xf32> to vector<1x32xf32>
    %168 = vector.extract_strided_slice %162 {offsets = [5, 0], sizes = [1, 32], strides = [1, 1]} : vector<6x32xf32> to vector<1x32xf32>
    %169 = arith.truncf %160 : vector<16x32xf32> to vector<16x32xbf16>
    %c1_54 = arith.constant 1 : index
    %c0_55 = arith.constant 0 : index
    %c0_56 = arith.constant 0 : index
    %170 = vector.load %arg1[%c1_54, %c0_55, %c0_56] : memref<2x32x96xbf16, #tpu.memory_space<vmem>>, vector<1x32x96xbf16>
    %171 = vector.shape_cast %170 : vector<1x32x96xbf16> to vector<32x96xbf16>
    %cst_57 = arith.constant dense<0.000000e+00> : vector<16x96xf32>
    %172 = tpu.matmul %169, %171, %cst_57 {dimension_numbers = #tpu.dot_dimension_numbers<[1], [0], [0], [1], [0, 0, 1, 1], [], []>} : vector<16x32xbf16>, vector<32x96xbf16>, vector<16x96xf32> -> vector<16x96xf32>
    %c1_58 = arith.constant 1 : index
    %c0_59 = arith.constant 0 : index
    %c0_60 = arith.constant 0 : index
    %173 = vector.load %arg2[%c1_58, %c0_59, %c0_60] : memref<2x1x96xf32, #tpu.memory_space<vmem>>, vector<1x1x96xf32>
    %174 = vector.shape_cast %173 : vector<1x1x96xf32> to vector<1x96xf32>
    %175 = vector.broadcast %174 : vector<1x96xf32> to vector<16x96xf32>
    %176 = arith.addf %172, %175 : vector<16x96xf32>
    %177 = vector.extract_strided_slice %176 {offsets = [0, 0], sizes = [16, 32], strides = [1, 1]} : vector<16x96xf32> to vector<16x32xf32>
    %178 = vector.extract_strided_slice %176 {offsets = [0, 32], sizes = [16, 32], strides = [1, 1]} : vector<16x96xf32> to vector<16x32xf32>
    %179 = vector.extract_strided_slice %176 {offsets = [0, 64], sizes = [16, 32], strides = [1, 1]} : vector<16x96xf32> to vector<16x32xf32>
    %180 = vector.extract_strided_slice %177 {offsets = [0, 0], sizes = [16, 8], strides = [1, 1]} : vector<16x32xf32> to vector<16x8xf32>
    %181 = vector.shape_cast %180 : vector<16x8xf32> to vector<2x8x8xf32>
    %182 = vector.extract_strided_slice %178 {offsets = [0, 0], sizes = [16, 8], strides = [1, 1]} : vector<16x32xf32> to vector<16x8xf32>
    %183 = vector.shape_cast %182 : vector<16x8xf32> to vector<2x8x8xf32>
    %184 = vector.extract_strided_slice %179 {offsets = [0, 0], sizes = [16, 8], strides = [1, 1]} : vector<16x32xf32> to vector<16x8xf32>
    %185 = vector.shape_cast %184 : vector<16x8xf32> to vector<2x8x8xf32>
    "tpu.trace_start"() <{level = 10 : i32, message = "bqd,bkd->bqk"}> : () -> ()
    %cst_61 = arith.constant dense<0.000000e+00> : vector<2x8x8xf32>
    %186 = tpu.matmul %181, %183, %cst_61 {dimension_numbers = #tpu.dot_dimension_numbers<[2], [2], [1], [1], [0, 0, 0, 1, 1, 1], [0], [0]>} : vector<2x8x8xf32>, vector<2x8x8xf32>, vector<2x8x8xf32> -> vector<2x8x8xf32>
    "tpu.trace_stop"() : () -> ()
    %cst_62 = arith.constant dense<0xFF800000> : vector<2x8xf32>
    %187 = vector.multi_reduction <maximumf>, %186, %cst_62 [2] : vector<2x8x8xf32> to vector<2x8xf32>
    %188 = vector.shape_cast %187 : vector<2x8xf32> to vector<2x8x1xf32>
    %189 = vector.broadcast %188 : vector<2x8x1xf32> to vector<2x8x8xf32>
    %190 = arith.subf %186, %189 : vector<2x8x8xf32>
    %191 = math.exp %190 : vector<2x8x8xf32>
    %cst_63 = arith.constant dense<0.000000e+00> : vector<2x8xf32>
    %192 = vector.multi_reduction <add>, %191, %cst_63 [2] : vector<2x8x8xf32> to vector<2x8xf32>
    %193 = vector.shape_cast %192 : vector<2x8xf32> to vector<2x8x1xf32>
    %194 = tpu.reciprocal %193 {approx = true} : vector<2x8x1xf32> -> vector<2x8x1xf32>
    %195 = vector.broadcast %194 : vector<2x8x1xf32> to vector<2x8x8xf32>
    %196 = arith.mulf %191, %195 : vector<2x8x8xf32>
    "tpu.trace_start"() <{level = 10 : i32, message = "bqk,bkd->bqd"}> : () -> ()
    %cst_64 = arith.constant dense<0.000000e+00> : vector<2x8x8xf32>
    %197 = tpu.matmul %196, %185, %cst_64 {dimension_numbers = #tpu.dot_dimension_numbers<[2], [1], [1], [2], [0, 0, 0, 1, 1, 2], [0], [0]>} : vector<2x8x8xf32>, vector<2x8x8xf32>, vector<2x8x8xf32> -> vector<2x8x8xf32>
    "tpu.trace_stop"() : () -> ()
    %198 = vector.shape_cast %197 : vector<2x8x8xf32> to vector<16x8xf32>
    %199 = vector.extract_strided_slice %177 {offsets = [0, 8], sizes = [16, 8], strides = [1, 1]} : vector<16x32xf32> to vector<16x8xf32>
    %200 = vector.shape_cast %199 : vector<16x8xf32> to vector<2x8x8xf32>
    %201 = vector.extract_strided_slice %178 {offsets = [0, 8], sizes = [16, 8], strides = [1, 1]} : vector<16x32xf32> to vector<16x8xf32>
    %202 = vector.shape_cast %201 : vector<16x8xf32> to vector<2x8x8xf32>
    %203 = vector.extract_strided_slice %179 {offsets = [0, 8], sizes = [16, 8], strides = [1, 1]} : vector<16x32xf32> to vector<16x8xf32>
    %204 = vector.shape_cast %203 : vector<16x8xf32> to vector<2x8x8xf32>
    "tpu.trace_start"() <{level = 10 : i32, message = "bqd,bkd->bqk"}> : () -> ()
    %cst_65 = arith.constant dense<0.000000e+00> : vector<2x8x8xf32>
    %205 = tpu.matmul %200, %202, %cst_65 {dimension_numbers = #tpu.dot_dimension_numbers<[2], [2], [1], [1], [0, 0, 0, 1, 1, 1], [0], [0]>} : vector<2x8x8xf32>, vector<2x8x8xf32>, vector<2x8x8xf32> -> vector<2x8x8xf32>
    "tpu.trace_stop"() : () -> ()
    %cst_66 = arith.constant dense<0xFF800000> : vector<2x8xf32>
    %206 = vector.multi_reduction <maximumf>, %205, %cst_66 [2] : vector<2x8x8xf32> to vector<2x8xf32>
    %207 = vector.shape_cast %206 : vector<2x8xf32> to vector<2x8x1xf32>
    %208 = vector.broadcast %207 : vector<2x8x1xf32> to vector<2x8x8xf32>
    %209 = arith.subf %205, %208 : vector<2x8x8xf32>
    %210 = math.exp %209 : vector<2x8x8xf32>
    %cst_67 = arith.constant dense<0.000000e+00> : vector<2x8xf32>
    %211 = vector.multi_reduction <add>, %210, %cst_67 [2] : vector<2x8x8xf32> to vector<2x8xf32>
    %212 = vector.shape_cast %211 : vector<2x8xf32> to vector<2x8x1xf32>
    %213 = tpu.reciprocal %212 {approx = true} : vector<2x8x1xf32> -> vector<2x8x1xf32>
    %214 = vector.broadcast %213 : vector<2x8x1xf32> to vector<2x8x8xf32>
    %215 = arith.mulf %210, %214 : vector<2x8x8xf32>
    "tpu.trace_start"() <{level = 10 : i32, message = "bqk,bkd->bqd"}> : () -> ()
    %cst_68 = arith.constant dense<0.000000e+00> : vector<2x8x8xf32>
    %216 = tpu.matmul %215, %204, %cst_68 {dimension_numbers = #tpu.dot_dimension_numbers<[2], [1], [1], [2], [0, 0, 0, 1, 1, 2], [0], [0]>} : vector<2x8x8xf32>, vector<2x8x8xf32>, vector<2x8x8xf32> -> vector<2x8x8xf32>
    "tpu.trace_stop"() : () -> ()
    %217 = vector.shape_cast %216 : vector<2x8x8xf32> to vector<16x8xf32>
    %218 = vector.extract_strided_slice %177 {offsets = [0, 16], sizes = [16, 8], strides = [1, 1]} : vector<16x32xf32> to vector<16x8xf32>
    %219 = vector.shape_cast %218 : vector<16x8xf32> to vector<2x8x8xf32>
    %220 = vector.extract_strided_slice %178 {offsets = [0, 16], sizes = [16, 8], strides = [1, 1]} : vector<16x32xf32> to vector<16x8xf32>
    %221 = vector.shape_cast %220 : vector<16x8xf32> to vector<2x8x8xf32>
    %222 = vector.extract_strided_slice %179 {offsets = [0, 16], sizes = [16, 8], strides = [1, 1]} : vector<16x32xf32> to vector<16x8xf32>
    %223 = vector.shape_cast %222 : vector<16x8xf32> to vector<2x8x8xf32>
    "tpu.trace_start"() <{level = 10 : i32, message = "bqd,bkd->bqk"}> : () -> ()
    %cst_69 = arith.constant dense<0.000000e+00> : vector<2x8x8xf32>
    %224 = tpu.matmul %219, %221, %cst_69 {dimension_numbers = #tpu.dot_dimension_numbers<[2], [2], [1], [1], [0, 0, 0, 1, 1, 1], [0], [0]>} : vector<2x8x8xf32>, vector<2x8x8xf32>, vector<2x8x8xf32> -> vector<2x8x8xf32>
    "tpu.trace_stop"() : () -> ()
    %cst_70 = arith.constant dense<0xFF800000> : vector<2x8xf32>
    %225 = vector.multi_reduction <maximumf>, %224, %cst_70 [2] : vector<2x8x8xf32> to vector<2x8xf32>
    %226 = vector.shape_cast %225 : vector<2x8xf32> to vector<2x8x1xf32>
    %227 = vector.broadcast %226 : vector<2x8x1xf32> to vector<2x8x8xf32>
    %228 = arith.subf %224, %227 : vector<2x8x8xf32>
    %229 = math.exp %228 : vector<2x8x8xf32>
    %cst_71 = arith.constant dense<0.000000e+00> : vector<2x8xf32>
    %230 = vector.multi_reduction <add>, %229, %cst_71 [2] : vector<2x8x8xf32> to vector<2x8xf32>
    %231 = vector.shape_cast %230 : vector<2x8xf32> to vector<2x8x1xf32>
    %232 = tpu.reciprocal %231 {approx = true} : vector<2x8x1xf32> -> vector<2x8x1xf32>
    %233 = vector.broadcast %232 : vector<2x8x1xf32> to vector<2x8x8xf32>
    %234 = arith.mulf %229, %233 : vector<2x8x8xf32>
    "tpu.trace_start"() <{level = 10 : i32, message = "bqk,bkd->bqd"}> : () -> ()
    %cst_72 = arith.constant dense<0.000000e+00> : vector<2x8x8xf32>
    %235 = tpu.matmul %234, %223, %cst_72 {dimension_numbers = #tpu.dot_dimension_numbers<[2], [1], [1], [2], [0, 0, 0, 1, 1, 2], [0], [0]>} : vector<2x8x8xf32>, vector<2x8x8xf32>, vector<2x8x8xf32> -> vector<2x8x8xf32>
    "tpu.trace_stop"() : () -> ()
    %236 = vector.shape_cast %235 : vector<2x8x8xf32> to vector<16x8xf32>
    %237 = vector.extract_strided_slice %177 {offsets = [0, 24], sizes = [16, 8], strides = [1, 1]} : vector<16x32xf32> to vector<16x8xf32>
    %238 = vector.shape_cast %237 : vector<16x8xf32> to vector<2x8x8xf32>
    %239 = vector.extract_strided_slice %178 {offsets = [0, 24], sizes = [16, 8], strides = [1, 1]} : vector<16x32xf32> to vector<16x8xf32>
    %240 = vector.shape_cast %239 : vector<16x8xf32> to vector<2x8x8xf32>
    %241 = vector.extract_strided_slice %179 {offsets = [0, 24], sizes = [16, 8], strides = [1, 1]} : vector<16x32xf32> to vector<16x8xf32>
    %242 = vector.shape_cast %241 : vector<16x8xf32> to vector<2x8x8xf32>
    "tpu.trace_start"() <{level = 10 : i32, message = "bqd,bkd->bqk"}> : () -> ()
    %cst_73 = arith.constant dense<0.000000e+00> : vector<2x8x8xf32>
    %243 = tpu.matmul %238, %240, %cst_73 {dimension_numbers = #tpu.dot_dimension_numbers<[2], [2], [1], [1], [0, 0, 0, 1, 1, 1], [0], [0]>} : vector<2x8x8xf32>, vector<2x8x8xf32>, vector<2x8x8xf32> -> vector<2x8x8xf32>
    "tpu.trace_stop"() : () -> ()
    %cst_74 = arith.constant dense<0xFF800000> : vector<2x8xf32>
    %244 = vector.multi_reduction <maximumf>, %243, %cst_74 [2] : vector<2x8x8xf32> to vector<2x8xf32>
    %245 = vector.shape_cast %244 : vector<2x8xf32> to vector<2x8x1xf32>
    %246 = vector.broadcast %245 : vector<2x8x1xf32> to vector<2x8x8xf32>
    %247 = arith.subf %243, %246 : vector<2x8x8xf32>
    %248 = math.exp %247 : vector<2x8x8xf32>
    %cst_75 = arith.constant dense<0.000000e+00> : vector<2x8xf32>
    %249 = vector.multi_reduction <add>, %248, %cst_75 [2] : vector<2x8x8xf32> to vector<2x8xf32>
    %250 = vector.shape_cast %249 : vector<2x8xf32> to vector<2x8x1xf32>
    %251 = tpu.reciprocal %250 {approx = true} : vector<2x8x1xf32> -> vector<2x8x1xf32>
    %252 = vector.broadcast %251 : vector<2x8x1xf32> to vector<2x8x8xf32>
    %253 = arith.mulf %248, %252 : vector<2x8x8xf32>
    "tpu.trace_start"() <{level = 10 : i32, message = "bqk,bkd->bqd"}> : () -> ()
    %cst_76 = arith.constant dense<0.000000e+00> : vector<2x8x8xf32>
    %254 = tpu.matmul %253, %242, %cst_76 {dimension_numbers = #tpu.dot_dimension_numbers<[2], [1], [1], [2], [0, 0, 0, 1, 1, 2], [0], [0]>} : vector<2x8x8xf32>, vector<2x8x8xf32>, vector<2x8x8xf32> -> vector<2x8x8xf32>
    "tpu.trace_stop"() : () -> ()
    %255 = vector.shape_cast %254 : vector<2x8x8xf32> to vector<16x8xf32>
    %256 = tpu.concatenate %198, %217, %236, %255 in 1 : vector<16x8xf32>, vector<16x8xf32>, vector<16x8xf32>, vector<16x8xf32> -> vector<16x32xf32>
    %257 = arith.truncf %256 : vector<16x32xf32> to vector<16x32xbf16>
    %c1_77 = arith.constant 1 : index
    %c0_78 = arith.constant 0 : index
    %c0_79 = arith.constant 0 : index
    %258 = vector.load %arg3[%c1_77, %c0_78, %c0_79] : memref<2x32x32xbf16, #tpu.memory_space<vmem>>, vector<1x32x32xbf16>
    %259 = vector.shape_cast %258 : vector<1x32x32xbf16> to vector<32x32xbf16>
    %cst_80 = arith.constant dense<0.000000e+00> : vector<16x32xf32>
    %260 = tpu.matmul %257, %259, %cst_80 {dimension_numbers = #tpu.dot_dimension_numbers<[1], [0], [0], [1], [0, 0, 1, 1], [], []>} : vector<16x32xbf16>, vector<32x32xbf16>, vector<16x32xf32> -> vector<16x32xf32>
    %261 = vector.broadcast %163 : vector<1x32xf32> to vector<16x32xf32>
    %262 = arith.addf %260, %261 : vector<16x32xf32>
    %263 = arith.addf %160, %262 : vector<16x32xf32>
    %cst_81 = arith.constant dense<0.000000e+00> : vector<16xf32>
    %264 = vector.multi_reduction <add>, %263, %cst_81 [1] : vector<16x32xf32> to vector<16xf32>
    %265 = vector.shape_cast %264 : vector<16xf32> to vector<16x1xf32>
    %cst_82 = arith.constant 3.200000e+01 : f32
    %266 = vector.broadcast %cst_82 : f32 to vector<16x1xf32>
    %267 = arith.divf %265, %266 : vector<16x1xf32>
    %268 = vector.broadcast %267 : vector<16x1xf32> to vector<16x32xf32>
    %269 = arith.subf %263, %268 : vector<16x32xf32>
    %270 = arith.mulf %269, %269 : vector<16x32xf32>
    %cst_83 = arith.constant dense<0.000000e+00> : vector<16xf32>
    %271 = vector.multi_reduction <add>, %270, %cst_83 [1] : vector<16x32xf32> to vector<16xf32>
    %272 = vector.shape_cast %271 : vector<16xf32> to vector<16x1xf32>
    %cst_84 = arith.constant 3.200000e+01 : f32
    %273 = vector.broadcast %cst_84 : f32 to vector<16x1xf32>
    %274 = arith.divf %272, %273 : vector<16x1xf32>
    %cst_85 = arith.constant 9.99999974E-6 : f32
    %275 = vector.broadcast %cst_85 : f32 to vector<16x1xf32>
    %276 = arith.addf %274, %275 : vector<16x1xf32>
    %277 = math.rsqrt %276 : vector<16x1xf32>
    %278 = vector.broadcast %277 : vector<16x1xf32> to vector<16x32xf32>
    %279 = arith.mulf %269, %278 : vector<16x32xf32>
    %280 = vector.broadcast %165 : vector<1x32xf32> to vector<16x32xf32>
    %281 = arith.mulf %279, %280 : vector<16x32xf32>
    %282 = vector.broadcast %166 : vector<1x32xf32> to vector<16x32xf32>
    %283 = arith.addf %281, %282 : vector<16x32xf32>
    %284 = arith.truncf %283 : vector<16x32xf32> to vector<16x32xbf16>
    %c1_86 = arith.constant 1 : index
    %c0_87 = arith.constant 0 : index
    %c0_88 = arith.constant 0 : index
    %285 = vector.load %arg4[%c1_86, %c0_87, %c0_88] : memref<2x32x2048xbf16, #tpu.memory_space<vmem>>, vector<1x32x2048xbf16>
    %286 = vector.shape_cast %285 : vector<1x32x2048xbf16> to vector<32x2048xbf16>
    %cst_89 = arith.constant dense<0.000000e+00> : vector<16x2048xf32>
    %287 = tpu.matmul %284, %286, %cst_89 {dimension_numbers = #tpu.dot_dimension_numbers<[1], [0], [0], [1], [0, 0, 1, 1], [], []>} : vector<16x32xbf16>, vector<32x2048xbf16>, vector<16x2048xf32> -> vector<16x2048xf32>
    %c1_90 = arith.constant 1 : index
    %c0_91 = arith.constant 0 : index
    %c0_92 = arith.constant 0 : index
    %288 = vector.load %arg5[%c1_90, %c0_91, %c0_92] : memref<2x1x2048xf32, #tpu.memory_space<vmem>>, vector<1x1x2048xf32>
    %289 = vector.shape_cast %288 : vector<1x1x2048xf32> to vector<1x2048xf32>
    %290 = vector.broadcast %289 : vector<1x2048xf32> to vector<16x2048xf32>
    %291 = arith.addf %287, %290 : vector<16x2048xf32>
    %cst_93 = arith.constant 0.000000e+00 : f32
    %292 = vector.broadcast %cst_93 : f32 to vector<16x2048xf32>
    %293 = arith.maximumf %291, %292 : vector<16x2048xf32>
    %294 = arith.truncf %293 : vector<16x2048xf32> to vector<16x2048xbf16>
    %c1_94 = arith.constant 1 : index
    %c0_95 = arith.constant 0 : index
    %c0_96 = arith.constant 0 : index
    %295 = vector.load %arg6[%c1_94, %c0_95, %c0_96] : memref<2x2048x32xbf16, #tpu.memory_space<vmem>>, vector<1x2048x32xbf16>
    %296 = vector.shape_cast %295 : vector<1x2048x32xbf16> to vector<2048x32xbf16>
    %cst_97 = arith.constant dense<0.000000e+00> : vector<16x32xf32>
    %297 = tpu.matmul %294, %296, %cst_97 {dimension_numbers = #tpu.dot_dimension_numbers<[1], [0], [0], [1], [0, 0, 1, 1], [], []>} : vector<16x2048xbf16>, vector<2048x32xbf16>, vector<16x32xf32> -> vector<16x32xf32>
    %298 = vector.broadcast %164 : vector<1x32xf32> to vector<16x32xf32>
    %299 = arith.addf %297, %298 : vector<16x32xf32>
    %300 = arith.addf %283, %299 : vector<16x32xf32>
    %cst_98 = arith.constant dense<0.000000e+00> : vector<16xf32>
    %301 = vector.multi_reduction <add>, %300, %cst_98 [1] : vector<16x32xf32> to vector<16xf32>
    %302 = vector.shape_cast %301 : vector<16xf32> to vector<16x1xf32>
    %cst_99 = arith.constant 3.200000e+01 : f32
    %303 = vector.broadcast %cst_99 : f32 to vector<16x1xf32>
    %304 = arith.divf %302, %303 : vector<16x1xf32>
    %305 = vector.broadcast %304 : vector<16x1xf32> to vector<16x32xf32>
    %306 = arith.subf %300, %305 : vector<16x32xf32>
    %307 = arith.mulf %306, %306 : vector<16x32xf32>
    %cst_100 = arith.constant dense<0.000000e+00> : vector<16xf32>
    %308 = vector.multi_reduction <add>, %307, %cst_100 [1] : vector<16x32xf32> to vector<16xf32>
    %309 = vector.shape_cast %308 : vector<16xf32> to vector<16x1xf32>
    %cst_101 = arith.constant 3.200000e+01 : f32
    %310 = vector.broadcast %cst_101 : f32 to vector<16x1xf32>
    %311 = arith.divf %309, %310 : vector<16x1xf32>
    %cst_102 = arith.constant 9.99999974E-6 : f32
    %312 = vector.broadcast %cst_102 : f32 to vector<16x1xf32>
    %313 = arith.addf %311, %312 : vector<16x1xf32>
    %314 = math.rsqrt %313 : vector<16x1xf32>
    %315 = vector.broadcast %314 : vector<16x1xf32> to vector<16x32xf32>
    %316 = arith.mulf %306, %315 : vector<16x32xf32>
    %317 = vector.broadcast %167 : vector<1x32xf32> to vector<16x32xf32>
    %318 = arith.mulf %316, %317 : vector<16x32xf32>
    %319 = vector.broadcast %168 : vector<1x32xf32> to vector<16x32xf32>
    %320 = arith.addf %318, %319 : vector<16x32xf32>
    %c0_103 = arith.constant 0 : index
    %c0_104 = arith.constant 0 : index
    %321 = vector.load %arg8[%c0_103, %c0_104] : memref<2x32xf32, #tpu.memory_space<vmem>>, vector<2x32xf32>
    %322 = vector.extract_strided_slice %321 {offsets = [0, 0], sizes = [1, 32], strides = [1, 1]} : vector<2x32xf32> to vector<1x32xf32>
    %323 = vector.extract_strided_slice %321 {offsets = [1, 0], sizes = [1, 32], strides = [1, 1]} : vector<2x32xf32> to vector<1x32xf32>
    %cst_105 = arith.constant dense<0.000000e+00> : vector<16xf32>
    %324 = vector.multi_reduction <add>, %320, %cst_105 [1] : vector<16x32xf32> to vector<16xf32>
    %325 = vector.shape_cast %324 : vector<16xf32> to vector<16x1xf32>
    %cst_106 = arith.constant 3.200000e+01 : f32
    %326 = vector.broadcast %cst_106 : f32 to vector<16x1xf32>
    %327 = arith.divf %325, %326 : vector<16x1xf32>
    %328 = vector.broadcast %327 : vector<16x1xf32> to vector<16x32xf32>
    %329 = arith.subf %320, %328 : vector<16x32xf32>
    %330 = arith.mulf %329, %329 : vector<16x32xf32>
    %cst_107 = arith.constant dense<0.000000e+00> : vector<16xf32>
    %331 = vector.multi_reduction <add>, %330, %cst_107 [1] : vector<16x32xf32> to vector<16xf32>
    %332 = vector.shape_cast %331 : vector<16xf32> to vector<16x1xf32>
    %cst_108 = arith.constant 3.200000e+01 : f32
    %333 = vector.broadcast %cst_108 : f32 to vector<16x1xf32>
    %334 = arith.divf %332, %333 : vector<16x1xf32>
    %cst_109 = arith.constant 9.99999974E-6 : f32
    %335 = vector.broadcast %cst_109 : f32 to vector<16x1xf32>
    %336 = arith.addf %334, %335 : vector<16x1xf32>
    %337 = math.rsqrt %336 : vector<16x1xf32>
    %338 = vector.broadcast %337 : vector<16x1xf32> to vector<16x32xf32>
    %339 = arith.mulf %329, %338 : vector<16x32xf32>
    %340 = vector.broadcast %322 : vector<1x32xf32> to vector<16x32xf32>
    %341 = arith.mulf %339, %340 : vector<16x32xf32>
    %342 = vector.broadcast %323 : vector<1x32xf32> to vector<16x32xf32>
    %343 = arith.addf %341, %342 : vector<16x32xf32>
    %c0_110 = arith.constant 0 : index
    %c0_111 = arith.constant 0 : index
    %344 = vector.load %arg9[%c0_110, %c0_111] : memref<16x32xf32, #tpu.memory_space<vmem>>, vector<16x32xf32>
    tpu.vector_store %arg9[%c0_110, %c0_111], %343 {strides = array<i32>} : memref<16x32xf32, #tpu.memory_space<vmem>>, vector<16x32xf32>,
    return
  }
}

module attributes {stable_mosaic.version = 11 : i64} {
  func.func @_decoder_stack_kernel(%arg0: memref<16x32xf32, #tpu.memory_space<vmem>>, %arg1: memref<16x32xf32, #tpu.memory_space<vmem>>, %arg2: memref<2x32x96xbf16, #tpu.memory_space<vmem>>, %arg3: memref<2x1x96xf32, #tpu.memory_space<vmem>>, %arg4: memref<2x32x32xbf16, #tpu.memory_space<vmem>>, %arg5: memref<2x32x32xbf16, #tpu.memory_space<vmem>>, %arg6: memref<2x32x64xbf16, #tpu.memory_space<vmem>>, %arg7: memref<2x1x64xf32, #tpu.memory_space<vmem>>, %arg8: memref<2x32x32xbf16, #tpu.memory_space<vmem>>, %arg9: memref<2x32x2048xbf16, #tpu.memory_space<vmem>>, %arg10: memref<2x1x2048xf32, #tpu.memory_space<vmem>>, %arg11: memref<2x2048x32xbf16, #tpu.memory_space<vmem>>, %arg12: memref<2x10x32xf32, #tpu.memory_space<vmem>>, %arg13: memref<2x32xf32, #tpu.memory_space<vmem>>, %arg14: memref<32x128xf32, #tpu.memory_space<vmem>>, %arg15: memref<1x128xf32, #tpu.memory_space<vmem>>, %arg16: memref<16x128xf32, #tpu.memory_space<vmem>>) attributes {dimension_semantics = [], scalar_prefetch = 0 : i64, scratch_operands = 0 : i64, tpu.core_type = #tpu.core_type<tc>} {
    %c0 = arith.constant 0 : index
    %c0_0 = arith.constant 0 : index
    %0 = vector.load %arg0[%c0, %c0_0] : memref<16x32xf32, #tpu.memory_space<vmem>>, vector<16x32xf32>
    %c0_1 = arith.constant 0 : index
    %c0_2 = arith.constant 0 : index
    %1 = vector.load %arg1[%c0_1, %c0_2] : memref<16x32xf32, #tpu.memory_space<vmem>>, vector<16x32xf32>
    %2 = tpu.iota {dimensions = array<i32: 0>} : vector<8x8xi32>
    %3 = tpu.iota {dimensions = array<i32: 1>} : vector<8x8xi32>
    %4 = arith.cmpi sge, %2, %3 : vector<8x8xi32>
    %cst = arith.constant 0.000000e+00 : f32
    %cst_3 = arith.constant -1.000000e+30 : f32
    %5 = vector.broadcast %cst : f32 to vector<8x8xf32>
    %6 = vector.broadcast %cst_3 : f32 to vector<8x8xf32>
    %7 = arith.select %4, %5, %6 : vector<8x8xi1>, vector<8x8xf32>
    %c0_4 = arith.constant 0 : index
    %c0_5 = arith.constant 0 : index
    %c0_6 = arith.constant 0 : index
    %8 = vector.load %arg12[%c0_4, %c0_5, %c0_6] : memref<2x10x32xf32, #tpu.memory_space<vmem>>, vector<1x10x32xf32>
    %9 = vector.shape_cast %8 : vector<1x10x32xf32> to vector<10x32xf32>
    %10 = vector.extract_strided_slice %9 {offsets = [0, 0], sizes = [1, 32], strides = [1, 1]} : vector<10x32xf32> to vector<1x32xf32>
    %11 = vector.extract_strided_slice %9 {offsets = [1, 0], sizes = [1, 32], strides = [1, 1]} : vector<10x32xf32> to vector<1x32xf32>
    %12 = vector.extract_strided_slice %9 {offsets = [2, 0], sizes = [1, 32], strides = [1, 1]} : vector<10x32xf32> to vector<1x32xf32>
    %13 = vector.extract_strided_slice %9 {offsets = [3, 0], sizes = [1, 32], strides = [1, 1]} : vector<10x32xf32> to vector<1x32xf32>
    %14 = vector.extract_strided_slice %9 {offsets = [4, 0], sizes = [1, 32], strides = [1, 1]} : vector<10x32xf32> to vector<1x32xf32>
    %15 = vector.extract_strided_slice %9 {offsets = [5, 0], sizes = [1, 32], strides = [1, 1]} : vector<10x32xf32> to vector<1x32xf32>
    %16 = vector.extract_strided_slice %9 {offsets = [6, 0], sizes = [1, 32], strides = [1, 1]} : vector<10x32xf32> to vector<1x32xf32>
    %17 = vector.extract_strided_slice %9 {offsets = [7, 0], sizes = [1, 32], strides = [1, 1]} : vector<10x32xf32> to vector<1x32xf32>
    %18 = vector.extract_strided_slice %9 {offsets = [8, 0], sizes = [1, 32], strides = [1, 1]} : vector<10x32xf32> to vector<1x32xf32>
    %19 = vector.extract_strided_slice %9 {offsets = [9, 0], sizes = [1, 32], strides = [1, 1]} : vector<10x32xf32> to vector<1x32xf32>
    %20 = arith.truncf %0 : vector<16x32xf32> to vector<16x32xbf16>
    %c0_7 = arith.constant 0 : index
    %c0_8 = arith.constant 0 : index
    %c0_9 = arith.constant 0 : index
    %21 = vector.load %arg2[%c0_7, %c0_8, %c0_9] : memref<2x32x96xbf16, #tpu.memory_space<vmem>>, vector<1x32x96xbf16>
    %22 = vector.shape_cast %21 : vector<1x32x96xbf16> to vector<32x96xbf16>
    %cst_10 = arith.constant dense<0.000000e+00> : vector<16x96xf32>
    %23 = tpu.matmul %20, %22, %cst_10 {dimension_numbers = #tpu.dot_dimension_numbers<[1], [0], [0], [1], [0, 0, 1, 1], [], []>} : vector<16x32xbf16>, vector<32x96xbf16>, vector<16x96xf32> -> vector<16x96xf32>
    %c0_11 = arith.constant 0 : index
    %c0_12 = arith.constant 0 : index
    %c0_13 = arith.constant 0 : index
    %24 = vector.load %arg3[%c0_11, %c0_12, %c0_13] : memref<2x1x96xf32, #tpu.memory_space<vmem>>, vector<1x1x96xf32>
    %25 = vector.shape_cast %24 : vector<1x1x96xf32> to vector<1x96xf32>
    %26 = vector.broadcast %25 : vector<1x96xf32> to vector<16x96xf32>
    %27 = arith.addf %23, %26 : vector<16x96xf32>
    %28 = vector.extract_strided_slice %27 {offsets = [0, 0], sizes = [16, 32], strides = [1, 1]} : vector<16x96xf32> to vector<16x32xf32>
    %29 = vector.extract_strided_slice %27 {offsets = [0, 32], sizes = [16, 32], strides = [1, 1]} : vector<16x96xf32> to vector<16x32xf32>
    %30 = vector.extract_strided_slice %27 {offsets = [0, 64], sizes = [16, 32], strides = [1, 1]} : vector<16x96xf32> to vector<16x32xf32>
    %31 = vector.extract_strided_slice %28 {offsets = [0, 0], sizes = [16, 8], strides = [1, 1]} : vector<16x32xf32> to vector<16x8xf32>
    %32 = vector.shape_cast %31 : vector<16x8xf32> to vector<2x8x8xf32>
    %33 = vector.extract_strided_slice %29 {offsets = [0, 0], sizes = [16, 8], strides = [1, 1]} : vector<16x32xf32> to vector<16x8xf32>
    %34 = vector.shape_cast %33 : vector<16x8xf32> to vector<2x8x8xf32>
    %35 = vector.extract_strided_slice %30 {offsets = [0, 0], sizes = [16, 8], strides = [1, 1]} : vector<16x32xf32> to vector<16x8xf32>
    %36 = vector.shape_cast %35 : vector<16x8xf32> to vector<2x8x8xf32>
    "tpu.trace_start"() <{level = 10 : i32, message = "bqd,bkd->bqk"}> : () -> ()
    %cst_14 = arith.constant dense<0.000000e+00> : vector<2x8x8xf32>
    %37 = tpu.matmul %32, %34, %cst_14 {dimension_numbers = #tpu.dot_dimension_numbers<[2], [2], [1], [1], [0, 0, 0, 1, 1, 1], [0], [0]>} : vector<2x8x8xf32>, vector<2x8x8xf32>, vector<2x8x8xf32> -> vector<2x8x8xf32>
    "tpu.trace_stop"() : () -> ()
    %38 = vector.shape_cast %7 : vector<8x8xf32> to vector<1x8x8xf32>
    %39 = vector.broadcast %38 : vector<1x8x8xf32> to vector<2x8x8xf32>
    %40 = arith.addf %37, %39 : vector<2x8x8xf32>
    %cst_15 = arith.constant dense<0xFF800000> : vector<2x8xf32>
    %41 = vector.multi_reduction <maximumf>, %40, %cst_15 [2] : vector<2x8x8xf32> to vector<2x8xf32>
    %42 = vector.shape_cast %41 : vector<2x8xf32> to vector<2x8x1xf32>
    %43 = vector.broadcast %42 : vector<2x8x1xf32> to vector<2x8x8xf32>
    %44 = arith.subf %40, %43 : vector<2x8x8xf32>
    %45 = math.exp %44 : vector<2x8x8xf32>
    %cst_16 = arith.constant dense<0.000000e+00> : vector<2x8xf32>
    %46 = vector.multi_reduction <add>, %45, %cst_16 [2] : vector<2x8x8xf32> to vector<2x8xf32>
    %47 = vector.shape_cast %46 : vector<2x8xf32> to vector<2x8x1xf32>
    %48 = tpu.reciprocal %47 {approx = true} : vector<2x8x1xf32> -> vector<2x8x1xf32>
    %49 = vector.broadcast %48 : vector<2x8x1xf32> to vector<2x8x8xf32>
    %50 = arith.mulf %45, %49 : vector<2x8x8xf32>
    "tpu.trace_start"() <{level = 10 : i32, message = "bqk,bkd->bqd"}> : () -> ()
    %cst_17 = arith.constant dense<0.000000e+00> : vector<2x8x8xf32>
    %51 = tpu.matmul %50, %36, %cst_17 {dimension_numbers = #tpu.dot_dimension_numbers<[2], [1], [1], [2], [0, 0, 0, 1, 1, 2], [0], [0]>} : vector<2x8x8xf32>, vector<2x8x8xf32>, vector<2x8x8xf32> -> vector<2x8x8xf32>
    "tpu.trace_stop"() : () -> ()
    %52 = vector.shape_cast %51 : vector<2x8x8xf32> to vector<16x8xf32>
    %53 = vector.extract_strided_slice %28 {offsets = [0, 8], sizes = [16, 8], strides = [1, 1]} : vector<16x32xf32> to vector<16x8xf32>
    %54 = vector.shape_cast %53 : vector<16x8xf32> to vector<2x8x8xf32>
    %55 = vector.extract_strided_slice %29 {offsets = [0, 8], sizes = [16, 8], strides = [1, 1]} : vector<16x32xf32> to vector<16x8xf32>
    %56 = vector.shape_cast %55 : vector<16x8xf32> to vector<2x8x8xf32>
    %57 = vector.extract_strided_slice %30 {offsets = [0, 8], sizes = [16, 8], strides = [1, 1]} : vector<16x32xf32> to vector<16x8xf32>
    %58 = vector.shape_cast %57 : vector<16x8xf32> to vector<2x8x8xf32>
    "tpu.trace_start"() <{level = 10 : i32, message = "bqd,bkd->bqk"}> : () -> ()
    %cst_18 = arith.constant dense<0.000000e+00> : vector<2x8x8xf32>
    %59 = tpu.matmul %54, %56, %cst_18 {dimension_numbers = #tpu.dot_dimension_numbers<[2], [2], [1], [1], [0, 0, 0, 1, 1, 1], [0], [0]>} : vector<2x8x8xf32>, vector<2x8x8xf32>, vector<2x8x8xf32> -> vector<2x8x8xf32>
    "tpu.trace_stop"() : () -> ()
    %60 = vector.shape_cast %7 : vector<8x8xf32> to vector<1x8x8xf32>
    %61 = vector.broadcast %60 : vector<1x8x8xf32> to vector<2x8x8xf32>
    %62 = arith.addf %59, %61 : vector<2x8x8xf32>
    %cst_19 = arith.constant dense<0xFF800000> : vector<2x8xf32>
    %63 = vector.multi_reduction <maximumf>, %62, %cst_19 [2] : vector<2x8x8xf32> to vector<2x8xf32>
    %64 = vector.shape_cast %63 : vector<2x8xf32> to vector<2x8x1xf32>
    %65 = vector.broadcast %64 : vector<2x8x1xf32> to vector<2x8x8xf32>
    %66 = arith.subf %62, %65 : vector<2x8x8xf32>
    %67 = math.exp %66 : vector<2x8x8xf32>
    %cst_20 = arith.constant dense<0.000000e+00> : vector<2x8xf32>
    %68 = vector.multi_reduction <add>, %67, %cst_20 [2] : vector<2x8x8xf32> to vector<2x8xf32>
    %69 = vector.shape_cast %68 : vector<2x8xf32> to vector<2x8x1xf32>
    %70 = tpu.reciprocal %69 {approx = true} : vector<2x8x1xf32> -> vector<2x8x1xf32>
    %71 = vector.broadcast %70 : vector<2x8x1xf32> to vector<2x8x8xf32>
    %72 = arith.mulf %67, %71 : vector<2x8x8xf32>
    "tpu.trace_start"() <{level = 10 : i32, message = "bqk,bkd->bqd"}> : () -> ()
    %cst_21 = arith.constant dense<0.000000e+00> : vector<2x8x8xf32>
    %73 = tpu.matmul %72, %58, %cst_21 {dimension_numbers = #tpu.dot_dimension_numbers<[2], [1], [1], [2], [0, 0, 0, 1, 1, 2], [0], [0]>} : vector<2x8x8xf32>, vector<2x8x8xf32>, vector<2x8x8xf32> -> vector<2x8x8xf32>
    "tpu.trace_stop"() : () -> ()
    %74 = vector.shape_cast %73 : vector<2x8x8xf32> to vector<16x8xf32>
    %75 = vector.extract_strided_slice %28 {offsets = [0, 16], sizes = [16, 8], strides = [1, 1]} : vector<16x32xf32> to vector<16x8xf32>
    %76 = vector.shape_cast %75 : vector<16x8xf32> to vector<2x8x8xf32>
    %77 = vector.extract_strided_slice %29 {offsets = [0, 16], sizes = [16, 8], strides = [1, 1]} : vector<16x32xf32> to vector<16x8xf32>
    %78 = vector.shape_cast %77 : vector<16x8xf32> to vector<2x8x8xf32>
    %79 = vector.extract_strided_slice %30 {offsets = [0, 16], sizes = [16, 8], strides = [1, 1]} : vector<16x32xf32> to vector<16x8xf32>
    %80 = vector.shape_cast %79 : vector<16x8xf32> to vector<2x8x8xf32>
    "tpu.trace_start"() <{level = 10 : i32, message = "bqd,bkd->bqk"}> : () -> ()
    %cst_22 = arith.constant dense<0.000000e+00> : vector<2x8x8xf32>
    %81 = tpu.matmul %76, %78, %cst_22 {dimension_numbers = #tpu.dot_dimension_numbers<[2], [2], [1], [1], [0, 0, 0, 1, 1, 1], [0], [0]>} : vector<2x8x8xf32>, vector<2x8x8xf32>, vector<2x8x8xf32> -> vector<2x8x8xf32>
    "tpu.trace_stop"() : () -> ()
    %82 = vector.shape_cast %7 : vector<8x8xf32> to vector<1x8x8xf32>
    %83 = vector.broadcast %82 : vector<1x8x8xf32> to vector<2x8x8xf32>
    %84 = arith.addf %81, %83 : vector<2x8x8xf32>
    %cst_23 = arith.constant dense<0xFF800000> : vector<2x8xf32>
    %85 = vector.multi_reduction <maximumf>, %84, %cst_23 [2] : vector<2x8x8xf32> to vector<2x8xf32>
    %86 = vector.shape_cast %85 : vector<2x8xf32> to vector<2x8x1xf32>
    %87 = vector.broadcast %86 : vector<2x8x1xf32> to vector<2x8x8xf32>
    %88 = arith.subf %84, %87 : vector<2x8x8xf32>
    %89 = math.exp %88 : vector<2x8x8xf32>
    %cst_24 = arith.constant dense<0.000000e+00> : vector<2x8xf32>
    %90 = vector.multi_reduction <add>, %89, %cst_24 [2] : vector<2x8x8xf32> to vector<2x8xf32>
    %91 = vector.shape_cast %90 : vector<2x8xf32> to vector<2x8x1xf32>
    %92 = tpu.reciprocal %91 {approx = true} : vector<2x8x1xf32> -> vector<2x8x1xf32>
    %93 = vector.broadcast %92 : vector<2x8x1xf32> to vector<2x8x8xf32>
    %94 = arith.mulf %89, %93 : vector<2x8x8xf32>
    "tpu.trace_start"() <{level = 10 : i32, message = "bqk,bkd->bqd"}> : () -> ()
    %cst_25 = arith.constant dense<0.000000e+00> : vector<2x8x8xf32>
    %95 = tpu.matmul %94, %80, %cst_25 {dimension_numbers = #tpu.dot_dimension_numbers<[2], [1], [1], [2], [0, 0, 0, 1, 1, 2], [0], [0]>} : vector<2x8x8xf32>, vector<2x8x8xf32>, vector<2x8x8xf32> -> vector<2x8x8xf32>
    "tpu.trace_stop"() : () -> ()
    %96 = vector.shape_cast %95 : vector<2x8x8xf32> to vector<16x8xf32>
    %97 = vector.extract_strided_slice %28 {offsets = [0, 24], sizes = [16, 8], strides = [1, 1]} : vector<16x32xf32> to vector<16x8xf32>
    %98 = vector.shape_cast %97 : vector<16x8xf32> to vector<2x8x8xf32>
    %99 = vector.extract_strided_slice %29 {offsets = [0, 24], sizes = [16, 8], strides = [1, 1]} : vector<16x32xf32> to vector<16x8xf32>
    %100 = vector.shape_cast %99 : vector<16x8xf32> to vector<2x8x8xf32>
    %101 = vector.extract_strided_slice %30 {offsets = [0, 24], sizes = [16, 8], strides = [1, 1]} : vector<16x32xf32> to vector<16x8xf32>
    %102 = vector.shape_cast %101 : vector<16x8xf32> to vector<2x8x8xf32>
    "tpu.trace_start"() <{level = 10 : i32, message = "bqd,bkd->bqk"}> : () -> ()
    %cst_26 = arith.constant dense<0.000000e+00> : vector<2x8x8xf32>
    %103 = tpu.matmul %98, %100, %cst_26 {dimension_numbers = #tpu.dot_dimension_numbers<[2], [2], [1], [1], [0, 0, 0, 1, 1, 1], [0], [0]>} : vector<2x8x8xf32>, vector<2x8x8xf32>, vector<2x8x8xf32> -> vector<2x8x8xf32>
    "tpu.trace_stop"() : () -> ()
    %104 = vector.shape_cast %7 : vector<8x8xf32> to vector<1x8x8xf32>
    %105 = vector.broadcast %104 : vector<1x8x8xf32> to vector<2x8x8xf32>
    %106 = arith.addf %103, %105 : vector<2x8x8xf32>
    %cst_27 = arith.constant dense<0xFF800000> : vector<2x8xf32>
    %107 = vector.multi_reduction <maximumf>, %106, %cst_27 [2] : vector<2x8x8xf32> to vector<2x8xf32>
    %108 = vector.shape_cast %107 : vector<2x8xf32> to vector<2x8x1xf32>
    %109 = vector.broadcast %108 : vector<2x8x1xf32> to vector<2x8x8xf32>
    %110 = arith.subf %106, %109 : vector<2x8x8xf32>
    %111 = math.exp %110 : vector<2x8x8xf32>
    %cst_28 = arith.constant dense<0.000000e+00> : vector<2x8xf32>
    %112 = vector.multi_reduction <add>, %111, %cst_28 [2] : vector<2x8x8xf32> to vector<2x8xf32>
    %113 = vector.shape_cast %112 : vector<2x8xf32> to vector<2x8x1xf32>
    %114 = tpu.reciprocal %113 {approx = true} : vector<2x8x1xf32> -> vector<2x8x1xf32>
    %115 = vector.broadcast %114 : vector<2x8x1xf32> to vector<2x8x8xf32>
    %116 = arith.mulf %111, %115 : vector<2x8x8xf32>
    "tpu.trace_start"() <{level = 10 : i32, message = "bqk,bkd->bqd"}> : () -> ()
    %cst_29 = arith.constant dense<0.000000e+00> : vector<2x8x8xf32>
    %117 = tpu.matmul %116, %102, %cst_29 {dimension_numbers = #tpu.dot_dimension_numbers<[2], [1], [1], [2], [0, 0, 0, 1, 1, 2], [0], [0]>} : vector<2x8x8xf32>, vector<2x8x8xf32>, vector<2x8x8xf32> -> vector<2x8x8xf32>
    "tpu.trace_stop"() : () -> ()
    %118 = vector.shape_cast %117 : vector<2x8x8xf32> to vector<16x8xf32>
    %119 = tpu.concatenate %52, %74, %96, %118 in 1 : vector<16x8xf32>, vector<16x8xf32>, vector<16x8xf32>, vector<16x8xf32> -> vector<16x32xf32>
    %120 = arith.truncf %119 : vector<16x32xf32> to vector<16x32xbf16>
    %c0_30 = arith.constant 0 : index
    %c0_31 = arith.constant 0 : index
    %c0_32 = arith.constant 0 : index
    %121 = vector.load %arg4[%c0_30, %c0_31, %c0_32] : memref<2x32x32xbf16, #tpu.memory_space<vmem>>, vector<1x32x32xbf16>
    %122 = vector.shape_cast %121 : vector<1x32x32xbf16> to vector<32x32xbf16>
    %cst_33 = arith.constant dense<0.000000e+00> : vector<16x32xf32>
    %123 = tpu.matmul %120, %122, %cst_33 {dimension_numbers = #tpu.dot_dimension_numbers<[1], [0], [0], [1], [0, 0, 1, 1], [], []>} : vector<16x32xbf16>, vector<32x32xbf16>, vector<16x32xf32> -> vector<16x32xf32>
    %124 = vector.broadcast %10 : vector<1x32xf32> to vector<16x32xf32>
    %125 = arith.addf %123, %124 : vector<16x32xf32>
    %126 = arith.addf %0, %125 : vector<16x32xf32>
    %cst_34 = arith.constant dense<0.000000e+00> : vector<16xf32>
    %127 = vector.multi_reduction <add>, %126, %cst_34 [1] : vector<16x32xf32> to vector<16xf32>
    %128 = vector.shape_cast %127 : vector<16xf32> to vector<16x1xf32>
    %cst_35 = arith.constant 3.200000e+01 : f32
    %129 = vector.broadcast %cst_35 : f32 to vector<16x1xf32>
    %130 = arith.divf %128, %129 : vector<16x1xf32>
    %131 = vector.broadcast %130 : vector<16x1xf32> to vector<16x32xf32>
    %132 = arith.subf %126, %131 : vector<16x32xf32>
    %133 = arith.mulf %132, %132 : vector<16x32xf32>
    %cst_36 = arith.constant dense<0.000000e+00> : vector<16xf32>
    %134 = vector.multi_reduction <add>, %133, %cst_36 [1] : vector<16x32xf32> to vector<16xf32>
    %135 = vector.shape_cast %134 : vector<16xf32> to vector<16x1xf32>
    %cst_37 = arith.constant 3.200000e+01 : f32
    %136 = vector.broadcast %cst_37 : f32 to vector<16x1xf32>
    %137 = arith.divf %135, %136 : vector<16x1xf32>
    %cst_38 = arith.constant 9.99999974E-6 : f32
    %138 = vector.broadcast %cst_38 : f32 to vector<16x1xf32>
    %139 = arith.addf %137, %138 : vector<16x1xf32>
    %140 = math.rsqrt %139 : vector<16x1xf32>
    %141 = vector.broadcast %140 : vector<16x1xf32> to vector<16x32xf32>
    %142 = arith.mulf %132, %141 : vector<16x32xf32>
    %143 = vector.broadcast %14 : vector<1x32xf32> to vector<16x32xf32>
    %144 = arith.mulf %142, %143 : vector<16x32xf32>
    %145 = vector.broadcast %15 : vector<1x32xf32> to vector<16x32xf32>
    %146 = arith.addf %144, %145 : vector<16x32xf32>
    %147 = arith.truncf %146 : vector<16x32xf32> to vector<16x32xbf16>
    %c0_39 = arith.constant 0 : index
    %c0_40 = arith.constant 0 : index
    %c0_41 = arith.constant 0 : index
    %148 = vector.load %arg5[%c0_39, %c0_40, %c0_41] : memref<2x32x32xbf16, #tpu.memory_space<vmem>>, vector<1x32x32xbf16>
    %149 = vector.shape_cast %148 : vector<1x32x32xbf16> to vector<32x32xbf16>
    %cst_42 = arith.constant dense<0.000000e+00> : vector<16x32xf32>
    %150 = tpu.matmul %147, %149, %cst_42 {dimension_numbers = #tpu.dot_dimension_numbers<[1], [0], [0], [1], [0, 0, 1, 1], [], []>} : vector<16x32xbf16>, vector<32x32xbf16>, vector<16x32xf32> -> vector<16x32xf32>
    %151 = vector.broadcast %11 : vector<1x32xf32> to vector<16x32xf32>
    %152 = arith.addf %150, %151 : vector<16x32xf32>
    %153 = arith.truncf %1 : vector<16x32xf32> to vector<16x32xbf16>
    %c0_43 = arith.constant 0 : index
    %c0_44 = arith.constant 0 : index
    %c0_45 = arith.constant 0 : index
    %154 = vector.load %arg6[%c0_43, %c0_44, %c0_45] : memref<2x32x64xbf16, #tpu.memory_space<vmem>>, vector<1x32x64xbf16>
    %155 = vector.shape_cast %154 : vector<1x32x64xbf16> to vector<32x64xbf16>
    %cst_46 = arith.constant dense<0.000000e+00> : vector<16x64xf32>
    %156 = tpu.matmul %153, %155, %cst_46 {dimension_numbers = #tpu.dot_dimension_numbers<[1], [0], [0], [1], [0, 0, 1, 1], [], []>} : vector<16x32xbf16>, vector<32x64xbf16>, vector<16x64xf32> -> vector<16x64xf32>
    %c0_47 = arith.constant 0 : index
    %c0_48 = arith.constant 0 : index
    %c0_49 = arith.constant 0 : index
    %157 = vector.load %arg7[%c0_47, %c0_48, %c0_49] : memref<2x1x64xf32, #tpu.memory_space<vmem>>, vector<1x1x64xf32>
    %158 = vector.shape_cast %157 : vector<1x1x64xf32> to vector<1x64xf32>
    %159 = vector.broadcast %158 : vector<1x64xf32> to vector<16x64xf32>
    %160 = arith.addf %156, %159 : vector<16x64xf32>
    %161 = vector.extract_strided_slice %160 {offsets = [0, 0], sizes = [16, 32], strides = [1, 1]} : vector<16x64xf32> to vector<16x32xf32>
    %162 = vector.extract_strided_slice %160 {offsets = [0, 32], sizes = [16, 32], strides = [1, 1]} : vector<16x64xf32> to vector<16x32xf32>
    %163 = vector.extract_strided_slice %152 {offsets = [0, 0], sizes = [16, 8], strides = [1, 1]} : vector<16x32xf32> to vector<16x8xf32>
    %164 = vector.shape_cast %163 : vector<16x8xf32> to vector<2x8x8xf32>
    %165 = vector.extract_strided_slice %161 {offsets = [0, 0], sizes = [16, 8], strides = [1, 1]} : vector<16x32xf32> to vector<16x8xf32>
    %166 = vector.shape_cast %165 : vector<16x8xf32> to vector<2x8x8xf32>
    %167 = vector.extract_strided_slice %162 {offsets = [0, 0], sizes = [16, 8], strides = [1, 1]} : vector<16x32xf32> to vector<16x8xf32>
    %168 = vector.shape_cast %167 : vector<16x8xf32> to vector<2x8x8xf32>
    "tpu.trace_start"() <{level = 10 : i32, message = "bqd,bkd->bqk"}> : () -> ()
    %cst_50 = arith.constant dense<0.000000e+00> : vector<2x8x8xf32>
    %169 = tpu.matmul %164, %166, %cst_50 {dimension_numbers = #tpu.dot_dimension_numbers<[2], [2], [1], [1], [0, 0, 0, 1, 1, 1], [0], [0]>} : vector<2x8x8xf32>, vector<2x8x8xf32>, vector<2x8x8xf32> -> vector<2x8x8xf32>
    "tpu.trace_stop"() : () -> ()
    %cst_51 = arith.constant dense<0xFF800000> : vector<2x8xf32>
    %170 = vector.multi_reduction <maximumf>, %169, %cst_51 [2] : vector<2x8x8xf32> to vector<2x8xf32>
    %171 = vector.shape_cast %170 : vector<2x8xf32> to vector<2x8x1xf32>
    %172 = vector.broadcast %171 : vector<2x8x1xf32> to vector<2x8x8xf32>
    %173 = arith.subf %169, %172 : vector<2x8x8xf32>
    %174 = math.exp %173 : vector<2x8x8xf32>
    %cst_52 = arith.constant dense<0.000000e+00> : vector<2x8xf32>
    %175 = vector.multi_reduction <add>, %174, %cst_52 [2] : vector<2x8x8xf32> to vector<2x8xf32>
    %176 = vector.shape_cast %175 : vector<2x8xf32> to vector<2x8x1xf32>
    %177 = tpu.reciprocal %176 {approx = true} : vector<2x8x1xf32> -> vector<2x8x1xf32>
    %178 = vector.broadcast %177 : vector<2x8x1xf32> to vector<2x8x8xf32>
    %179 = arith.mulf %174, %178 : vector<2x8x8xf32>
    "tpu.trace_start"() <{level = 10 : i32, message = "bqk,bkd->bqd"}> : () -> ()
    %cst_53 = arith.constant dense<0.000000e+00> : vector<2x8x8xf32>
    %180 = tpu.matmul %179, %168, %cst_53 {dimension_numbers = #tpu.dot_dimension_numbers<[2], [1], [1], [2], [0, 0, 0, 1, 1, 2], [0], [0]>} : vector<2x8x8xf32>, vector<2x8x8xf32>, vector<2x8x8xf32> -> vector<2x8x8xf32>
    "tpu.trace_stop"() : () -> ()
    %181 = vector.shape_cast %180 : vector<2x8x8xf32> to vector<16x8xf32>
    %182 = vector.extract_strided_slice %152 {offsets = [0, 8], sizes = [16, 8], strides = [1, 1]} : vector<16x32xf32> to vector<16x8xf32>
    %183 = vector.shape_cast %182 : vector<16x8xf32> to vector<2x8x8xf32>
    %184 = vector.extract_strided_slice %161 {offsets = [0, 8], sizes = [16, 8], strides = [1, 1]} : vector<16x32xf32> to vector<16x8xf32>
    %185 = vector.shape_cast %184 : vector<16x8xf32> to vector<2x8x8xf32>
    %186 = vector.extract_strided_slice %162 {offsets = [0, 8], sizes = [16, 8], strides = [1, 1]} : vector<16x32xf32> to vector<16x8xf32>
    %187 = vector.shape_cast %186 : vector<16x8xf32> to vector<2x8x8xf32>
    "tpu.trace_start"() <{level = 10 : i32, message = "bqd,bkd->bqk"}> : () -> ()
    %cst_54 = arith.constant dense<0.000000e+00> : vector<2x8x8xf32>
    %188 = tpu.matmul %183, %185, %cst_54 {dimension_numbers = #tpu.dot_dimension_numbers<[2], [2], [1], [1], [0, 0, 0, 1, 1, 1], [0], [0]>} : vector<2x8x8xf32>, vector<2x8x8xf32>, vector<2x8x8xf32> -> vector<2x8x8xf32>
    "tpu.trace_stop"() : () -> ()
    %cst_55 = arith.constant dense<0xFF800000> : vector<2x8xf32>
    %189 = vector.multi_reduction <maximumf>, %188, %cst_55 [2] : vector<2x8x8xf32> to vector<2x8xf32>
    %190 = vector.shape_cast %189 : vector<2x8xf32> to vector<2x8x1xf32>
    %191 = vector.broadcast %190 : vector<2x8x1xf32> to vector<2x8x8xf32>
    %192 = arith.subf %188, %191 : vector<2x8x8xf32>
    %193 = math.exp %192 : vector<2x8x8xf32>
    %cst_56 = arith.constant dense<0.000000e+00> : vector<2x8xf32>
    %194 = vector.multi_reduction <add>, %193, %cst_56 [2] : vector<2x8x8xf32> to vector<2x8xf32>
    %195 = vector.shape_cast %194 : vector<2x8xf32> to vector<2x8x1xf32>
    %196 = tpu.reciprocal %195 {approx = true} : vector<2x8x1xf32> -> vector<2x8x1xf32>
    %197 = vector.broadcast %196 : vector<2x8x1xf32> to vector<2x8x8xf32>
    %198 = arith.mulf %193, %197 : vector<2x8x8xf32>
    "tpu.trace_start"() <{level = 10 : i32, message = "bqk,bkd->bqd"}> : () -> ()
    %cst_57 = arith.constant dense<0.000000e+00> : vector<2x8x8xf32>
    %199 = tpu.matmul %198, %187, %cst_57 {dimension_numbers = #tpu.dot_dimension_numbers<[2], [1], [1], [2], [0, 0, 0, 1, 1, 2], [0], [0]>} : vector<2x8x8xf32>, vector<2x8x8xf32>, vector<2x8x8xf32> -> vector<2x8x8xf32>
    "tpu.trace_stop"() : () -> ()
    %200 = vector.shape_cast %199 : vector<2x8x8xf32> to vector<16x8xf32>
    %201 = vector.extract_strided_slice %152 {offsets = [0, 16], sizes = [16, 8], strides = [1, 1]} : vector<16x32xf32> to vector<16x8xf32>
    %202 = vector.shape_cast %201 : vector<16x8xf32> to vector<2x8x8xf32>
    %203 = vector.extract_strided_slice %161 {offsets = [0, 16], sizes = [16, 8], strides = [1, 1]} : vector<16x32xf32> to vector<16x8xf32>
    %204 = vector.shape_cast %203 : vector<16x8xf32> to vector<2x8x8xf32>
    %205 = vector.extract_strided_slice %162 {offsets = [0, 16], sizes = [16, 8], strides = [1, 1]} : vector<16x32xf32> to vector<16x8xf32>
    %206 = vector.shape_cast %205 : vector<16x8xf32> to vector<2x8x8xf32>
    "tpu.trace_start"() <{level = 10 : i32, message = "bqd,bkd->bqk"}> : () -> ()
    %cst_58 = arith.constant dense<0.000000e+00> : vector<2x8x8xf32>
    %207 = tpu.matmul %202, %204, %cst_58 {dimension_numbers = #tpu.dot_dimension_numbers<[2], [2], [1], [1], [0, 0, 0, 1, 1, 1], [0], [0]>} : vector<2x8x8xf32>, vector<2x8x8xf32>, vector<2x8x8xf32> -> vector<2x8x8xf32>
    "tpu.trace_stop"() : () -> ()
    %cst_59 = arith.constant dense<0xFF800000> : vector<2x8xf32>
    %208 = vector.multi_reduction <maximumf>, %207, %cst_59 [2] : vector<2x8x8xf32> to vector<2x8xf32>
    %209 = vector.shape_cast %208 : vector<2x8xf32> to vector<2x8x1xf32>
    %210 = vector.broadcast %209 : vector<2x8x1xf32> to vector<2x8x8xf32>
    %211 = arith.subf %207, %210 : vector<2x8x8xf32>
    %212 = math.exp %211 : vector<2x8x8xf32>
    %cst_60 = arith.constant dense<0.000000e+00> : vector<2x8xf32>
    %213 = vector.multi_reduction <add>, %212, %cst_60 [2] : vector<2x8x8xf32> to vector<2x8xf32>
    %214 = vector.shape_cast %213 : vector<2x8xf32> to vector<2x8x1xf32>
    %215 = tpu.reciprocal %214 {approx = true} : vector<2x8x1xf32> -> vector<2x8x1xf32>
    %216 = vector.broadcast %215 : vector<2x8x1xf32> to vector<2x8x8xf32>
    %217 = arith.mulf %212, %216 : vector<2x8x8xf32>
    "tpu.trace_start"() <{level = 10 : i32, message = "bqk,bkd->bqd"}> : () -> ()
    %cst_61 = arith.constant dense<0.000000e+00> : vector<2x8x8xf32>
    %218 = tpu.matmul %217, %206, %cst_61 {dimension_numbers = #tpu.dot_dimension_numbers<[2], [1], [1], [2], [0, 0, 0, 1, 1, 2], [0], [0]>} : vector<2x8x8xf32>, vector<2x8x8xf32>, vector<2x8x8xf32> -> vector<2x8x8xf32>
    "tpu.trace_stop"() : () -> ()
    %219 = vector.shape_cast %218 : vector<2x8x8xf32> to vector<16x8xf32>
    %220 = vector.extract_strided_slice %152 {offsets = [0, 24], sizes = [16, 8], strides = [1, 1]} : vector<16x32xf32> to vector<16x8xf32>
    %221 = vector.shape_cast %220 : vector<16x8xf32> to vector<2x8x8xf32>
    %222 = vector.extract_strided_slice %161 {offsets = [0, 24], sizes = [16, 8], strides = [1, 1]} : vector<16x32xf32> to vector<16x8xf32>
    %223 = vector.shape_cast %222 : vector<16x8xf32> to vector<2x8x8xf32>
    %224 = vector.extract_strided_slice %162 {offsets = [0, 24], sizes = [16, 8], strides = [1, 1]} : vector<16x32xf32> to vector<16x8xf32>
    %225 = vector.shape_cast %224 : vector<16x8xf32> to vector<2x8x8xf32>
    "tpu.trace_start"() <{level = 10 : i32, message = "bqd,bkd->bqk"}> : () -> ()
    %cst_62 = arith.constant dense<0.000000e+00> : vector<2x8x8xf32>
    %226 = tpu.matmul %221, %223, %cst_62 {dimension_numbers = #tpu.dot_dimension_numbers<[2], [2], [1], [1], [0, 0, 0, 1, 1, 1], [0], [0]>} : vector<2x8x8xf32>, vector<2x8x8xf32>, vector<2x8x8xf32> -> vector<2x8x8xf32>
    "tpu.trace_stop"() : () -> ()
    %cst_63 = arith.constant dense<0xFF800000> : vector<2x8xf32>
    %227 = vector.multi_reduction <maximumf>, %226, %cst_63 [2] : vector<2x8x8xf32> to vector<2x8xf32>
    %228 = vector.shape_cast %227 : vector<2x8xf32> to vector<2x8x1xf32>
    %229 = vector.broadcast %228 : vector<2x8x1xf32> to vector<2x8x8xf32>
    %230 = arith.subf %226, %229 : vector<2x8x8xf32>
    %231 = math.exp %230 : vector<2x8x8xf32>
    %cst_64 = arith.constant dense<0.000000e+00> : vector<2x8xf32>
    %232 = vector.multi_reduction <add>, %231, %cst_64 [2] : vector<2x8x8xf32> to vector<2x8xf32>
    %233 = vector.shape_cast %232 : vector<2x8xf32> to vector<2x8x1xf32>
    %234 = tpu.reciprocal %233 {approx = true} : vector<2x8x1xf32> -> vector<2x8x1xf32>
    %235 = vector.broadcast %234 : vector<2x8x1xf32> to vector<2x8x8xf32>
    %236 = arith.mulf %231, %235 : vector<2x8x8xf32>
    "tpu.trace_start"() <{level = 10 : i32, message = "bqk,bkd->bqd"}> : () -> ()
    %cst_65 = arith.constant dense<0.000000e+00> : vector<2x8x8xf32>
    %237 = tpu.matmul %236, %225, %cst_65 {dimension_numbers = #tpu.dot_dimension_numbers<[2], [1], [1], [2], [0, 0, 0, 1, 1, 2], [0], [0]>} : vector<2x8x8xf32>, vector<2x8x8xf32>, vector<2x8x8xf32> -> vector<2x8x8xf32>
    "tpu.trace_stop"() : () -> ()
    %238 = vector.shape_cast %237 : vector<2x8x8xf32> to vector<16x8xf32>
    %239 = tpu.concatenate %181, %200, %219, %238 in 1 : vector<16x8xf32>, vector<16x8xf32>, vector<16x8xf32>, vector<16x8xf32> -> vector<16x32xf32>
    %240 = arith.truncf %239 : vector<16x32xf32> to vector<16x32xbf16>
    %c0_66 = arith.constant 0 : index
    %c0_67 = arith.constant 0 : index
    %c0_68 = arith.constant 0 : index
    %241 = vector.load %arg8[%c0_66, %c0_67, %c0_68] : memref<2x32x32xbf16, #tpu.memory_space<vmem>>, vector<1x32x32xbf16>
    %242 = vector.shape_cast %241 : vector<1x32x32xbf16> to vector<32x32xbf16>
    %cst_69 = arith.constant dense<0.000000e+00> : vector<16x32xf32>
    %243 = tpu.matmul %240, %242, %cst_69 {dimension_numbers = #tpu.dot_dimension_numbers<[1], [0], [0], [1], [0, 0, 1, 1], [], []>} : vector<16x32xbf16>, vector<32x32xbf16>, vector<16x32xf32> -> vector<16x32xf32>
    %244 = vector.broadcast %12 : vector<1x32xf32> to vector<16x32xf32>
    %245 = arith.addf %243, %244 : vector<16x32xf32>
    %246 = arith.addf %146, %245 : vector<16x32xf32>
    %cst_70 = arith.constant dense<0.000000e+00> : vector<16xf32>
    %247 = vector.multi_reduction <add>, %246, %cst_70 [1] : vector<16x32xf32> to vector<16xf32>
    %248 = vector.shape_cast %247 : vector<16xf32> to vector<16x1xf32>
    %cst_71 = arith.constant 3.200000e+01 : f32
    %249 = vector.broadcast %cst_71 : f32 to vector<16x1xf32>
    %250 = arith.divf %248, %249 : vector<16x1xf32>
    %251 = vector.broadcast %250 : vector<16x1xf32> to vector<16x32xf32>
    %252 = arith.subf %246, %251 : vector<16x32xf32>
    %253 = arith.mulf %252, %252 : vector<16x32xf32>
    %cst_72 = arith.constant dense<0.000000e+00> : vector<16xf32>
    %254 = vector.multi_reduction <add>, %253, %cst_72 [1] : vector<16x32xf32> to vector<16xf32>
    %255 = vector.shape_cast %254 : vector<16xf32> to vector<16x1xf32>
    %cst_73 = arith.constant 3.200000e+01 : f32
    %256 = vector.broadcast %cst_73 : f32 to vector<16x1xf32>
    %257 = arith.divf %255, %256 : vector<16x1xf32>
    %cst_74 = arith.constant 9.99999974E-6 : f32
    %258 = vector.broadcast %cst_74 : f32 to vector<16x1xf32>
    %259 = arith.addf %257, %258 : vector<16x1xf32>
    %260 = math.rsqrt %259 : vector<16x1xf32>
    %261 = vector.broadcast %260 : vector<16x1xf32> to vector<16x32xf32>
    %262 = arith.mulf %252, %261 : vector<16x32xf32>
    %263 = vector.broadcast %16 : vector<1x32xf32> to vector<16x32xf32>
    %264 = arith.mulf %262, %263 : vector<16x32xf32>
    %265 = vector.broadcast %17 : vector<1x32xf32> to vector<16x32xf32>
    %266 = arith.addf %264, %265 : vector<16x32xf32>
    %267 = arith.truncf %266 : vector<16x32xf32> to vector<16x32xbf16>
    %c0_75 = arith.constant 0 : index
    %c0_76 = arith.constant 0 : index
    %c0_77 = arith.constant 0 : index
    %268 = vector.load %arg9[%c0_75, %c0_76, %c0_77] : memref<2x32x2048xbf16, #tpu.memory_space<vmem>>, vector<1x32x2048xbf16>
    %269 = vector.shape_cast %268 : vector<1x32x2048xbf16> to vector<32x2048xbf16>
    %cst_78 = arith.constant dense<0.000000e+00> : vector<16x2048xf32>
    %270 = tpu.matmul %267, %269, %cst_78 {dimension_numbers = #tpu.dot_dimension_numbers<[1], [0], [0], [1], [0, 0, 1, 1], [], []>} : vector<16x32xbf16>, vector<32x2048xbf16>, vector<16x2048xf32> -> vector<16x2048xf32>
    %c0_79 = arith.constant 0 : index
    %c0_80 = arith.constant 0 : index
    %c0_81 = arith.constant 0 : index
    %271 = vector.load %arg10[%c0_79, %c0_80, %c0_81] : memref<2x1x2048xf32, #tpu.memory_space<vmem>>, vector<1x1x2048xf32>
    %272 = vector.shape_cast %271 : vector<1x1x2048xf32> to vector<1x2048xf32>
    %273 = vector.broadcast %272 : vector<1x2048xf32> to vector<16x2048xf32>
    %274 = arith.addf %270, %273 : vector<16x2048xf32>
    %cst_82 = arith.constant 0.000000e+00 : f32
    %275 = vector.broadcast %cst_82 : f32 to vector<16x2048xf32>
    %276 = arith.maximumf %274, %275 : vector<16x2048xf32>
    %277 = arith.truncf %276 : vector<16x2048xf32> to vector<16x2048xbf16>
    %c0_83 = arith.constant 0 : index
    %c0_84 = arith.constant 0 : index
    %c0_85 = arith.constant 0 : index
    %278 = vector.load %arg11[%c0_83, %c0_84, %c0_85] : memref<2x2048x32xbf16, #tpu.memory_space<vmem>>, vector<1x2048x32xbf16>
    %279 = vector.shape_cast %278 : vector<1x2048x32xbf16> to vector<2048x32xbf16>
    %cst_86 = arith.constant dense<0.000000e+00> : vector<16x32xf32>
    %280 = tpu.matmul %277, %279, %cst_86 {dimension_numbers = #tpu.dot_dimension_numbers<[1], [0], [0], [1], [0, 0, 1, 1], [], []>} : vector<16x2048xbf16>, vector<2048x32xbf16>, vector<16x32xf32> -> vector<16x32xf32>
    %281 = vector.broadcast %13 : vector<1x32xf32> to vector<16x32xf32>
    %282 = arith.addf %280, %281 : vector<16x32xf32>
    %283 = arith.addf %266, %282 : vector<16x32xf32>
    %cst_87 = arith.constant dense<0.000000e+00> : vector<16xf32>
    %284 = vector.multi_reduction <add>, %283, %cst_87 [1] : vector<16x32xf32> to vector<16xf32>
    %285 = vector.shape_cast %284 : vector<16xf32> to vector<16x1xf32>
    %cst_88 = arith.constant 3.200000e+01 : f32
    %286 = vector.broadcast %cst_88 : f32 to vector<16x1xf32>
    %287 = arith.divf %285, %286 : vector<16x1xf32>
    %288 = vector.broadcast %287 : vector<16x1xf32> to vector<16x32xf32>
    %289 = arith.subf %283, %288 : vector<16x32xf32>
    %290 = arith.mulf %289, %289 : vector<16x32xf32>
    %cst_89 = arith.constant dense<0.000000e+00> : vector<16xf32>
    %291 = vector.multi_reduction <add>, %290, %cst_89 [1] : vector<16x32xf32> to vector<16xf32>
    %292 = vector.shape_cast %291 : vector<16xf32> to vector<16x1xf32>
    %cst_90 = arith.constant 3.200000e+01 : f32
    %293 = vector.broadcast %cst_90 : f32 to vector<16x1xf32>
    %294 = arith.divf %292, %293 : vector<16x1xf32>
    %cst_91 = arith.constant 9.99999974E-6 : f32
    %295 = vector.broadcast %cst_91 : f32 to vector<16x1xf32>
    %296 = arith.addf %294, %295 : vector<16x1xf32>
    %297 = math.rsqrt %296 : vector<16x1xf32>
    %298 = vector.broadcast %297 : vector<16x1xf32> to vector<16x32xf32>
    %299 = arith.mulf %289, %298 : vector<16x32xf32>
    %300 = vector.broadcast %18 : vector<1x32xf32> to vector<16x32xf32>
    %301 = arith.mulf %299, %300 : vector<16x32xf32>
    %302 = vector.broadcast %19 : vector<1x32xf32> to vector<16x32xf32>
    %303 = arith.addf %301, %302 : vector<16x32xf32>
    %c1 = arith.constant 1 : index
    %c0_92 = arith.constant 0 : index
    %c0_93 = arith.constant 0 : index
    %304 = vector.load %arg12[%c1, %c0_92, %c0_93] : memref<2x10x32xf32, #tpu.memory_space<vmem>>, vector<1x10x32xf32>
    %305 = vector.shape_cast %304 : vector<1x10x32xf32> to vector<10x32xf32>
    %306 = vector.extract_strided_slice %305 {offsets = [0, 0], sizes = [1, 32], strides = [1, 1]} : vector<10x32xf32> to vector<1x32xf32>
    %307 = vector.extract_strided_slice %305 {offsets = [1, 0], sizes = [1, 32], strides = [1, 1]} : vector<10x32xf32> to vector<1x32xf32>
    %308 = vector.extract_strided_slice %305 {offsets = [2, 0], sizes = [1, 32], strides = [1, 1]} : vector<10x32xf32> to vector<1x32xf32>
    %309 = vector.extract_strided_slice %305 {offsets = [3, 0], sizes = [1, 32], strides = [1, 1]} : vector<10x32xf32> to vector<1x32xf32>
    %310 = vector.extract_strided_slice %305 {offsets = [4, 0], sizes = [1, 32], strides = [1, 1]} : vector<10x32xf32> to vector<1x32xf32>
    %311 = vector.extract_strided_slice %305 {offsets = [5, 0], sizes = [1, 32], strides = [1, 1]} : vector<10x32xf32> to vector<1x32xf32>
    %312 = vector.extract_strided_slice %305 {offsets = [6, 0], sizes = [1, 32], strides = [1, 1]} : vector<10x32xf32> to vector<1x32xf32>
    %313 = vector.extract_strided_slice %305 {offsets = [7, 0], sizes = [1, 32], strides = [1, 1]} : vector<10x32xf32> to vector<1x32xf32>
    %314 = vector.extract_strided_slice %305 {offsets = [8, 0], sizes = [1, 32], strides = [1, 1]} : vector<10x32xf32> to vector<1x32xf32>
    %315 = vector.extract_strided_slice %305 {offsets = [9, 0], sizes = [1, 32], strides = [1, 1]} : vector<10x32xf32> to vector<1x32xf32>
    %316 = arith.truncf %303 : vector<16x32xf32> to vector<16x32xbf16>
    %c1_94 = arith.constant 1 : index
    %c0_95 = arith.constant 0 : index
    %c0_96 = arith.constant 0 : index
    %317 = vector.load %arg2[%c1_94, %c0_95, %c0_96] : memref<2x32x96xbf16, #tpu.memory_space<vmem>>, vector<1x32x96xbf16>
    %318 = vector.shape_cast %317 : vector<1x32x96xbf16> to vector<32x96xbf16>
    %cst_97 = arith.constant dense<0.000000e+00> : vector<16x96xf32>
    %319 = tpu.matmul %316, %318, %cst_97 {dimension_numbers = #tpu.dot_dimension_numbers<[1], [0], [0], [1], [0, 0, 1, 1], [], []>} : vector<16x32xbf16>, vector<32x96xbf16>, vector<16x96xf32> -> vector<16x96xf32>
    %c1_98 = arith.constant 1 : index
    %c0_99 = arith.constant 0 : index
    %c0_100 = arith.constant 0 : index
    %320 = vector.load %arg3[%c1_98, %c0_99, %c0_100] : memref<2x1x96xf32, #tpu.memory_space<vmem>>, vector<1x1x96xf32>
    %321 = vector.shape_cast %320 : vector<1x1x96xf32> to vector<1x96xf32>
    %322 = vector.broadcast %321 : vector<1x96xf32> to vector<16x96xf32>
    %323 = arith.addf %319, %322 : vector<16x96xf32>
    %324 = vector.extract_strided_slice %323 {offsets = [0, 0], sizes = [16, 32], strides = [1, 1]} : vector<16x96xf32> to vector<16x32xf32>
    %325 = vector.extract_strided_slice %323 {offsets = [0, 32], sizes = [16, 32], strides = [1, 1]} : vector<16x96xf32> to vector<16x32xf32>
    %326 = vector.extract_strided_slice %323 {offsets = [0, 64], sizes = [16, 32], strides = [1, 1]} : vector<16x96xf32> to vector<16x32xf32>
    %327 = vector.extract_strided_slice %324 {offsets = [0, 0], sizes = [16, 8], strides = [1, 1]} : vector<16x32xf32> to vector<16x8xf32>
    %328 = vector.shape_cast %327 : vector<16x8xf32> to vector<2x8x8xf32>
    %329 = vector.extract_strided_slice %325 {offsets = [0, 0], sizes = [16, 8], strides = [1, 1]} : vector<16x32xf32> to vector<16x8xf32>
    %330 = vector.shape_cast %329 : vector<16x8xf32> to vector<2x8x8xf32>
    %331 = vector.extract_strided_slice %326 {offsets = [0, 0], sizes = [16, 8], strides = [1, 1]} : vector<16x32xf32> to vector<16x8xf32>
    %332 = vector.shape_cast %331 : vector<16x8xf32> to vector<2x8x8xf32>
    "tpu.trace_start"() <{level = 10 : i32, message = "bqd,bkd->bqk"}> : () -> ()
    %cst_101 = arith.constant dense<0.000000e+00> : vector<2x8x8xf32>
    %333 = tpu.matmul %328, %330, %cst_101 {dimension_numbers = #tpu.dot_dimension_numbers<[2], [2], [1], [1], [0, 0, 0, 1, 1, 1], [0], [0]>} : vector<2x8x8xf32>, vector<2x8x8xf32>, vector<2x8x8xf32> -> vector<2x8x8xf32>
    "tpu.trace_stop"() : () -> ()
    %334 = vector.shape_cast %7 : vector<8x8xf32> to vector<1x8x8xf32>
    %335 = vector.broadcast %334 : vector<1x8x8xf32> to vector<2x8x8xf32>
    %336 = arith.addf %333, %335 : vector<2x8x8xf32>
    %cst_102 = arith.constant dense<0xFF800000> : vector<2x8xf32>
    %337 = vector.multi_reduction <maximumf>, %336, %cst_102 [2] : vector<2x8x8xf32> to vector<2x8xf32>
    %338 = vector.shape_cast %337 : vector<2x8xf32> to vector<2x8x1xf32>
    %339 = vector.broadcast %338 : vector<2x8x1xf32> to vector<2x8x8xf32>
    %340 = arith.subf %336, %339 : vector<2x8x8xf32>
    %341 = math.exp %340 : vector<2x8x8xf32>
    %cst_103 = arith.constant dense<0.000000e+00> : vector<2x8xf32>
    %342 = vector.multi_reduction <add>, %341, %cst_103 [2] : vector<2x8x8xf32> to vector<2x8xf32>
    %343 = vector.shape_cast %342 : vector<2x8xf32> to vector<2x8x1xf32>
    %344 = tpu.reciprocal %343 {approx = true} : vector<2x8x1xf32> -> vector<2x8x1xf32>
    %345 = vector.broadcast %344 : vector<2x8x1xf32> to vector<2x8x8xf32>
    %346 = arith.mulf %341, %345 : vector<2x8x8xf32>
    "tpu.trace_start"() <{level = 10 : i32, message = "bqk,bkd->bqd"}> : () -> ()
    %cst_104 = arith.constant dense<0.000000e+00> : vector<2x8x8xf32>
    %347 = tpu.matmul %346, %332, %cst_104 {dimension_numbers = #tpu.dot_dimension_numbers<[2], [1], [1], [2], [0, 0, 0, 1, 1, 2], [0], [0]>} : vector<2x8x8xf32>, vector<2x8x8xf32>, vector<2x8x8xf32> -> vector<2x8x8xf32>
    "tpu.trace_stop"() : () -> ()
    %348 = vector.shape_cast %347 : vector<2x8x8xf32> to vector<16x8xf32>
    %349 = vector.extract_strided_slice %324 {offsets = [0, 8], sizes = [16, 8], strides = [1, 1]} : vector<16x32xf32> to vector<16x8xf32>
    %350 = vector.shape_cast %349 : vector<16x8xf32> to vector<2x8x8xf32>
    %351 = vector.extract_strided_slice %325 {offsets = [0, 8], sizes = [16, 8], strides = [1, 1]} : vector<16x32xf32> to vector<16x8xf32>
    %352 = vector.shape_cast %351 : vector<16x8xf32> to vector<2x8x8xf32>
    %353 = vector.extract_strided_slice %326 {offsets = [0, 8], sizes = [16, 8], strides = [1, 1]} : vector<16x32xf32> to vector<16x8xf32>
    %354 = vector.shape_cast %353 : vector<16x8xf32> to vector<2x8x8xf32>
    "tpu.trace_start"() <{level = 10 : i32, message = "bqd,bkd->bqk"}> : () -> ()
    %cst_105 = arith.constant dense<0.000000e+00> : vector<2x8x8xf32>
    %355 = tpu.matmul %350, %352, %cst_105 {dimension_numbers = #tpu.dot_dimension_numbers<[2], [2], [1], [1], [0, 0, 0, 1, 1, 1], [0], [0]>} : vector<2x8x8xf32>, vector<2x8x8xf32>, vector<2x8x8xf32> -> vector<2x8x8xf32>
    "tpu.trace_stop"() : () -> ()
    %356 = vector.shape_cast %7 : vector<8x8xf32> to vector<1x8x8xf32>
    %357 = vector.broadcast %356 : vector<1x8x8xf32> to vector<2x8x8xf32>
    %358 = arith.addf %355, %357 : vector<2x8x8xf32>
    %cst_106 = arith.constant dense<0xFF800000> : vector<2x8xf32>
    %359 = vector.multi_reduction <maximumf>, %358, %cst_106 [2] : vector<2x8x8xf32> to vector<2x8xf32>
    %360 = vector.shape_cast %359 : vector<2x8xf32> to vector<2x8x1xf32>
    %361 = vector.broadcast %360 : vector<2x8x1xf32> to vector<2x8x8xf32>
    %362 = arith.subf %358, %361 : vector<2x8x8xf32>
    %363 = math.exp %362 : vector<2x8x8xf32>
    %cst_107 = arith.constant dense<0.000000e+00> : vector<2x8xf32>
    %364 = vector.multi_reduction <add>, %363, %cst_107 [2] : vector<2x8x8xf32> to vector<2x8xf32>
    %365 = vector.shape_cast %364 : vector<2x8xf32> to vector<2x8x1xf32>
    %366 = tpu.reciprocal %365 {approx = true} : vector<2x8x1xf32> -> vector<2x8x1xf32>
    %367 = vector.broadcast %366 : vector<2x8x1xf32> to vector<2x8x8xf32>
    %368 = arith.mulf %363, %367 : vector<2x8x8xf32>
    "tpu.trace_start"() <{level = 10 : i32, message = "bqk,bkd->bqd"}> : () -> ()
    %cst_108 = arith.constant dense<0.000000e+00> : vector<2x8x8xf32>
    %369 = tpu.matmul %368, %354, %cst_108 {dimension_numbers = #tpu.dot_dimension_numbers<[2], [1], [1], [2], [0, 0, 0, 1, 1, 2], [0], [0]>} : vector<2x8x8xf32>, vector<2x8x8xf32>, vector<2x8x8xf32> -> vector<2x8x8xf32>
    "tpu.trace_stop"() : () -> ()
    %370 = vector.shape_cast %369 : vector<2x8x8xf32> to vector<16x8xf32>
    %371 = vector.extract_strided_slice %324 {offsets = [0, 16], sizes = [16, 8], strides = [1, 1]} : vector<16x32xf32> to vector<16x8xf32>
    %372 = vector.shape_cast %371 : vector<16x8xf32> to vector<2x8x8xf32>
    %373 = vector.extract_strided_slice %325 {offsets = [0, 16], sizes = [16, 8], strides = [1, 1]} : vector<16x32xf32> to vector<16x8xf32>
    %374 = vector.shape_cast %373 : vector<16x8xf32> to vector<2x8x8xf32>
    %375 = vector.extract_strided_slice %326 {offsets = [0, 16], sizes = [16, 8], strides = [1, 1]} : vector<16x32xf32> to vector<16x8xf32>
    %376 = vector.shape_cast %375 : vector<16x8xf32> to vector<2x8x8xf32>
    "tpu.trace_start"() <{level = 10 : i32, message = "bqd,bkd->bqk"}> : () -> ()
    %cst_109 = arith.constant dense<0.000000e+00> : vector<2x8x8xf32>
    %377 = tpu.matmul %372, %374, %cst_109 {dimension_numbers = #tpu.dot_dimension_numbers<[2], [2], [1], [1], [0, 0, 0, 1, 1, 1], [0], [0]>} : vector<2x8x8xf32>, vector<2x8x8xf32>, vector<2x8x8xf32> -> vector<2x8x8xf32>
    "tpu.trace_stop"() : () -> ()
    %378 = vector.shape_cast %7 : vector<8x8xf32> to vector<1x8x8xf32>
    %379 = vector.broadcast %378 : vector<1x8x8xf32> to vector<2x8x8xf32>
    %380 = arith.addf %377, %379 : vector<2x8x8xf32>
    %cst_110 = arith.constant dense<0xFF800000> : vector<2x8xf32>
    %381 = vector.multi_reduction <maximumf>, %380, %cst_110 [2] : vector<2x8x8xf32> to vector<2x8xf32>
    %382 = vector.shape_cast %381 : vector<2x8xf32> to vector<2x8x1xf32>
    %383 = vector.broadcast %382 : vector<2x8x1xf32> to vector<2x8x8xf32>
    %384 = arith.subf %380, %383 : vector<2x8x8xf32>
    %385 = math.exp %384 : vector<2x8x8xf32>
    %cst_111 = arith.constant dense<0.000000e+00> : vector<2x8xf32>
    %386 = vector.multi_reduction <add>, %385, %cst_111 [2] : vector<2x8x8xf32> to vector<2x8xf32>
    %387 = vector.shape_cast %386 : vector<2x8xf32> to vector<2x8x1xf32>
    %388 = tpu.reciprocal %387 {approx = true} : vector<2x8x1xf32> -> vector<2x8x1xf32>
    %389 = vector.broadcast %388 : vector<2x8x1xf32> to vector<2x8x8xf32>
    %390 = arith.mulf %385, %389 : vector<2x8x8xf32>
    "tpu.trace_start"() <{level = 10 : i32, message = "bqk,bkd->bqd"}> : () -> ()
    %cst_112 = arith.constant dense<0.000000e+00> : vector<2x8x8xf32>
    %391 = tpu.matmul %390, %376, %cst_112 {dimension_numbers = #tpu.dot_dimension_numbers<[2], [1], [1], [2], [0, 0, 0, 1, 1, 2], [0], [0]>} : vector<2x8x8xf32>, vector<2x8x8xf32>, vector<2x8x8xf32> -> vector<2x8x8xf32>
    "tpu.trace_stop"() : () -> ()
    %392 = vector.shape_cast %391 : vector<2x8x8xf32> to vector<16x8xf32>
    %393 = vector.extract_strided_slice %324 {offsets = [0, 24], sizes = [16, 8], strides = [1, 1]} : vector<16x32xf32> to vector<16x8xf32>
    %394 = vector.shape_cast %393 : vector<16x8xf32> to vector<2x8x8xf32>
    %395 = vector.extract_strided_slice %325 {offsets = [0, 24], sizes = [16, 8], strides = [1, 1]} : vector<16x32xf32> to vector<16x8xf32>
    %396 = vector.shape_cast %395 : vector<16x8xf32> to vector<2x8x8xf32>
    %397 = vector.extract_strided_slice %326 {offsets = [0, 24], sizes = [16, 8], strides = [1, 1]} : vector<16x32xf32> to vector<16x8xf32>
    %398 = vector.shape_cast %397 : vector<16x8xf32> to vector<2x8x8xf32>
    "tpu.trace_start"() <{level = 10 : i32, message = "bqd,bkd->bqk"}> : () -> ()
    %cst_113 = arith.constant dense<0.000000e+00> : vector<2x8x8xf32>
    %399 = tpu.matmul %394, %396, %cst_113 {dimension_numbers = #tpu.dot_dimension_numbers<[2], [2], [1], [1], [0, 0, 0, 1, 1, 1], [0], [0]>} : vector<2x8x8xf32>, vector<2x8x8xf32>, vector<2x8x8xf32> -> vector<2x8x8xf32>
    "tpu.trace_stop"() : () -> ()
    %400 = vector.shape_cast %7 : vector<8x8xf32> to vector<1x8x8xf32>
    %401 = vector.broadcast %400 : vector<1x8x8xf32> to vector<2x8x8xf32>
    %402 = arith.addf %399, %401 : vector<2x8x8xf32>
    %cst_114 = arith.constant dense<0xFF800000> : vector<2x8xf32>
    %403 = vector.multi_reduction <maximumf>, %402, %cst_114 [2] : vector<2x8x8xf32> to vector<2x8xf32>
    %404 = vector.shape_cast %403 : vector<2x8xf32> to vector<2x8x1xf32>
    %405 = vector.broadcast %404 : vector<2x8x1xf32> to vector<2x8x8xf32>
    %406 = arith.subf %402, %405 : vector<2x8x8xf32>
    %407 = math.exp %406 : vector<2x8x8xf32>
    %cst_115 = arith.constant dense<0.000000e+00> : vector<2x8xf32>
    %408 = vector.multi_reduction <add>, %407, %cst_115 [2] : vector<2x8x8xf32> to vector<2x8xf32>
    %409 = vector.shape_cast %408 : vector<2x8xf32> to vector<2x8x1xf32>
    %410 = tpu.reciprocal %409 {approx = true} : vector<2x8x1xf32> -> vector<2x8x1xf32>
    %411 = vector.broadcast %410 : vector<2x8x1xf32> to vector<2x8x8xf32>
    %412 = arith.mulf %407, %411 : vector<2x8x8xf32>
    "tpu.trace_start"() <{level = 10 : i32, message = "bqk,bkd->bqd"}> : () -> ()
    %cst_116 = arith.constant dense<0.000000e+00> : vector<2x8x8xf32>
    %413 = tpu.matmul %412, %398, %cst_116 {dimension_numbers = #tpu.dot_dimension_numbers<[2], [1], [1], [2], [0, 0, 0, 1, 1, 2], [0], [0]>} : vector<2x8x8xf32>, vector<2x8x8xf32>, vector<2x8x8xf32> -> vector<2x8x8xf32>
    "tpu.trace_stop"() : () -> ()
    %414 = vector.shape_cast %413 : vector<2x8x8xf32> to vector<16x8xf32>
    %415 = tpu.concatenate %348, %370, %392, %414 in 1 : vector<16x8xf32>, vector<16x8xf32>, vector<16x8xf32>, vector<16x8xf32> -> vector<16x32xf32>
    %416 = arith.truncf %415 : vector<16x32xf32> to vector<16x32xbf16>
    %c1_117 = arith.constant 1 : index
    %c0_118 = arith.constant 0 : index
    %c0_119 = arith.constant 0 : index
    %417 = vector.load %arg4[%c1_117, %c0_118, %c0_119] : memref<2x32x32xbf16, #tpu.memory_space<vmem>>, vector<1x32x32xbf16>
    %418 = vector.shape_cast %417 : vector<1x32x32xbf16> to vector<32x32xbf16>
    %cst_120 = arith.constant dense<0.000000e+00> : vector<16x32xf32>
    %419 = tpu.matmul %416, %418, %cst_120 {dimension_numbers = #tpu.dot_dimension_numbers<[1], [0], [0], [1], [0, 0, 1, 1], [], []>} : vector<16x32xbf16>, vector<32x32xbf16>, vector<16x32xf32> -> vector<16x32xf32>
    %420 = vector.broadcast %306 : vector<1x32xf32> to vector<16x32xf32>
    %421 = arith.addf %419, %420 : vector<16x32xf32>
    %422 = arith.addf %303, %421 : vector<16x32xf32>
    %cst_121 = arith.constant dense<0.000000e+00> : vector<16xf32>
    %423 = vector.multi_reduction <add>, %422, %cst_121 [1] : vector<16x32xf32> to vector<16xf32>
    %424 = vector.shape_cast %423 : vector<16xf32> to vector<16x1xf32>
    %cst_122 = arith.constant 3.200000e+01 : f32
    %425 = vector.broadcast %cst_122 : f32 to vector<16x1xf32>
    %426 = arith.divf %424, %425 : vector<16x1xf32>
    %427 = vector.broadcast %426 : vector<16x1xf32> to vector<16x32xf32>
    %428 = arith.subf %422, %427 : vector<16x32xf32>
    %429 = arith.mulf %428, %428 : vector<16x32xf32>
    %cst_123 = arith.constant dense<0.000000e+00> : vector<16xf32>
    %430 = vector.multi_reduction <add>, %429, %cst_123 [1] : vector<16x32xf32> to vector<16xf32>
    %431 = vector.shape_cast %430 : vector<16xf32> to vector<16x1xf32>
    %cst_124 = arith.constant 3.200000e+01 : f32
    %432 = vector.broadcast %cst_124 : f32 to vector<16x1xf32>
    %433 = arith.divf %431, %432 : vector<16x1xf32>
    %cst_125 = arith.constant 9.99999974E-6 : f32
    %434 = vector.broadcast %cst_125 : f32 to vector<16x1xf32>
    %435 = arith.addf %433, %434 : vector<16x1xf32>
    %436 = math.rsqrt %435 : vector<16x1xf32>
    %437 = vector.broadcast %436 : vector<16x1xf32> to vector<16x32xf32>
    %438 = arith.mulf %428, %437 : vector<16x32xf32>
    %439 = vector.broadcast %310 : vector<1x32xf32> to vector<16x32xf32>
    %440 = arith.mulf %438, %439 : vector<16x32xf32>
    %441 = vector.broadcast %311 : vector<1x32xf32> to vector<16x32xf32>
    %442 = arith.addf %440, %441 : vector<16x32xf32>
    %443 = arith.truncf %442 : vector<16x32xf32> to vector<16x32xbf16>
    %c1_126 = arith.constant 1 : index
    %c0_127 = arith.constant 0 : index
    %c0_128 = arith.constant 0 : index
    %444 = vector.load %arg5[%c1_126, %c0_127, %c0_128] : memref<2x32x32xbf16, #tpu.memory_space<vmem>>, vector<1x32x32xbf16>
    %445 = vector.shape_cast %444 : vector<1x32x32xbf16> to vector<32x32xbf16>
    %cst_129 = arith.constant dense<0.000000e+00> : vector<16x32xf32>
    %446 = tpu.matmul %443, %445, %cst_129 {dimension_numbers = #tpu.dot_dimension_numbers<[1], [0], [0], [1], [0, 0, 1, 1], [], []>} : vector<16x32xbf16>, vector<32x32xbf16>, vector<16x32xf32> -> vector<16x32xf32>
    %447 = vector.broadcast %307 : vector<1x32xf32> to vector<16x32xf32>
    %448 = arith.addf %446, %447 : vector<16x32xf32>
    %449 = arith.truncf %1 : vector<16x32xf32> to vector<16x32xbf16>
    %c1_130 = arith.constant 1 : index
    %c0_131 = arith.constant 0 : index
    %c0_132 = arith.constant 0 : index
    %450 = vector.load %arg6[%c1_130, %c0_131, %c0_132] : memref<2x32x64xbf16, #tpu.memory_space<vmem>>, vector<1x32x64xbf16>
    %451 = vector.shape_cast %450 : vector<1x32x64xbf16> to vector<32x64xbf16>
    %cst_133 = arith.constant dense<0.000000e+00> : vector<16x64xf32>
    %452 = tpu.matmul %449, %451, %cst_133 {dimension_numbers = #tpu.dot_dimension_numbers<[1], [0], [0], [1], [0, 0, 1, 1], [], []>} : vector<16x32xbf16>, vector<32x64xbf16>, vector<16x64xf32> -> vector<16x64xf32>
    %c1_134 = arith.constant 1 : index
    %c0_135 = arith.constant 0 : index
    %c0_136 = arith.constant 0 : index
    %453 = vector.load %arg7[%c1_134, %c0_135, %c0_136] : memref<2x1x64xf32, #tpu.memory_space<vmem>>, vector<1x1x64xf32>
    %454 = vector.shape_cast %453 : vector<1x1x64xf32> to vector<1x64xf32>
    %455 = vector.broadcast %454 : vector<1x64xf32> to vector<16x64xf32>
    %456 = arith.addf %452, %455 : vector<16x64xf32>
    %457 = vector.extract_strided_slice %456 {offsets = [0, 0], sizes = [16, 32], strides = [1, 1]} : vector<16x64xf32> to vector<16x32xf32>
    %458 = vector.extract_strided_slice %456 {offsets = [0, 32], sizes = [16, 32], strides = [1, 1]} : vector<16x64xf32> to vector<16x32xf32>
    %459 = vector.extract_strided_slice %448 {offsets = [0, 0], sizes = [16, 8], strides = [1, 1]} : vector<16x32xf32> to vector<16x8xf32>
    %460 = vector.shape_cast %459 : vector<16x8xf32> to vector<2x8x8xf32>
    %461 = vector.extract_strided_slice %457 {offsets = [0, 0], sizes = [16, 8], strides = [1, 1]} : vector<16x32xf32> to vector<16x8xf32>
    %462 = vector.shape_cast %461 : vector<16x8xf32> to vector<2x8x8xf32>
    %463 = vector.extract_strided_slice %458 {offsets = [0, 0], sizes = [16, 8], strides = [1, 1]} : vector<16x32xf32> to vector<16x8xf32>
    %464 = vector.shape_cast %463 : vector<16x8xf32> to vector<2x8x8xf32>
    "tpu.trace_start"() <{level = 10 : i32, message = "bqd,bkd->bqk"}> : () -> ()
    %cst_137 = arith.constant dense<0.000000e+00> : vector<2x8x8xf32>
    %465 = tpu.matmul %460, %462, %cst_137 {dimension_numbers = #tpu.dot_dimension_numbers<[2], [2], [1], [1], [0, 0, 0, 1, 1, 1], [0], [0]>} : vector<2x8x8xf32>, vector<2x8x8xf32>, vector<2x8x8xf32> -> vector<2x8x8xf32>
    "tpu.trace_stop"() : () -> ()
    %cst_138 = arith.constant dense<0xFF800000> : vector<2x8xf32>
    %466 = vector.multi_reduction <maximumf>, %465, %cst_138 [2] : vector<2x8x8xf32> to vector<2x8xf32>
    %467 = vector.shape_cast %466 : vector<2x8xf32> to vector<2x8x1xf32>
    %468 = vector.broadcast %467 : vector<2x8x1xf32> to vector<2x8x8xf32>
    %469 = arith.subf %465, %468 : vector<2x8x8xf32>
    %470 = math.exp %469 : vector<2x8x8xf32>
    %cst_139 = arith.constant dense<0.000000e+00> : vector<2x8xf32>
    %471 = vector.multi_reduction <add>, %470, %cst_139 [2] : vector<2x8x8xf32> to vector<2x8xf32>
    %472 = vector.shape_cast %471 : vector<2x8xf32> to vector<2x8x1xf32>
    %473 = tpu.reciprocal %472 {approx = true} : vector<2x8x1xf32> -> vector<2x8x1xf32>
    %474 = vector.broadcast %473 : vector<2x8x1xf32> to vector<2x8x8xf32>
    %475 = arith.mulf %470, %474 : vector<2x8x8xf32>
    "tpu.trace_start"() <{level = 10 : i32, message = "bqk,bkd->bqd"}> : () -> ()
    %cst_140 = arith.constant dense<0.000000e+00> : vector<2x8x8xf32>
    %476 = tpu.matmul %475, %464, %cst_140 {dimension_numbers = #tpu.dot_dimension_numbers<[2], [1], [1], [2], [0, 0, 0, 1, 1, 2], [0], [0]>} : vector<2x8x8xf32>, vector<2x8x8xf32>, vector<2x8x8xf32> -> vector<2x8x8xf32>
    "tpu.trace_stop"() : () -> ()
    %477 = vector.shape_cast %476 : vector<2x8x8xf32> to vector<16x8xf32>
    %478 = vector.extract_strided_slice %448 {offsets = [0, 8], sizes = [16, 8], strides = [1, 1]} : vector<16x32xf32> to vector<16x8xf32>
    %479 = vector.shape_cast %478 : vector<16x8xf32> to vector<2x8x8xf32>
    %480 = vector.extract_strided_slice %457 {offsets = [0, 8], sizes = [16, 8], strides = [1, 1]} : vector<16x32xf32> to vector<16x8xf32>
    %481 = vector.shape_cast %480 : vector<16x8xf32> to vector<2x8x8xf32>
    %482 = vector.extract_strided_slice %458 {offsets = [0, 8], sizes = [16, 8], strides = [1, 1]} : vector<16x32xf32> to vector<16x8xf32>
    %483 = vector.shape_cast %482 : vector<16x8xf32> to vector<2x8x8xf32>
    "tpu.trace_start"() <{level = 10 : i32, message = "bqd,bkd->bqk"}> : () -> ()
    %cst_141 = arith.constant dense<0.000000e+00> : vector<2x8x8xf32>
    %484 = tpu.matmul %479, %481, %cst_141 {dimension_numbers = #tpu.dot_dimension_numbers<[2], [2], [1], [1], [0, 0, 0, 1, 1, 1], [0], [0]>} : vector<2x8x8xf32>, vector<2x8x8xf32>, vector<2x8x8xf32> -> vector<2x8x8xf32>
    "tpu.trace_stop"() : () -> ()
    %cst_142 = arith.constant dense<0xFF800000> : vector<2x8xf32>
    %485 = vector.multi_reduction <maximumf>, %484, %cst_142 [2] : vector<2x8x8xf32> to vector<2x8xf32>
    %486 = vector.shape_cast %485 : vector<2x8xf32> to vector<2x8x1xf32>
    %487 = vector.broadcast %486 : vector<2x8x1xf32> to vector<2x8x8xf32>
    %488 = arith.subf %484, %487 : vector<2x8x8xf32>
    %489 = math.exp %488 : vector<2x8x8xf32>
    %cst_143 = arith.constant dense<0.000000e+00> : vector<2x8xf32>
    %490 = vector.multi_reduction <add>, %489, %cst_143 [2] : vector<2x8x8xf32> to vector<2x8xf32>
    %491 = vector.shape_cast %490 : vector<2x8xf32> to vector<2x8x1xf32>
    %492 = tpu.reciprocal %491 {approx = true} : vector<2x8x1xf32> -> vector<2x8x1xf32>
    %493 = vector.broadcast %492 : vector<2x8x1xf32> to vector<2x8x8xf32>
    %494 = arith.mulf %489, %493 : vector<2x8x8xf32>
    "tpu.trace_start"() <{level = 10 : i32, message = "bqk,bkd->bqd"}> : () -> ()
    %cst_144 = arith.constant dense<0.000000e+00> : vector<2x8x8xf32>
    %495 = tpu.matmul %494, %483, %cst_144 {dimension_numbers = #tpu.dot_dimension_numbers<[2], [1], [1], [2], [0, 0, 0, 1, 1, 2], [0], [0]>} : vector<2x8x8xf32>, vector<2x8x8xf32>, vector<2x8x8xf32> -> vector<2x8x8xf32>
    "tpu.trace_stop"() : () -> ()
    %496 = vector.shape_cast %495 : vector<2x8x8xf32> to vector<16x8xf32>
    %497 = vector.extract_strided_slice %448 {offsets = [0, 16], sizes = [16, 8], strides = [1, 1]} : vector<16x32xf32> to vector<16x8xf32>
    %498 = vector.shape_cast %497 : vector<16x8xf32> to vector<2x8x8xf32>
    %499 = vector.extract_strided_slice %457 {offsets = [0, 16], sizes = [16, 8], strides = [1, 1]} : vector<16x32xf32> to vector<16x8xf32>
    %500 = vector.shape_cast %499 : vector<16x8xf32> to vector<2x8x8xf32>
    %501 = vector.extract_strided_slice %458 {offsets = [0, 16], sizes = [16, 8], strides = [1, 1]} : vector<16x32xf32> to vector<16x8xf32>
    %502 = vector.shape_cast %501 : vector<16x8xf32> to vector<2x8x8xf32>
    "tpu.trace_start"() <{level = 10 : i32, message = "bqd,bkd->bqk"}> : () -> ()
    %cst_145 = arith.constant dense<0.000000e+00> : vector<2x8x8xf32>
    %503 = tpu.matmul %498, %500, %cst_145 {dimension_numbers = #tpu.dot_dimension_numbers<[2], [2], [1], [1], [0, 0, 0, 1, 1, 1], [0], [0]>} : vector<2x8x8xf32>, vector<2x8x8xf32>, vector<2x8x8xf32> -> vector<2x8x8xf32>
    "tpu.trace_stop"() : () -> ()
    %cst_146 = arith.constant dense<0xFF800000> : vector<2x8xf32>
    %504 = vector.multi_reduction <maximumf>, %503, %cst_146 [2] : vector<2x8x8xf32> to vector<2x8xf32>
    %505 = vector.shape_cast %504 : vector<2x8xf32> to vector<2x8x1xf32>
    %506 = vector.broadcast %505 : vector<2x8x1xf32> to vector<2x8x8xf32>
    %507 = arith.subf %503, %506 : vector<2x8x8xf32>
    %508 = math.exp %507 : vector<2x8x8xf32>
    %cst_147 = arith.constant dense<0.000000e+00> : vector<2x8xf32>
    %509 = vector.multi_reduction <add>, %508, %cst_147 [2] : vector<2x8x8xf32> to vector<2x8xf32>
    %510 = vector.shape_cast %509 : vector<2x8xf32> to vector<2x8x1xf32>
    %511 = tpu.reciprocal %510 {approx = true} : vector<2x8x1xf32> -> vector<2x8x1xf32>
    %512 = vector.broadcast %511 : vector<2x8x1xf32> to vector<2x8x8xf32>
    %513 = arith.mulf %508, %512 : vector<2x8x8xf32>
    "tpu.trace_start"() <{level = 10 : i32, message = "bqk,bkd->bqd"}> : () -> ()
    %cst_148 = arith.constant dense<0.000000e+00> : vector<2x8x8xf32>
    %514 = tpu.matmul %513, %502, %cst_148 {dimension_numbers = #tpu.dot_dimension_numbers<[2], [1], [1], [2], [0, 0, 0, 1, 1, 2], [0], [0]>} : vector<2x8x8xf32>, vector<2x8x8xf32>, vector<2x8x8xf32> -> vector<2x8x8xf32>
    "tpu.trace_stop"() : () -> ()
    %515 = vector.shape_cast %514 : vector<2x8x8xf32> to vector<16x8xf32>
    %516 = vector.extract_strided_slice %448 {offsets = [0, 24], sizes = [16, 8], strides = [1, 1]} : vector<16x32xf32> to vector<16x8xf32>
    %517 = vector.shape_cast %516 : vector<16x8xf32> to vector<2x8x8xf32>
    %518 = vector.extract_strided_slice %457 {offsets = [0, 24], sizes = [16, 8], strides = [1, 1]} : vector<16x32xf32> to vector<16x8xf32>
    %519 = vector.shape_cast %518 : vector<16x8xf32> to vector<2x8x8xf32>
    %520 = vector.extract_strided_slice %458 {offsets = [0, 24], sizes = [16, 8], strides = [1, 1]} : vector<16x32xf32> to vector<16x8xf32>
    %521 = vector.shape_cast %520 : vector<16x8xf32> to vector<2x8x8xf32>
    "tpu.trace_start"() <{level = 10 : i32, message = "bqd,bkd->bqk"}> : () -> ()
    %cst_149 = arith.constant dense<0.000000e+00> : vector<2x8x8xf32>
    %522 = tpu.matmul %517, %519, %cst_149 {dimension_numbers = #tpu.dot_dimension_numbers<[2], [2], [1], [1], [0, 0, 0, 1, 1, 1], [0], [0]>} : vector<2x8x8xf32>, vector<2x8x8xf32>, vector<2x8x8xf32> -> vector<2x8x8xf32>
    "tpu.trace_stop"() : () -> ()
    %cst_150 = arith.constant dense<0xFF800000> : vector<2x8xf32>
    %523 = vector.multi_reduction <maximumf>, %522, %cst_150 [2] : vector<2x8x8xf32> to vector<2x8xf32>
    %524 = vector.shape_cast %523 : vector<2x8xf32> to vector<2x8x1xf32>
    %525 = vector.broadcast %524 : vector<2x8x1xf32> to vector<2x8x8xf32>
    %526 = arith.subf %522, %525 : vector<2x8x8xf32>
    %527 = math.exp %526 : vector<2x8x8xf32>
    %cst_151 = arith.constant dense<0.000000e+00> : vector<2x8xf32>
    %528 = vector.multi_reduction <add>, %527, %cst_151 [2] : vector<2x8x8xf32> to vector<2x8xf32>
    %529 = vector.shape_cast %528 : vector<2x8xf32> to vector<2x8x1xf32>
    %530 = tpu.reciprocal %529 {approx = true} : vector<2x8x1xf32> -> vector<2x8x1xf32>
    %531 = vector.broadcast %530 : vector<2x8x1xf32> to vector<2x8x8xf32>
    %532 = arith.mulf %527, %531 : vector<2x8x8xf32>
    "tpu.trace_start"() <{level = 10 : i32, message = "bqk,bkd->bqd"}> : () -> ()
    %cst_152 = arith.constant dense<0.000000e+00> : vector<2x8x8xf32>
    %533 = tpu.matmul %532, %521, %cst_152 {dimension_numbers = #tpu.dot_dimension_numbers<[2], [1], [1], [2], [0, 0, 0, 1, 1, 2], [0], [0]>} : vector<2x8x8xf32>, vector<2x8x8xf32>, vector<2x8x8xf32> -> vector<2x8x8xf32>
    "tpu.trace_stop"() : () -> ()
    %534 = vector.shape_cast %533 : vector<2x8x8xf32> to vector<16x8xf32>
    %535 = tpu.concatenate %477, %496, %515, %534 in 1 : vector<16x8xf32>, vector<16x8xf32>, vector<16x8xf32>, vector<16x8xf32> -> vector<16x32xf32>
    %536 = arith.truncf %535 : vector<16x32xf32> to vector<16x32xbf16>
    %c1_153 = arith.constant 1 : index
    %c0_154 = arith.constant 0 : index
    %c0_155 = arith.constant 0 : index
    %537 = vector.load %arg8[%c1_153, %c0_154, %c0_155] : memref<2x32x32xbf16, #tpu.memory_space<vmem>>, vector<1x32x32xbf16>
    %538 = vector.shape_cast %537 : vector<1x32x32xbf16> to vector<32x32xbf16>
    %cst_156 = arith.constant dense<0.000000e+00> : vector<16x32xf32>
    %539 = tpu.matmul %536, %538, %cst_156 {dimension_numbers = #tpu.dot_dimension_numbers<[1], [0], [0], [1], [0, 0, 1, 1], [], []>} : vector<16x32xbf16>, vector<32x32xbf16>, vector<16x32xf32> -> vector<16x32xf32>
    %540 = vector.broadcast %308 : vector<1x32xf32> to vector<16x32xf32>
    %541 = arith.addf %539, %540 : vector<16x32xf32>
    %542 = arith.addf %442, %541 : vector<16x32xf32>
    %cst_157 = arith.constant dense<0.000000e+00> : vector<16xf32>
    %543 = vector.multi_reduction <add>, %542, %cst_157 [1] : vector<16x32xf32> to vector<16xf32>
    %544 = vector.shape_cast %543 : vector<16xf32> to vector<16x1xf32>
    %cst_158 = arith.constant 3.200000e+01 : f32
    %545 = vector.broadcast %cst_158 : f32 to vector<16x1xf32>
    %546 = arith.divf %544, %545 : vector<16x1xf32>
    %547 = vector.broadcast %546 : vector<16x1xf32> to vector<16x32xf32>
    %548 = arith.subf %542, %547 : vector<16x32xf32>
    %549 = arith.mulf %548, %548 : vector<16x32xf32>
    %cst_159 = arith.constant dense<0.000000e+00> : vector<16xf32>
    %550 = vector.multi_reduction <add>, %549, %cst_159 [1] : vector<16x32xf32> to vector<16xf32>
    %551 = vector.shape_cast %550 : vector<16xf32> to vector<16x1xf32>
    %cst_160 = arith.constant 3.200000e+01 : f32
    %552 = vector.broadcast %cst_160 : f32 to vector<16x1xf32>
    %553 = arith.divf %551, %552 : vector<16x1xf32>
    %cst_161 = arith.constant 9.99999974E-6 : f32
    %554 = vector.broadcast %cst_161 : f32 to vector<16x1xf32>
    %555 = arith.addf %553, %554 : vector<16x1xf32>
    %556 = math.rsqrt %555 : vector<16x1xf32>
    %557 = vector.broadcast %556 : vector<16x1xf32> to vector<16x32xf32>
    %558 = arith.mulf %548, %557 : vector<16x32xf32>
    %559 = vector.broadcast %312 : vector<1x32xf32> to vector<16x32xf32>
    %560 = arith.mulf %558, %559 : vector<16x32xf32>
    %561 = vector.broadcast %313 : vector<1x32xf32> to vector<16x32xf32>
    %562 = arith.addf %560, %561 : vector<16x32xf32>
    %563 = arith.truncf %562 : vector<16x32xf32> to vector<16x32xbf16>
    %c1_162 = arith.constant 1 : index
    %c0_163 = arith.constant 0 : index
    %c0_164 = arith.constant 0 : index
    %564 = vector.load %arg9[%c1_162, %c0_163, %c0_164] : memref<2x32x2048xbf16, #tpu.memory_space<vmem>>, vector<1x32x2048xbf16>
    %565 = vector.shape_cast %564 : vector<1x32x2048xbf16> to vector<32x2048xbf16>
    %cst_165 = arith.constant dense<0.000000e+00> : vector<16x2048xf32>
    %566 = tpu.matmul %563, %565, %cst_165 {dimension_numbers = #tpu.dot_dimension_numbers<[1], [0], [0], [1], [0, 0, 1, 1], [], []>} : vector<16x32xbf16>, vector<32x2048xbf16>, vector<16x2048xf32> -> vector<16x2048xf32>
    %c1_166 = arith.constant 1 : index
    %c0_167 = arith.constant 0 : index
    %c0_168 = arith.constant 0 : index
    %567 = vector.load %arg10[%c1_166, %c0_167, %c0_168] : memref<2x1x2048xf32, #tpu.memory_space<vmem>>, vector<1x1x2048xf32>
    %568 = vector.shape_cast %567 : vector<1x1x2048xf32> to vector<1x2048xf32>
    %569 = vector.broadcast %568 : vector<1x2048xf32> to vector<16x2048xf32>
    %570 = arith.addf %566, %569 : vector<16x2048xf32>
    %cst_169 = arith.constant 0.000000e+00 : f32
    %571 = vector.broadcast %cst_169 : f32 to vector<16x2048xf32>
    %572 = arith.maximumf %570, %571 : vector<16x2048xf32>
    %573 = arith.truncf %572 : vector<16x2048xf32> to vector<16x2048xbf16>
    %c1_170 = arith.constant 1 : index
    %c0_171 = arith.constant 0 : index
    %c0_172 = arith.constant 0 : index
    %574 = vector.load %arg11[%c1_170, %c0_171, %c0_172] : memref<2x2048x32xbf16, #tpu.memory_space<vmem>>, vector<1x2048x32xbf16>
    %575 = vector.shape_cast %574 : vector<1x2048x32xbf16> to vector<2048x32xbf16>
    %cst_173 = arith.constant dense<0.000000e+00> : vector<16x32xf32>
    %576 = tpu.matmul %573, %575, %cst_173 {dimension_numbers = #tpu.dot_dimension_numbers<[1], [0], [0], [1], [0, 0, 1, 1], [], []>} : vector<16x2048xbf16>, vector<2048x32xbf16>, vector<16x32xf32> -> vector<16x32xf32>
    %577 = vector.broadcast %309 : vector<1x32xf32> to vector<16x32xf32>
    %578 = arith.addf %576, %577 : vector<16x32xf32>
    %579 = arith.addf %562, %578 : vector<16x32xf32>
    %cst_174 = arith.constant dense<0.000000e+00> : vector<16xf32>
    %580 = vector.multi_reduction <add>, %579, %cst_174 [1] : vector<16x32xf32> to vector<16xf32>
    %581 = vector.shape_cast %580 : vector<16xf32> to vector<16x1xf32>
    %cst_175 = arith.constant 3.200000e+01 : f32
    %582 = vector.broadcast %cst_175 : f32 to vector<16x1xf32>
    %583 = arith.divf %581, %582 : vector<16x1xf32>
    %584 = vector.broadcast %583 : vector<16x1xf32> to vector<16x32xf32>
    %585 = arith.subf %579, %584 : vector<16x32xf32>
    %586 = arith.mulf %585, %585 : vector<16x32xf32>
    %cst_176 = arith.constant dense<0.000000e+00> : vector<16xf32>
    %587 = vector.multi_reduction <add>, %586, %cst_176 [1] : vector<16x32xf32> to vector<16xf32>
    %588 = vector.shape_cast %587 : vector<16xf32> to vector<16x1xf32>
    %cst_177 = arith.constant 3.200000e+01 : f32
    %589 = vector.broadcast %cst_177 : f32 to vector<16x1xf32>
    %590 = arith.divf %588, %589 : vector<16x1xf32>
    %cst_178 = arith.constant 9.99999974E-6 : f32
    %591 = vector.broadcast %cst_178 : f32 to vector<16x1xf32>
    %592 = arith.addf %590, %591 : vector<16x1xf32>
    %593 = math.rsqrt %592 : vector<16x1xf32>
    %594 = vector.broadcast %593 : vector<16x1xf32> to vector<16x32xf32>
    %595 = arith.mulf %585, %594 : vector<16x32xf32>
    %596 = vector.broadcast %314 : vector<1x32xf32> to vector<16x32xf32>
    %597 = arith.mulf %595, %596 : vector<16x32xf32>
    %598 = vector.broadcast %315 : vector<1x32xf32> to vector<16x32xf32>
    %599 = arith.addf %597, %598 : vector<16x32xf32>
    %c0_179 = arith.constant 0 : index
    %c0_180 = arith.constant 0 : index
    %600 = vector.load %arg13[%c0_179, %c0_180] : memref<2x32xf32, #tpu.memory_space<vmem>>, vector<2x32xf32>
    %601 = vector.extract_strided_slice %600 {offsets = [0, 0], sizes = [1, 32], strides = [1, 1]} : vector<2x32xf32> to vector<1x32xf32>
    %602 = vector.extract_strided_slice %600 {offsets = [1, 0], sizes = [1, 32], strides = [1, 1]} : vector<2x32xf32> to vector<1x32xf32>
    %cst_181 = arith.constant dense<0.000000e+00> : vector<16xf32>
    %603 = vector.multi_reduction <add>, %599, %cst_181 [1] : vector<16x32xf32> to vector<16xf32>
    %604 = vector.shape_cast %603 : vector<16xf32> to vector<16x1xf32>
    %cst_182 = arith.constant 3.200000e+01 : f32
    %605 = vector.broadcast %cst_182 : f32 to vector<16x1xf32>
    %606 = arith.divf %604, %605 : vector<16x1xf32>
    %607 = vector.broadcast %606 : vector<16x1xf32> to vector<16x32xf32>
    %608 = arith.subf %599, %607 : vector<16x32xf32>
    %609 = arith.mulf %608, %608 : vector<16x32xf32>
    %cst_183 = arith.constant dense<0.000000e+00> : vector<16xf32>
    %610 = vector.multi_reduction <add>, %609, %cst_183 [1] : vector<16x32xf32> to vector<16xf32>
    %611 = vector.shape_cast %610 : vector<16xf32> to vector<16x1xf32>
    %cst_184 = arith.constant 3.200000e+01 : f32
    %612 = vector.broadcast %cst_184 : f32 to vector<16x1xf32>
    %613 = arith.divf %611, %612 : vector<16x1xf32>
    %cst_185 = arith.constant 9.99999974E-6 : f32
    %614 = vector.broadcast %cst_185 : f32 to vector<16x1xf32>
    %615 = arith.addf %613, %614 : vector<16x1xf32>
    %616 = math.rsqrt %615 : vector<16x1xf32>
    %617 = vector.broadcast %616 : vector<16x1xf32> to vector<16x32xf32>
    %618 = arith.mulf %608, %617 : vector<16x32xf32>
    %619 = vector.broadcast %601 : vector<1x32xf32> to vector<16x32xf32>
    %620 = arith.mulf %618, %619 : vector<16x32xf32>
    %621 = vector.broadcast %602 : vector<1x32xf32> to vector<16x32xf32>
    %622 = arith.addf %620, %621 : vector<16x32xf32>
    %c0_186 = arith.constant 0 : index
    %c0_187 = arith.constant 0 : index
    %623 = vector.load %arg14[%c0_186, %c0_187] : memref<32x128xf32, #tpu.memory_space<vmem>>, vector<32x128xf32>
    %cst_188 = arith.constant dense<0.000000e+00> : vector<16x128xf32>
    %624 = tpu.matmul %622, %623, %cst_188 {dimension_numbers = #tpu.dot_dimension_numbers<[1], [0], [0], [1], [0, 0, 1, 1], [], []>} : vector<16x32xf32>, vector<32x128xf32>, vector<16x128xf32> -> vector<16x128xf32>
    %c0_189 = arith.constant 0 : index
    %c0_190 = arith.constant 0 : index
    %625 = vector.load %arg15[%c0_189, %c0_190] : memref<1x128xf32, #tpu.memory_space<vmem>>, vector<1x128xf32>
    %626 = vector.broadcast %625 : vector<1x128xf32> to vector<16x128xf32>
    %627 = arith.addf %624, %626 : vector<16x128xf32>
    %c0_191 = arith.constant 0 : index
    %c0_192 = arith.constant 0 : index
    %628 = vector.load %arg16[%c0_191, %c0_192] : memref<16x128xf32, #tpu.memory_space<vmem>>, vector<16x128xf32>
    tpu.vector_store %arg16[%c0_191, %c0_192], %627 {strides = array<i32>} : memref<16x128xf32, #tpu.memory_space<vmem>>, vector<16x128xf32>,
    return
  }
}

</mosaic_0001>

<llo_original>
// kernel: transformer_forward.2
$region0: #{transformer_forward.2}
  #allocation0 [shape = 'u32[]', space=smem, size = 0x4, offset = 0x4, fixed_abs, tag = 'smem constant byte address 0x4 - core index']
  #allocation1 [shape = 'u32[72,128]{1,0:T(1,128)}', space=vmem, size = 0x9000, scoped, tag = 'internal scratch']
  %s0 = inlined_call_operand.vmem [shape: f32[16,32], index: 0, kind: input, shape index: {}]
  %s1 = inlined_call_operand.vmem [shape: bf16[2,32,96], index: 1, kind: input, shape index: {}]
  %s2 = inlined_call_operand.vmem [shape: f32[2,1,96], index: 2, kind: input, shape index: {}]
  %s3 = inlined_call_operand.vmem [shape: bf16[2,32,32], index: 3, kind: input, shape index: {}]
  %s4 = inlined_call_operand.vmem [shape: bf16[2,32,2048], index: 4, kind: input, shape index: {}]
  %s5 = inlined_call_operand.vmem [shape: f32[2,1,2048], index: 5, kind: input, shape index: {}]
  %s6 = inlined_call_operand.vmem [shape: bf16[2,2048,32], index: 6, kind: input, shape index: {}]
  %s7 = inlined_call_operand.vmem [shape: f32[2,6,32], index: 7, kind: input, shape index: {}]
  %s8 = inlined_call_operand.vmem [shape: f32[2,32], index: 8, kind: input, shape index: {}]
  %s9 = inlined_call_operand.vmem [shape: f32[16,32], index: 9, kind: output, shape index: {}]
  %s10 = sld [smem:[#allocation0]]
  $region46: #{transformer_forward.2} parent=0
    _
  %s12 = ssub.s32 1, %s10
  %s13 = scalar_select 0, %s12, %s10
  // Predicated region
  $region2: #{transformer_forward.2} parent=0 // pred_check
    _
  $region3: #{transformer_forward.2} parent=0 // pred_check_branch
    %15 = sbr.rel (0) target = $region5
  $region4: #{transformer_forward.2} parent=0 // pred_region
    _
  $region5: #{transformer_forward.2} parent=0 // pred_fallthru
    _
  // Predicated region
  $region6: #{transformer_forward.2} parent=0 // pred_check
    _
  $region7: #{transformer_forward.2} parent=0 // pred_check_branch
    %17 = sbr.rel (0) target = $region9
  $region8: #{transformer_forward.2} parent=0 // pred_region
    _
  $region9: #{transformer_forward.2} parent=0 // pred_fallthru
    _
  // Predicated region
  $region10: #{transformer_forward.2} parent=0 // pred_check
    _
  $region11: #{transformer_forward.2} parent=0 // pred_check_branch
    %19 = sbr.rel (0) target = $region13
  $region12: #{transformer_forward.2} parent=0 // pred_region
    _
  $region13: #{transformer_forward.2} parent=0 // pred_fallthru
    _
  // Predicated region
  $region14: #{transformer_forward.2} parent=0 // pred_check
    _
  $region15: #{transformer_forward.2} parent=0 // pred_check_branch
    %21 = sbr.rel (0) target = $region17
  $region16: #{transformer_forward.2} parent=0 // pred_region
    _
  $region17: #{transformer_forward.2} parent=0 // pred_fallthru
    _
  // Predicated region
  $region18: #{transformer_forward.2} parent=0 // pred_check
    _
  $region19: #{transformer_forward.2} parent=0 // pred_check_branch
    %23 = sbr.rel (0) target = $region21
  $region20: #{transformer_forward.2} parent=0 // pred_region
    _
  $region21: #{transformer_forward.2} parent=0 // pred_fallthru
    _
  // Predicated region
  $region22: #{transformer_forward.2} parent=0 // pred_check
    _
  $region23: #{transformer_forward.2} parent=0 // pred_check_branch
    %25 = sbr.rel (0) target = $region25
  $region24: #{transformer_forward.2} parent=0 // pred_region
    _
  $region25: #{transformer_forward.2} parent=0 // pred_fallthru
    _
  // Predicated region
  $region26: #{transformer_forward.2} parent=0 // pred_check
    _
  $region27: #{transformer_forward.2} parent=0 // pred_check_branch
    %27 = sbr.rel (0) target = $region29
  $region28: #{transformer_forward.2} parent=0 // pred_region
    _
  $region29: #{transformer_forward.2} parent=0 // pred_fallthru
    _
  // Predicated region
  $region30: #{transformer_forward.2} parent=0 // pred_check
    _
  $region31: #{transformer_forward.2} parent=0 // pred_check_branch
    %29 = sbr.rel (0) target = $region33
  $region32: #{transformer_forward.2} parent=0 // pred_region
    _
  $region33: #{transformer_forward.2} parent=0 // pred_fallthru
    _
  // Predicated region
  $region34: #{transformer_forward.2} parent=0 // pred_check
    _
  $region35: #{transformer_forward.2} parent=0 // pred_check_branch
    %31 = sbr.rel (0) target = $region37
  $region36: #{transformer_forward.2} parent=0 // pred_region
    _
  $region37: #{transformer_forward.2} parent=0 // pred_fallthru
    _
  %v33 = vld [vmem:[%s0] sm:$0xff]
  %v34 = vld [vmem:[%s0 + $0x8] sm:$0xff]
  %v35 = vld [vmem:[%s7] sm:$0x3f]
  %v36 = vpack.c.bf16 %v34, %v33
  %v37 = vld [vmem:[%s1] sm:$0xf]
  %v38 = vld [vmem:[%s1 + $0x4] sm:$0xf]
  %v39 = vld [vmem:[%s1 + $0x8] sm:$0xf]
  %v40 = vld [vmem:[%s1 + $0xc] sm:$0xf]
  %v41 = vld [vmem:[%s2] sm:$0x1]
  %v43 = vperm.slane %v41, 0
  %v49 = vunpack.c.l.b16 %v37
  %v50 = vunpack.c.l.b16 %v38
  %v51 = vunpack.c.l.b16 %v39
  %v52 = vunpack.c.l.b16 %v40
  %v53 = vpack.c.b16 %v50, %v49
  %v54 = vpack.c.b16 %v52, %v51
  %vm57 = vcmask 261120
  %v59 = vsel %vm57, %v36, 0
  %61 = vmatpush.bf16.msra.mxu0 0
  %62 = vmatpush.bf16.msra.mxu0 0
  %63 = vmatpush.bf16.msra.mxu0 0
  %64 = vmatpush.bf16.msra.mxu0 0
  %65 = vmatpush.bf16.msra.mxu0 0
  %66 = vmatpush.bf16.msra.mxu0 0
  %67 = vmatpush.bf16.msra.mxu0 %v54
  %68 = vmatpush.bf16.msra.mxu0 %v53
  %69 = vmatmul.bf16.gmra.mxu0 %v59
  %v70 = vpop.f32.mrf.mxu0
  %v71 = vadd.f32 %v43, %v70
  %v72 = vpop.f32.mrf.mxu0
  %v73 = vadd.f32 %v43, %v72
  %74 = vdwg.mxu0
  %76 = vrot.lane.b32.xlu0 %v71, 96
  %v77 = vpop.permute.xlu0 %76
  %vm78 = vcmask 64512
  %v79 = vsel %vm78, %v71, 0
  %v81 = vsel %vm78, %v77, 0
  %83 = vmatpush.xpose.msra.mxu0 0.0
  %84 = vmatpush.xpose.msra.mxu0 0.0
  %85 = vmatpush.xpose.msra.mxu0 0.0
  %86 = vmatpush.xpose.msra.mxu0 0.0
  %87 = vmatpush.xpose.msra.mxu0 0.0
  %88 = vmatpush.xpose.msra.mxu0 0.0
  %89 = vmatpush.xpose.msra.mxu0 0.0
  %90 = vmatpush.xpose.msra.mxu0 0.0
  %91 = vmatpush.xpose.msra.mxu0 0.0
  %92 = vmatpush.xpose.msra.mxu0 0.0
  %93 = vmatpush.xpose.msra.mxu0 0.0
  %94 = vmatpush.xpose.msra.mxu0 0.0
  %95 = vmatpush.xpose.msra.mxu0 0.0
  %96 = vmatpush.xpose.msra.mxu0 0.0
  %97 = vmatpush.xpose.msra.mxu0 0.0
  %98 = vmatpush.xpose.msra.mxu0 %v81
  %99 = vmatmul.f32.gmra.mxu0 %v79
  %v100 = vpop.f32.mrf.mxu0
  %v101 = vadd.f32 0.0, %v100
  %102 = vdwg.mxu0
  %104 = vrot.lane.b32.xlu0 %v73, 96
  %v105 = vpop.permute.xlu0 %104
  %v106 = vsel %vm78, %v73, 0
  %v108 = vsel %vm78, %v105, 0
  %110 = vmatpush.xpose.msra.mxu0 0.0
  %111 = vmatpush.xpose.msra.mxu0 0.0
  %112 = vmatpush.xpose.msra.mxu0 0.0
  %113 = vmatpush.xpose.msra.mxu0 0.0
  %114 = vmatpush.xpose.msra.mxu0 0.0
  %115 = vmatpush.xpose.msra.mxu0 0.0
  %116 = vmatpush.xpose.msra.mxu0 0.0
  %117 = vmatpush.xpose.msra.mxu0 0.0
  %118 = vmatpush.xpose.msra.mxu0 0.0
  %119 = vmatpush.xpose.msra.mxu0 0.0
  %120 = vmatpush.xpose.msra.mxu0 0.0
  %121 = vmatpush.xpose.msra.mxu0 0.0
  %122 = vmatpush.xpose.msra.mxu0 0.0
  %123 = vmatpush.xpose.msra.mxu0 0.0
  %124 = vmatpush.xpose.msra.mxu0 0.0
  %125 = vmatpush.xpose.msra.mxu0 %v108
  %126 = vmatmul.f32.gmra.mxu0 %v106
  %v127 = vpop.f32.mrf.mxu0
  %v128 = vadd.f32 0.0, %v127
  %129 = vdwg.mxu0
  %v130 = vsel %vm78, %v101, -inf
  %131 = vmax.xlane.f32.xlu0 %v130
  %v132 = vpop.xlane.xlu0 %131
  %v133 = vsel %vm78, %v128, -inf
  %134 = vmax.xlane.f32.xlu0 %v133
  %v135 = vpop.xlane.xlu0 %134
  %v136 = vsub.f32 %v101, %v132
  %v137 = vsub.f32 %v128, %v135
  %v138 = vmul.f32 %v136, 1.442695
  %v139 = vpow.pop %v138
  %v140 = vmul.f32 %v137, 1.442695
  %v141 = vpow.pop %v140
  %v142 = vsel %vm78, %v139, 0.0
  %143 = vadd.xlane.f32.xlu0 %v142
  %v144 = vpop.xlane.xlu0 %143
  %v145 = vsel %vm78, %v141, 0.0
  %146 = vadd.xlane.f32.xlu0 %v145
  %v147 = vpop.xlane.xlu0 %146
  %v148 = vrcp.pop %v144
  %v149 = vrcp.pop %v147
  %v150 = vmul.f32 %v139, %v148
  %v151 = vmul.f32 %v141, %v149
  %152 = vrot.lane.b32.xlu0 %v71, 64
  %v153 = vpop.permute.xlu0 %152
  %v156 = vsel %vm78, %v150, 0
  %158 = vmatpush.msra.mxu0 0.0
  %159 = vmatpush.msra.mxu0 0.0
  %160 = vmatpush.msra.mxu0 0.0
  %161 = vmatpush.msra.mxu0 0.0
  %162 = vmatpush.msra.mxu0 0.0
  %163 = vmatpush.msra.mxu0 0.0
  %164 = vmatpush.msra.mxu0 0.0
  %165 = vmatpush.msra.mxu0 0.0
  %166 = vmatpush.msra.mxu0 0.0
  %167 = vmatpush.msra.mxu0 0.0
  %168 = vmatpush.msra.mxu0 0.0
  %169 = vmatpush.msra.mxu0 0.0
  %170 = vmatpush.msra.mxu0 0.0
  %171 = vmatpush.msra.mxu0 0.0
  %172 = vmatpush.msra.mxu0 0.0
  %173 = vmatpush.msra.mxu0 %v153
  %174 = vmatmul.f32.gmra.mxu0 %v156
  %v175 = vpop.f32.mrf.mxu0
  %v176 = vadd.f32 0.0, %v175
  %177 = vdwg.mxu0
  %178 = vrot.lane.b32.xlu0 %v73, 64
  %v179 = vpop.permute.xlu0 %178
  %v182 = vsel %vm78, %v151, 0
  %184 = vmatpush.msra.mxu0 0.0
  %185 = vmatpush.msra.mxu0 0.0
  %186 = vmatpush.msra.mxu0 0.0
  %187 = vmatpush.msra.mxu0 0.0
  %188 = vmatpush.msra.mxu0 0.0
  %189 = vmatpush.msra.mxu0 0.0
  %190 = vmatpush.msra.mxu0 0.0
  %191 = vmatpush.msra.mxu0 0.0
  %192 = vmatpush.msra.mxu0 0.0
  %193 = vmatpush.msra.mxu0 0.0
  %194 = vmatpush.msra.mxu0 0.0
  %195 = vmatpush.msra.mxu0 0.0
  %196 = vmatpush.msra.mxu0 0.0
  %197 = vmatpush.msra.mxu0 0.0
  %198 = vmatpush.msra.mxu0 0.0
  %199 = vmatpush.msra.mxu0 %v179
  %200 = vmatmul.f32.gmra.mxu0 %v182
  %v201 = vpop.f32.mrf.mxu0
  %v202 = vadd.f32 0.0, %v201
  %203 = vdwg.mxu0
  %204 = vrot.lane.b32.xlu0 %v71, 120
  %v205 = vpop.permute.xlu0 %204
  %206 = vrot.lane.b32.xlu0 %v71, 88
  %v207 = vpop.permute.xlu0 %206
  %v208 = vsel %vm78, %v205, 0
  %v210 = vsel %vm78, %v207, 0
  %212 = vmatpush.xpose.msra.mxu0 0.0
  %213 = vmatpush.xpose.msra.mxu0 0.0
  %214 = vmatpush.xpose.msra.mxu0 0.0
  %215 = vmatpush.xpose.msra.mxu0 0.0
  %216 = vmatpush.xpose.msra.mxu0 0.0
  %217 = vmatpush.xpose.msra.mxu0 0.0
  %218 = vmatpush.xpose.msra.mxu0 0.0
  %219 = vmatpush.xpose.msra.mxu0 0.0
  %220 = vmatpush.xpose.msra.mxu0 0.0
  %221 = vmatpush.xpose.msra.mxu0 0.0
  %222 = vmatpush.xpose.msra.mxu0 0.0
  %223 = vmatpush.xpose.msra.mxu0 0.0
  %224 = vmatpush.xpose.msra.mxu0 0.0
  %225 = vmatpush.xpose.msra.mxu0 0.0
  %226 = vmatpush.xpose.msra.mxu0 0.0
  %227 = vmatpush.xpose.msra.mxu0 %v210
  %228 = vmatmul.f32.gmra.mxu0 %v208
  %v229 = vpop.f32.mrf.mxu0
  %v230 = vadd.f32 0.0, %v229
  %231 = vdwg.mxu0
  %232 = vrot.lane.b32.xlu0 %v73, 120
  %v233 = vpop.permute.xlu0 %232
  %234 = vrot.lane.b32.xlu0 %v73, 88
  %v235 = vpop.permute.xlu0 %234
  %v236 = vsel %vm78, %v233, 0
  %v238 = vsel %vm78, %v235, 0
  %240 = vmatpush.xpose.msra.mxu0 0.0
  %241 = vmatpush.xpose.msra.mxu0 0.0
  %242 = vmatpush.xpose.msra.mxu0 0.0
  %243 = vmatpush.xpose.msra.mxu0 0.0
  %244 = vmatpush.xpose.msra.mxu0 0.0
  %245 = vmatpush.xpose.msra.mxu0 0.0
  %246 = vmatpush.xpose.msra.mxu0 0.0
  %247 = vmatpush.xpose.msra.mxu0 0.0
  %248 = vmatpush.xpose.msra.mxu0 0.0
  %249 = vmatpush.xpose.msra.mxu0 0.0
  %250 = vmatpush.xpose.msra.mxu0 0.0
  %251 = vmatpush.xpose.msra.mxu0 0.0
  %252 = vmatpush.xpose.msra.mxu0 0.0
  %253 = vmatpush.xpose.msra.mxu0 0.0
  %254 = vmatpush.xpose.msra.mxu0 0.0
  %255 = vmatpush.xpose.msra.mxu0 %v238
  %256 = vmatmul.f32.gmra.mxu0 %v236
  %v257 = vpop.f32.mrf.mxu0
  %v258 = vadd.f32 0.0, %v257
  %259 = vdwg.mxu0
  %v260 = vsel %vm78, %v230, -inf
  %261 = vmax.xlane.f32.xlu0 %v260
  %v262 = vpop.xlane.xlu0 %261
  %v263 = vsel %vm78, %v258, -inf
  %264 = vmax.xlane.f32.xlu0 %v263
  %v265 = vpop.xlane.xlu0 %264
  %v266 = vsub.f32 %v230, %v262
  %v267 = vsub.f32 %v258, %v265
  %v268 = vmul.f32 %v266, 1.442695
  %v269 = vpow.pop %v268
  %v270 = vmul.f32 %v267, 1.442695
  %v271 = vpow.pop %v270
  %v272 = vsel %vm78, %v269, 0.0
  %273 = vadd.xlane.f32.xlu0 %v272
  %v274 = vpop.xlane.xlu0 %273
  %v275 = vsel %vm78, %v271, 0.0
  %276 = vadd.xlane.f32.xlu0 %v275
  %v277 = vpop.xlane.xlu0 %276
  %v278 = vrcp.pop %v274
  %v279 = vrcp.pop %v277
  %v280 = vmul.f32 %v269, %v278
  %v281 = vmul.f32 %v271, %v279
  %282 = vrot.lane.b32.xlu0 %v71, 56
  %v283 = vpop.permute.xlu0 %282
  %v286 = vsel %vm78, %v280, 0
  %288 = vmatpush.msra.mxu0 0.0
  %289 = vmatpush.msra.mxu0 0.0
  %290 = vmatpush.msra.mxu0 0.0
  %291 = vmatpush.msra.mxu0 0.0
  %292 = vmatpush.msra.mxu0 0.0
  %293 = vmatpush.msra.mxu0 0.0
  %294 = vmatpush.msra.mxu0 0.0
  %295 = vmatpush.msra.mxu0 0.0
  %296 = vmatpush.msra.mxu0 0.0
  %297 = vmatpush.msra.mxu0 0.0
  %298 = vmatpush.msra.mxu0 0.0
  %299 = vmatpush.msra.mxu0 0.0
  %300 = vmatpush.msra.mxu0 0.0
  %301 = vmatpush.msra.mxu0 0.0
  %302 = vmatpush.msra.mxu0 0.0
  %303 = vmatpush.msra.mxu0 %v283
  %304 = vmatmul.f32.gmra.mxu0 %v286
  %v305 = vpop.f32.mrf.mxu0
  %v306 = vadd.f32 0.0, %v305
  %307 = vdwg.mxu0
  %308 = vrot.lane.b32.xlu0 %v73, 56
  %v309 = vpop.permute.xlu0 %308
  %v312 = vsel %vm78, %v281, 0
  %314 = vmatpush.msra.mxu0 0.0
  %315 = vmatpush.msra.mxu0 0.0
  %316 = vmatpush.msra.mxu0 0.0
  %317 = vmatpush.msra.mxu0 0.0
  %318 = vmatpush.msra.mxu0 0.0
  %319 = vmatpush.msra.mxu0 0.0
  %320 = vmatpush.msra.mxu0 0.0
  %321 = vmatpush.msra.mxu0 0.0
  %322 = vmatpush.msra.mxu0 0.0
  %323 = vmatpush.msra.mxu0 0.0
  %324 = vmatpush.msra.mxu0 0.0
  %325 = vmatpush.msra.mxu0 0.0
  %326 = vmatpush.msra.mxu0 0.0
  %327 = vmatpush.msra.mxu0 0.0
  %328 = vmatpush.msra.mxu0 0.0
  %329 = vmatpush.msra.mxu0 %v309
  %330 = vmatmul.f32.gmra.mxu0 %v312
  %v331 = vpop.f32.mrf.mxu0
  %v332 = vadd.f32 0.0, %v331
  %333 = vdwg.mxu0
  %334 = vrot.lane.b32.xlu0 %v71, 112
  %v335 = vpop.permute.xlu0 %334
  %336 = vrot.lane.b32.xlu0 %v71, 80
  %v337 = vpop.permute.xlu0 %336
  %v338 = vsel %vm78, %v335, 0
  %v340 = vsel %vm78, %v337, 0
  %342 = vmatpush.xpose.msra.mxu0 0.0
  %343 = vmatpush.xpose.msra.mxu0 0.0
  %344 = vmatpush.xpose.msra.mxu0 0.0
  %345 = vmatpush.xpose.msra.mxu0 0.0
  %346 = vmatpush.xpose.msra.mxu0 0.0
  %347 = vmatpush.xpose.msra.mxu0 0.0
  %348 = vmatpush.xpose.msra.mxu0 0.0
  %349 = vmatpush.xpose.msra.mxu0 0.0
  %350 = vmatpush.xpose.msra.mxu0 0.0
  %351 = vmatpush.xpose.msra.mxu0 0.0
  %352 = vmatpush.xpose.msra.mxu0 0.0
  %353 = vmatpush.xpose.msra.mxu0 0.0
  %354 = vmatpush.xpose.msra.mxu0 0.0
  %355 = vmatpush.xpose.msra.mxu0 0.0
  %356 = vmatpush.xpose.msra.mxu0 0.0
  %357 = vmatpush.xpose.msra.mxu0 %v340
  %358 = vmatmul.f32.gmra.mxu0 %v338
  %v359 = vpop.f32.mrf.mxu0
  %v360 = vadd.f32 0.0, %v359
  %361 = vdwg.mxu0
  %362 = vrot.lane.b32.xlu0 %v73, 112
  %v363 = vpop.permute.xlu0 %362
  %364 = vrot.lane.b32.xlu0 %v73, 80
  %v365 = vpop.permute.xlu0 %364
  %v366 = vsel %vm78, %v363, 0
  %v368 = vsel %vm78, %v365, 0
  %370 = vmatpush.xpose.msra.mxu0 0.0
  %371 = vmatpush.xpose.msra.mxu0 0.0
  %372 = vmatpush.xpose.msra.mxu0 0.0
  %373 = vmatpush.xpose.msra.mxu0 0.0
  %374 = vmatpush.xpose.msra.mxu0 0.0
  %375 = vmatpush.xpose.msra.mxu0 0.0
  %376 = vmatpush.xpose.msra.mxu0 0.0
  %377 = vmatpush.xpose.msra.mxu0 0.0
  %378 = vmatpush.xpose.msra.mxu0 0.0
  %379 = vmatpush.xpose.msra.mxu0 0.0
  %380 = vmatpush.xpose.msra.mxu0 0.0
  %381 = vmatpush.xpose.msra.mxu0 0.0
  %382 = vmatpush.xpose.msra.mxu0 0.0
  %383 = vmatpush.xpose.msra.mxu0 0.0
  %384 = vmatpush.xpose.msra.mxu0 0.0
  %385 = vmatpush.xpose.msra.mxu0 %v368
  %386 = vmatmul.f32.gmra.mxu0 %v366
  %v387 = vpop.f32.mrf.mxu0
  %v388 = vadd.f32 0.0, %v387
  %389 = vdwg.mxu0
  %v390 = vsel %vm78, %v360, -inf
  %391 = vmax.xlane.f32.xlu0 %v390
  %v392 = vpop.xlane.xlu0 %391
  %v393 = vsel %vm78, %v388, -inf
  %394 = vmax.xlane.f32.xlu0 %v393
  %v395 = vpop.xlane.xlu0 %394
  %v396 = vsub.f32 %v360, %v392
  %v397 = vsub.f32 %v388, %v395
  %v398 = vmul.f32 %v396, 1.442695
  %v399 = vpow.pop %v398
  %v400 = vmul.f32 %v397, 1.442695
  %v401 = vpow.pop %v400
  %v402 = vsel %vm78, %v399, 0.0
  %403 = vadd.xlane.f32.xlu0 %v402
  %v404 = vpop.xlane.xlu0 %403
  %v405 = vsel %vm78, %v401, 0.0
  %406 = vadd.xlane.f32.xlu0 %v405
  %v407 = vpop.xlane.xlu0 %406
  %v408 = vrcp.pop %v404
  %v409 = vrcp.pop %v407
  %v410 = vmul.f32 %v399, %v408
  %v411 = vmul.f32 %v401, %v409
  %412 = vrot.lane.b32.xlu0 %v71, 48
  %v413 = vpop.permute.xlu0 %412
  %v416 = vsel %vm78, %v410, 0
  %418 = vmatpush.msra.mxu0 0.0
  %419 = vmatpush.msra.mxu0 0.0
  %420 = vmatpush.msra.mxu0 0.0
  %421 = vmatpush.msra.mxu0 0.0
  %422 = vmatpush.msra.mxu0 0.0
  %423 = vmatpush.msra.mxu0 0.0
  %424 = vmatpush.msra.mxu0 0.0
  %425 = vmatpush.msra.mxu0 0.0
  %426 = vmatpush.msra.mxu0 0.0
  %427 = vmatpush.msra.mxu0 0.0
  %428 = vmatpush.msra.mxu0 0.0
  %429 = vmatpush.msra.mxu0 0.0
  %430 = vmatpush.msra.mxu0 0.0
  %431 = vmatpush.msra.mxu0 0.0
  %432 = vmatpush.msra.mxu0 0.0
  %433 = vmatpush.msra.mxu0 %v413
  %434 = vmatmul.f32.gmra.mxu0 %v416
  %v435 = vpop.f32.mrf.mxu0
  %v436 = vadd.f32 0.0, %v435
  %437 = vdwg.mxu0
  %438 = vrot.lane.b32.xlu0 %v73, 48
  %v439 = vpop.permute.xlu0 %438
  %v442 = vsel %vm78, %v411, 0
  %444 = vmatpush.msra.mxu0 0.0
  %445 = vmatpush.msra.mxu0 0.0
  %446 = vmatpush.msra.mxu0 0.0
  %447 = vmatpush.msra.mxu0 0.0
  %448 = vmatpush.msra.mxu0 0.0
  %449 = vmatpush.msra.mxu0 0.0
  %450 = vmatpush.msra.mxu0 0.0
  %451 = vmatpush.msra.mxu0 0.0
  %452 = vmatpush.msra.mxu0 0.0
  %453 = vmatpush.msra.mxu0 0.0
  %454 = vmatpush.msra.mxu0 0.0
  %455 = vmatpush.msra.mxu0 0.0
  %456 = vmatpush.msra.mxu0 0.0
  %457 = vmatpush.msra.mxu0 0.0
  %458 = vmatpush.msra.mxu0 0.0
  %459 = vmatpush.msra.mxu0 %v439
  %460 = vmatmul.f32.gmra.mxu0 %v442
  %v461 = vpop.f32.mrf.mxu0
  %v462 = vadd.f32 0.0, %v461
  %463 = vdwg.mxu0
  %464 = vrot.lane.b32.xlu0 %v71, 104
  %v465 = vpop.permute.xlu0 %464
  %466 = vrot.lane.b32.xlu0 %v71, 72
  %v467 = vpop.permute.xlu0 %466
  %v468 = vsel %vm78, %v465, 0
  %v470 = vsel %vm78, %v467, 0
  %472 = vmatpush.xpose.msra.mxu0 0.0
  %473 = vmatpush.xpose.msra.mxu0 0.0
  %474 = vmatpush.xpose.msra.mxu0 0.0
  %475 = vmatpush.xpose.msra.mxu0 0.0
  %476 = vmatpush.xpose.msra.mxu0 0.0
  %477 = vmatpush.xpose.msra.mxu0 0.0
  %478 = vmatpush.xpose.msra.mxu0 0.0
  %479 = vmatpush.xpose.msra.mxu0 0.0
  %480 = vmatpush.xpose.msra.mxu0 0.0
  %481 = vmatpush.xpose.msra.mxu0 0.0
  %482 = vmatpush.xpose.msra.mxu0 0.0
  %483 = vmatpush.xpose.msra.mxu0 0.0
  %484 = vmatpush.xpose.msra.mxu0 0.0
  %485 = vmatpush.xpose.msra.mxu0 0.0
  %486 = vmatpush.xpose.msra.mxu0 0.0
  %487 = vmatpush.xpose.msra.mxu0 %v470
  %488 = vmatmul.f32.gmra.mxu0 %v468
  %v489 = vpop.f32.mrf.mxu0
  %v490 = vadd.f32 0.0, %v489
  %491 = vdwg.mxu0
  %492 = vrot.lane.b32.xlu0 %v73, 104
  %v493 = vpop.permute.xlu0 %492
  %494 = vrot.lane.b32.xlu0 %v73, 72
  %v495 = vpop.permute.xlu0 %494
  %v496 = vsel %vm78, %v493, 0
  %v498 = vsel %vm78, %v495, 0
  %500 = vmatpush.xpose.msra.mxu0 0.0
  %501 = vmatpush.xpose.msra.mxu0 0.0
  %502 = vmatpush.xpose.msra.mxu0 0.0
  %503 = vmatpush.xpose.msra.mxu0 0.0
  %504 = vmatpush.xpose.msra.mxu0 0.0
  %505 = vmatpush.xpose.msra.mxu0 0.0
  %506 = vmatpush.xpose.msra.mxu0 0.0
  %507 = vmatpush.xpose.msra.mxu0 0.0
  %508 = vmatpush.xpose.msra.mxu0 0.0
  %509 = vmatpush.xpose.msra.mxu0 0.0
  %510 = vmatpush.xpose.msra.mxu0 0.0
  %511 = vmatpush.xpose.msra.mxu0 0.0
  %512 = vmatpush.xpose.msra.mxu0 0.0
  %513 = vmatpush.xpose.msra.mxu0 0.0
  %514 = vmatpush.xpose.msra.mxu0 0.0
  %515 = vmatpush.xpose.msra.mxu0 %v498
  %516 = vmatmul.f32.gmra.mxu0 %v496
  %v517 = vpop.f32.mrf.mxu0
  %v518 = vadd.f32 0.0, %v517
  %519 = vdwg.mxu0
  %v520 = vsel %vm78, %v490, -inf
  %521 = vmax.xlane.f32.xlu0 %v520
  %v522 = vpop.xlane.xlu0 %521
  %v523 = vsel %vm78, %v518, -inf
  %524 = vmax.xlane.f32.xlu0 %v523
  %v525 = vpop.xlane.xlu0 %524
  %v526 = vsub.f32 %v490, %v522
  %v527 = vsub.f32 %v518, %v525
  %v528 = vmul.f32 %v526, 1.442695
  %v529 = vpow.pop %v528
  %v530 = vmul.f32 %v527, 1.442695
  %v531 = vpow.pop %v530
  %v532 = vsel %vm78, %v529, 0.0
  %533 = vadd.xlane.f32.xlu0 %v532
  %v534 = vpop.xlane.xlu0 %533
  %v535 = vsel %vm78, %v531, 0.0
  %536 = vadd.xlane.f32.xlu0 %v535
  %v537 = vpop.xlane.xlu0 %536
  %v538 = vrcp.pop %v534
  %v539 = vrcp.pop %v537
  %v540 = vmul.f32 %v529, %v538
  %v541 = vmul.f32 %v531, %v539
  %542 = vrot.lane.b32.xlu0 %v71, 40
  %v543 = vpop.permute.xlu0 %542
  %v546 = vsel %vm78, %v540, 0
  %548 = vmatpush.msra.mxu0 0.0
  %549 = vmatpush.msra.mxu0 0.0
  %550 = vmatpush.msra.mxu0 0.0
  %551 = vmatpush.msra.mxu0 0.0
  %552 = vmatpush.msra.mxu0 0.0
  %553 = vmatpush.msra.mxu0 0.0
  %554 = vmatpush.msra.mxu0 0.0
  %555 = vmatpush.msra.mxu0 0.0
  %556 = vmatpush.msra.mxu0 0.0
  %557 = vmatpush.msra.mxu0 0.0
  %558 = vmatpush.msra.mxu0 0.0
  %559 = vmatpush.msra.mxu0 0.0
  %560 = vmatpush.msra.mxu0 0.0
  %561 = vmatpush.msra.mxu0 0.0
  %562 = vmatpush.msra.mxu0 0.0
  %563 = vmatpush.msra.mxu0 %v543
  %564 = vmatmul.f32.gmra.mxu0 %v546
  %v565 = vpop.f32.mrf.mxu0
  %v566 = vadd.f32 0.0, %v565
  %567 = vdwg.mxu0
  %568 = vrot.lane.b32.xlu0 %v73, 40
  %v569 = vpop.permute.xlu0 %568
  %v572 = vsel %vm78, %v541, 0
  %574 = vmatpush.msra.mxu0 0.0
  %575 = vmatpush.msra.mxu0 0.0
  %576 = vmatpush.msra.mxu0 0.0
  %577 = vmatpush.msra.mxu0 0.0
  %578 = vmatpush.msra.mxu0 0.0
  %579 = vmatpush.msra.mxu0 0.0
  %580 = vmatpush.msra.mxu0 0.0
  %581 = vmatpush.msra.mxu0 0.0
  %582 = vmatpush.msra.mxu0 0.0
  %583 = vmatpush.msra.mxu0 0.0
  %584 = vmatpush.msra.mxu0 0.0
  %585 = vmatpush.msra.mxu0 0.0
  %586 = vmatpush.msra.mxu0 0.0
  %587 = vmatpush.msra.mxu0 0.0
  %588 = vmatpush.msra.mxu0 0.0
  %589 = vmatpush.msra.mxu0 %v569
  %590 = vmatmul.f32.gmra.mxu0 %v572
  %v591 = vpop.f32.mrf.mxu0
  %v592 = vadd.f32 0.0, %v591
  %593 = vdwg.mxu0
  %596 = vrot.lane.b32.xlu0 %v306, 8
  %v597 = vpop.permute.xlu0 %596
  %598 = vrot.lane.b32.xlu0 %v332, 8
  %v599 = vpop.permute.xlu0 %598
  %604 = vrot.lane.b32.xlu0 %v436, 16
  %v605 = vpop.permute.xlu0 %604
  %606 = vrot.lane.b32.xlu0 %v462, 16
  %v607 = vpop.permute.xlu0 %606
  %612 = vrot.lane.b32.xlu0 %v566, 24
  %v613 = vpop.permute.xlu0 %612
  %614 = vrot.lane.b32.xlu0 %v592, 24
  %v615 = vpop.permute.xlu0 %614
  %v618 = vsel %vm78, %v176, %v597
  %v619 = vsel %vm78, %v202, %v599
  %vm620 = vcmask 130048
  %v621 = vsel %vm620, %v618, %v605
  %v622 = vsel %vm620, %v619, %v607
  %vm623 = vcmask 195584
  %v624 = vsel %vm623, %v621, %v613
  %v625 = vsel %vm623, %v622, %v615
  %v626 = vpack.c.bf16 %v625, %v624
  %v627 = vld [vmem:[%s3] sm:$0xf]
  %v628 = vld [vmem:[%s3 + $0x4] sm:$0xf]
  %v629 = vld [vmem:[%s3 + $0x8] sm:$0xf]
  %v630 = vld [vmem:[%s3 + $0xc] sm:$0xf]
  %v631 = vperm.slane %v35, 0
  %v636 = vunpack.c.l.b16 %v627
  %v637 = vunpack.c.l.b16 %v628
  %v638 = vunpack.c.l.b16 %v629
  %v639 = vunpack.c.l.b16 %v630
  %v640 = vpack.c.b16 %v637, %v636
  %v641 = vpack.c.b16 %v639, %v638
  %v645 = vsel %vm57, %v626, 0
  %647 = vmatpush.bf16.msra.mxu0 0
  %648 = vmatpush.bf16.msra.mxu0 0
  %649 = vmatpush.bf16.msra.mxu0 0
  %650 = vmatpush.bf16.msra.mxu0 0
  %651 = vmatpush.bf16.msra.mxu0 0
  %652 = vmatpush.bf16.msra.mxu0 0
  %653 = vmatpush.bf16.msra.mxu0 %v641
  %654 = vmatpush.bf16.msra.mxu0 %v640
  %655 = vmatmul.bf16.gmra.mxu0 %v645
  %v656 = vpop.f32.mrf.mxu0
  %v657 = vadd.f32 %v631, %v656
  %v658 = vpop.f32.mrf.mxu0
  %v659 = vadd.f32 %v631, %v658
  %660 = vdwg.mxu0
  %v661 = vadd.f32 %v33, %v657
  %v662 = vadd.f32 %v34, %v659
  %v663 = vsel %vm57, %v661, 0.0
  %664 = vadd.xlane.f32.xlu0 %v663
  %v665 = vpop.xlane.xlu0 %664
  %v666 = vsel %vm57, %v662, 0.0
  %667 = vadd.xlane.f32.xlu0 %v666
  %v668 = vpop.xlane.xlu0 %667
  %v669 = vrcp.pop 32.0
  %v670 = vmul.f32 32.0, %v669
  %v671 = vsub.f32 1.0, %v670
  %v672 = vmul.f32 %v669, %v671
  %v673 = vadd.f32 %v669, %v672
  %vm674 = vweird.f32 %v669
  %v675 = vsel %vm674, %v669, %v673
  %v676 = vmul.f32 %v665, %v675
  %v677 = vmul.f32 %v668, %v675
  %v678 = vsub.f32 %v661, %v676
  %v679 = vsub.f32 %v662, %v677
  %v680 = vmul.f32 %v678, %v678
  %v681 = vmul.f32 %v679, %v679
  %v682 = vsel %vm57, %v680, 0.0
  %683 = vadd.xlane.f32.xlu0 %v682
  %v684 = vpop.xlane.xlu0 %683
  %v685 = vsel %vm57, %v681, 0.0
  %686 = vadd.xlane.f32.xlu0 %v685
  %v687 = vpop.xlane.xlu0 %686
  %v688 = vmul.f32 %v684, %v675
  %v689 = vmul.f32 %v687, %v675
  %v690 = vadd.f32 %v688, 1e-05
  %v691 = vadd.f32 %v689, 1e-05
  %v692 = vrsqrt.pop %v690
  %v693 = vmul.f32 %v692, %v690
  %v694 = vmul.f32 %v693, %v692
  %v695 = vmul.f32 0.5, %v694
  %v696 = vsub.f32 1.5, %v695
  %v697 = vmul.f32 %v692, %v696
  %vm698 = vweird.f32 %v690
  %vm699 = vweird.f32 %v692
  %vm700 = vmor %vm698, %vm699
  %v701 = vsel %vm700, %v692, %v697
  %v702 = vrsqrt.pop %v691
  %v703 = vmul.f32 %v702, %v691
  %v704 = vmul.f32 %v703, %v702
  %v705 = vmul.f32 0.5, %v704
  %v706 = vsub.f32 1.5, %v705
  %v707 = vmul.f32 %v702, %v706
  %vm708 = vweird.f32 %v691
  %vm709 = vweird.f32 %v702
  %vm710 = vmor %vm708, %vm709
  %v711 = vsel %vm710, %v702, %v707
  %v712 = vmul.f32 %v678, %v701
  %v713 = vmul.f32 %v679, %v711
  %v714 = vperm.slane %v35, 2
  %v715 = vmul.f32 %v712, %v714
  %v716 = vmul.f32 %v713, %v714
  %v717 = vperm.slane %v35, 3
  %v718 = vadd.f32 %v715, %v717
  %v719 = vadd.f32 %v716, %v717
  %v720 = vpack.c.bf16 %v719, %v718
  %v721 = vld [vmem:[%s4] sm:$0xff]
  %v722 = vld [vmem:[%s4 + $0x8] sm:$0xff]
  %v723 = vld [vmem:[%s4 + $0x10] sm:$0xff]
  %v724 = vld [vmem:[%s4 + $0x18] sm:$0xff]
  %v725 = vld [vmem:[%s4 + $0x20] sm:$0xff]
  %v726 = vld [vmem:[%s4 + $0x28] sm:$0xff]
  %v727 = vld [vmem:[%s4 + $0x30] sm:$0xff]
  %v728 = vld [vmem:[%s4 + $0x38] sm:$0xff]
  %v729 = vld [vmem:[%s4 + $0x40] sm:$0xff]
  %v730 = vld [vmem:[%s4 + $0x48] sm:$0xff]
  %v731 = vld [vmem:[%s4 + $0x50] sm:$0xff]
  %v732 = vld [vmem:[%s4 + $0x58] sm:$0xff]
  %v733 = vld [vmem:[%s4 + $0x60] sm:$0xff]
  %v734 = vld [vmem:[%s4 + $0x68] sm:$0xff]
  %v735 = vld [vmem:[%s4 + $0x70] sm:$0xff]
  %v736 = vld [vmem:[%s4 + $0x78] sm:$0xff]
  %v737 = vld [vmem:[%s4 + $0x80] sm:$0xff]
  %v738 = vld [vmem:[%s4 + $0x88] sm:$0xff]
  %v739 = vld [vmem:[%s4 + $0x90] sm:$0xff]
  %v740 = vld [vmem:[%s4 + $0x98] sm:$0xff]
  %v741 = vld [vmem:[%s4 + $0xa0] sm:$0xff]
  %v742 = vld [vmem:[%s4 + $0xa8] sm:$0xff]
  %v743 = vld [vmem:[%s4 + $0xb0] sm:$0xff]
  %v744 = vld [vmem:[%s4 + $0xb8] sm:$0xff]
  %v745 = vld [vmem:[%s4 + $0xc0] sm:$0xff]
  %v746 = vld [vmem:[%s4 + $0xc8] sm:$0xff]
  %v747 = vld [vmem:[%s4 + $0xd0] sm:$0xff]
  %v748 = vld [vmem:[%s4 + $0xd8] sm:$0xff]
  %v749 = vld [vmem:[%s4 + $0xe0] sm:$0xff]
  %v750 = vld [vmem:[%s4 + $0xe8] sm:$0xff]
  %v751 = vld [vmem:[%s4 + $0xf0] sm:$0xff]
  %v752 = vld [vmem:[%s4 + $0xf8] sm:$0xff]
  %v753 = vld [vmem:[%s5] sm:$0xff]
  %v754 = vld [vmem:[%s5 + $0x8] sm:$0xff]
  %v757 = vperm.slane %v753, 0
  %v758 = vperm.slane %v753, 1
  %v759 = vperm.slane %v753, 2
  %v760 = vperm.slane %v753, 3
  %v761 = vperm.slane %v753, 4
  %v762 = vperm.slane %v753, 5
  %v763 = vperm.slane %v753, 6
  %v764 = vperm.slane %v753, 7
  %v765 = vperm.slane %v754, 0
  %v766 = vperm.slane %v754, 1
  %v767 = vperm.slane %v754, 2
  %v768 = vperm.slane %v754, 3
  %v769 = vperm.slane %v754, 4
  %v770 = vperm.slane %v754, 5
  %v771 = vperm.slane %v754, 6
  %v772 = vperm.slane %v754, 7
  %v821 = vunpack.c.l.b16 %v721
  %v822 = vunpack.c.h.b16 %v721
  %v823 = vunpack.c.l.b16 %v722
  %v824 = vunpack.c.h.b16 %v722
  %v825 = vunpack.c.l.b16 %v723
  %v826 = vunpack.c.h.b16 %v723
  %v827 = vunpack.c.l.b16 %v724
  %v828 = vunpack.c.h.b16 %v724
  %v829 = vunpack.c.l.b16 %v725
  %v830 = vunpack.c.h.b16 %v725
  %v831 = vunpack.c.l.b16 %v726
  %v832 = vunpack.c.h.b16 %v726
  %v833 = vunpack.c.l.b16 %v727
  %v834 = vunpack.c.h.b16 %v727
  %v835 = vunpack.c.l.b16 %v728
  %v836 = vunpack.c.h.b16 %v728
  %v837 = vunpack.c.l.b16 %v729
  %v838 = vunpack.c.h.b16 %v729
  %v839 = vunpack.c.l.b16 %v730
  %v840 = vunpack.c.h.b16 %v730
  %v841 = vunpack.c.l.b16 %v731
  %v842 = vunpack.c.h.b16 %v731
  %v843 = vunpack.c.l.b16 %v732
  %v844 = vunpack.c.h.b16 %v732
  %v845 = vunpack.c.l.b16 %v733
  %v846 = vunpack.c.h.b16 %v733
  %v847 = vunpack.c.l.b16 %v734
  %v848 = vunpack.c.h.b16 %v734
  %v849 = vunpack.c.l.b16 %v735
  %v850 = vunpack.c.h.b16 %v735
  %v851 = vunpack.c.l.b16 %v736
  %v852 = vunpack.c.h.b16 %v736
  %v853 = vunpack.c.l.b16 %v737
  %v854 = vunpack.c.h.b16 %v737
  %v855 = vunpack.c.l.b16 %v738
  %v856 = vunpack.c.h.b16 %v738
  %v857 = vunpack.c.l.b16 %v739
  %v858 = vunpack.c.h.b16 %v739
  %v859 = vunpack.c.l.b16 %v740
  %v860 = vunpack.c.h.b16 %v740
  %v861 = vunpack.c.l.b16 %v741
  %v862 = vunpack.c.h.b16 %v741
  %v863 = vunpack.c.l.b16 %v742
  %v864 = vunpack.c.h.b16 %v742
  %v865 = vunpack.c.l.b16 %v743
  %v866 = vunpack.c.h.b16 %v743
  %v867 = vunpack.c.l.b16 %v744
  %v868 = vunpack.c.h.b16 %v744
  %v869 = vunpack.c.l.b16 %v745
  %v870 = vunpack.c.h.b16 %v745
  %v871 = vunpack.c.l.b16 %v746
  %v872 = vunpack.c.h.b16 %v746
  %v873 = vunpack.c.l.b16 %v747
  %v874 = vunpack.c.h.b16 %v747
  %v875 = vunpack.c.l.b16 %v748
  %v876 = vunpack.c.h.b16 %v748
  %v877 = vunpack.c.l.b16 %v749
  %v878 = vunpack.c.h.b16 %v749
  %v879 = vunpack.c.l.b16 %v750
  %v880 = vunpack.c.h.b16 %v750
  %v881 = vunpack.c.l.b16 %v751
  %v882 = vunpack.c.h.b16 %v751
  %v883 = vunpack.c.l.b16 %v752
  %v884 = vunpack.c.h.b16 %v752
  %v885 = vpack.c.b16 %v837, %v821
  %v886 = vpack.c.b16 %v838, %v822
  %v887 = vpack.c.b16 %v839, %v823
  %v888 = vpack.c.b16 %v840, %v824
  %v889 = vpack.c.b16 %v841, %v825
  %v890 = vpack.c.b16 %v842, %v826
  %v891 = vpack.c.b16 %v843, %v827
  %v892 = vpack.c.b16 %v844, %v828
  %v893 = vpack.c.b16 %v845, %v829
  %v894 = vpack.c.b16 %v846, %v830
  %v895 = vpack.c.b16 %v847, %v831
  %v896 = vpack.c.b16 %v848, %v832
  %v897 = vpack.c.b16 %v849, %v833
  %v898 = vpack.c.b16 %v850, %v834
  %v899 = vpack.c.b16 %v851, %v835
  %v900 = vpack.c.b16 %v852, %v836
  %v901 = vpack.c.b16 %v869, %v853
  %v902 = vpack.c.b16 %v870, %v854
  %v903 = vpack.c.b16 %v871, %v855
  %v904 = vpack.c.b16 %v872, %v856
  %v905 = vpack.c.b16 %v873, %v857
  %v906 = vpack.c.b16 %v874, %v858
  %v907 = vpack.c.b16 %v875, %v859
  %v908 = vpack.c.b16 %v876, %v860
  %v909 = vpack.c.b16 %v877, %v861
  %v910 = vpack.c.b16 %v878, %v862
  %v911 = vpack.c.b16 %v879, %v863
  %v912 = vpack.c.b16 %v880, %v864
  %v913 = vpack.c.b16 %v881, %v865
  %v914 = vpack.c.b16 %v882, %v866
  %v915 = vpack.c.b16 %v883, %v867
  %v916 = vpack.c.b16 %v884, %v868
  %v950 = vsel %vm57, %v720, 0
  %952 = vmatpush.bf16.msra.mxu0 0
  %953 = vmatpush.bf16.msra.mxu0 0
  %954 = vmatpush.bf16.msra.mxu0 0
  %955 = vmatpush.bf16.msra.mxu0 0
  %956 = vmatpush.bf16.msra.mxu0 0
  %957 = vmatpush.bf16.msra.mxu0 0
  %958 = vmatpush.bf16.msra.mxu0 %v901
  %959 = vmatpush.bf16.msra.mxu0 %v885
  %960 = vmatmul.bf16.gmra.mxu0 %v950
  %v961 = vpop.f32.mrf.mxu0
  %v962 = vadd.f32 %v757, %v961
  %v963 = vpop.f32.mrf.mxu0
  %v964 = vadd.f32 %v757, %v963
  %965 = vdwg.mxu0
  %966 = vmatpush.bf16.msra.mxu0 0
  %967 = vmatpush.bf16.msra.mxu0 0
  %968 = vmatpush.bf16.msra.mxu0 0
  %969 = vmatpush.bf16.msra.mxu0 0
  %970 = vmatpush.bf16.msra.mxu0 0
  %971 = vmatpush.bf16.msra.mxu0 0
  %972 = vmatpush.bf16.msra.mxu0 %v902
  %973 = vmatpush.bf16.msra.mxu0 %v886
  %974 = vmatmul.bf16.gmra.mxu0 %v950
  %v975 = vpop.f32.mrf.mxu0
  %v976 = vadd.f32 %v758, %v975
  %v977 = vpop.f32.mrf.mxu0
  %v978 = vadd.f32 %v758, %v977
  %979 = vdwg.mxu0
  %980 = vmatpush.bf16.msra.mxu0 0
  %981 = vmatpush.bf16.msra.mxu0 0
  %982 = vmatpush.bf16.msra.mxu0 0
  %983 = vmatpush.bf16.msra.mxu0 0
  %984 = vmatpush.bf16.msra.mxu0 0
  %985 = vmatpush.bf16.msra.mxu0 0
  %986 = vmatpush.bf16.msra.mxu0 %v903
  %987 = vmatpush.bf16.msra.mxu0 %v887
  %988 = vmatmul.bf16.gmra.mxu0 %v950
  %v989 = vpop.f32.mrf.mxu0
  %v990 = vadd.f32 %v759, %v989
  %v991 = vpop.f32.mrf.mxu0
  %v992 = vadd.f32 %v759, %v991
  %993 = vdwg.mxu0
  %994 = vmatpush.bf16.msra.mxu0 0
  %995 = vmatpush.bf16.msra.mxu0 0
  %996 = vmatpush.bf16.msra.mxu0 0
  %997 = vmatpush.bf16.msra.mxu0 0
  %998 = vmatpush.bf16.msra.mxu0 0
  %999 = vmatpush.bf16.msra.mxu0 0
  %1000 = vmatpush.bf16.msra.mxu0 %v904
  %1001 = vmatpush.bf16.msra.mxu0 %v888
  %1002 = vmatmul.bf16.gmra.mxu0 %v950
  %v1003 = vpop.f32.mrf.mxu0
  %v1004 = vadd.f32 %v760, %v1003
  %v1005 = vpop.f32.mrf.mxu0
  %v1006 = vadd.f32 %v760, %v1005
  %1007 = vdwg.mxu0
  %1008 = vmatpush.bf16.msra.mxu0 0
  %1009 = vmatpush.bf16.msra.mxu0 0
  %1010 = vmatpush.bf16.msra.mxu0 0
  %1011 = vmatpush.bf16.msra.mxu0 0
  %1012 = vmatpush.bf16.msra.mxu0 0
  %1013 = vmatpush.bf16.msra.mxu0 0
  %1014 = vmatpush.bf16.msra.mxu0 %v905
  %1015 = vmatpush.bf16.msra.mxu0 %v889
  %1016 = vmatmul.bf16.gmra.mxu0 %v950
  %v1017 = vpop.f32.mrf.mxu0
  %v1018 = vadd.f32 %v761, %v1017
  %v1019 = vpop.f32.mrf.mxu0
  %v1020 = vadd.f32 %v761, %v1019
  %1021 = vdwg.mxu0
  %1022 = vmatpush.bf16.msra.mxu0 0
  %1023 = vmatpush.bf16.msra.mxu0 0
  %1024 = vmatpush.bf16.msra.mxu0 0
  %1025 = vmatpush.bf16.msra.mxu0 0
  %1026 = vmatpush.bf16.msra.mxu0 0
  %1027 = vmatpush.bf16.msra.mxu0 0
  %1028 = vmatpush.bf16.msra.mxu0 %v906
  %1029 = vmatpush.bf16.msra.mxu0 %v890
  %1030 = vmatmul.bf16.gmra.mxu0 %v950
  %v1031 = vpop.f32.mrf.mxu0
  %v1032 = vadd.f32 %v762, %v1031
  %v1033 = vpop.f32.mrf.mxu0
  %v1034 = vadd.f32 %v762, %v1033
  %1035 = vdwg.mxu0
  %1036 = vmatpush.bf16.msra.mxu0 0
  %1037 = vmatpush.bf16.msra.mxu0 0
  %1038 = vmatpush.bf16.msra.mxu0 0
  %1039 = vmatpush.bf16.msra.mxu0 0
  %1040 = vmatpush.bf16.msra.mxu0 0
  %1041 = vmatpush.bf16.msra.mxu0 0
  %1042 = vmatpush.bf16.msra.mxu0 %v907
  %1043 = vmatpush.bf16.msra.mxu0 %v891
  %1044 = vmatmul.bf16.gmra.mxu0 %v950
  %v1045 = vpop.f32.mrf.mxu0
  %v1046 = vadd.f32 %v763, %v1045
  %v1047 = vpop.f32.mrf.mxu0
  %v1048 = vadd.f32 %v763, %v1047
  %1049 = vdwg.mxu0
  %1050 = vmatpush.bf16.msra.mxu0 0
  %1051 = vmatpush.bf16.msra.mxu0 0
  %1052 = vmatpush.bf16.msra.mxu0 0
  %1053 = vmatpush.bf16.msra.mxu0 0
  %1054 = vmatpush.bf16.msra.mxu0 0
  %1055 = vmatpush.bf16.msra.mxu0 0
  %1056 = vmatpush.bf16.msra.mxu0 %v908
  %1057 = vmatpush.bf16.msra.mxu0 %v892
  %1058 = vmatmul.bf16.gmra.mxu0 %v950
  %v1059 = vpop.f32.mrf.mxu0
  %v1060 = vadd.f32 %v764, %v1059
  %v1061 = vpop.f32.mrf.mxu0
  %v1062 = vadd.f32 %v764, %v1061
  %1063 = vdwg.mxu0
  %1064 = vmatpush.bf16.msra.mxu0 0
  %1065 = vmatpush.bf16.msra.mxu0 0
  %1066 = vmatpush.bf16.msra.mxu0 0
  %1067 = vmatpush.bf16.msra.mxu0 0
  %1068 = vmatpush.bf16.msra.mxu0 0
  %1069 = vmatpush.bf16.msra.mxu0 0
  %1070 = vmatpush.bf16.msra.mxu0 %v909
  %1071 = vmatpush.bf16.msra.mxu0 %v893
  %1072 = vmatmul.bf16.gmra.mxu0 %v950
  %v1073 = vpop.f32.mrf.mxu0
  %v1074 = vadd.f32 %v765, %v1073
  %v1075 = vpop.f32.mrf.mxu0
  %v1076 = vadd.f32 %v765, %v1075
  %1077 = vdwg.mxu0
  %1078 = vmatpush.bf16.msra.mxu0 0
  %1079 = vmatpush.bf16.msra.mxu0 0
  %1080 = vmatpush.bf16.msra.mxu0 0
  %1081 = vmatpush.bf16.msra.mxu0 0
  %1082 = vmatpush.bf16.msra.mxu0 0
  %1083 = vmatpush.bf16.msra.mxu0 0
  %1084 = vmatpush.bf16.msra.mxu0 %v910
  %1085 = vmatpush.bf16.msra.mxu0 %v894
  %1086 = vmatmul.bf16.gmra.mxu0 %v950
  %v1087 = vpop.f32.mrf.mxu0
  %v1088 = vadd.f32 %v766, %v1087
  %v1089 = vpop.f32.mrf.mxu0
  %v1090 = vadd.f32 %v766, %v1089
  %1091 = vdwg.mxu0
  %1092 = vmatpush.bf16.msra.mxu0 0
  %1093 = vmatpush.bf16.msra.mxu0 0
  %1094 = vmatpush.bf16.msra.mxu0 0
  %1095 = vmatpush.bf16.msra.mxu0 0
  %1096 = vmatpush.bf16.msra.mxu0 0
  %1097 = vmatpush.bf16.msra.mxu0 0
  %1098 = vmatpush.bf16.msra.mxu0 %v911
  %1099 = vmatpush.bf16.msra.mxu0 %v895
  %1100 = vmatmul.bf16.gmra.mxu0 %v950
  %v1101 = vpop.f32.mrf.mxu0
  %v1102 = vadd.f32 %v767, %v1101
  %v1103 = vpop.f32.mrf.mxu0
  %v1104 = vadd.f32 %v767, %v1103
  %1105 = vdwg.mxu0
  %1106 = vmatpush.bf16.msra.mxu0 0
  %1107 = vmatpush.bf16.msra.mxu0 0
  %1108 = vmatpush.bf16.msra.mxu0 0
  %1109 = vmatpush.bf16.msra.mxu0 0
  %1110 = vmatpush.bf16.msra.mxu0 0
  %1111 = vmatpush.bf16.msra.mxu0 0
  %1112 = vmatpush.bf16.msra.mxu0 %v912
  %1113 = vmatpush.bf16.msra.mxu0 %v896
  %1114 = vmatmul.bf16.gmra.mxu0 %v950
  %v1115 = vpop.f32.mrf.mxu0
  %v1116 = vadd.f32 %v768, %v1115
  %v1117 = vpop.f32.mrf.mxu0
  %v1118 = vadd.f32 %v768, %v1117
  %1119 = vdwg.mxu0
  %1120 = vmatpush.bf16.msra.mxu0 0
  %1121 = vmatpush.bf16.msra.mxu0 0
  %1122 = vmatpush.bf16.msra.mxu0 0
  %1123 = vmatpush.bf16.msra.mxu0 0
  %1124 = vmatpush.bf16.msra.mxu0 0
  %1125 = vmatpush.bf16.msra.mxu0 0
  %1126 = vmatpush.bf16.msra.mxu0 %v913
  %1127 = vmatpush.bf16.msra.mxu0 %v897
  %1128 = vmatmul.bf16.gmra.mxu0 %v950
  %v1129 = vpop.f32.mrf.mxu0
  %v1130 = vadd.f32 %v769, %v1129
  %v1131 = vpop.f32.mrf.mxu0
  %v1132 = vadd.f32 %v769, %v1131
  %1133 = vdwg.mxu0
  %1134 = vmatpush.bf16.msra.mxu0 0
  %1135 = vmatpush.bf16.msra.mxu0 0
  %1136 = vmatpush.bf16.msra.mxu0 0
  %1137 = vmatpush.bf16.msra.mxu0 0
  %1138 = vmatpush.bf16.msra.mxu0 0
  %1139 = vmatpush.bf16.msra.mxu0 0
  %1140 = vmatpush.bf16.msra.mxu0 %v914
  %1141 = vmatpush.bf16.msra.mxu0 %v898
  %1142 = vmatmul.bf16.gmra.mxu0 %v950
  %v1143 = vpop.f32.mrf.mxu0
  %v1144 = vadd.f32 %v770, %v1143
  %v1145 = vpop.f32.mrf.mxu0
  %v1146 = vadd.f32 %v770, %v1145
  %1147 = vdwg.mxu0
  %1148 = vmatpush.bf16.msra.mxu0 0
  %1149 = vmatpush.bf16.msra.mxu0 0
  %1150 = vmatpush.bf16.msra.mxu0 0
  %1151 = vmatpush.bf16.msra.mxu0 0
  %1152 = vmatpush.bf16.msra.mxu0 0
  %1153 = vmatpush.bf16.msra.mxu0 0
  %1154 = vmatpush.bf16.msra.mxu0 %v915
  %1155 = vmatpush.bf16.msra.mxu0 %v899
  %1156 = vmatmul.bf16.gmra.mxu0 %v950
  %v1157 = vpop.f32.mrf.mxu0
  %v1158 = vadd.f32 %v771, %v1157
  %v1159 = vpop.f32.mrf.mxu0
  %v1160 = vadd.f32 %v771, %v1159
  %1161 = vdwg.mxu0
  %1162 = vmatpush.bf16.msra.mxu0 0
  %1163 = vmatpush.bf16.msra.mxu0 0
  %1164 = vmatpush.bf16.msra.mxu0 0
  %1165 = vmatpush.bf16.msra.mxu0 0
  %1166 = vmatpush.bf16.msra.mxu0 0
  %1167 = vmatpush.bf16.msra.mxu0 0
  %1168 = vmatpush.bf16.msra.mxu0 %v916
  %1169 = vmatpush.bf16.msra.mxu0 %v900
  %1170 = vmatmul.bf16.gmra.mxu0 %v950
  %v1171 = vpop.f32.mrf.mxu0
  %v1172 = vadd.f32 %v772, %v1171
  %v1173 = vpop.f32.mrf.mxu0
  %v1174 = vadd.f32 %v772, %v1173
  %1175 = vdwg.mxu0
  %v1176 = vmax.f32 %v962, 0.0
  %v1177 = vmax.f32 %v976, 0.0
  %v1178 = vmax.f32 %v990, 0.0
  %v1179 = vmax.f32 %v1004, 0.0
  %v1180 = vmax.f32 %v1018, 0.0
  %v1181 = vmax.f32 %v1032, 0.0
  %v1182 = vmax.f32 %v1046, 0.0
  %v1183 = vmax.f32 %v1060, 0.0
  %v1184 = vmax.f32 %v1074, 0.0
  %v1185 = vmax.f32 %v1088, 0.0
  %v1186 = vmax.f32 %v1102, 0.0
  %v1187 = vmax.f32 %v1116, 0.0
  %v1188 = vmax.f32 %v1130, 0.0
  %v1189 = vmax.f32 %v1144, 0.0
  %v1190 = vmax.f32 %v1158, 0.0
  %v1191 = vmax.f32 %v1172, 0.0
  %v1192 = vmax.f32 %v964, 0.0
  %v1193 = vmax.f32 %v978, 0.0
  %v1194 = vmax.f32 %v992, 0.0
  %v1195 = vmax.f32 %v1006, 0.0
  %v1196 = vmax.f32 %v1020, 0.0
  %v1197 = vmax.f32 %v1034, 0.0
  %v1198 = vmax.f32 %v1048, 0.0
  %v1199 = vmax.f32 %v1062, 0.0
  %v1200 = vmax.f32 %v1076, 0.0
  %v1201 = vmax.f32 %v1090, 0.0
  %v1202 = vmax.f32 %v1104, 0.0
  %v1203 = vmax.f32 %v1118, 0.0
  %v1204 = vmax.f32 %v1132, 0.0
  %v1205 = vmax.f32 %v1146, 0.0
  %v1206 = vmax.f32 %v1160, 0.0
  %v1207 = vmax.f32 %v1174, 0.0
  %v1208 = vpack.c.bf16 %v1192, %v1176
  %v1209 = vpack.c.bf16 %v1193, %v1177
  %v1210 = vpack.c.bf16 %v1194, %v1178
  %v1211 = vpack.c.bf16 %v1195, %v1179
  %v1212 = vpack.c.bf16 %v1196, %v1180
  %v1213 = vpack.c.bf16 %v1197, %v1181
  %v1214 = vpack.c.bf16 %v1198, %v1182
  %v1215 = vpack.c.bf16 %v1199, %v1183
  %v1216 = vpack.c.bf16 %v1200, %v1184
  %v1217 = vpack.c.bf16 %v1201, %v1185
  %v1218 = vpack.c.bf16 %v1202, %v1186
  %v1219 = vpack.c.bf16 %v1203, %v1187
  %v1220 = vpack.c.bf16 %v1204, %v1188
  %v1221 = vpack.c.bf16 %v1205, %v1189
  %v1222 = vpack.c.bf16 %v1206, %v1190
  %v1223 = vpack.c.bf16 %v1207, %v1191
  %v1224 = vld [vmem:[%s6] sm:$0xf]
  %v1225 = vld [vmem:[%s6 + $0x4] sm:$0xf]
  %v1226 = vld [vmem:[%s6 + $0x8] sm:$0xf]
  %v1227 = vld [vmem:[%s6 + $0xc] sm:$0xf]
  %v1228 = vld [vmem:[%s6 + $0x10] sm:$0xf]
  %v1229 = vld [vmem:[%s6 + $0x14] sm:$0xf]
  %v1230 = vld [vmem:[%s6 + $0x18] sm:$0xf]
  %v1231 = vld [vmem:[%s6 + $0x1c] sm:$0xf]
  %v1232 = vld [vmem:[%s6 + $0x20] sm:$0xf]
  %v1233 = vld [vmem:[%s6 + $0x24] sm:$0xf]
  %v1234 = vld [vmem:[%s6 + $0x28] sm:$0xf]
  %v1235 = vld [vmem:[%s6 + $0x2c] sm:$0xf]
  %v1236 = vld [vmem:[%s6 + $0x30] sm:$0xf]
  %v1237 = vld [vmem:[%s6 + $0x34] sm:$0xf]
  %v1238 = vld [vmem:[%s6 + $0x38] sm:$0xf]
  %v1239 = vld [vmem:[%s6 + $0x3c] sm:$0xf]
  %v1240 = vld [vmem:[%s6 + $0x40] sm:$0xf]
  %v1241 = vld [vmem:[%s6 + $0x44] sm:$0xf]
  %v1242 = vld [vmem:[%s6 + $0x48] sm:$0xf]
  %v1243 = vld [vmem:[%s6 + $0x4c] sm:$0xf]
  %v1244 = vld [vmem:[%s6 + $0x50] sm:$0xf]
  %v1245 = vld [vmem:[%s6 + $0x54] sm:$0xf]
  %v1246 = vld [vmem:[%s6 + $0x58] sm:$0xf]
  %v1247 = vld [vmem:[%s6 + $0x5c] sm:$0xf]
  %v1248 = vld [vmem:[%s6 + $0x60] sm:$0xf]
  %v1249 = vld [vmem:[%s6 + $0x64] sm:$0xf]
  %v1250 = vld [vmem:[%s6 + $0x68] sm:$0xf]
  %v1251 = vld [vmem:[%s6 + $0x6c] sm:$0xf]
  %v1252 = vld [vmem:[%s6 + $0x70] sm:$0xf]
  %v1253 = vld [vmem:[%s6 + $0x74] sm:$0xf]
  %v1254 = vld [vmem:[%s6 + $0x78] sm:$0xf]
  %v1255 = vld [vmem:[%s6 + $0x7c] sm:$0xf]
  %v1256 = vld [vmem:[%s6 + $0x80] sm:$0xf]
  %v1257 = vld [vmem:[%s6 + $0x84] sm:$0xf]
  %v1258 = vld [vmem:[%s6 + $0x88] sm:$0xf]
  %v1259 = vld [vmem:[%s6 + $0x8c] sm:$0xf]
  %v1260 = vld [vmem:[%s6 + $0x90] sm:$0xf]
  %v1261 = vld [vmem:[%s6 + $0x94] sm:$0xf]
  %v1262 = vld [vmem:[%s6 + $0x98] sm:$0xf]
  %v1263 = vld [vmem:[%s6 + $0x9c] sm:$0xf]
  %v1264 = vld [vmem:[%s6 + $0xa0] sm:$0xf]
  %v1265 = vld [vmem:[%s6 + $0xa4] sm:$0xf]
  %v1266 = vld [vmem:[%s6 + $0xa8] sm:$0xf]
  %v1267 = vld [vmem:[%s6 + $0xac] sm:$0xf]
  %v1268 = vld [vmem:[%s6 + $0xb0] sm:$0xf]
  %v1269 = vld [vmem:[%s6 + $0xb4] sm:$0xf]
  %v1270 = vld [vmem:[%s6 + $0xb8] sm:$0xf]
  %v1271 = vld [vmem:[%s6 + $0xbc] sm:$0xf]
  %v1272 = vld [vmem:[%s6 + $0xc0] sm:$0xf]
  %v1273 = vld [vmem:[%s6 + $0xc4] sm:$0xf]
  %v1274 = vld [vmem:[%s6 + $0xc8] sm:$0xf]
  %v1275 = vld [vmem:[%s6 + $0xcc] sm:$0xf]
  %v1276 = vld [vmem:[%s6 + $0xd0] sm:$0xf]
  %v1277 = vld [vmem:[%s6 + $0xd4] sm:$0xf]
  %v1278 = vld [vmem:[%s6 + $0xd8] sm:$0xf]
  %v1279 = vld [vmem:[%s6 + $0xdc] sm:$0xf]
  %v1280 = vld [vmem:[%s6 + $0xe0] sm:$0xf]
  %v1281 = vld [vmem:[%s6 + $0xe4] sm:$0xf]
  %v1282 = vld [vmem:[%s6 + $0xe8] sm:$0xf]
  %v1283 = vld [vmem:[%s6 + $0xec] sm:$0xf]
  %v1284 = vld [vmem:[%s6 + $0xf0] sm:$0xf]
  %v1285 = vld [vmem:[%s6 + $0xf4] sm:$0xf]
  %v1286 = vld [vmem:[%s6 + $0xf8] sm:$0xf]
  %v1287 = vld [vmem:[%s6 + $0xfc] sm:$0xf]
  %v1288 = vld [vmem:[%s6 + $0x100] sm:$0xf]
  %v1289 = vld [vmem:[%s6 + $0x104] sm:$0xf]
  %v1290 = vld [vmem:[%s6 + $0x108] sm:$0xf]
  %v1291 = vld [vmem:[%s6 + $0x10c] sm:$0xf]
  %v1292 = vld [vmem:[%s6 + $0x110] sm:$0xf]
  %v1293 = vld [vmem:[%s6 + $0x114] sm:$0xf]
  %v1294 = vld [vmem:[%s6 + $0x118] sm:$0xf]
  %v1295 = vld [vmem:[%s6 + $0x11c] sm:$0xf]
  %v1296 = vld [vmem:[%s6 + $0x120] sm:$0xf]
  %v1297 = vld [vmem:[%s6 + $0x124] sm:$0xf]
  %v1298 = vld [vmem:[%s6 + $0x128] sm:$0xf]
  %v1299 = vld [vmem:[%s6 + $0x12c] sm:$0xf]
  %v1300 = vld [vmem:[%s6 + $0x130] sm:$0xf]
  %v1301 = vld [vmem:[%s6 + $0x134] sm:$0xf]
  %v1302 = vld [vmem:[%s6 + $0x138] sm:$0xf]
  %v1303 = vld [vmem:[%s6 + $0x13c] sm:$0xf]
  %v1304 = vld [vmem:[%s6 + $0x140] sm:$0xf]
  %v1305 = vld [vmem:[%s6 + $0x144] sm:$0xf]
  %v1306 = vld [vmem:[%s6 + $0x148] sm:$0xf]
  %v1307 = vld [vmem:[%s6 + $0x14c] sm:$0xf]
  %v1308 = vld [vmem:[%s6 + $0x150] sm:$0xf]
  %v1309 = vld [vmem:[%s6 + $0x154] sm:$0xf]
  %v1310 = vld [vmem:[%s6 + $0x158] sm:$0xf]
  %v1311 = vld [vmem:[%s6 + $0x15c] sm:$0xf]
  %v1312 = vld [vmem:[%s6 + $0x160] sm:$0xf]
  %v1313 = vld [vmem:[%s6 + $0x164] sm:$0xf]
  %v1314 = vld [vmem:[%s6 + $0x168] sm:$0xf]
  %v1315 = vld [vmem:[%s6 + $0x16c] sm:$0xf]
  %v1316 = vld [vmem:[%s6 + $0x170] sm:$0xf]
  %v1317 = vld [vmem:[%s6 + $0x174] sm:$0xf]
  %v1318 = vld [vmem:[%s6 + $0x178] sm:$0xf]
  %v1319 = vld [vmem:[%s6 + $0x17c] sm:$0xf]
  %v1320 = vld [vmem:[%s6 + $0x180] sm:$0xf]
  %v1321 = vld [vmem:[%s6 + $0x184] sm:$0xf]
  %v1322 = vld [vmem:[%s6 + $0x188] sm:$0xf]
  %v1323 = vld [vmem:[%s6 + $0x18c] sm:$0xf]
  %v1324 = vld [vmem:[%s6 + $0x190] sm:$0xf]
  %v1325 = vld [vmem:[%s6 + $0x194] sm:$0xf]
  %v1326 = vld [vmem:[%s6 + $0x198] sm:$0xf]
  %v1327 = vld [vmem:[%s6 + $0x19c] sm:$0xf]
  %v1328 = vld [vmem:[%s6 + $0x1a0] sm:$0xf]
  %v1329 = vld [vmem:[%s6 + $0x1a4] sm:$0xf]
  %v1330 = vld [vmem:[%s6 + $0x1a8] sm:$0xf]
  %v1331 = vld [vmem:[%s6 + $0x1ac] sm:$0xf]
  %v1332 = vld [vmem:[%s6 + $0x1b0] sm:$0xf]
  %v1333 = vld [vmem:[%s6 + $0x1b4] sm:$0xf]
  %v1334 = vld [vmem:[%s6 + $0x1b8] sm:$0xf]
  %v1335 = vld [vmem:[%s6 + $0x1bc] sm:$0xf]
  %v1336 = vld [vmem:[%s6 + $0x1c0] sm:$0xf]
  %v1337 = vld [vmem:[%s6 + $0x1c4] sm:$0xf]
  %v1338 = vld [vmem:[%s6 + $0x1c8] sm:$0xf]
  %v1339 = vld [vmem:[%s6 + $0x1cc] sm:$0xf]
  %v1340 = vld [vmem:[%s6 + $0x1d0] sm:$0xf]
  %v1341 = vld [vmem:[%s6 + $0x1d4] sm:$0xf]
  %v1342 = vld [vmem:[%s6 + $0x1d8] sm:$0xf]
  %v1343 = vld [vmem:[%s6 + $0x1dc] sm:$0xf]
  %v1344 = vld [vmem:[%s6 + $0x1e0] sm:$0xf]
  %v1345 = vld [vmem:[%s6 + $0x1e4] sm:$0xf]
  %v1346 = vld [vmem:[%s6 + $0x1e8] sm:$0xf]
  %v1347 = vld [vmem:[%s6 + $0x1ec] sm:$0xf]
  %v1348 = vld [vmem:[%s6 + $0x1f0] sm:$0xf]
  %v1349 = vld [vmem:[%s6 + $0x1f4] sm:$0xf]
  %v1350 = vld [vmem:[%s6 + $0x1f8] sm:$0xf]
  %v1351 = vld [vmem:[%s6 + $0x1fc] sm:$0xf]
  %v1352 = vld [vmem:[%s6 + $0x200] sm:$0xf]
  %v1353 = vld [vmem:[%s6 + $0x204] sm:$0xf]
  %v1354 = vld [vmem:[%s6 + $0x208] sm:$0xf]
  %v1355 = vld [vmem:[%s6 + $0x20c] sm:$0xf]
  %v1356 = vld [vmem:[%s6 + $0x210] sm:$0xf]
  %v1357 = vld [vmem:[%s6 + $0x214] sm:$0xf]
  %v1358 = vld [vmem:[%s6 + $0x218] sm:$0xf]
  %v1359 = vld [vmem:[%s6 + $0x21c] sm:$0xf]
  %v1360 = vld [vmem:[%s6 + $0x220] sm:$0xf]
  %v1361 = vld [vmem:[%s6 + $0x224] sm:$0xf]
  %v1362 = vld [vmem:[%s6 + $0x228] sm:$0xf]
  %v1363 = vld [vmem:[%s6 + $0x22c] sm:$0xf]
  %v1364 = vld [vmem:[%s6 + $0x230] sm:$0xf]
  %v1365 = vld [vmem:[%s6 + $0x234] sm:$0xf]
  %v1366 = vld [vmem:[%s6 + $0x238] sm:$0xf]
  %v1367 = vld [vmem:[%s6 + $0x23c] sm:$0xf]
  %v1368 = vld [vmem:[%s6 + $0x240] sm:$0xf]
  %v1369 = vld [vmem:[%s6 + $0x244] sm:$0xf]
  %v1370 = vld [vmem:[%s6 + $0x248] sm:$0xf]
  %v1371 = vld [vmem:[%s6 + $0x24c] sm:$0xf]
  %v1372 = vld [vmem:[%s6 + $0x250] sm:$0xf]
  %v1373 = vld [vmem:[%s6 + $0x254] sm:$0xf]
  %v1374 = vld [vmem:[%s6 + $0x258] sm:$0xf]
  %v1375 = vld [vmem:[%s6 + $0x25c] sm:$0xf]
  %v1376 = vld [vmem:[%s6 + $0x260] sm:$0xf]
  %v1377 = vld [vmem:[%s6 + $0x264] sm:$0xf]
  %v1378 = vld [vmem:[%s6 + $0x268] sm:$0xf]
  %v1379 = vld [vmem:[%s6 + $0x26c] sm:$0xf]
  %v1380 = vld [vmem:[%s6 + $0x270] sm:$0xf]
  %v1381 = vld [vmem:[%s6 + $0x274] sm:$0xf]
  %v1382 = vld [vmem:[%s6 + $0x278] sm:$0xf]
  %v1383 = vld [vmem:[%s6 + $0x27c] sm:$0xf]
  %v1384 = vld [vmem:[%s6 + $0x280] sm:$0xf]
  %v1385 = vld [vmem:[%s6 + $0x284] sm:$0xf]
  %v1386 = vld [vmem:[%s6 + $0x288] sm:$0xf]
  %v1387 = vld [vmem:[%s6 + $0x28c] sm:$0xf]
  %v1388 = vld [vmem:[%s6 + $0x290] sm:$0xf]
  %v1389 = vld [vmem:[%s6 + $0x294] sm:$0xf]
  %v1390 = vld [vmem:[%s6 + $0x298] sm:$0xf]
  %v1391 = vld [vmem:[%s6 + $0x29c] sm:$0xf]
  %v1392 = vld [vmem:[%s6 + $0x2a0] sm:$0xf]
  %v1393 = vld [vmem:[%s6 + $0x2a4] sm:$0xf]
  %v1394 = vld [vmem:[%s6 + $0x2a8] sm:$0xf]
  %v1395 = vld [vmem:[%s6 + $0x2ac] sm:$0xf]
  %v1396 = vld [vmem:[%s6 + $0x2b0] sm:$0xf]
  %v1397 = vld [vmem:[%s6 + $0x2b4] sm:$0xf]
  %v1398 = vld [vmem:[%s6 + $0x2b8] sm:$0xf]
  %v1399 = vld [vmem:[%s6 + $0x2bc] sm:$0xf]
  %v1400 = vld [vmem:[%s6 + $0x2c0] sm:$0xf]
  %v1401 = vld [vmem:[%s6 + $0x2c4] sm:$0xf]
  %v1402 = vld [vmem:[%s6 + $0x2c8] sm:$0xf]
  %v1403 = vld [vmem:[%s6 + $0x2cc] sm:$0xf]
  %v1404 = vld [vmem:[%s6 + $0x2d0] sm:$0xf]
  %v1405 = vld [vmem:[%s6 + $0x2d4] sm:$0xf]
  %v1406 = vld [vmem:[%s6 + $0x2d8] sm:$0xf]
  %v1407 = vld [vmem:[%s6 + $0x2dc] sm:$0xf]
  %v1408 = vld [vmem:[%s6 + $0x2e0] sm:$0xf]
  %v1409 = vld [vmem:[%s6 + $0x2e4] sm:$0xf]
  %v1410 = vld [vmem:[%s6 + $0x2e8] sm:$0xf]
  %v1411 = vld [vmem:[%s6 + $0x2ec] sm:$0xf]
  %v1412 = vld [vmem:[%s6 + $0x2f0] sm:$0xf]
  %v1413 = vld [vmem:[%s6 + $0x2f4] sm:$0xf]
  %v1414 = vld [vmem:[%s6 + $0x2f8] sm:$0xf]
  %v1415 = vld [vmem:[%s6 + $0x2fc] sm:$0xf]
  %v1416 = vld [vmem:[%s6 + $0x300] sm:$0xf]
  %v1417 = vld [vmem:[%s6 + $0x304] sm:$0xf]
  %v1418 = vld [vmem:[%s6 + $0x308] sm:$0xf]
  %v1419 = vld [vmem:[%s6 + $0x30c] sm:$0xf]
  %v1420 = vld [vmem:[%s6 + $0x310] sm:$0xf]
  %v1421 = vld [vmem:[%s6 + $0x314] sm:$0xf]
  %v1422 = vld [vmem:[%s6 + $0x318] sm:$0xf]
  %v1423 = vld [vmem:[%s6 + $0x31c] sm:$0xf]
  %v1424 = vld [vmem:[%s6 + $0x320] sm:$0xf]
  %v1425 = vld [vmem:[%s6 + $0x324] sm:$0xf]
  %v1426 = vld [vmem:[%s6 + $0x328] sm:$0xf]
  %v1427 = vld [vmem:[%s6 + $0x32c] sm:$0xf]
  %v1428 = vld [vmem:[%s6 + $0x330] sm:$0xf]
  %v1429 = vld [vmem:[%s6 + $0x334] sm:$0xf]
  %v1430 = vld [vmem:[%s6 + $0x338] sm:$0xf]
  %v1431 = vld [vmem:[%s6 + $0x33c] sm:$0xf]
  %v1432 = vld [vmem:[%s6 + $0x340] sm:$0xf]
  %v1433 = vld [vmem:[%s6 + $0x344] sm:$0xf]
  %v1434 = vld [vmem:[%s6 + $0x348] sm:$0xf]
  %v1435 = vld [vmem:[%s6 + $0x34c] sm:$0xf]
  %v1436 = vld [vmem:[%s6 + $0x350] sm:$0xf]
  %v1437 = vld [vmem:[%s6 + $0x354] sm:$0xf]
  %v1438 = vld [vmem:[%s6 + $0x358] sm:$0xf]
  %v1439 = vld [vmem:[%s6 + $0x35c] sm:$0xf]
  %v1440 = vld [vmem:[%s6 + $0x360] sm:$0xf]
  %v1441 = vld [vmem:[%s6 + $0x364] sm:$0xf]
  %v1442 = vld [vmem:[%s6 + $0x368] sm:$0xf]
  %v1443 = vld [vmem:[%s6 + $0x36c] sm:$0xf]
  %v1444 = vld [vmem:[%s6 + $0x370] sm:$0xf]
  %v1445 = vld [vmem:[%s6 + $0x374] sm:$0xf]
  %v1446 = vld [vmem:[%s6 + $0x378] sm:$0xf]
  %v1447 = vld [vmem:[%s6 + $0x37c] sm:$0xf]
  %v1448 = vld [vmem:[%s6 + $0x380] sm:$0xf]
  %v1449 = vld [vmem:[%s6 + $0x384] sm:$0xf]
  %v1450 = vld [vmem:[%s6 + $0x388] sm:$0xf]
  %v1451 = vld [vmem:[%s6 + $0x38c] sm:$0xf]
  %v1452 = vld [vmem:[%s6 + $0x390] sm:$0xf]
  %v1453 = vld [vmem:[%s6 + $0x394] sm:$0xf]
  %v1454 = vld [vmem:[%s6 + $0x398] sm:$0xf]
  %v1455 = vld [vmem:[%s6 + $0x39c] sm:$0xf]
  %v1456 = vld [vmem:[%s6 + $0x3a0] sm:$0xf]
  %v1457 = vld [vmem:[%s6 + $0x3a4] sm:$0xf]
  %v1458 = vld [vmem:[%s6 + $0x3a8] sm:$0xf]
  %v1459 = vld [vmem:[%s6 + $0x3ac] sm:$0xf]
  %v1460 = vld [vmem:[%s6 + $0x3b0] sm:$0xf]
  %v1461 = vld [vmem:[%s6 + $0x3b4] sm:$0xf]
  %v1462 = vld [vmem:[%s6 + $0x3b8] sm:$0xf]
  %v1463 = vld [vmem:[%s6 + $0x3bc] sm:$0xf]
  %v1464 = vld [vmem:[%s6 + $0x3c0] sm:$0xf]
  %v1465 = vld [vmem:[%s6 + $0x3c4] sm:$0xf]
  %v1466 = vld [vmem:[%s6 + $0x3c8] sm:$0xf]
  %v1467 = vld [vmem:[%s6 + $0x3cc] sm:$0xf]
  %v1468 = vld [vmem:[%s6 + $0x3d0] sm:$0xf]
  %v1469 = vld [vmem:[%s6 + $0x3d4] sm:$0xf]
  %v1470 = vld [vmem:[%s6 + $0x3d8] sm:$0xf]
  %v1471 = vld [vmem:[%s6 + $0x3dc] sm:$0xf]
  %v1472 = vld [vmem:[%s6 + $0x3e0] sm:$0xf]
  %v1473 = vld [vmem:[%s6 + $0x3e4] sm:$0xf]
  %v1474 = vld [vmem:[%s6 + $0x3e8] sm:$0xf]
  %v1475 = vld [vmem:[%s6 + $0x3ec] sm:$0xf]
  %v1476 = vld [vmem:[%s6 + $0x3f0] sm:$0xf]
  %v1477 = vld [vmem:[%s6 + $0x3f4] sm:$0xf]
  %v1478 = vld [vmem:[%s6 + $0x3f8] sm:$0xf]
  %v1479 = vld [vmem:[%s6 + $0x3fc] sm:$0xf]
  %v1480 = vperm.slane %v35, 1
  %v1737 = vunpack.c.l.b16 %v1224
  %v1738 = vunpack.c.l.b16 %v1225
  %v1739 = vunpack.c.l.b16 %v1226
  %v1740 = vunpack.c.l.b16 %v1227
  %v1741 = vunpack.c.l.b16 %v1228
  %v1742 = vunpack.c.l.b16 %v1229
  %v1743 = vunpack.c.l.b16 %v1230
  %v1744 = vunpack.c.l.b16 %v1231
  %v1745 = vunpack.c.l.b16 %v1232
  %v1746 = vunpack.c.l.b16 %v1233
  %v1747 = vunpack.c.l.b16 %v1234
  %v1748 = vunpack.c.l.b16 %v1235
  %v1749 = vunpack.c.l.b16 %v1236
  %v1750 = vunpack.c.l.b16 %v1237
  %v1751 = vunpack.c.l.b16 %v1238
  %v1752 = vunpack.c.l.b16 %v1239
  %v1753 = vunpack.c.l.b16 %v1240
  %v1754 = vunpack.c.l.b16 %v1241
  %v1755 = vunpack.c.l.b16 %v1242
  %v1756 = vunpack.c.l.b16 %v1243
  %v1757 = vunpack.c.l.b16 %v1244
  %v1758 = vunpack.c.l.b16 %v1245
  %v1759 = vunpack.c.l.b16 %v1246
  %v1760 = vunpack.c.l.b16 %v1247
  %v1761 = vunpack.c.l.b16 %v1248
  %v1762 = vunpack.c.l.b16 %v1249
  %v1763 = vunpack.c.l.b16 %v1250
  %v1764 = vunpack.c.l.b16 %v1251
  %v1765 = vunpack.c.l.b16 %v1252
  %v1766 = vunpack.c.l.b16 %v1253
  %v1767 = vunpack.c.l.b16 %v1254
  %v1768 = vunpack.c.l.b16 %v1255
  %v1769 = vunpack.c.l.b16 %v1256
  %v1770 = vunpack.c.l.b16 %v1257
  %v1771 = vunpack.c.l.b16 %v1258
  %v1772 = vunpack.c.l.b16 %v1259
  %v1773 = vunpack.c.l.b16 %v1260
  %v1774 = vunpack.c.l.b16 %v1261
  %v1775 = vunpack.c.l.b16 %v1262
  %v1776 = vunpack.c.l.b16 %v1263
  %v1777 = vunpack.c.l.b16 %v1264
  %v1778 = vunpack.c.l.b16 %v1265
  %v1779 = vunpack.c.l.b16 %v1266
  %v1780 = vunpack.c.l.b16 %v1267
  %v1781 = vunpack.c.l.b16 %v1268
  %v1782 = vunpack.c.l.b16 %v1269
  %v1783 = vunpack.c.l.b16 %v1270
  %v1784 = vunpack.c.l.b16 %v1271
  %v1785 = vunpack.c.l.b16 %v1272
  %v1786 = vunpack.c.l.b16 %v1273
  %v1787 = vunpack.c.l.b16 %v1274
  %v1788 = vunpack.c.l.b16 %v1275
  %v1789 = vunpack.c.l.b16 %v1276
  %v1790 = vunpack.c.l.b16 %v1277
  %v1791 = vunpack.c.l.b16 %v1278
  %v1792 = vunpack.c.l.b16 %v1279
  %v1793 = vunpack.c.l.b16 %v1280
  %v1794 = vunpack.c.l.b16 %v1281
  %v1795 = vunpack.c.l.b16 %v1282
  %v1796 = vunpack.c.l.b16 %v1283
  %v1797 = vunpack.c.l.b16 %v1284
  %v1798 = vunpack.c.l.b16 %v1285
  %v1799 = vunpack.c.l.b16 %v1286
  %v1800 = vunpack.c.l.b16 %v1287
  %v1801 = vunpack.c.l.b16 %v1288
  %v1802 = vunpack.c.l.b16 %v1289
  %v1803 = vunpack.c.l.b16 %v1290
  %v1804 = vunpack.c.l.b16 %v1291
  %v1805 = vunpack.c.l.b16 %v1292
  %v1806 = vunpack.c.l.b16 %v1293
  %v1807 = vunpack.c.l.b16 %v1294
  %v1808 = vunpack.c.l.b16 %v1295
  %v1809 = vunpack.c.l.b16 %v1296
  %v1810 = vunpack.c.l.b16 %v1297
  %v1811 = vunpack.c.l.b16 %v1298
  %v1812 = vunpack.c.l.b16 %v1299
  %v1813 = vunpack.c.l.b16 %v1300
  %v1814 = vunpack.c.l.b16 %v1301
  %v1815 = vunpack.c.l.b16 %v1302
  %v1816 = vunpack.c.l.b16 %v1303
  %v1817 = vunpack.c.l.b16 %v1304
  %v1818 = vunpack.c.l.b16 %v1305
  %v1819 = vunpack.c.l.b16 %v1306
  %v1820 = vunpack.c.l.b16 %v1307
  %v1821 = vunpack.c.l.b16 %v1308
  %v1822 = vunpack.c.l.b16 %v1309
  %v1823 = vunpack.c.l.b16 %v1310
  %v1824 = vunpack.c.l.b16 %v1311
  %v1825 = vunpack.c.l.b16 %v1312
  %v1826 = vunpack.c.l.b16 %v1313
  %v1827 = vunpack.c.l.b16 %v1314
  %v1828 = vunpack.c.l.b16 %v1315
  %v1829 = vunpack.c.l.b16 %v1316
  %v1830 = vunpack.c.l.b16 %v1317
  %v1831 = vunpack.c.l.b16 %v1318
  %v1832 = vunpack.c.l.b16 %v1319
  %v1833 = vunpack.c.l.b16 %v1320
  %v1834 = vunpack.c.l.b16 %v1321
  %v1835 = vunpack.c.l.b16 %v1322
  %v1836 = vunpack.c.l.b16 %v1323
  %v1837 = vunpack.c.l.b16 %v1324
  %v1838 = vunpack.c.l.b16 %v1325
  %v1839 = vunpack.c.l.b16 %v1326
  %v1840 = vunpack.c.l.b16 %v1327
  %v1841 = vunpack.c.l.b16 %v1328
  %v1842 = vunpack.c.l.b16 %v1329
  %v1843 = vunpack.c.l.b16 %v1330
  %v1844 = vunpack.c.l.b16 %v1331
  %v1845 = vunpack.c.l.b16 %v1332
  %v1846 = vunpack.c.l.b16 %v1333
  %v1847 = vunpack.c.l.b16 %v1334
  %v1848 = vunpack.c.l.b16 %v1335
  %v1849 = vunpack.c.l.b16 %v1336
  %v1850 = vunpack.c.l.b16 %v1337
  %v1851 = vunpack.c.l.b16 %v1338
  %v1852 = vunpack.c.l.b16 %v1339
  %v1853 = vunpack.c.l.b16 %v1340
  %v1854 = vunpack.c.l.b16 %v1341
  %v1855 = vunpack.c.l.b16 %v1342
  %v1856 = vunpack.c.l.b16 %v1343
  %v1857 = vunpack.c.l.b16 %v1344
  %v1858 = vunpack.c.l.b16 %v1345
  %v1859 = vunpack.c.l.b16 %v1346
  %v1860 = vunpack.c.l.b16 %v1347
  %v1861 = vunpack.c.l.b16 %v1348
  %v1862 = vunpack.c.l.b16 %v1349
  %v1863 = vunpack.c.l.b16 %v1350
  %v1864 = vunpack.c.l.b16 %v1351
  %v1865 = vunpack.c.l.b16 %v1352
  %v1866 = vunpack.c.l.b16 %v1353
  %v1867 = vunpack.c.l.b16 %v1354
  %v1868 = vunpack.c.l.b16 %v1355
  %v1869 = vunpack.c.l.b16 %v1356
  %v1870 = vunpack.c.l.b16 %v1357
  %v1871 = vunpack.c.l.b16 %v1358
  %v1872 = vunpack.c.l.b16 %v1359
  %v1873 = vunpack.c.l.b16 %v1360
  %v1874 = vunpack.c.l.b16 %v1361
  %v1875 = vunpack.c.l.b16 %v1362
  %v1876 = vunpack.c.l.b16 %v1363
  %v1877 = vunpack.c.l.b16 %v1364
  %v1878 = vunpack.c.l.b16 %v1365
  %v1879 = vunpack.c.l.b16 %v1366
  %v1880 = vunpack.c.l.b16 %v1367
  %v1881 = vunpack.c.l.b16 %v1368
  %v1882 = vunpack.c.l.b16 %v1369
  %v1883 = vunpack.c.l.b16 %v1370
  %v1884 = vunpack.c.l.b16 %v1371
  %v1885 = vunpack.c.l.b16 %v1372
  %v1886 = vunpack.c.l.b16 %v1373
  %v1887 = vunpack.c.l.b16 %v1374
  %v1888 = vunpack.c.l.b16 %v1375
  %v1889 = vunpack.c.l.b16 %v1376
  %v1890 = vunpack.c.l.b16 %v1377
  %v1891 = vunpack.c.l.b16 %v1378
  %v1892 = vunpack.c.l.b16 %v1379
  %v1893 = vunpack.c.l.b16 %v1380
  %v1894 = vunpack.c.l.b16 %v1381
  %v1895 = vunpack.c.l.b16 %v1382
  %v1896 = vunpack.c.l.b16 %v1383
  %v1897 = vunpack.c.l.b16 %v1384
  %v1898 = vunpack.c.l.b16 %v1385
  %v1899 = vunpack.c.l.b16 %v1386
  %v1900 = vunpack.c.l.b16 %v1387
  %v1901 = vunpack.c.l.b16 %v1388
  %v1902 = vunpack.c.l.b16 %v1389
  %v1903 = vunpack.c.l.b16 %v1390
  %v1904 = vunpack.c.l.b16 %v1391
  %v1905 = vunpack.c.l.b16 %v1392
  %v1906 = vunpack.c.l.b16 %v1393
  %v1907 = vunpack.c.l.b16 %v1394
  %v1908 = vunpack.c.l.b16 %v1395
  %v1909 = vunpack.c.l.b16 %v1396
  %v1910 = vunpack.c.l.b16 %v1397
  %v1911 = vunpack.c.l.b16 %v1398
  %v1912 = vunpack.c.l.b16 %v1399
  %v1913 = vunpack.c.l.b16 %v1400
  %v1914 = vunpack.c.l.b16 %v1401
  %v1915 = vunpack.c.l.b16 %v1402
  %v1916 = vunpack.c.l.b16 %v1403
  %v1917 = vunpack.c.l.b16 %v1404
  %v1918 = vunpack.c.l.b16 %v1405
  %v1919 = vunpack.c.l.b16 %v1406
  %v1920 = vunpack.c.l.b16 %v1407
  %v1921 = vunpack.c.l.b16 %v1408
  %v1922 = vunpack.c.l.b16 %v1409
  %v1923 = vunpack.c.l.b16 %v1410
  %v1924 = vunpack.c.l.b16 %v1411
  %v1925 = vunpack.c.l.b16 %v1412
  %v1926 = vunpack.c.l.b16 %v1413
  %v1927 = vunpack.c.l.b16 %v1414
  %v1928 = vunpack.c.l.b16 %v1415
  %v1929 = vunpack.c.l.b16 %v1416
  %v1930 = vunpack.c.l.b16 %v1417
  %v1931 = vunpack.c.l.b16 %v1418
  %v1932 = vunpack.c.l.b16 %v1419
  %v1933 = vunpack.c.l.b16 %v1420
  %v1934 = vunpack.c.l.b16 %v1421
  %v1935 = vunpack.c.l.b16 %v1422
  %v1936 = vunpack.c.l.b16 %v1423
  %v1937 = vunpack.c.l.b16 %v1424
  %v1938 = vunpack.c.l.b16 %v1425
  %v1939 = vunpack.c.l.b16 %v1426
  %v1940 = vunpack.c.l.b16 %v1427
  %v1941 = vunpack.c.l.b16 %v1428
  %v1942 = vunpack.c.l.b16 %v1429
  %v1943 = vunpack.c.l.b16 %v1430
  %v1944 = vunpack.c.l.b16 %v1431
  %v1945 = vunpack.c.l.b16 %v1432
  %v1946 = vunpack.c.l.b16 %v1433
  %v1947 = vunpack.c.l.b16 %v1434
  %v1948 = vunpack.c.l.b16 %v1435
  %v1949 = vunpack.c.l.b16 %v1436
  %v1950 = vunpack.c.l.b16 %v1437
  %v1951 = vunpack.c.l.b16 %v1438
  %v1952 = vunpack.c.l.b16 %v1439
  %v1953 = vunpack.c.l.b16 %v1440
  %v1954 = vunpack.c.l.b16 %v1441
  %v1955 = vunpack.c.l.b16 %v1442
  %v1956 = vunpack.c.l.b16 %v1443
  %v1957 = vunpack.c.l.b16 %v1444
  %v1958 = vunpack.c.l.b16 %v1445
  %v1959 = vunpack.c.l.b16 %v1446
  %v1960 = vunpack.c.l.b16 %v1447
  %v1961 = vunpack.c.l.b16 %v1448
  %v1962 = vunpack.c.l.b16 %v1449
  %v1963 = vunpack.c.l.b16 %v1450
  %v1964 = vunpack.c.l.b16 %v1451
  %v1965 = vunpack.c.l.b16 %v1452
  %v1966 = vunpack.c.l.b16 %v1453
  %v1967 = vunpack.c.l.b16 %v1454
  %v1968 = vunpack.c.l.b16 %v1455
  %v1969 = vunpack.c.l.b16 %v1456
  %v1970 = vunpack.c.l.b16 %v1457
  %v1971 = vunpack.c.l.b16 %v1458
  %v1972 = vunpack.c.l.b16 %v1459
  %v1973 = vunpack.c.l.b16 %v1460
  %v1974 = vunpack.c.l.b16 %v1461
  %v1975 = vunpack.c.l.b16 %v1462
  %v1976 = vunpack.c.l.b16 %v1463
  %v1977 = vunpack.c.l.b16 %v1464
  %v1978 = vunpack.c.l.b16 %v1465
  %v1979 = vunpack.c.l.b16 %v1466
  %v1980 = vunpack.c.l.b16 %v1467
  %v1981 = vunpack.c.l.b16 %v1468
  %v1982 = vunpack.c.l.b16 %v1469
  %v1983 = vunpack.c.l.b16 %v1470
  %v1984 = vunpack.c.l.b16 %v1471
  %v1985 = vunpack.c.l.b16 %v1472
  %v1986 = vunpack.c.l.b16 %v1473
  %v1987 = vunpack.c.l.b16 %v1474
  %v1988 = vunpack.c.l.b16 %v1475
  %v1989 = vunpack.c.l.b16 %v1476
  %v1990 = vunpack.c.l.b16 %v1477
  %v1991 = vunpack.c.l.b16 %v1478
  %v1992 = vunpack.c.l.b16 %v1479
  %v1993 = vpack.c.b16 %v1738, %v1737
  %v1994 = vpack.c.b16 %v1740, %v1739
  %v1995 = vpack.c.b16 %v1742, %v1741
  %v1996 = vpack.c.b16 %v1744, %v1743
  %v1997 = vpack.c.b16 %v1746, %v1745
  %v1998 = vpack.c.b16 %v1748, %v1747
  %v1999 = vpack.c.b16 %v1750, %v1749
  %v2000 = vpack.c.b16 %v1752, %v1751
  %v2001 = vpack.c.b16 %v1754, %v1753
  %v2002 = vpack.c.b16 %v1756, %v1755
  %v2003 = vpack.c.b16 %v1758, %v1757
  %v2004 = vpack.c.b16 %v1760, %v1759
  %v2005 = vpack.c.b16 %v1762, %v1761
  %v2006 = vpack.c.b16 %v1764, %v1763
  %v2007 = vpack.c.b16 %v1766, %v1765
  %v2008 = vpack.c.b16 %v1768, %v1767
  %v2009 = vpack.c.b16 %v1770, %v1769
  %v2010 = vpack.c.b16 %v1772, %v1771
  %v2011 = vpack.c.b16 %v1774, %v1773
  %v2012 = vpack.c.b16 %v1776, %v1775
  %v2013 = vpack.c.b16 %v1778, %v1777
  %v2014 = vpack.c.b16 %v1780, %v1779
  %v2015 = vpack.c.b16 %v1782, %v1781
  %v2016 = vpack.c.b16 %v1784, %v1783
  %v2017 = vpack.c.b16 %v1786, %v1785
  %v2018 = vpack.c.b16 %v1788, %v1787
  %v2019 = vpack.c.b16 %v1790, %v1789
  %v2020 = vpack.c.b16 %v1792, %v1791
  %v2021 = vpack.c.b16 %v1794, %v1793
  %v2022 = vpack.c.b16 %v1796, %v1795
  %v2023 = vpack.c.b16 %v1798, %v1797
  %v2024 = vpack.c.b16 %v1800, %v1799
  %v2025 = vpack.c.b16 %v1802, %v1801
  %v2026 = vpack.c.b16 %v1804, %v1803
  %v2027 = vpack.c.b16 %v1806, %v1805
  %v2028 = vpack.c.b16 %v1808, %v1807
  %v2029 = vpack.c.b16 %v1810, %v1809
  %v2030 = vpack.c.b16 %v1812, %v1811
  %v2031 = vpack.c.b16 %v1814, %v1813
  %v2032 = vpack.c.b16 %v1816, %v1815
  %v2033 = vpack.c.b16 %v1818, %v1817
  %v2034 = vpack.c.b16 %v1820, %v1819
  %v2035 = vpack.c.b16 %v1822, %v1821
  %v2036 = vpack.c.b16 %v1824, %v1823
  %v2037 = vpack.c.b16 %v1826, %v1825
  %v2038 = vpack.c.b16 %v1828, %v1827
  %v2039 = vpack.c.b16 %v1830, %v1829
  %v2040 = vpack.c.b16 %v1832, %v1831
  %v2041 = vpack.c.b16 %v1834, %v1833
  %v2042 = vpack.c.b16 %v1836, %v1835
  %v2043 = vpack.c.b16 %v1838, %v1837
  %v2044 = vpack.c.b16 %v1840, %v1839
  %v2045 = vpack.c.b16 %v1842, %v1841
  %v2046 = vpack.c.b16 %v1844, %v1843
  %v2047 = vpack.c.b16 %v1846, %v1845
  %v2048 = vpack.c.b16 %v1848, %v1847
  %v2049 = vpack.c.b16 %v1850, %v1849
  %v2050 = vpack.c.b16 %v1852, %v1851
  %v2051 = vpack.c.b16 %v1854, %v1853
  %v2052 = vpack.c.b16 %v1856, %v1855
  %v2053 = vpack.c.b16 %v1858, %v1857
  %v2054 = vpack.c.b16 %v1860, %v1859
  %v2055 = vpack.c.b16 %v1862, %v1861
  %v2056 = vpack.c.b16 %v1864, %v1863
  %v2057 = vpack.c.b16 %v1866, %v1865
  %v2058 = vpack.c.b16 %v1868, %v1867
  %v2059 = vpack.c.b16 %v1870, %v1869
  %v2060 = vpack.c.b16 %v1872, %v1871
  %v2061 = vpack.c.b16 %v1874, %v1873
  %v2062 = vpack.c.b16 %v1876, %v1875
  %v2063 = vpack.c.b16 %v1878, %v1877
  %v2064 = vpack.c.b16 %v1880, %v1879
  %v2065 = vpack.c.b16 %v1882, %v1881
  %v2066 = vpack.c.b16 %v1884, %v1883
  %v2067 = vpack.c.b16 %v1886, %v1885
  %v2068 = vpack.c.b16 %v1888, %v1887
  %v2069 = vpack.c.b16 %v1890, %v1889
  %v2070 = vpack.c.b16 %v1892, %v1891
  %v2071 = vpack.c.b16 %v1894, %v1893
  %v2072 = vpack.c.b16 %v1896, %v1895
  %v2073 = vpack.c.b16 %v1898, %v1897
  %v2074 = vpack.c.b16 %v1900, %v1899
  %v2075 = vpack.c.b16 %v1902, %v1901
  %v2076 = vpack.c.b16 %v1904, %v1903
  %v2077 = vpack.c.b16 %v1906, %v1905
  %v2078 = vpack.c.b16 %v1908, %v1907
  %v2079 = vpack.c.b16 %v1910, %v1909
  %v2080 = vpack.c.b16 %v1912, %v1911
  %v2081 = vpack.c.b16 %v1914, %v1913
  %v2082 = vpack.c.b16 %v1916, %v1915
  %v2083 = vpack.c.b16 %v1918, %v1917
  %v2084 = vpack.c.b16 %v1920, %v1919
  %v2085 = vpack.c.b16 %v1922, %v1921
  %v2086 = vpack.c.b16 %v1924, %v1923
  %v2087 = vpack.c.b16 %v1926, %v1925
  %v2088 = vpack.c.b16 %v1928, %v1927
  %v2089 = vpack.c.b16 %v1930, %v1929
  %v2090 = vpack.c.b16 %v1932, %v1931
  %v2091 = vpack.c.b16 %v1934, %v1933
  %v2092 = vpack.c.b16 %v1936, %v1935
  %v2093 = vpack.c.b16 %v1938, %v1937
  %v2094 = vpack.c.b16 %v1940, %v1939
  %v2095 = vpack.c.b16 %v1942, %v1941
  %v2096 = vpack.c.b16 %v1944, %v1943
  %v2097 = vpack.c.b16 %v1946, %v1945
  %v2098 = vpack.c.b16 %v1948, %v1947
  %v2099 = vpack.c.b16 %v1950, %v1949
  %v2100 = vpack.c.b16 %v1952, %v1951
  %v2101 = vpack.c.b16 %v1954, %v1953
  %v2102 = vpack.c.b16 %v1956, %v1955
  %v2103 = vpack.c.b16 %v1958, %v1957
  %v2104 = vpack.c.b16 %v1960, %v1959
  %v2105 = vpack.c.b16 %v1962, %v1961
  %v2106 = vpack.c.b16 %v1964, %v1963
  %v2107 = vpack.c.b16 %v1966, %v1965
  %v2108 = vpack.c.b16 %v1968, %v1967
  %v2109 = vpack.c.b16 %v1970, %v1969
  %v2110 = vpack.c.b16 %v1972, %v1971
  %v2111 = vpack.c.b16 %v1974, %v1973
  %v2112 = vpack.c.b16 %v1976, %v1975
  %v2113 = vpack.c.b16 %v1978, %v1977
  %v2114 = vpack.c.b16 %v1980, %v1979
  %v2115 = vpack.c.b16 %v1982, %v1981
  %v2116 = vpack.c.b16 %v1984, %v1983
  %v2117 = vpack.c.b16 %v1986, %v1985
  %v2118 = vpack.c.b16 %v1988, %v1987
  %v2119 = vpack.c.b16 %v1990, %v1989
  %v2120 = vpack.c.b16 %v1992, %v1991
  %2249 = vmatpush.bf16.msra.mxu0 %v2000
  %2250 = vmatpush.bf16.msra.mxu0 %v1999
  %2251 = vmatpush.bf16.msra.mxu0 %v1998
  %2252 = vmatpush.bf16.msra.mxu0 %v1997
  %2253 = vmatpush.bf16.msra.mxu0 %v1996
  %2254 = vmatpush.bf16.msra.mxu0 %v1995
  %2255 = vmatpush.bf16.msra.mxu0 %v1994
  %2256 = vmatpush.bf16.msra.mxu0 %v1993
  %2257 = vmatmul.bf16.gmra.mxu0 %v1208
  %v2258 = vpop.f32.mrf.mxu0
  %v2259 = vadd.f32 %v1480, %v2258
  %v2260 = vpop.f32.mrf.mxu0
  %v2261 = vadd.f32 %v1480, %v2260
  %2262 = vdwg.mxu0
  %2263 = vmatpush.bf16.msra.mxu0 %v2008
  %2264 = vmatpush.bf16.msra.mxu0 %v2007
  %2265 = vmatpush.bf16.msra.mxu0 %v2006
  %2266 = vmatpush.bf16.msra.mxu0 %v2005
  %2267 = vmatpush.bf16.msra.mxu0 %v2004
  %2268 = vmatpush.bf16.msra.mxu0 %v2003
  %2269 = vmatpush.bf16.msra.mxu0 %v2002
  %2270 = vmatpush.bf16.msra.mxu0 %v2001
  %2271 = vmatmul.bf16.gmra.mxu0 %v1209
  %v2272 = vpop.f32.mrf.mxu0
  %v2273 = vadd.f32 %v2259, %v2272
  %v2274 = vpop.f32.mrf.mxu0
  %v2275 = vadd.f32 %v2261, %v2274
  %2276 = vdwg.mxu0
  %2277 = vmatpush.bf16.msra.mxu0 %v2016
  %2278 = vmatpush.bf16.msra.mxu0 %v2015
  %2279 = vmatpush.bf16.msra.mxu0 %v2014
  %2280 = vmatpush.bf16.msra.mxu0 %v2013
  %2281 = vmatpush.bf16.msra.mxu0 %v2012
  %2282 = vmatpush.bf16.msra.mxu0 %v2011
  %2283 = vmatpush.bf16.msra.mxu0 %v2010
  %2284 = vmatpush.bf16.msra.mxu0 %v2009
  %2285 = vmatmul.bf16.gmra.mxu0 %v1210
  %v2286 = vpop.f32.mrf.mxu0
  %v2287 = vadd.f32 %v2273, %v2286
  %v2288 = vpop.f32.mrf.mxu0
  %v2289 = vadd.f32 %v2275, %v2288
  %2290 = vdwg.mxu0
  %2291 = vmatpush.bf16.msra.mxu0 %v2024
  %2292 = vmatpush.bf16.msra.mxu0 %v2023
  %2293 = vmatpush.bf16.msra.mxu0 %v2022
  %2294 = vmatpush.bf16.msra.mxu0 %v2021
  %2295 = vmatpush.bf16.msra.mxu0 %v2020
  %2296 = vmatpush.bf16.msra.mxu0 %v2019
  %2297 = vmatpush.bf16.msra.mxu0 %v2018
  %2298 = vmatpush.bf16.msra.mxu0 %v2017
  %2299 = vmatmul.bf16.gmra.mxu0 %v1211
  %v2300 = vpop.f32.mrf.mxu0
  %v2301 = vadd.f32 %v2287, %v2300
  %v2302 = vpop.f32.mrf.mxu0
  %v2303 = vadd.f32 %v2289, %v2302
  %2304 = vdwg.mxu0
  %2305 = vmatpush.bf16.msra.mxu0 %v2032
  %2306 = vmatpush.bf16.msra.mxu0 %v2031
  %2307 = vmatpush.bf16.msra.mxu0 %v2030
  %2308 = vmatpush.bf16.msra.mxu0 %v2029
  %2309 = vmatpush.bf16.msra.mxu0 %v2028
  %2310 = vmatpush.bf16.msra.mxu0 %v2027
  %2311 = vmatpush.bf16.msra.mxu0 %v2026
  %2312 = vmatpush.bf16.msra.mxu0 %v2025
  %2313 = vmatmul.bf16.gmra.mxu0 %v1212
  %v2314 = vpop.f32.mrf.mxu0
  %v2315 = vadd.f32 %v2301, %v2314
  %v2316 = vpop.f32.mrf.mxu0
  %v2317 = vadd.f32 %v2303, %v2316
  %2318 = vdwg.mxu0
  %2319 = vmatpush.bf16.msra.mxu0 %v2040
  %2320 = vmatpush.bf16.msra.mxu0 %v2039
  %2321 = vmatpush.bf16.msra.mxu0 %v2038
  %2322 = vmatpush.bf16.msra.mxu0 %v2037
  %2323 = vmatpush.bf16.msra.mxu0 %v2036
  %2324 = vmatpush.bf16.msra.mxu0 %v2035
  %2325 = vmatpush.bf16.msra.mxu0 %v2034
  %2326 = vmatpush.bf16.msra.mxu0 %v2033
  %2327 = vmatmul.bf16.gmra.mxu0 %v1213
  %v2328 = vpop.f32.mrf.mxu0
  %v2329 = vadd.f32 %v2315, %v2328
  %v2330 = vpop.f32.mrf.mxu0
  %v2331 = vadd.f32 %v2317, %v2330
  %2332 = vdwg.mxu0
  %2333 = vmatpush.bf16.msra.mxu0 %v2048
  %2334 = vmatpush.bf16.msra.mxu0 %v2047
  %2335 = vmatpush.bf16.msra.mxu0 %v2046
  %2336 = vmatpush.bf16.msra.mxu0 %v2045
  %2337 = vmatpush.bf16.msra.mxu0 %v2044
  %2338 = vmatpush.bf16.msra.mxu0 %v2043
  %2339 = vmatpush.bf16.msra.mxu0 %v2042
  %2340 = vmatpush.bf16.msra.mxu0 %v2041
  %2341 = vmatmul.bf16.gmra.mxu0 %v1214
  %v2342 = vpop.f32.mrf.mxu0
  %v2343 = vadd.f32 %v2329, %v2342
  %v2344 = vpop.f32.mrf.mxu0
  %v2345 = vadd.f32 %v2331, %v2344
  %2346 = vdwg.mxu0
  %2347 = vmatpush.bf16.msra.mxu0 %v2056
  %2348 = vmatpush.bf16.msra.mxu0 %v2055
  %2349 = vmatpush.bf16.msra.mxu0 %v2054
  %2350 = vmatpush.bf16.msra.mxu0 %v2053
  %2351 = vmatpush.bf16.msra.mxu0 %v2052
  %2352 = vmatpush.bf16.msra.mxu0 %v2051
  %2353 = vmatpush.bf16.msra.mxu0 %v2050
  %2354 = vmatpush.bf16.msra.mxu0 %v2049
  %2355 = vmatmul.bf16.gmra.mxu0 %v1215
  %v2356 = vpop.f32.mrf.mxu0
  %v2357 = vadd.f32 %v2343, %v2356
  %v2358 = vpop.f32.mrf.mxu0
  %v2359 = vadd.f32 %v2345, %v2358
  %2360 = vdwg.mxu0
  %2361 = vmatpush.bf16.msra.mxu0 %v2064
  %2362 = vmatpush.bf16.msra.mxu0 %v2063
  %2363 = vmatpush.bf16.msra.mxu0 %v2062
  %2364 = vmatpush.bf16.msra.mxu0 %v2061
  %2365 = vmatpush.bf16.msra.mxu0 %v2060
  %2366 = vmatpush.bf16.msra.mxu0 %v2059
  %2367 = vmatpush.bf16.msra.mxu0 %v2058
  %2368 = vmatpush.bf16.msra.mxu0 %v2057
  %2369 = vmatmul.bf16.gmra.mxu0 %v1216
  %v2370 = vpop.f32.mrf.mxu0
  %v2371 = vadd.f32 %v2357, %v2370
  %v2372 = vpop.f32.mrf.mxu0
  %v2373 = vadd.f32 %v2359, %v2372
  %2374 = vdwg.mxu0
  %2375 = vmatpush.bf16.msra.mxu0 %v2072
  %2376 = vmatpush.bf16.msra.mxu0 %v2071
  %2377 = vmatpush.bf16.msra.mxu0 %v2070
  %2378 = vmatpush.bf16.msra.mxu0 %v2069
  %2379 = vmatpush.bf16.msra.mxu0 %v2068
  %2380 = vmatpush.bf16.msra.mxu0 %v2067
  %2381 = vmatpush.bf16.msra.mxu0 %v2066
  %2382 = vmatpush.bf16.msra.mxu0 %v2065
  %2383 = vmatmul.bf16.gmra.mxu0 %v1217
  %v2384 = vpop.f32.mrf.mxu0
  %v2385 = vadd.f32 %v2371, %v2384
  %v2386 = vpop.f32.mrf.mxu0
  %v2387 = vadd.f32 %v2373, %v2386
  %2388 = vdwg.mxu0
  %2389 = vmatpush.bf16.msra.mxu0 %v2080
  %2390 = vmatpush.bf16.msra.mxu0 %v2079
  %2391 = vmatpush.bf16.msra.mxu0 %v2078
  %2392 = vmatpush.bf16.msra.mxu0 %v2077
  %2393 = vmatpush.bf16.msra.mxu0 %v2076
  %2394 = vmatpush.bf16.msra.mxu0 %v2075
  %2395 = vmatpush.bf16.msra.mxu0 %v2074
  %2396 = vmatpush.bf16.msra.mxu0 %v2073
  %2397 = vmatmul.bf16.gmra.mxu0 %v1218
  %v2398 = vpop.f32.mrf.mxu0
  %v2399 = vadd.f32 %v2385, %v2398
  %v2400 = vpop.f32.mrf.mxu0
  %v2401 = vadd.f32 %v2387, %v2400
  %2402 = vdwg.mxu0
  %2403 = vmatpush.bf16.msra.mxu0 %v2088
  %2404 = vmatpush.bf16.msra.mxu0 %v2087
  %2405 = vmatpush.bf16.msra.mxu0 %v2086
  %2406 = vmatpush.bf16.msra.mxu0 %v2085
  %2407 = vmatpush.bf16.msra.mxu0 %v2084
  %2408 = vmatpush.bf16.msra.mxu0 %v2083
  %2409 = vmatpush.bf16.msra.mxu0 %v2082
  %2410 = vmatpush.bf16.msra.mxu0 %v2081
  %2411 = vmatmul.bf16.gmra.mxu0 %v1219
  %v2412 = vpop.f32.mrf.mxu0
  %v2413 = vadd.f32 %v2399, %v2412
  %v2414 = vpop.f32.mrf.mxu0
  %v2415 = vadd.f32 %v2401, %v2414
  %2416 = vdwg.mxu0
  %2417 = vmatpush.bf16.msra.mxu0 %v2096
  %2418 = vmatpush.bf16.msra.mxu0 %v2095
  %2419 = vmatpush.bf16.msra.mxu0 %v2094
  %2420 = vmatpush.bf16.msra.mxu0 %v2093
  %2421 = vmatpush.bf16.msra.mxu0 %v2092
  %2422 = vmatpush.bf16.msra.mxu0 %v2091
  %2423 = vmatpush.bf16.msra.mxu0 %v2090
  %2424 = vmatpush.bf16.msra.mxu0 %v2089
  %2425 = vmatmul.bf16.gmra.mxu0 %v1220
  %v2426 = vpop.f32.mrf.mxu0
  %v2427 = vadd.f32 %v2413, %v2426
  %v2428 = vpop.f32.mrf.mxu0
  %v2429 = vadd.f32 %v2415, %v2428
  %2430 = vdwg.mxu0
  %2431 = vmatpush.bf16.msra.mxu0 %v2104
  %2432 = vmatpush.bf16.msra.mxu0 %v2103
  %2433 = vmatpush.bf16.msra.mxu0 %v2102
  %2434 = vmatpush.bf16.msra.mxu0 %v2101
  %2435 = vmatpush.bf16.msra.mxu0 %v2100
  %2436 = vmatpush.bf16.msra.mxu0 %v2099
  %2437 = vmatpush.bf16.msra.mxu0 %v2098
  %2438 = vmatpush.bf16.msra.mxu0 %v2097
  %2439 = vmatmul.bf16.gmra.mxu0 %v1221
  %v2440 = vpop.f32.mrf.mxu0
  %v2441 = vadd.f32 %v2427, %v2440
  %v2442 = vpop.f32.mrf.mxu0
  %v2443 = vadd.f32 %v2429, %v2442
  %2444 = vdwg.mxu0
  %2445 = vmatpush.bf16.msra.mxu0 %v2112
  %2446 = vmatpush.bf16.msra.mxu0 %v2111
  %2447 = vmatpush.bf16.msra.mxu0 %v2110
  %2448 = vmatpush.bf16.msra.mxu0 %v2109
  %2449 = vmatpush.bf16.msra.mxu0 %v2108
  %2450 = vmatpush.bf16.msra.mxu0 %v2107
  %2451 = vmatpush.bf16.msra.mxu0 %v2106
  %2452 = vmatpush.bf16.msra.mxu0 %v2105
  %2453 = vmatmul.bf16.gmra.mxu0 %v1222
  %v2454 = vpop.f32.mrf.mxu0
  %v2455 = vadd.f32 %v2441, %v2454
  %v2456 = vpop.f32.mrf.mxu0
  %v2457 = vadd.f32 %v2443, %v2456
  %2458 = vdwg.mxu0
  %2459 = vmatpush.bf16.msra.mxu0 %v2120
  %2460 = vmatpush.bf16.msra.mxu0 %v2119
  %2461 = vmatpush.bf16.msra.mxu0 %v2118
  %2462 = vmatpush.bf16.msra.mxu0 %v2117
  %2463 = vmatpush.bf16.msra.mxu0 %v2116
  %2464 = vmatpush.bf16.msra.mxu0 %v2115
  %2465 = vmatpush.bf16.msra.mxu0 %v2114
  %2466 = vmatpush.bf16.msra.mxu0 %v2113
  %2467 = vmatmul.bf16.gmra.mxu0 %v1223
  %v2468 = vpop.f32.mrf.mxu0
  %v2469 = vadd.f32 %v2455, %v2468
  %v2470 = vpop.f32.mrf.mxu0
  %v2471 = vadd.f32 %v2457, %v2470
  %2472 = vdwg.mxu0
  %v2473 = vadd.f32 %v718, %v2469
  %v2474 = vadd.f32 %v719, %v2471
  %v2475 = vsel %vm57, %v2473, 0.0
  %2476 = vadd.xlane.f32.xlu0 %v2475
  %v2477 = vpop.xlane.xlu0 %2476
  %v2478 = vsel %vm57, %v2474, 0.0
  %2479 = vadd.xlane.f32.xlu0 %v2478
  %v2480 = vpop.xlane.xlu0 %2479
  %v2481 = vmul.f32 %v2477, %v675
  %v2482 = vmul.f32 %v2480, %v675
  %v2483 = vsub.f32 %v2473, %v2481
  %v2484 = vsub.f32 %v2474, %v2482
  %v2485 = vmul.f32 %v2483, %v2483
  %v2486 = vmul.f32 %v2484, %v2484
  %v2487 = vsel %vm57, %v2485, 0.0
  %2488 = vadd.xlane.f32.xlu0 %v2487
  %v2489 = vpop.xlane.xlu0 %2488
  %v2490 = vsel %vm57, %v2486, 0.0
  %2491 = vadd.xlane.f32.xlu0 %v2490
  %v2492 = vpop.xlane.xlu0 %2491
  %v2493 = vmul.f32 %v2489, %v675
  %v2494 = vmul.f32 %v2492, %v675
  %v2495 = vadd.f32 %v2493, 1e-05
  %v2496 = vadd.f32 %v2494, 1e-05
  %v2497 = vrsqrt.pop %v2495
  %v2498 = vmul.f32 %v2497, %v2495
  %v2499 = vmul.f32 %v2498, %v2497
  %v2500 = vmul.f32 0.5, %v2499
  %v2501 = vsub.f32 1.5, %v2500
  %v2502 = vmul.f32 %v2497, %v2501
  %vm2503 = vweird.f32 %v2495
  %vm2504 = vweird.f32 %v2497
  %vm2505 = vmor %vm2503, %vm2504
  %v2506 = vsel %vm2505, %v2497, %v2502
  %v2507 = vrsqrt.pop %v2496
  %v2508 = vmul.f32 %v2507, %v2496
  %v2509 = vmul.f32 %v2508, %v2507
  %v2510 = vmul.f32 0.5, %v2509
  %v2511 = vsub.f32 1.5, %v2510
  %v2512 = vmul.f32 %v2507, %v2511
  %vm2513 = vweird.f32 %v2496
  %vm2514 = vweird.f32 %v2507
  %vm2515 = vmor %vm2513, %vm2514
  %v2516 = vsel %vm2515, %v2507, %v2512
  %v2517 = vmul.f32 %v2483, %v2506
  %v2518 = vmul.f32 %v2484, %v2516
  %v2519 = vperm.slane %v35, 4
  %v2520 = vmul.f32 %v2517, %v2519
  %v2521 = vmul.f32 %v2518, %v2519
  %v2522 = vperm.slane %v35, 5
  %v2523 = vadd.f32 %v2520, %v2522
  %v2524 = vadd.f32 %v2521, %v2522
  %s2525 = scalar_lea.vmem %s7, 8
  %v2526 = vld [vmem:[%s2525] sm:$0x3f]
  %v2527 = vpack.c.bf16 %v2524, %v2523
  %s2528 = scalar_lea.vmem %s1, 16
  %v2529 = vld [vmem:[%s2528] sm:$0xf]
  %v2530 = vld [vmem:[%s2528 + $0x4] sm:$0xf]
  %v2531 = vld [vmem:[%s2528 + $0x8] sm:$0xf]
  %v2532 = vld [vmem:[%s2528 + $0xc] sm:$0xf]
  %s2533 = scalar_lea.vmem %s2, 1
  %v2534 = vld [vmem:[%s2533] sm:$0x1]
  %v2536 = vperm.slane %v2534, 0
  %v2542 = vunpack.c.l.b16 %v2529
  %v2543 = vunpack.c.l.b16 %v2530
  %v2544 = vunpack.c.l.b16 %v2531
  %v2545 = vunpack.c.l.b16 %v2532
  %v2546 = vpack.c.b16 %v2543, %v2542
  %v2547 = vpack.c.b16 %v2545, %v2544
  %v2551 = vsel %vm57, %v2527, 0
  %2553 = vmatpush.bf16.msra.mxu0 0
  %2554 = vmatpush.bf16.msra.mxu0 0
  %2555 = vmatpush.bf16.msra.mxu0 0
  %2556 = vmatpush.bf16.msra.mxu0 0
  %2557 = vmatpush.bf16.msra.mxu0 0
  %2558 = vmatpush.bf16.msra.mxu0 0
  %2559 = vmatpush.bf16.msra.mxu0 %v2547
  %2560 = vmatpush.bf16.msra.mxu0 %v2546
  %2561 = vmatmul.bf16.gmra.mxu0 %v2551
  %v2562 = vpop.f32.mrf.mxu0
  %v2563 = vadd.f32 %v2536, %v2562
  %v2564 = vpop.f32.mrf.mxu0
  %v2565 = vadd.f32 %v2536, %v2564
  %2566 = vdwg.mxu0
  %2568 = vrot.lane.b32.xlu0 %v2563, 96
  %v2569 = vpop.permute.xlu0 %2568
  %v2570 = vsel %vm78, %v2563, 0
  %v2572 = vsel %vm78, %v2569, 0
  %2574 = vmatpush.xpose.msra.mxu0 0.0
  %2575 = vmatpush.xpose.msra.mxu0 0.0
  %2576 = vmatpush.xpose.msra.mxu0 0.0
  %2577 = vmatpush.xpose.msra.mxu0 0.0
  %2578 = vmatpush.xpose.msra.mxu0 0.0
  %2579 = vmatpush.xpose.msra.mxu0 0.0
  %2580 = vmatpush.xpose.msra.mxu0 0.0
  %2581 = vmatpush.xpose.msra.mxu0 0.0
  %2582 = vmatpush.xpose.msra.mxu0 0.0
  %2583 = vmatpush.xpose.msra.mxu0 0.0
  %2584 = vmatpush.xpose.msra.mxu0 0.0
  %2585 = vmatpush.xpose.msra.mxu0 0.0
  %2586 = vmatpush.xpose.msra.mxu0 0.0
  %2587 = vmatpush.xpose.msra.mxu0 0.0
  %2588 = vmatpush.xpose.msra.mxu0 0.0
  %2589 = vmatpush.xpose.msra.mxu0 %v2572
  %2590 = vmatmul.f32.gmra.mxu0 %v2570
  %v2591 = vpop.f32.mrf.mxu0
  %v2592 = vadd.f32 0.0, %v2591
  %2593 = vdwg.mxu0
  %2595 = vrot.lane.b32.xlu0 %v2565, 96
  %v2596 = vpop.permute.xlu0 %2595
  %v2597 = vsel %vm78, %v2565, 0
  %v2599 = vsel %vm78, %v2596, 0
  %2601 = vmatpush.xpose.msra.mxu0 0.0
  %2602 = vmatpush.xpose.msra.mxu0 0.0
  %2603 = vmatpush.xpose.msra.mxu0 0.0
  %2604 = vmatpush.xpose.msra.mxu0 0.0
  %2605 = vmatpush.xpose.msra.mxu0 0.0
  %2606 = vmatpush.xpose.msra.mxu0 0.0
  %2607 = vmatpush.xpose.msra.mxu0 0.0
  %2608 = vmatpush.xpose.msra.mxu0 0.0
  %2609 = vmatpush.xpose.msra.mxu0 0.0
  %2610 = vmatpush.xpose.msra.mxu0 0.0
  %2611 = vmatpush.xpose.msra.mxu0 0.0
  %2612 = vmatpush.xpose.msra.mxu0 0.0
  %2613 = vmatpush.xpose.msra.mxu0 0.0
  %2614 = vmatpush.xpose.msra.mxu0 0.0
  %2615 = vmatpush.xpose.msra.mxu0 0.0
  %2616 = vmatpush.xpose.msra.mxu0 %v2599
  %2617 = vmatmul.f32.gmra.mxu0 %v2597
  %v2618 = vpop.f32.mrf.mxu0
  %v2619 = vadd.f32 0.0, %v2618
  %2620 = vdwg.mxu0
  %v2621 = vsel %vm78, %v2592, -inf
  %2622 = vmax.xlane.f32.xlu0 %v2621
  %v2623 = vpop.xlane.xlu0 %2622
  %v2624 = vsel %vm78, %v2619, -inf
  %2625 = vmax.xlane.f32.xlu0 %v2624
  %v2626 = vpop.xlane.xlu0 %2625
  %v2627 = vsub.f32 %v2592, %v2623
  %v2628 = vsub.f32 %v2619, %v2626
  %v2629 = vmul.f32 %v2627, 1.442695
  %v2630 = vpow.pop %v2629
  %v2631 = vmul.f32 %v2628, 1.442695
  %v2632 = vpow.pop %v2631
  %v2633 = vsel %vm78, %v2630, 0.0
  %2634 = vadd.xlane.f32.xlu0 %v2633
  %v2635 = vpop.xlane.xlu0 %2634
  %v2636 = vsel %vm78, %v2632, 0.0
  %2637 = vadd.xlane.f32.xlu0 %v2636
  %v2638 = vpop.xlane.xlu0 %2637
  %v2639 = vrcp.pop %v2635
  %v2640 = vrcp.pop %v2638
  %v2641 = vmul.f32 %v2630, %v2639
  %v2642 = vmul.f32 %v2632, %v2640
  %2643 = vrot.lane.b32.xlu0 %v2563, 64
  %v2644 = vpop.permute.xlu0 %2643
  %v2647 = vsel %vm78, %v2641, 0
  %2649 = vmatpush.msra.mxu0 0.0
  %2650 = vmatpush.msra.mxu0 0.0
  %2651 = vmatpush.msra.mxu0 0.0
  %2652 = vmatpush.msra.mxu0 0.0
  %2653 = vmatpush.msra.mxu0 0.0
  %2654 = vmatpush.msra.mxu0 0.0
  %2655 = vmatpush.msra.mxu0 0.0
  %2656 = vmatpush.msra.mxu0 0.0
  %2657 = vmatpush.msra.mxu0 0.0
  %2658 = vmatpush.msra.mxu0 0.0
  %2659 = vmatpush.msra.mxu0 0.0
  %2660 = vmatpush.msra.mxu0 0.0
  %2661 = vmatpush.msra.mxu0 0.0
  %2662 = vmatpush.msra.mxu0 0.0
  %2663 = vmatpush.msra.mxu0 0.0
  %2664 = vmatpush.msra.mxu0 %v2644
  %2665 = vmatmul.f32.gmra.mxu0 %v2647
  %v2666 = vpop.f32.mrf.mxu0
  %v2667 = vadd.f32 0.0, %v2666
  %2668 = vdwg.mxu0
  %2669 = vrot.lane.b32.xlu0 %v2565, 64
  %v2670 = vpop.permute.xlu0 %2669
  %v2673 = vsel %vm78, %v2642, 0
  %2675 = vmatpush.msra.mxu0 0.0
  %2676 = vmatpush.msra.mxu0 0.0
  %2677 = vmatpush.msra.mxu0 0.0
  %2678 = vmatpush.msra.mxu0 0.0
  %2679 = vmatpush.msra.mxu0 0.0
  %2680 = vmatpush.msra.mxu0 0.0
  %2681 = vmatpush.msra.mxu0 0.0
  %2682 = vmatpush.msra.mxu0 0.0
  %2683 = vmatpush.msra.mxu0 0.0
  %2684 = vmatpush.msra.mxu0 0.0
  %2685 = vmatpush.msra.mxu0 0.0
  %2686 = vmatpush.msra.mxu0 0.0
  %2687 = vmatpush.msra.mxu0 0.0
  %2688 = vmatpush.msra.mxu0 0.0
  %2689 = vmatpush.msra.mxu0 0.0
  %2690 = vmatpush.msra.mxu0 %v2670
  %2691 = vmatmul.f32.gmra.mxu0 %v2673
  %v2692 = vpop.f32.mrf.mxu0
  %v2693 = vadd.f32 0.0, %v2692
  %2694 = vdwg.mxu0
  %2695 = vrot.lane.b32.xlu0 %v2563, 120
  %v2696 = vpop.permute.xlu0 %2695
  %2697 = vrot.lane.b32.xlu0 %v2563, 88
  %v2698 = vpop.permute.xlu0 %2697
  %v2699 = vsel %vm78, %v2696, 0
  %v2701 = vsel %vm78, %v2698, 0
  %2703 = vmatpush.xpose.msra.mxu0 0.0
  %2704 = vmatpush.xpose.msra.mxu0 0.0
  %2705 = vmatpush.xpose.msra.mxu0 0.0
  %2706 = vmatpush.xpose.msra.mxu0 0.0
  %2707 = vmatpush.xpose.msra.mxu0 0.0
  %2708 = vmatpush.xpose.msra.mxu0 0.0
  %2709 = vmatpush.xpose.msra.mxu0 0.0
  %2710 = vmatpush.xpose.msra.mxu0 0.0
  %2711 = vmatpush.xpose.msra.mxu0 0.0
  %2712 = vmatpush.xpose.msra.mxu0 0.0
  %2713 = vmatpush.xpose.msra.mxu0 0.0
  %2714 = vmatpush.xpose.msra.mxu0 0.0
  %2715 = vmatpush.xpose.msra.mxu0 0.0
  %2716 = vmatpush.xpose.msra.mxu0 0.0
  %2717 = vmatpush.xpose.msra.mxu0 0.0
  %2718 = vmatpush.xpose.msra.mxu0 %v2701
  %2719 = vmatmul.f32.gmra.mxu0 %v2699
  %v2720 = vpop.f32.mrf.mxu0
  %v2721 = vadd.f32 0.0, %v2720
  %2722 = vdwg.mxu0
  %2723 = vrot.lane.b32.xlu0 %v2565, 120
  %v2724 = vpop.permute.xlu0 %2723
  %2725 = vrot.lane.b32.xlu0 %v2565, 88
  %v2726 = vpop.permute.xlu0 %2725
  %v2727 = vsel %vm78, %v2724, 0
  %v2729 = vsel %vm78, %v2726, 0
  %2731 = vmatpush.xpose.msra.mxu0 0.0
  %2732 = vmatpush.xpose.msra.mxu0 0.0
  %2733 = vmatpush.xpose.msra.mxu0 0.0
  %2734 = vmatpush.xpose.msra.mxu0 0.0
  %2735 = vmatpush.xpose.msra.mxu0 0.0
  %2736 = vmatpush.xpose.msra.mxu0 0.0
  %2737 = vmatpush.xpose.msra.mxu0 0.0
  %2738 = vmatpush.xpose.msra.mxu0 0.0
  %2739 = vmatpush.xpose.msra.mxu0 0.0
  %2740 = vmatpush.xpose.msra.mxu0 0.0
  %2741 = vmatpush.xpose.msra.mxu0 0.0
  %2742 = vmatpush.xpose.msra.mxu0 0.0
  %2743 = vmatpush.xpose.msra.mxu0 0.0
  %2744 = vmatpush.xpose.msra.mxu0 0.0
  %2745 = vmatpush.xpose.msra.mxu0 0.0
  %2746 = vmatpush.xpose.msra.mxu0 %v2729
  %2747 = vmatmul.f32.gmra.mxu0 %v2727
  %v2748 = vpop.f32.mrf.mxu0
  %v2749 = vadd.f32 0.0, %v2748
  %2750 = vdwg.mxu0
  %v2751 = vsel %vm78, %v2721, -inf
  %2752 = vmax.xlane.f32.xlu0 %v2751
  %v2753 = vpop.xlane.xlu0 %2752
  %v2754 = vsel %vm78, %v2749, -inf
  %2755 = vmax.xlane.f32.xlu0 %v2754
  %v2756 = vpop.xlane.xlu0 %2755
  %v2757 = vsub.f32 %v2721, %v2753
  %v2758 = vsub.f32 %v2749, %v2756
  %v2759 = vmul.f32 %v2757, 1.442695
  %v2760 = vpow.pop %v2759
  %v2761 = vmul.f32 %v2758, 1.442695
  %v2762 = vpow.pop %v2761
  %v2763 = vsel %vm78, %v2760, 0.0
  %2764 = vadd.xlane.f32.xlu0 %v2763
  %v2765 = vpop.xlane.xlu0 %2764
  %v2766 = vsel %vm78, %v2762, 0.0
  %2767 = vadd.xlane.f32.xlu0 %v2766
  %v2768 = vpop.xlane.xlu0 %2767
  %v2769 = vrcp.pop %v2765
  %v2770 = vrcp.pop %v2768
  %v2771 = vmul.f32 %v2760, %v2769
  %v2772 = vmul.f32 %v2762, %v2770
  %2773 = vrot.lane.b32.xlu0 %v2563, 56
  %v2774 = vpop.permute.xlu0 %2773
  %v2777 = vsel %vm78, %v2771, 0
  %2779 = vmatpush.msra.mxu0 0.0
  %2780 = vmatpush.msra.mxu0 0.0
  %2781 = vmatpush.msra.mxu0 0.0
  %2782 = vmatpush.msra.mxu0 0.0
  %2783 = vmatpush.msra.mxu0 0.0
  %2784 = vmatpush.msra.mxu0 0.0
  %2785 = vmatpush.msra.mxu0 0.0
  %2786 = vmatpush.msra.mxu0 0.0
  %2787 = vmatpush.msra.mxu0 0.0
  %2788 = vmatpush.msra.mxu0 0.0
  %2789 = vmatpush.msra.mxu0 0.0
  %2790 = vmatpush.msra.mxu0 0.0
  %2791 = vmatpush.msra.mxu0 0.0
  %2792 = vmatpush.msra.mxu0 0.0
  %2793 = vmatpush.msra.mxu0 0.0
  %2794 = vmatpush.msra.mxu0 %v2774
  %2795 = vmatmul.f32.gmra.mxu0 %v2777
  %v2796 = vpop.f32.mrf.mxu0
  %v2797 = vadd.f32 0.0, %v2796
  %2798 = vdwg.mxu0
  %2799 = vrot.lane.b32.xlu0 %v2565, 56
  %v2800 = vpop.permute.xlu0 %2799
  %v2803 = vsel %vm78, %v2772, 0
  %2805 = vmatpush.msra.mxu0 0.0
  %2806 = vmatpush.msra.mxu0 0.0
  %2807 = vmatpush.msra.mxu0 0.0
  %2808 = vmatpush.msra.mxu0 0.0
  %2809 = vmatpush.msra.mxu0 0.0
  %2810 = vmatpush.msra.mxu0 0.0
  %2811 = vmatpush.msra.mxu0 0.0
  %2812 = vmatpush.msra.mxu0 0.0
  %2813 = vmatpush.msra.mxu0 0.0
  %2814 = vmatpush.msra.mxu0 0.0
  %2815 = vmatpush.msra.mxu0 0.0
  %2816 = vmatpush.msra.mxu0 0.0
  %2817 = vmatpush.msra.mxu0 0.0
  %2818 = vmatpush.msra.mxu0 0.0
  %2819 = vmatpush.msra.mxu0 0.0
  %2820 = vmatpush.msra.mxu0 %v2800
  %2821 = vmatmul.f32.gmra.mxu0 %v2803
  %v2822 = vpop.f32.mrf.mxu0
  %v2823 = vadd.f32 0.0, %v2822
  %2824 = vdwg.mxu0
  %2825 = vrot.lane.b32.xlu0 %v2563, 112
  %v2826 = vpop.permute.xlu0 %2825
  %2827 = vrot.lane.b32.xlu0 %v2563, 80
  %v2828 = vpop.permute.xlu0 %2827
  %v2829 = vsel %vm78, %v2826, 0
  %v2831 = vsel %vm78, %v2828, 0
  %2833 = vmatpush.xpose.msra.mxu0 0.0
  %2834 = vmatpush.xpose.msra.mxu0 0.0
  %2835 = vmatpush.xpose.msra.mxu0 0.0
  %2836 = vmatpush.xpose.msra.mxu0 0.0
  %2837 = vmatpush.xpose.msra.mxu0 0.0
  %2838 = vmatpush.xpose.msra.mxu0 0.0
  %2839 = vmatpush.xpose.msra.mxu0 0.0
  %2840 = vmatpush.xpose.msra.mxu0 0.0
  %2841 = vmatpush.xpose.msra.mxu0 0.0
  %2842 = vmatpush.xpose.msra.mxu0 0.0
  %2843 = vmatpush.xpose.msra.mxu0 0.0
  %2844 = vmatpush.xpose.msra.mxu0 0.0
  %2845 = vmatpush.xpose.msra.mxu0 0.0
  %2846 = vmatpush.xpose.msra.mxu0 0.0
  %2847 = vmatpush.xpose.msra.mxu0 0.0
  %2848 = vmatpush.xpose.msra.mxu0 %v2831
  %2849 = vmatmul.f32.gmra.mxu0 %v2829
  %v2850 = vpop.f32.mrf.mxu0
  %v2851 = vadd.f32 0.0, %v2850
  %2852 = vdwg.mxu0
  %2853 = vrot.lane.b32.xlu0 %v2565, 112
  %v2854 = vpop.permute.xlu0 %2853
  %2855 = vrot.lane.b32.xlu0 %v2565, 80
  %v2856 = vpop.permute.xlu0 %2855
  %v2857 = vsel %vm78, %v2854, 0
  %v2859 = vsel %vm78, %v2856, 0
  %2861 = vmatpush.xpose.msra.mxu0 0.0
  %2862 = vmatpush.xpose.msra.mxu0 0.0
  %2863 = vmatpush.xpose.msra.mxu0 0.0
  %2864 = vmatpush.xpose.msra.mxu0 0.0
  %2865 = vmatpush.xpose.msra.mxu0 0.0
  %2866 = vmatpush.xpose.msra.mxu0 0.0
  %2867 = vmatpush.xpose.msra.mxu0 0.0
  %2868 = vmatpush.xpose.msra.mxu0 0.0
  %2869 = vmatpush.xpose.msra.mxu0 0.0
  %2870 = vmatpush.xpose.msra.mxu0 0.0
  %2871 = vmatpush.xpose.msra.mxu0 0.0
  %2872 = vmatpush.xpose.msra.mxu0 0.0
  %2873 = vmatpush.xpose.msra.mxu0 0.0
  %2874 = vmatpush.xpose.msra.mxu0 0.0
  %2875 = vmatpush.xpose.msra.mxu0 0.0
  %2876 = vmatpush.xpose.msra.mxu0 %v2859
  %2877 = vmatmul.f32.gmra.mxu0 %v2857
  %v2878 = vpop.f32.mrf.mxu0
  %v2879 = vadd.f32 0.0, %v2878
  %2880 = vdwg.mxu0
  %v2881 = vsel %vm78, %v2851, -inf
  %2882 = vmax.xlane.f32.xlu0 %v2881
  %v2883 = vpop.xlane.xlu0 %2882
  %v2884 = vsel %vm78, %v2879, -inf
  %2885 = vmax.xlane.f32.xlu0 %v2884
  %v2886 = vpop.xlane.xlu0 %2885
  %v2887 = vsub.f32 %v2851, %v2883
  %v2888 = vsub.f32 %v2879, %v2886
  %v2889 = vmul.f32 %v2887, 1.442695
  %v2890 = vpow.pop %v2889
  %v2891 = vmul.f32 %v2888, 1.442695
  %v2892 = vpow.pop %v2891
  %v2893 = vsel %vm78, %v2890, 0.0
  %2894 = vadd.xlane.f32.xlu0 %v2893
  %v2895 = vpop.xlane.xlu0 %2894
  %v2896 = vsel %vm78, %v2892, 0.0
  %2897 = vadd.xlane.f32.xlu0 %v2896
  %v2898 = vpop.xlane.xlu0 %2897
  %v2899 = vrcp.pop %v2895
  %v2900 = vrcp.pop %v2898
  %v2901 = vmul.f32 %v2890, %v2899
  %v2902 = vmul.f32 %v2892, %v2900
  %2903 = vrot.lane.b32.xlu0 %v2563, 48
  %v2904 = vpop.permute.xlu0 %2903
  %v2907 = vsel %vm78, %v2901, 0
  %2909 = vmatpush.msra.mxu0 0.0
  %2910 = vmatpush.msra.mxu0 0.0
  %2911 = vmatpush.msra.mxu0 0.0
  %2912 = vmatpush.msra.mxu0 0.0
  %2913 = vmatpush.msra.mxu0 0.0
  %2914 = vmatpush.msra.mxu0 0.0
  %2915 = vmatpush.msra.mxu0 0.0
  %2916 = vmatpush.msra.mxu0 0.0
  %2917 = vmatpush.msra.mxu0 0.0
  %2918 = vmatpush.msra.mxu0 0.0
  %2919 = vmatpush.msra.mxu0 0.0
  %2920 = vmatpush.msra.mxu0 0.0
  %2921 = vmatpush.msra.mxu0 0.0
  %2922 = vmatpush.msra.mxu0 0.0
  %2923 = vmatpush.msra.mxu0 0.0
  %2924 = vmatpush.msra.mxu0 %v2904
  %2925 = vmatmul.f32.gmra.mxu0 %v2907
  %v2926 = vpop.f32.mrf.mxu0
  %v2927 = vadd.f32 0.0, %v2926
  %2928 = vdwg.mxu0
  %2929 = vrot.lane.b32.xlu0 %v2565, 48
  %v2930 = vpop.permute.xlu0 %2929
  %v2933 = vsel %vm78, %v2902, 0
  %2935 = vmatpush.msra.mxu0 0.0
  %2936 = vmatpush.msra.mxu0 0.0
  %2937 = vmatpush.msra.mxu0 0.0
  %2938 = vmatpush.msra.mxu0 0.0
  %2939 = vmatpush.msra.mxu0 0.0
  %2940 = vmatpush.msra.mxu0 0.0
  %2941 = vmatpush.msra.mxu0 0.0
  %2942 = vmatpush.msra.mxu0 0.0
  %2943 = vmatpush.msra.mxu0 0.0
  %2944 = vmatpush.msra.mxu0 0.0
  %2945 = vmatpush.msra.mxu0 0.0
  %2946 = vmatpush.msra.mxu0 0.0
  %2947 = vmatpush.msra.mxu0 0.0
  %2948 = vmatpush.msra.mxu0 0.0
  %2949 = vmatpush.msra.mxu0 0.0
  %2950 = vmatpush.msra.mxu0 %v2930
  %2951 = vmatmul.f32.gmra.mxu0 %v2933
  %v2952 = vpop.f32.mrf.mxu0
  %v2953 = vadd.f32 0.0, %v2952
  %2954 = vdwg.mxu0
  %2955 = vrot.lane.b32.xlu0 %v2563, 104
  %v2956 = vpop.permute.xlu0 %2955
  %2957 = vrot.lane.b32.xlu0 %v2563, 72
  %v2958 = vpop.permute.xlu0 %2957
  %v2959 = vsel %vm78, %v2956, 0
  %v2961 = vsel %vm78, %v2958, 0
  %2963 = vmatpush.xpose.msra.mxu0 0.0
  %2964 = vmatpush.xpose.msra.mxu0 0.0
  %2965 = vmatpush.xpose.msra.mxu0 0.0
  %2966 = vmatpush.xpose.msra.mxu0 0.0
  %2967 = vmatpush.xpose.msra.mxu0 0.0
  %2968 = vmatpush.xpose.msra.mxu0 0.0
  %2969 = vmatpush.xpose.msra.mxu0 0.0
  %2970 = vmatpush.xpose.msra.mxu0 0.0
  %2971 = vmatpush.xpose.msra.mxu0 0.0
  %2972 = vmatpush.xpose.msra.mxu0 0.0
  %2973 = vmatpush.xpose.msra.mxu0 0.0
  %2974 = vmatpush.xpose.msra.mxu0 0.0
  %2975 = vmatpush.xpose.msra.mxu0 0.0
  %2976 = vmatpush.xpose.msra.mxu0 0.0
  %2977 = vmatpush.xpose.msra.mxu0 0.0
  %2978 = vmatpush.xpose.msra.mxu0 %v2961
  %2979 = vmatmul.f32.gmra.mxu0 %v2959
  %v2980 = vpop.f32.mrf.mxu0
  %v2981 = vadd.f32 0.0, %v2980
  %2982 = vdwg.mxu0
  %2983 = vrot.lane.b32.xlu0 %v2565, 104
  %v2984 = vpop.permute.xlu0 %2983
  %2985 = vrot.lane.b32.xlu0 %v2565, 72
  %v2986 = vpop.permute.xlu0 %2985
  %v2987 = vsel %vm78, %v2984, 0
  %v2989 = vsel %vm78, %v2986, 0
  %2991 = vmatpush.xpose.msra.mxu0 0.0
  %2992 = vmatpush.xpose.msra.mxu0 0.0
  %2993 = vmatpush.xpose.msra.mxu0 0.0
  %2994 = vmatpush.xpose.msra.mxu0 0.0
  %2995 = vmatpush.xpose.msra.mxu0 0.0
  %2996 = vmatpush.xpose.msra.mxu0 0.0
  %2997 = vmatpush.xpose.msra.mxu0 0.0
  %2998 = vmatpush.xpose.msra.mxu0 0.0
  %2999 = vmatpush.xpose.msra.mxu0 0.0
  %3000 = vmatpush.xpose.msra.mxu0 0.0
  %3001 = vmatpush.xpose.msra.mxu0 0.0
  %3002 = vmatpush.xpose.msra.mxu0 0.0
  %3003 = vmatpush.xpose.msra.mxu0 0.0
  %3004 = vmatpush.xpose.msra.mxu0 0.0
  %3005 = vmatpush.xpose.msra.mxu0 0.0
  %3006 = vmatpush.xpose.msra.mxu0 %v2989
  %3007 = vmatmul.f32.gmra.mxu0 %v2987
  %v3008 = vpop.f32.mrf.mxu0
  %v3009 = vadd.f32 0.0, %v3008
  %3010 = vdwg.mxu0
  %v3011 = vsel %vm78, %v2981, -inf
  %3012 = vmax.xlane.f32.xlu0 %v3011
  %v3013 = vpop.xlane.xlu0 %3012
  %v3014 = vsel %vm78, %v3009, -inf
  %3015 = vmax.xlane.f32.xlu0 %v3014
  %v3016 = vpop.xlane.xlu0 %3015
  %v3017 = vsub.f32 %v2981, %v3013
  %v3018 = vsub.f32 %v3009, %v3016
  %v3019 = vmul.f32 %v3017, 1.442695
  %v3020 = vpow.pop %v3019
  %v3021 = vmul.f32 %v3018, 1.442695
  %v3022 = vpow.pop %v3021
  %v3023 = vsel %vm78, %v3020, 0.0
  %3024 = vadd.xlane.f32.xlu0 %v3023
  %v3025 = vpop.xlane.xlu0 %3024
  %v3026 = vsel %vm78, %v3022, 0.0
  %3027 = vadd.xlane.f32.xlu0 %v3026
  %v3028 = vpop.xlane.xlu0 %3027
  %v3029 = vrcp.pop %v3025
  %v3030 = vrcp.pop %v3028
  %v3031 = vmul.f32 %v3020, %v3029
  %v3032 = vmul.f32 %v3022, %v3030
  %3033 = vrot.lane.b32.xlu0 %v2563, 40
  %v3034 = vpop.permute.xlu0 %3033
  %v3037 = vsel %vm78, %v3031, 0
  %3039 = vmatpush.msra.mxu0 0.0
  %3040 = vmatpush.msra.mxu0 0.0
  %3041 = vmatpush.msra.mxu0 0.0
  %3042 = vmatpush.msra.mxu0 0.0
  %3043 = vmatpush.msra.mxu0 0.0
  %3044 = vmatpush.msra.mxu0 0.0
  %3045 = vmatpush.msra.mxu0 0.0
  %3046 = vmatpush.msra.mxu0 0.0
  %3047 = vmatpush.msra.mxu0 0.0
  %3048 = vmatpush.msra.mxu0 0.0
  %3049 = vmatpush.msra.mxu0 0.0
  %3050 = vmatpush.msra.mxu0 0.0
  %3051 = vmatpush.msra.mxu0 0.0
  %3052 = vmatpush.msra.mxu0 0.0
  %3053 = vmatpush.msra.mxu0 0.0
  %3054 = vmatpush.msra.mxu0 %v3034
  %3055 = vmatmul.f32.gmra.mxu0 %v3037
  %v3056 = vpop.f32.mrf.mxu0
  %v3057 = vadd.f32 0.0, %v3056
  %3058 = vdwg.mxu0
  %3059 = vrot.lane.b32.xlu0 %v2565, 40
  %v3060 = vpop.permute.xlu0 %3059
  %v3063 = vsel %vm78, %v3032, 0
  %3065 = vmatpush.msra.mxu0 0.0
  %3066 = vmatpush.msra.mxu0 0.0
  %3067 = vmatpush.msra.mxu0 0.0
  %3068 = vmatpush.msra.mxu0 0.0
  %3069 = vmatpush.msra.mxu0 0.0
  %3070 = vmatpush.msra.mxu0 0.0
  %3071 = vmatpush.msra.mxu0 0.0
  %3072 = vmatpush.msra.mxu0 0.0
  %3073 = vmatpush.msra.mxu0 0.0
  %3074 = vmatpush.msra.mxu0 0.0
  %3075 = vmatpush.msra.mxu0 0.0
  %3076 = vmatpush.msra.mxu0 0.0
  %3077 = vmatpush.msra.mxu0 0.0
  %3078 = vmatpush.msra.mxu0 0.0
  %3079 = vmatpush.msra.mxu0 0.0
  %3080 = vmatpush.msra.mxu0 %v3060
  %3081 = vmatmul.f32.gmra.mxu0 %v3063
  %v3082 = vpop.f32.mrf.mxu0
  %v3083 = vadd.f32 0.0, %v3082
  %3084 = vdwg.mxu0
  %3087 = vrot.lane.b32.xlu0 %v2797, 8
  %v3088 = vpop.permute.xlu0 %3087
  %3089 = vrot.lane.b32.xlu0 %v2823, 8
  %v3090 = vpop.permute.xlu0 %3089
  %3095 = vrot.lane.b32.xlu0 %v2927, 16
  %v3096 = vpop.permute.xlu0 %3095
  %3097 = vrot.lane.b32.xlu0 %v2953, 16
  %v3098 = vpop.permute.xlu0 %3097
  %3103 = vrot.lane.b32.xlu0 %v3057, 24
  %v3104 = vpop.permute.xlu0 %3103
  %3105 = vrot.lane.b32.xlu0 %v3083, 24
  %v3106 = vpop.permute.xlu0 %3105
  %v3109 = vsel %vm78, %v2667, %v3088
  %v3110 = vsel %vm78, %v2693, %v3090
  %v3111 = vsel %vm620, %v3109, %v3096
  %v3112 = vsel %vm620, %v3110, %v3098
  %v3113 = vsel %vm623, %v3111, %v3104
  %v3114 = vsel %vm623, %v3112, %v3106
  %v3115 = vpack.c.bf16 %v3114, %v3113
  %s3116 = scalar_lea.vmem %s3, 16
  %v3117 = vld [vmem:[%s3116] sm:$0xf]
  %v3118 = vld [vmem:[%s3116 + $0x4] sm:$0xf]
  %v3119 = vld [vmem:[%s3116 + $0x8] sm:$0xf]
  %v3120 = vld [vmem:[%s3116 + $0xc] sm:$0xf]
  %v3121 = vperm.slane %v2526, 0
  %v3126 = vunpack.c.l.b16 %v3117
  %v3127 = vunpack.c.l.b16 %v3118
  %v3128 = vunpack.c.l.b16 %v3119
  %v3129 = vunpack.c.l.b16 %v3120
  %v3130 = vpack.c.b16 %v3127, %v3126
  %v3131 = vpack.c.b16 %v3129, %v3128
  %v3135 = vsel %vm57, %v3115, 0
  %3137 = vmatpush.bf16.msra.mxu0 0
  %3138 = vmatpush.bf16.msra.mxu0 0
  %3139 = vmatpush.bf16.msra.mxu0 0
  %3140 = vmatpush.bf16.msra.mxu0 0
  %3141 = vmatpush.bf16.msra.mxu0 0
  %3142 = vmatpush.bf16.msra.mxu0 0
  %3143 = vmatpush.bf16.msra.mxu0 %v3131
  %3144 = vmatpush.bf16.msra.mxu0 %v3130
  %3145 = vmatmul.bf16.gmra.mxu0 %v3135
  %v3146 = vpop.f32.mrf.mxu0
  %v3147 = vadd.f32 %v3121, %v3146
  %v3148 = vpop.f32.mrf.mxu0
  %v3149 = vadd.f32 %v3121, %v3148
  %3150 = vdwg.mxu0
  %v3151 = vadd.f32 %v2523, %v3147
  %v3152 = vadd.f32 %v2524, %v3149
  %v3153 = vsel %vm57, %v3151, 0.0
  %3154 = vadd.xlane.f32.xlu0 %v3153
  %v3155 = vpop.xlane.xlu0 %3154
  %v3156 = vsel %vm57, %v3152, 0.0
  %3157 = vadd.xlane.f32.xlu0 %v3156
  %v3158 = vpop.xlane.xlu0 %3157
  %v3159 = vmul.f32 %v3155, %v675
  %v3160 = vmul.f32 %v3158, %v675
  %v3161 = vsub.f32 %v3151, %v3159
  %v3162 = vsub.f32 %v3152, %v3160
  %v3163 = vmul.f32 %v3161, %v3161
  %v3164 = vmul.f32 %v3162, %v3162
  %v3165 = vsel %vm57, %v3163, 0.0
  %3166 = vadd.xlane.f32.xlu0 %v3165
  %v3167 = vpop.xlane.xlu0 %3166
  %v3168 = vsel %vm57, %v3164, 0.0
  %3169 = vadd.xlane.f32.xlu0 %v3168
  %v3170 = vpop.xlane.xlu0 %3169
  %v3171 = vmul.f32 %v3167, %v675
  %v3172 = vmul.f32 %v3170, %v675
  %v3173 = vadd.f32 %v3171, 1e-05
  %v3174 = vadd.f32 %v3172, 1e-05
  %v3175 = vrsqrt.pop %v3173
  %v3176 = vmul.f32 %v3175, %v3173
  %v3177 = vmul.f32 %v3176, %v3175
  %v3178 = vmul.f32 0.5, %v3177
  %v3179 = vsub.f32 1.5, %v3178
  %v3180 = vmul.f32 %v3175, %v3179
  %vm3181 = vweird.f32 %v3173
  %vm3182 = vweird.f32 %v3175
  %vm3183 = vmor %vm3181, %vm3182
  %v3184 = vsel %vm3183, %v3175, %v3180
  %v3185 = vrsqrt.pop %v3174
  %v3186 = vmul.f32 %v3185, %v3174
  %v3187 = vmul.f32 %v3186, %v3185
  %v3188 = vmul.f32 0.5, %v3187
  %v3189 = vsub.f32 1.5, %v3188
  %v3190 = vmul.f32 %v3185, %v3189
  %vm3191 = vweird.f32 %v3174
  %vm3192 = vweird.f32 %v3185
  %vm3193 = vmor %vm3191, %vm3192
  %v3194 = vsel %vm3193, %v3185, %v3190
  %v3195 = vmul.f32 %v3161, %v3184
  %v3196 = vmul.f32 %v3162, %v3194
  %v3197 = vperm.slane %v2526, 2
  %v3198 = vmul.f32 %v3195, %v3197
  %v3199 = vmul.f32 %v3196, %v3197
  %v3200 = vperm.slane %v2526, 3
  %v3201 = vadd.f32 %v3198, %v3200
  %v3202 = vadd.f32 %v3199, %v3200
  %v3203 = vpack.c.bf16 %v3202, %v3201
  %s3204 = scalar_lea.vmem %s4, 256
  %v3205 = vld [vmem:[%s3204] sm:$0xff]
  %v3206 = vld [vmem:[%s3204 + $0x8] sm:$0xff]
  %v3207 = vld [vmem:[%s3204 + $0x10] sm:$0xff]
  %v3208 = vld [vmem:[%s3204 + $0x18] sm:$0xff]
  %v3209 = vld [vmem:[%s3204 + $0x20] sm:$0xff]
  %v3210 = vld [vmem:[%s3204 + $0x28] sm:$0xff]
  %v3211 = vld [vmem:[%s3204 + $0x30] sm:$0xff]
  %v3212 = vld [vmem:[%s3204 + $0x38] sm:$0xff]
  %v3213 = vld [vmem:[%s3204 + $0x40] sm:$0xff]
  %v3214 = vld [vmem:[%s3204 + $0x48] sm:$0xff]
  %v3215 = vld [vmem:[%s3204 + $0x50] sm:$0xff]
  %v3216 = vld [vmem:[%s3204 + $0x58] sm:$0xff]
  %v3217 = vld [vmem:[%s3204 + $0x60] sm:$0xff]
  %v3218 = vld [vmem:[%s3204 + $0x68] sm:$0xff]
  %v3219 = vld [vmem:[%s3204 + $0x70] sm:$0xff]
  %v3220 = vld [vmem:[%s3204 + $0x78] sm:$0xff]
  %v3221 = vld [vmem:[%s3204 + $0x80] sm:$0xff]
  %v3222 = vld [vmem:[%s3204 + $0x88] sm:$0xff]
  %v3223 = vld [vmem:[%s3204 + $0x90] sm:$0xff]
  %v3224 = vld [vmem:[%s3204 + $0x98] sm:$0xff]
  %v3225 = vld [vmem:[%s3204 + $0xa0] sm:$0xff]
  %v3226 = vld [vmem:[%s3204 + $0xa8] sm:$0xff]
  %v3227 = vld [vmem:[%s3204 + $0xb0] sm:$0xff]
  %v3228 = vld [vmem:[%s3204 + $0xb8] sm:$0xff]
  %v3229 = vld [vmem:[%s3204 + $0xc0] sm:$0xff]
  %v3230 = vld [vmem:[%s3204 + $0xc8] sm:$0xff]
  %v3231 = vld [vmem:[%s3204 + $0xd0] sm:$0xff]
  %v3232 = vld [vmem:[%s3204 + $0xd8] sm:$0xff]
  %v3233 = vld [vmem:[%s3204 + $0xe0] sm:$0xff]
  %v3234 = vld [vmem:[%s3204 + $0xe8] sm:$0xff]
  %v3235 = vld [vmem:[%s3204 + $0xf0] sm:$0xff]
  %v3236 = vld [vmem:[%s3204 + $0xf8] sm:$0xff]
  %s3237 = scalar_lea.vmem %s5, 16
  %v3238 = vld [vmem:[%s3237] sm:$0xff]
  %v3239 = vld [vmem:[%s3237 + $0x8] sm:$0xff]
  %v3242 = vperm.slane %v3238, 0
  %v3243 = vperm.slane %v3238, 1
  %v3244 = vperm.slane %v3238, 2
  %v3245 = vperm.slane %v3238, 3
  %v3246 = vperm.slane %v3238, 4
  %v3247 = vperm.slane %v3238, 5
  %v3248 = vperm.slane %v3238, 6
  %v3249 = vperm.slane %v3238, 7
  %v3250 = vperm.slane %v3239, 0
  %v3251 = vperm.slane %v3239, 1
  %v3252 = vperm.slane %v3239, 2
  %v3253 = vperm.slane %v3239, 3
  %v3254 = vperm.slane %v3239, 4
  %v3255 = vperm.slane %v3239, 5
  %v3256 = vperm.slane %v3239, 6
  %v3257 = vperm.slane %v3239, 7
  %v3306 = vunpack.c.l.b16 %v3205
  %v3307 = vunpack.c.h.b16 %v3205
  %v3308 = vunpack.c.l.b16 %v3206
  %v3309 = vunpack.c.h.b16 %v3206
  %v3310 = vunpack.c.l.b16 %v3207
  %v3311 = vunpack.c.h.b16 %v3207
  %v3312 = vunpack.c.l.b16 %v3208
  %v3313 = vunpack.c.h.b16 %v3208
  %v3314 = vunpack.c.l.b16 %v3209
  %v3315 = vunpack.c.h.b16 %v3209
  %v3316 = vunpack.c.l.b16 %v3210
  %v3317 = vunpack.c.h.b16 %v3210
  %v3318 = vunpack.c.l.b16 %v3211
  %v3319 = vunpack.c.h.b16 %v3211
  %v3320 = vunpack.c.l.b16 %v3212
  %v3321 = vunpack.c.h.b16 %v3212
  %v3322 = vunpack.c.l.b16 %v3213
  %v3323 = vunpack.c.h.b16 %v3213
  %v3324 = vunpack.c.l.b16 %v3214
  %v3325 = vunpack.c.h.b16 %v3214
  %v3326 = vunpack.c.l.b16 %v3215
  %v3327 = vunpack.c.h.b16 %v3215
  %v3328 = vunpack.c.l.b16 %v3216
  %v3329 = vunpack.c.h.b16 %v3216
  %v3330 = vunpack.c.l.b16 %v3217
  %v3331 = vunpack.c.h.b16 %v3217
  %v3332 = vunpack.c.l.b16 %v3218
  %v3333 = vunpack.c.h.b16 %v3218
  %v3334 = vunpack.c.l.b16 %v3219
  %v3335 = vunpack.c.h.b16 %v3219
  %v3336 = vunpack.c.l.b16 %v3220
  %v3337 = vunpack.c.h.b16 %v3220
  %v3338 = vunpack.c.l.b16 %v3221
  %v3339 = vunpack.c.h.b16 %v3221
  %v3340 = vunpack.c.l.b16 %v3222
  %v3341 = vunpack.c.h.b16 %v3222
  %v3342 = vunpack.c.l.b16 %v3223
  %v3343 = vunpack.c.h.b16 %v3223
  %v3344 = vunpack.c.l.b16 %v3224
  %v3345 = vunpack.c.h.b16 %v3224
  %v3346 = vunpack.c.l.b16 %v3225
  %v3347 = vunpack.c.h.b16 %v3225
  %v3348 = vunpack.c.l.b16 %v3226
  %v3349 = vunpack.c.h.b16 %v3226
  %v3350 = vunpack.c.l.b16 %v3227
  %v3351 = vunpack.c.h.b16 %v3227
  %v3352 = vunpack.c.l.b16 %v3228
  %v3353 = vunpack.c.h.b16 %v3228
  %v3354 = vunpack.c.l.b16 %v3229
  %v3355 = vunpack.c.h.b16 %v3229
  %v3356 = vunpack.c.l.b16 %v3230
  %v3357 = vunpack.c.h.b16 %v3230
  %v3358 = vunpack.c.l.b16 %v3231
  %v3359 = vunpack.c.h.b16 %v3231
  %v3360 = vunpack.c.l.b16 %v3232
  %v3361 = vunpack.c.h.b16 %v3232
  %v3362 = vunpack.c.l.b16 %v3233
  %v3363 = vunpack.c.h.b16 %v3233
  %v3364 = vunpack.c.l.b16 %v3234
  %v3365 = vunpack.c.h.b16 %v3234
  %v3366 = vunpack.c.l.b16 %v3235
  %v3367 = vunpack.c.h.b16 %v3235
  %v3368 = vunpack.c.l.b16 %v3236
  %v3369 = vunpack.c.h.b16 %v3236
  %v3370 = vpack.c.b16 %v3322, %v3306
  %v3371 = vpack.c.b16 %v3323, %v3307
  %v3372 = vpack.c.b16 %v3324, %v3308
  %v3373 = vpack.c.b16 %v3325, %v3309
  %v3374 = vpack.c.b16 %v3326, %v3310
  %v3375 = vpack.c.b16 %v3327, %v3311
  %v3376 = vpack.c.b16 %v3328, %v3312
  %v3377 = vpack.c.b16 %v3329, %v3313
  %v3378 = vpack.c.b16 %v3330, %v3314
  %v3379 = vpack.c.b16 %v3331, %v3315
  %v3380 = vpack.c.b16 %v3332, %v3316
  %v3381 = vpack.c.b16 %v3333, %v3317
  %v3382 = vpack.c.b16 %v3334, %v3318
  %v3383 = vpack.c.b16 %v3335, %v3319
  %v3384 = vpack.c.b16 %v3336, %v3320
  %v3385 = vpack.c.b16 %v3337, %v3321
  %v3386 = vpack.c.b16 %v3354, %v3338
  %v3387 = vpack.c.b16 %v3355, %v3339
  %v3388 = vpack.c.b16 %v3356, %v3340
  %v3389 = vpack.c.b16 %v3357, %v3341
  %v3390 = vpack.c.b16 %v3358, %v3342
  %v3391 = vpack.c.b16 %v3359, %v3343
  %v3392 = vpack.c.b16 %v3360, %v3344
  %v3393 = vpack.c.b16 %v3361, %v3345
  %v3394 = vpack.c.b16 %v3362, %v3346
  %v3395 = vpack.c.b16 %v3363, %v3347
  %v3396 = vpack.c.b16 %v3364, %v3348
  %v3397 = vpack.c.b16 %v3365, %v3349
  %v3398 = vpack.c.b16 %v3366, %v3350
  %v3399 = vpack.c.b16 %v3367, %v3351
  %v3400 = vpack.c.b16 %v3368, %v3352
  %v3401 = vpack.c.b16 %v3369, %v3353
  %v3435 = vsel %vm57, %v3203, 0
  %3437 = vmatpush.bf16.msra.mxu0 0
  %3438 = vmatpush.bf16.msra.mxu0 0
  %3439 = vmatpush.bf16.msra.mxu0 0
  %3440 = vmatpush.bf16.msra.mxu0 0
  %3441 = vmatpush.bf16.msra.mxu0 0
  %3442 = vmatpush.bf16.msra.mxu0 0
  %3443 = vmatpush.bf16.msra.mxu0 %v3386
  %3444 = vmatpush.bf16.msra.mxu0 %v3370
  %3445 = vmatmul.bf16.gmra.mxu0 %v3435
  %v3446 = vpop.f32.mrf.mxu0
  %v3447 = vadd.f32 %v3242, %v3446
  %v3448 = vpop.f32.mrf.mxu0
  %v3449 = vadd.f32 %v3242, %v3448
  %3450 = vdwg.mxu0
  %3451 = vmatpush.bf16.msra.mxu0 0
  %3452 = vmatpush.bf16.msra.mxu0 0
  %3453 = vmatpush.bf16.msra.mxu0 0
  %3454 = vmatpush.bf16.msra.mxu0 0
  %3455 = vmatpush.bf16.msra.mxu0 0
  %3456 = vmatpush.bf16.msra.mxu0 0
  %3457 = vmatpush.bf16.msra.mxu0 %v3387
  %3458 = vmatpush.bf16.msra.mxu0 %v3371
  %3459 = vmatmul.bf16.gmra.mxu0 %v3435
  %v3460 = vpop.f32.mrf.mxu0
  %v3461 = vadd.f32 %v3243, %v3460
  %v3462 = vpop.f32.mrf.mxu0
  %v3463 = vadd.f32 %v3243, %v3462
  %3464 = vdwg.mxu0
  %3465 = vmatpush.bf16.msra.mxu0 0
  %3466 = vmatpush.bf16.msra.mxu0 0
  %3467 = vmatpush.bf16.msra.mxu0 0
  %3468 = vmatpush.bf16.msra.mxu0 0
  %3469 = vmatpush.bf16.msra.mxu0 0
  %3470 = vmatpush.bf16.msra.mxu0 0
  %3471 = vmatpush.bf16.msra.mxu0 %v3388
  %3472 = vmatpush.bf16.msra.mxu0 %v3372
  %3473 = vmatmul.bf16.gmra.mxu0 %v3435
  %v3474 = vpop.f32.mrf.mxu0
  %v3475 = vadd.f32 %v3244, %v3474
  %v3476 = vpop.f32.mrf.mxu0
  %v3477 = vadd.f32 %v3244, %v3476
  %3478 = vdwg.mxu0
  %3479 = vmatpush.bf16.msra.mxu0 0
  %3480 = vmatpush.bf16.msra.mxu0 0
  %3481 = vmatpush.bf16.msra.mxu0 0
  %3482 = vmatpush.bf16.msra.mxu0 0
  %3483 = vmatpush.bf16.msra.mxu0 0
  %3484 = vmatpush.bf16.msra.mxu0 0
  %3485 = vmatpush.bf16.msra.mxu0 %v3389
  %3486 = vmatpush.bf16.msra.mxu0 %v3373
  %3487 = vmatmul.bf16.gmra.mxu0 %v3435
  %v3488 = vpop.f32.mrf.mxu0
  %v3489 = vadd.f32 %v3245, %v3488
  %v3490 = vpop.f32.mrf.mxu0
  %v3491 = vadd.f32 %v3245, %v3490
  %3492 = vdwg.mxu0
  %3493 = vmatpush.bf16.msra.mxu0 0
  %3494 = vmatpush.bf16.msra.mxu0 0
  %3495 = vmatpush.bf16.msra.mxu0 0
  %3496 = vmatpush.bf16.msra.mxu0 0
  %3497 = vmatpush.bf16.msra.mxu0 0
  %3498 = vmatpush.bf16.msra.mxu0 0
  %3499 = vmatpush.bf16.msra.mxu0 %v3390
  %3500 = vmatpush.bf16.msra.mxu0 %v3374
  %3501 = vmatmul.bf16.gmra.mxu0 %v3435
  %v3502 = vpop.f32.mrf.mxu0
  %v3503 = vadd.f32 %v3246, %v3502
  %v3504 = vpop.f32.mrf.mxu0
  %v3505 = vadd.f32 %v3246, %v3504
  %3506 = vdwg.mxu0
  %3507 = vmatpush.bf16.msra.mxu0 0
  %3508 = vmatpush.bf16.msra.mxu0 0
  %3509 = vmatpush.bf16.msra.mxu0 0
  %3510 = vmatpush.bf16.msra.mxu0 0
  %3511 = vmatpush.bf16.msra.mxu0 0
  %3512 = vmatpush.bf16.msra.mxu0 0
  %3513 = vmatpush.bf16.msra.mxu0 %v3391
  %3514 = vmatpush.bf16.msra.mxu0 %v3375
  %3515 = vmatmul.bf16.gmra.mxu0 %v3435
  %v3516 = vpop.f32.mrf.mxu0
  %v3517 = vadd.f32 %v3247, %v3516
  %v3518 = vpop.f32.mrf.mxu0
  %v3519 = vadd.f32 %v3247, %v3518
  %3520 = vdwg.mxu0
  %3521 = vmatpush.bf16.msra.mxu0 0
  %3522 = vmatpush.bf16.msra.mxu0 0
  %3523 = vmatpush.bf16.msra.mxu0 0
  %3524 = vmatpush.bf16.msra.mxu0 0
  %3525 = vmatpush.bf16.msra.mxu0 0
  %3526 = vmatpush.bf16.msra.mxu0 0
  %3527 = vmatpush.bf16.msra.mxu0 %v3392
  %3528 = vmatpush.bf16.msra.mxu0 %v3376
  %3529 = vmatmul.bf16.gmra.mxu0 %v3435
  %v3530 = vpop.f32.mrf.mxu0
  %v3531 = vadd.f32 %v3248, %v3530
  %v3532 = vpop.f32.mrf.mxu0
  %v3533 = vadd.f32 %v3248, %v3532
  %3534 = vdwg.mxu0
  %3535 = vmatpush.bf16.msra.mxu0 0
  %3536 = vmatpush.bf16.msra.mxu0 0
  %3537 = vmatpush.bf16.msra.mxu0 0
  %3538 = vmatpush.bf16.msra.mxu0 0
  %3539 = vmatpush.bf16.msra.mxu0 0
  %3540 = vmatpush.bf16.msra.mxu0 0
  %3541 = vmatpush.bf16.msra.mxu0 %v3393
  %3542 = vmatpush.bf16.msra.mxu0 %v3377
  %3543 = vmatmul.bf16.gmra.mxu0 %v3435
  %v3544 = vpop.f32.mrf.mxu0
  %v3545 = vadd.f32 %v3249, %v3544
  %v3546 = vpop.f32.mrf.mxu0
  %v3547 = vadd.f32 %v3249, %v3546
  %3548 = vdwg.mxu0
  %3549 = vmatpush.bf16.msra.mxu0 0
  %3550 = vmatpush.bf16.msra.mxu0 0
  %3551 = vmatpush.bf16.msra.mxu0 0
  %3552 = vmatpush.bf16.msra.mxu0 0
  %3553 = vmatpush.bf16.msra.mxu0 0
  %3554 = vmatpush.bf16.msra.mxu0 0
  %3555 = vmatpush.bf16.msra.mxu0 %v3394
  %3556 = vmatpush.bf16.msra.mxu0 %v3378
  %3557 = vmatmul.bf16.gmra.mxu0 %v3435
  %v3558 = vpop.f32.mrf.mxu0
  %v3559 = vadd.f32 %v3250, %v3558
  %v3560 = vpop.f32.mrf.mxu0
  %v3561 = vadd.f32 %v3250, %v3560
  %3562 = vdwg.mxu0
  %3563 = vmatpush.bf16.msra.mxu0 0
  %3564 = vmatpush.bf16.msra.mxu0 0
  %3565 = vmatpush.bf16.msra.mxu0 0
  %3566 = vmatpush.bf16.msra.mxu0 0
  %3567 = vmatpush.bf16.msra.mxu0 0
  %3568 = vmatpush.bf16.msra.mxu0 0
  %3569 = vmatpush.bf16.msra.mxu0 %v3395
  %3570 = vmatpush.bf16.msra.mxu0 %v3379
  %3571 = vmatmul.bf16.gmra.mxu0 %v3435
  %v3572 = vpop.f32.mrf.mxu0
  %v3573 = vadd.f32 %v3251, %v3572
  %v3574 = vpop.f32.mrf.mxu0
  %v3575 = vadd.f32 %v3251, %v3574
  %3576 = vdwg.mxu0
  %3577 = vmatpush.bf16.msra.mxu0 0
  %3578 = vmatpush.bf16.msra.mxu0 0
  %3579 = vmatpush.bf16.msra.mxu0 0
  %3580 = vmatpush.bf16.msra.mxu0 0
  %3581 = vmatpush.bf16.msra.mxu0 0
  %3582 = vmatpush.bf16.msra.mxu0 0
  %3583 = vmatpush.bf16.msra.mxu0 %v3396
  %3584 = vmatpush.bf16.msra.mxu0 %v3380
  %3585 = vmatmul.bf16.gmra.mxu0 %v3435
  %v3586 = vpop.f32.mrf.mxu0
  %v3587 = vadd.f32 %v3252, %v3586
  %v3588 = vpop.f32.mrf.mxu0
  %v3589 = vadd.f32 %v3252, %v3588
  %3590 = vdwg.mxu0
  %3591 = vmatpush.bf16.msra.mxu0 0
  %3592 = vmatpush.bf16.msra.mxu0 0
  %3593 = vmatpush.bf16.msra.mxu0 0
  %3594 = vmatpush.bf16.msra.mxu0 0
  %3595 = vmatpush.bf16.msra.mxu0 0
  %3596 = vmatpush.bf16.msra.mxu0 0
  %3597 = vmatpush.bf16.msra.mxu0 %v3397
  %3598 = vmatpush.bf16.msra.mxu0 %v3381
  %3599 = vmatmul.bf16.gmra.mxu0 %v3435
  %v3600 = vpop.f32.mrf.mxu0
  %v3601 = vadd.f32 %v3253, %v3600
  %v3602 = vpop.f32.mrf.mxu0
  %v3603 = vadd.f32 %v3253, %v3602
  %3604 = vdwg.mxu0
  %3605 = vmatpush.bf16.msra.mxu0 0
  %3606 = vmatpush.bf16.msra.mxu0 0
  %3607 = vmatpush.bf16.msra.mxu0 0
  %3608 = vmatpush.bf16.msra.mxu0 0
  %3609 = vmatpush.bf16.msra.mxu0 0
  %3610 = vmatpush.bf16.msra.mxu0 0
  %3611 = vmatpush.bf16.msra.mxu0 %v3398
  %3612 = vmatpush.bf16.msra.mxu0 %v3382
  %3613 = vmatmul.bf16.gmra.mxu0 %v3435
  %v3614 = vpop.f32.mrf.mxu0
  %v3615 = vadd.f32 %v3254, %v3614
  %v3616 = vpop.f32.mrf.mxu0
  %v3617 = vadd.f32 %v3254, %v3616
  %3618 = vdwg.mxu0
  %3619 = vmatpush.bf16.msra.mxu0 0
  %3620 = vmatpush.bf16.msra.mxu0 0
  %3621 = vmatpush.bf16.msra.mxu0 0
  %3622 = vmatpush.bf16.msra.mxu0 0
  %3623 = vmatpush.bf16.msra.mxu0 0
  %3624 = vmatpush.bf16.msra.mxu0 0
  %3625 = vmatpush.bf16.msra.mxu0 %v3399
  %3626 = vmatpush.bf16.msra.mxu0 %v3383
  %3627 = vmatmul.bf16.gmra.mxu0 %v3435
  %v3628 = vpop.f32.mrf.mxu0
  %v3629 = vadd.f32 %v3255, %v3628
  %v3630 = vpop.f32.mrf.mxu0
  %v3631 = vadd.f32 %v3255, %v3630
  %3632 = vdwg.mxu0
  %3633 = vmatpush.bf16.msra.mxu0 0
  %3634 = vmatpush.bf16.msra.mxu0 0
  %3635 = vmatpush.bf16.msra.mxu0 0
  %3636 = vmatpush.bf16.msra.mxu0 0
  %3637 = vmatpush.bf16.msra.mxu0 0
  %3638 = vmatpush.bf16.msra.mxu0 0
  %3639 = vmatpush.bf16.msra.mxu0 %v3400
  %3640 = vmatpush.bf16.msra.mxu0 %v3384
  %3641 = vmatmul.bf16.gmra.mxu0 %v3435
  %v3642 = vpop.f32.mrf.mxu0
  %v3643 = vadd.f32 %v3256, %v3642
  %v3644 = vpop.f32.mrf.mxu0
  %v3645 = vadd.f32 %v3256, %v3644
  %3646 = vdwg.mxu0
  %3647 = vmatpush.bf16.msra.mxu0 0
  %3648 = vmatpush.bf16.msra.mxu0 0
  %3649 = vmatpush.bf16.msra.mxu0 0
  %3650 = vmatpush.bf16.msra.mxu0 0
  %3651 = vmatpush.bf16.msra.mxu0 0
  %3652 = vmatpush.bf16.msra.mxu0 0
  %3653 = vmatpush.bf16.msra.mxu0 %v3401
  %3654 = vmatpush.bf16.msra.mxu0 %v3385
  %3655 = vmatmul.bf16.gmra.mxu0 %v3435
  %v3656 = vpop.f32.mrf.mxu0
  %v3657 = vadd.f32 %v3257, %v3656
  %v3658 = vpop.f32.mrf.mxu0
  %v3659 = vadd.f32 %v3257, %v3658
  %3660 = vdwg.mxu0
  %v3661 = vmax.f32 %v3447, 0.0
  %v3662 = vmax.f32 %v3461, 0.0
  %v3663 = vmax.f32 %v3475, 0.0
  %v3664 = vmax.f32 %v3489, 0.0
  %v3665 = vmax.f32 %v3503, 0.0
  %v3666 = vmax.f32 %v3517, 0.0
  %v3667 = vmax.f32 %v3531, 0.0
  %v3668 = vmax.f32 %v3545, 0.0
  %v3669 = vmax.f32 %v3559, 0.0
  %v3670 = vmax.f32 %v3573, 0.0
  %v3671 = vmax.f32 %v3587, 0.0
  %v3672 = vmax.f32 %v3601, 0.0
  %v3673 = vmax.f32 %v3615, 0.0
  %v3674 = vmax.f32 %v3629, 0.0
  %v3675 = vmax.f32 %v3643, 0.0
  %v3676 = vmax.f32 %v3657, 0.0
  %v3677 = vmax.f32 %v3449, 0.0
  %v3678 = vmax.f32 %v3463, 0.0
  %v3679 = vmax.f32 %v3477, 0.0
  %v3680 = vmax.f32 %v3491, 0.0
  %v3681 = vmax.f32 %v3505, 0.0
  %v3682 = vmax.f32 %v3519, 0.0
  %v3683 = vmax.f32 %v3533, 0.0
  %v3684 = vmax.f32 %v3547, 0.0
  %v3685 = vmax.f32 %v3561, 0.0
  %v3686 = vmax.f32 %v3575, 0.0
  %v3687 = vmax.f32 %v3589, 0.0
  %v3688 = vmax.f32 %v3603, 0.0
  %v3689 = vmax.f32 %v3617, 0.0
  %v3690 = vmax.f32 %v3631, 0.0
  %v3691 = vmax.f32 %v3645, 0.0
  %v3692 = vmax.f32 %v3659, 0.0
  %v3693 = vpack.c.bf16 %v3677, %v3661
  %v3694 = vpack.c.bf16 %v3678, %v3662
  %v3695 = vpack.c.bf16 %v3679, %v3663
  %v3696 = vpack.c.bf16 %v3680, %v3664
  %v3697 = vpack.c.bf16 %v3681, %v3665
  %v3698 = vpack.c.bf16 %v3682, %v3666
  %v3699 = vpack.c.bf16 %v3683, %v3667
  %v3700 = vpack.c.bf16 %v3684, %v3668
  %v3701 = vpack.c.bf16 %v3685, %v3669
  %v3702 = vpack.c.bf16 %v3686, %v3670
  %v3703 = vpack.c.bf16 %v3687, %v3671
  %v3704 = vpack.c.bf16 %v3688, %v3672
  %v3705 = vpack.c.bf16 %v3689, %v3673
  %v3706 = vpack.c.bf16 %v3690, %v3674
  %v3707 = vpack.c.bf16 %v3691, %v3675
  %v3708 = vpack.c.bf16 %v3692, %v3676
  %s3709 = scalar_lea.vmem %s6, 1024
  %v3710 = vld [vmem:[%s3709] sm:$0xf]
  %v3711 = vld [vmem:[%s3709 + $0x4] sm:$0xf]
  %v3712 = vld [vmem:[%s3709 + $0x8] sm:$0xf]
  %v3713 = vld [vmem:[%s3709 + $0xc] sm:$0xf]
  %v3714 = vld [vmem:[%s3709 + $0x10] sm:$0xf]
  %v3715 = vld [vmem:[%s3709 + $0x14] sm:$0xf]
  %v3716 = vld [vmem:[%s3709 + $0x18] sm:$0xf]
  %v3717 = vld [vmem:[%s3709 + $0x1c] sm:$0xf]
  %v3718 = vld [vmem:[%s3709 + $0x20] sm:$0xf]
  %v3719 = vld [vmem:[%s3709 + $0x24] sm:$0xf]
  %v3720 = vld [vmem:[%s3709 + $0x28] sm:$0xf]
  %v3721 = vld [vmem:[%s3709 + $0x2c] sm:$0xf]
  %v3722 = vld [vmem:[%s3709 + $0x30] sm:$0xf]
  %v3723 = vld [vmem:[%s3709 + $0x34] sm:$0xf]
  %v3724 = vld [vmem:[%s3709 + $0x38] sm:$0xf]
  %v3725 = vld [vmem:[%s3709 + $0x3c] sm:$0xf]
  %v3726 = vld [vmem:[%s3709 + $0x40] sm:$0xf]
  %v3727 = vld [vmem:[%s3709 + $0x44] sm:$0xf]
  %v3728 = vld [vmem:[%s3709 + $0x48] sm:$0xf]
  %v3729 = vld [vmem:[%s3709 + $0x4c] sm:$0xf]
  %v3730 = vld [vmem:[%s3709 + $0x50] sm:$0xf]
  %v3731 = vld [vmem:[%s3709 + $0x54] sm:$0xf]
  %v3732 = vld [vmem:[%s3709 + $0x58] sm:$0xf]
  %v3733 = vld [vmem:[%s3709 + $0x5c] sm:$0xf]
  %v3734 = vld [vmem:[%s3709 + $0x60] sm:$0xf]
  %v3735 = vld [vmem:[%s3709 + $0x64] sm:$0xf]
  %v3736 = vld [vmem:[%s3709 + $0x68] sm:$0xf]
  %v3737 = vld [vmem:[%s3709 + $0x6c] sm:$0xf]
  %v3738 = vld [vmem:[%s3709 + $0x70] sm:$0xf]
  %v3739 = vld [vmem:[%s3709 + $0x74] sm:$0xf]
  %v3740 = vld [vmem:[%s3709 + $0x78] sm:$0xf]
  %v3741 = vld [vmem:[%s3709 + $0x7c] sm:$0xf]
  %v3742 = vld [vmem:[%s3709 + $0x80] sm:$0xf]
  %v3743 = vld [vmem:[%s3709 + $0x84] sm:$0xf]
  %v3744 = vld [vmem:[%s3709 + $0x88] sm:$0xf]
  %v3745 = vld [vmem:[%s3709 + $0x8c] sm:$0xf]
  %v3746 = vld [vmem:[%s3709 + $0x90] sm:$0xf]
  %v3747 = vld [vmem:[%s3709 + $0x94] sm:$0xf]
  %v3748 = vld [vmem:[%s3709 + $0x98] sm:$0xf]
  %v3749 = vld [vmem:[%s3709 + $0x9c] sm:$0xf]
  %v3750 = vld [vmem:[%s3709 + $0xa0] sm:$0xf]
  %v3751 = vld [vmem:[%s3709 + $0xa4] sm:$0xf]
  %v3752 = vld [vmem:[%s3709 + $0xa8] sm:$0xf]
  %v3753 = vld [vmem:[%s3709 + $0xac] sm:$0xf]
  %v3754 = vld [vmem:[%s3709 + $0xb0] sm:$0xf]
  %v3755 = vld [vmem:[%s3709 + $0xb4] sm:$0xf]
  %v3756 = vld [vmem:[%s3709 + $0xb8] sm:$0xf]
  %v3757 = vld [vmem:[%s3709 + $0xbc] sm:$0xf]
  %v3758 = vld [vmem:[%s3709 + $0xc0] sm:$0xf]
  %v3759 = vld [vmem:[%s3709 + $0xc4] sm:$0xf]
  %v3760 = vld [vmem:[%s3709 + $0xc8] sm:$0xf]
  %v3761 = vld [vmem:[%s3709 + $0xcc] sm:$0xf]
  %v3762 = vld [vmem:[%s3709 + $0xd0] sm:$0xf]
  %v3763 = vld [vmem:[%s3709 + $0xd4] sm:$0xf]
  %v3764 = vld [vmem:[%s3709 + $0xd8] sm:$0xf]
  %v3765 = vld [vmem:[%s3709 + $0xdc] sm:$0xf]
  %v3766 = vld [vmem:[%s3709 + $0xe0] sm:$0xf]
  %v3767 = vld [vmem:[%s3709 + $0xe4] sm:$0xf]
  %v3768 = vld [vmem:[%s3709 + $0xe8] sm:$0xf]
  %v3769 = vld [vmem:[%s3709 + $0xec] sm:$0xf]
  %v3770 = vld [vmem:[%s3709 + $0xf0] sm:$0xf]
  %v3771 = vld [vmem:[%s3709 + $0xf4] sm:$0xf]
  %v3772 = vld [vmem:[%s3709 + $0xf8] sm:$0xf]
  %v3773 = vld [vmem:[%s3709 + $0xfc] sm:$0xf]
  %v3774 = vld [vmem:[%s3709 + $0x100] sm:$0xf]
  %v3775 = vld [vmem:[%s3709 + $0x104] sm:$0xf]
  %v3776 = vld [vmem:[%s3709 + $0x108] sm:$0xf]
  %v3777 = vld [vmem:[%s3709 + $0x10c] sm:$0xf]
  %v3778 = vld [vmem:[%s3709 + $0x110] sm:$0xf]
  %v3779 = vld [vmem:[%s3709 + $0x114] sm:$0xf]
  %v3780 = vld [vmem:[%s3709 + $0x118] sm:$0xf]
  %v3781 = vld [vmem:[%s3709 + $0x11c] sm:$0xf]
  %v3782 = vld [vmem:[%s3709 + $0x120] sm:$0xf]
  %v3783 = vld [vmem:[%s3709 + $0x124] sm:$0xf]
  %v3784 = vld [vmem:[%s3709 + $0x128] sm:$0xf]
  %v3785 = vld [vmem:[%s3709 + $0x12c] sm:$0xf]
  %v3786 = vld [vmem:[%s3709 + $0x130] sm:$0xf]
  %v3787 = vld [vmem:[%s3709 + $0x134] sm:$0xf]
  %v3788 = vld [vmem:[%s3709 + $0x138] sm:$0xf]
  %v3789 = vld [vmem:[%s3709 + $0x13c] sm:$0xf]
  %v3790 = vld [vmem:[%s3709 + $0x140] sm:$0xf]
  %v3791 = vld [vmem:[%s3709 + $0x144] sm:$0xf]
  %v3792 = vld [vmem:[%s3709 + $0x148] sm:$0xf]
  %v3793 = vld [vmem:[%s3709 + $0x14c] sm:$0xf]
  %v3794 = vld [vmem:[%s3709 + $0x150] sm:$0xf]
  %v3795 = vld [vmem:[%s3709 + $0x154] sm:$0xf]
  %v3796 = vld [vmem:[%s3709 + $0x158] sm:$0xf]
  %v3797 = vld [vmem:[%s3709 + $0x15c] sm:$0xf]
  %v3798 = vld [vmem:[%s3709 + $0x160] sm:$0xf]
  %v3799 = vld [vmem:[%s3709 + $0x164] sm:$0xf]
  %v3800 = vld [vmem:[%s3709 + $0x168] sm:$0xf]
  %v3801 = vld [vmem:[%s3709 + $0x16c] sm:$0xf]
  %v3802 = vld [vmem:[%s3709 + $0x170] sm:$0xf]
  %v3803 = vld [vmem:[%s3709 + $0x174] sm:$0xf]
  %v3804 = vld [vmem:[%s3709 + $0x178] sm:$0xf]
  %v3805 = vld [vmem:[%s3709 + $0x17c] sm:$0xf]
  %v3806 = vld [vmem:[%s3709 + $0x180] sm:$0xf]
  %v3807 = vld [vmem:[%s3709 + $0x184] sm:$0xf]
  %v3808 = vld [vmem:[%s3709 + $0x188] sm:$0xf]
  %v3809 = vld [vmem:[%s3709 + $0x18c] sm:$0xf]
  %v3810 = vld [vmem:[%s3709 + $0x190] sm:$0xf]
  %v3811 = vld [vmem:[%s3709 + $0x194] sm:$0xf]
  %v3812 = vld [vmem:[%s3709 + $0x198] sm:$0xf]
  %v3813 = vld [vmem:[%s3709 + $0x19c] sm:$0xf]
  %v3814 = vld [vmem:[%s3709 + $0x1a0] sm:$0xf]
  %v3815 = vld [vmem:[%s3709 + $0x1a4] sm:$0xf]
  %v3816 = vld [vmem:[%s3709 + $0x1a8] sm:$0xf]
  %v3817 = vld [vmem:[%s3709 + $0x1ac] sm:$0xf]
  %v3818 = vld [vmem:[%s3709 + $0x1b0] sm:$0xf]
  %v3819 = vld [vmem:[%s3709 + $0x1b4] sm:$0xf]
  %v3820 = vld [vmem:[%s3709 + $0x1b8] sm:$0xf]
  %v3821 = vld [vmem:[%s3709 + $0x1bc] sm:$0xf]
  %v3822 = vld [vmem:[%s3709 + $0x1c0] sm:$0xf]
  %v3823 = vld [vmem:[%s3709 + $0x1c4] sm:$0xf]
  %v3824 = vld [vmem:[%s3709 + $0x1c8] sm:$0xf]
  %v3825 = vld [vmem:[%s3709 + $0x1cc] sm:$0xf]
  %v3826 = vld [vmem:[%s3709 + $0x1d0] sm:$0xf]
  %v3827 = vld [vmem:[%s3709 + $0x1d4] sm:$0xf]
  %v3828 = vld [vmem:[%s3709 + $0x1d8] sm:$0xf]
  %v3829 = vld [vmem:[%s3709 + $0x1dc] sm:$0xf]
  %v3830 = vld [vmem:[%s3709 + $0x1e0] sm:$0xf]
  %v3831 = vld [vmem:[%s3709 + $0x1e4] sm:$0xf]
  %v3832 = vld [vmem:[%s3709 + $0x1e8] sm:$0xf]
  %v3833 = vld [vmem:[%s3709 + $0x1ec] sm:$0xf]
  %v3834 = vld [vmem:[%s3709 + $0x1f0] sm:$0xf]
  %v3835 = vld [vmem:[%s3709 + $0x1f4] sm:$0xf]
  %v3836 = vld [vmem:[%s3709 + $0x1f8] sm:$0xf]
  %v3837 = vld [vmem:[%s3709 + $0x1fc] sm:$0xf]
  %v3838 = vld [vmem:[%s3709 + $0x200] sm:$0xf]
  %v3839 = vld [vmem:[%s3709 + $0x204] sm:$0xf]
  %v3840 = vld [vmem:[%s3709 + $0x208] sm:$0xf]
  %v3841 = vld [vmem:[%s3709 + $0x20c] sm:$0xf]
  %v3842 = vld [vmem:[%s3709 + $0x210] sm:$0xf]
  %v3843 = vld [vmem:[%s3709 + $0x214] sm:$0xf]
  %v3844 = vld [vmem:[%s3709 + $0x218] sm:$0xf]
  %v3845 = vld [vmem:[%s3709 + $0x21c] sm:$0xf]
  %v3846 = vld [vmem:[%s3709 + $0x220] sm:$0xf]
  %v3847 = vld [vmem:[%s3709 + $0x224] sm:$0xf]
  %v3848 = vld [vmem:[%s3709 + $0x228] sm:$0xf]
  %v3849 = vld [vmem:[%s3709 + $0x22c] sm:$0xf]
  %v3850 = vld [vmem:[%s3709 + $0x230] sm:$0xf]
  %v3851 = vld [vmem:[%s3709 + $0x234] sm:$0xf]
  %v3852 = vld [vmem:[%s3709 + $0x238] sm:$0xf]
  %v3853 = vld [vmem:[%s3709 + $0x23c] sm:$0xf]
  %v3854 = vld [vmem:[%s3709 + $0x240] sm:$0xf]
  %v3855 = vld [vmem:[%s3709 + $0x244] sm:$0xf]
  %v3856 = vld [vmem:[%s3709 + $0x248] sm:$0xf]
  %v3857 = vld [vmem:[%s3709 + $0x24c] sm:$0xf]
  %v3858 = vld [vmem:[%s3709 + $0x250] sm:$0xf]
  %v3859 = vld [vmem:[%s3709 + $0x254] sm:$0xf]
  %v3860 = vld [vmem:[%s3709 + $0x258] sm:$0xf]
  %v3861 = vld [vmem:[%s3709 + $0x25c] sm:$0xf]
  %v3862 = vld [vmem:[%s3709 + $0x260] sm:$0xf]
  %v3863 = vld [vmem:[%s3709 + $0x264] sm:$0xf]
  %v3864 = vld [vmem:[%s3709 + $0x268] sm:$0xf]
  %v3865 = vld [vmem:[%s3709 + $0x26c] sm:$0xf]
  %v3866 = vld [vmem:[%s3709 + $0x270] sm:$0xf]
  %v3867 = vld [vmem:[%s3709 + $0x274] sm:$0xf]
  %v3868 = vld [vmem:[%s3709 + $0x278] sm:$0xf]
  %v3869 = vld [vmem:[%s3709 + $0x27c] sm:$0xf]
  %v3870 = vld [vmem:[%s3709 + $0x280] sm:$0xf]
  %v3871 = vld [vmem:[%s3709 + $0x284] sm:$0xf]
  %v3872 = vld [vmem:[%s3709 + $0x288] sm:$0xf]
  %v3873 = vld [vmem:[%s3709 + $0x28c] sm:$0xf]
  %v3874 = vld [vmem:[%s3709 + $0x290] sm:$0xf]
  %v3875 = vld [vmem:[%s3709 + $0x294] sm:$0xf]
  %v3876 = vld [vmem:[%s3709 + $0x298] sm:$0xf]
  %v3877 = vld [vmem:[%s3709 + $0x29c] sm:$0xf]
  %v3878 = vld [vmem:[%s3709 + $0x2a0] sm:$0xf]
  %v3879 = vld [vmem:[%s3709 + $0x2a4] sm:$0xf]
  %v3880 = vld [vmem:[%s3709 + $0x2a8] sm:$0xf]
  %v3881 = vld [vmem:[%s3709 + $0x2ac] sm:$0xf]
  %v3882 = vld [vmem:[%s3709 + $0x2b0] sm:$0xf]
  %v3883 = vld [vmem:[%s3709 + $0x2b4] sm:$0xf]
  %v3884 = vld [vmem:[%s3709 + $0x2b8] sm:$0xf]
  %v3885 = vld [vmem:[%s3709 + $0x2bc] sm:$0xf]
  %v3886 = vld [vmem:[%s3709 + $0x2c0] sm:$0xf]
  %v3887 = vld [vmem:[%s3709 + $0x2c4] sm:$0xf]
  %v3888 = vld [vmem:[%s3709 + $0x2c8] sm:$0xf]
  %v3889 = vld [vmem:[%s3709 + $0x2cc] sm:$0xf]
  %v3890 = vld [vmem:[%s3709 + $0x2d0] sm:$0xf]
  %v3891 = vld [vmem:[%s3709 + $0x2d4] sm:$0xf]
  %v3892 = vld [vmem:[%s3709 + $0x2d8] sm:$0xf]
  %v3893 = vld [vmem:[%s3709 + $0x2dc] sm:$0xf]
  %v3894 = vld [vmem:[%s3709 + $0x2e0] sm:$0xf]
  %v3895 = vld [vmem:[%s3709 + $0x2e4] sm:$0xf]
  %v3896 = vld [vmem:[%s3709 + $0x2e8] sm:$0xf]
  %v3897 = vld [vmem:[%s3709 + $0x2ec] sm:$0xf]
  %v3898 = vld [vmem:[%s3709 + $0x2f0] sm:$0xf]
  %v3899 = vld [vmem:[%s3709 + $0x2f4] sm:$0xf]
  %v3900 = vld [vmem:[%s3709 + $0x2f8] sm:$0xf]
  %v3901 = vld [vmem:[%s3709 + $0x2fc] sm:$0xf]
  %v3902 = vld [vmem:[%s3709 + $0x300] sm:$0xf]
  %v3903 = vld [vmem:[%s3709 + $0x304] sm:$0xf]
  %v3904 = vld [vmem:[%s3709 + $0x308] sm:$0xf]
  %v3905 = vld [vmem:[%s3709 + $0x30c] sm:$0xf]
  %v3906 = vld [vmem:[%s3709 + $0x310] sm:$0xf]
  %v3907 = vld [vmem:[%s3709 + $0x314] sm:$0xf]
  %v3908 = vld [vmem:[%s3709 + $0x318] sm:$0xf]
  %v3909 = vld [vmem:[%s3709 + $0x31c] sm:$0xf]
  %v3910 = vld [vmem:[%s3709 + $0x320] sm:$0xf]
  %v3911 = vld [vmem:[%s3709 + $0x324] sm:$0xf]
  %v3912 = vld [vmem:[%s3709 + $0x328] sm:$0xf]
  %v3913 = vld [vmem:[%s3709 + $0x32c] sm:$0xf]
  %v3914 = vld [vmem:[%s3709 + $0x330] sm:$0xf]
  %v3915 = vld [vmem:[%s3709 + $0x334] sm:$0xf]
  %v3916 = vld [vmem:[%s3709 + $0x338] sm:$0xf]
  %v3917 = vld [vmem:[%s3709 + $0x33c] sm:$0xf]
  %v3918 = vld [vmem:[%s3709 + $0x340] sm:$0xf]
  %v3919 = vld [vmem:[%s3709 + $0x344] sm:$0xf]
  %v3920 = vld [vmem:[%s3709 + $0x348] sm:$0xf]
  %v3921 = vld [vmem:[%s3709 + $0x34c] sm:$0xf]
  %v3922 = vld [vmem:[%s3709 + $0x350] sm:$0xf]
  %v3923 = vld [vmem:[%s3709 + $0x354] sm:$0xf]
  %v3924 = vld [vmem:[%s3709 + $0x358] sm:$0xf]
  %v3925 = vld [vmem:[%s3709 + $0x35c] sm:$0xf]
  %v3926 = vld [vmem:[%s3709 + $0x360] sm:$0xf]
  %v3927 = vld [vmem:[%s3709 + $0x364] sm:$0xf]
  %v3928 = vld [vmem:[%s3709 + $0x368] sm:$0xf]
  %v3929 = vld [vmem:[%s3709 + $0x36c] sm:$0xf]
  %v3930 = vld [vmem:[%s3709 + $0x370] sm:$0xf]
  %v3931 = vld [vmem:[%s3709 + $0x374] sm:$0xf]
  %v3932 = vld [vmem:[%s3709 + $0x378] sm:$0xf]
  %v3933 = vld [vmem:[%s3709 + $0x37c] sm:$0xf]
  %v3934 = vld [vmem:[%s3709 + $0x380] sm:$0xf]
  %v3935 = vld [vmem:[%s3709 + $0x384] sm:$0xf]
  %v3936 = vld [vmem:[%s3709 + $0x388] sm:$0xf]
  %v3937 = vld [vmem:[%s3709 + $0x38c] sm:$0xf]
  %v3938 = vld [vmem:[%s3709 + $0x390] sm:$0xf]
  %v3939 = vld [vmem:[%s3709 + $0x394] sm:$0xf]
  %v3940 = vld [vmem:[%s3709 + $0x398] sm:$0xf]
  %v3941 = vld [vmem:[%s3709 + $0x39c] sm:$0xf]
  %v3942 = vld [vmem:[%s3709 + $0x3a0] sm:$0xf]
  %v3943 = vld [vmem:[%s3709 + $0x3a4] sm:$0xf]
  %v3944 = vld [vmem:[%s3709 + $0x3a8] sm:$0xf]
  %v3945 = vld [vmem:[%s3709 + $0x3ac] sm:$0xf]
  %v3946 = vld [vmem:[%s3709 + $0x3b0] sm:$0xf]
  %v3947 = vld [vmem:[%s3709 + $0x3b4] sm:$0xf]
  %v3948 = vld [vmem:[%s3709 + $0x3b8] sm:$0xf]
  %v3949 = vld [vmem:[%s3709 + $0x3bc] sm:$0xf]
  %v3950 = vld [vmem:[%s3709 + $0x3c0] sm:$0xf]
  %v3951 = vld [vmem:[%s3709 + $0x3c4] sm:$0xf]
  %v3952 = vld [vmem:[%s3709 + $0x3c8] sm:$0xf]
  %v3953 = vld [vmem:[%s3709 + $0x3cc] sm:$0xf]
  %v3954 = vld [vmem:[%s3709 + $0x3d0] sm:$0xf]
  %v3955 = vld [vmem:[%s3709 + $0x3d4] sm:$0xf]
  %v3956 = vld [vmem:[%s3709 + $0x3d8] sm:$0xf]
  %v3957 = vld [vmem:[%s3709 + $0x3dc] sm:$0xf]
  %v3958 = vld [vmem:[%s3709 + $0x3e0] sm:$0xf]
  %v3959 = vld [vmem:[%s3709 + $0x3e4] sm:$0xf]
  %v3960 = vld [vmem:[%s3709 + $0x3e8] sm:$0xf]
  %v3961 = vld [vmem:[%s3709 + $0x3ec] sm:$0xf]
  %v3962 = vld [vmem:[%s3709 + $0x3f0] sm:$0xf]
  %v3963 = vld [vmem:[%s3709 + $0x3f4] sm:$0xf]
  %v3964 = vld [vmem:[%s3709 + $0x3f8] sm:$0xf]
  %v3965 = vld [vmem:[%s3709 + $0x3fc] sm:$0xf]
  %v3966 = vperm.slane %v2526, 1
  %v4223 = vunpack.c.l.b16 %v3710
  %v4224 = vunpack.c.l.b16 %v3711
  %v4225 = vunpack.c.l.b16 %v3712
  %v4226 = vunpack.c.l.b16 %v3713
  %v4227 = vunpack.c.l.b16 %v3714
  %v4228 = vunpack.c.l.b16 %v3715
  %v4229 = vunpack.c.l.b16 %v3716
  %v4230 = vunpack.c.l.b16 %v3717
  %v4231 = vunpack.c.l.b16 %v3718
  %v4232 = vunpack.c.l.b16 %v3719
  %v4233 = vunpack.c.l.b16 %v3720
  %v4234 = vunpack.c.l.b16 %v3721
  %v4235 = vunpack.c.l.b16 %v3722
  %v4236 = vunpack.c.l.b16 %v3723
  %v4237 = vunpack.c.l.b16 %v3724
  %v4238 = vunpack.c.l.b16 %v3725
  %v4239 = vunpack.c.l.b16 %v3726
  %v4240 = vunpack.c.l.b16 %v3727
  %v4241 = vunpack.c.l.b16 %v3728
  %v4242 = vunpack.c.l.b16 %v3729
  %v4243 = vunpack.c.l.b16 %v3730
  %v4244 = vunpack.c.l.b16 %v3731
  %v4245 = vunpack.c.l.b16 %v3732
  %v4246 = vunpack.c.l.b16 %v3733
  %v4247 = vunpack.c.l.b16 %v3734
  %v4248 = vunpack.c.l.b16 %v3735
  %v4249 = vunpack.c.l.b16 %v3736
  %v4250 = vunpack.c.l.b16 %v3737
  %v4251 = vunpack.c.l.b16 %v3738
  %v4252 = vunpack.c.l.b16 %v3739
  %v4253 = vunpack.c.l.b16 %v3740
  %v4254 = vunpack.c.l.b16 %v3741
  %v4255 = vunpack.c.l.b16 %v3742
  %v4256 = vunpack.c.l.b16 %v3743
  %v4257 = vunpack.c.l.b16 %v3744
  %v4258 = vunpack.c.l.b16 %v3745
  %v4259 = vunpack.c.l.b16 %v3746
  %v4260 = vunpack.c.l.b16 %v3747
  %v4261 = vunpack.c.l.b16 %v3748
  %v4262 = vunpack.c.l.b16 %v3749
  %v4263 = vunpack.c.l.b16 %v3750
  %v4264 = vunpack.c.l.b16 %v3751
  %v4265 = vunpack.c.l.b16 %v3752
  %v4266 = vunpack.c.l.b16 %v3753
  %v4267 = vunpack.c.l.b16 %v3754
  %v4268 = vunpack.c.l.b16 %v3755
  %v4269 = vunpack.c.l.b16 %v3756
  %v4270 = vunpack.c.l.b16 %v3757
  %v4271 = vunpack.c.l.b16 %v3758
  %v4272 = vunpack.c.l.b16 %v3759
  %v4273 = vunpack.c.l.b16 %v3760
  %v4274 = vunpack.c.l.b16 %v3761
  %v4275 = vunpack.c.l.b16 %v3762
  %v4276 = vunpack.c.l.b16 %v3763
  %v4277 = vunpack.c.l.b16 %v3764
  %v4278 = vunpack.c.l.b16 %v3765
  %v4279 = vunpack.c.l.b16 %v3766
  %v4280 = vunpack.c.l.b16 %v3767
  %v4281 = vunpack.c.l.b16 %v3768
  %v4282 = vunpack.c.l.b16 %v3769
  %v4283 = vunpack.c.l.b16 %v3770
  %v4284 = vunpack.c.l.b16 %v3771
  %v4285 = vunpack.c.l.b16 %v3772
  %v4286 = vunpack.c.l.b16 %v3773
  %v4287 = vunpack.c.l.b16 %v3774
  %v4288 = vunpack.c.l.b16 %v3775
  %v4289 = vunpack.c.l.b16 %v3776
  %v4290 = vunpack.c.l.b16 %v3777
  %v4291 = vunpack.c.l.b16 %v3778
  %v4292 = vunpack.c.l.b16 %v3779
  %v4293 = vunpack.c.l.b16 %v3780
  %v4294 = vunpack.c.l.b16 %v3781
  %v4295 = vunpack.c.l.b16 %v3782
  %v4296 = vunpack.c.l.b16 %v3783
  %v4297 = vunpack.c.l.b16 %v3784
  %v4298 = vunpack.c.l.b16 %v3785
  %v4299 = vunpack.c.l.b16 %v3786
  %v4300 = vunpack.c.l.b16 %v3787
  %v4301 = vunpack.c.l.b16 %v3788
  %v4302 = vunpack.c.l.b16 %v3789
  %v4303 = vunpack.c.l.b16 %v3790
  %v4304 = vunpack.c.l.b16 %v3791
  %v4305 = vunpack.c.l.b16 %v3792
  %v4306 = vunpack.c.l.b16 %v3793
  %v4307 = vunpack.c.l.b16 %v3794
  %v4308 = vunpack.c.l.b16 %v3795
  %v4309 = vunpack.c.l.b16 %v3796
  %v4310 = vunpack.c.l.b16 %v3797
  %v4311 = vunpack.c.l.b16 %v3798
  %v4312 = vunpack.c.l.b16 %v3799
  %v4313 = vunpack.c.l.b16 %v3800
  %v4314 = vunpack.c.l.b16 %v3801
  %v4315 = vunpack.c.l.b16 %v3802
  %v4316 = vunpack.c.l.b16 %v3803
  %v4317 = vunpack.c.l.b16 %v3804
  %v4318 = vunpack.c.l.b16 %v3805
  %v4319 = vunpack.c.l.b16 %v3806
  %v4320 = vunpack.c.l.b16 %v3807
  %v4321 = vunpack.c.l.b16 %v3808
  %v4322 = vunpack.c.l.b16 %v3809
  %v4323 = vunpack.c.l.b16 %v3810
  %v4324 = vunpack.c.l.b16 %v3811
  %v4325 = vunpack.c.l.b16 %v3812
  %v4326 = vunpack.c.l.b16 %v3813
  %v4327 = vunpack.c.l.b16 %v3814
  %v4328 = vunpack.c.l.b16 %v3815
  %v4329 = vunpack.c.l.b16 %v3816
  %v4330 = vunpack.c.l.b16 %v3817
  %v4331 = vunpack.c.l.b16 %v3818
  %v4332 = vunpack.c.l.b16 %v3819
  %v4333 = vunpack.c.l.b16 %v3820
  %v4334 = vunpack.c.l.b16 %v3821
  %v4335 = vunpack.c.l.b16 %v3822
  %v4336 = vunpack.c.l.b16 %v3823
  %v4337 = vunpack.c.l.b16 %v3824
  %v4338 = vunpack.c.l.b16 %v3825
  %v4339 = vunpack.c.l.b16 %v3826
  %v4340 = vunpack.c.l.b16 %v3827
  %v4341 = vunpack.c.l.b16 %v3828
  %v4342 = vunpack.c.l.b16 %v3829
  %v4343 = vunpack.c.l.b16 %v3830
  %v4344 = vunpack.c.l.b16 %v3831
  %v4345 = vunpack.c.l.b16 %v3832
  %v4346 = vunpack.c.l.b16 %v3833
  %v4347 = vunpack.c.l.b16 %v3834
  %v4348 = vunpack.c.l.b16 %v3835
  %v4349 = vunpack.c.l.b16 %v3836
  %v4350 = vunpack.c.l.b16 %v3837
  %v4351 = vunpack.c.l.b16 %v3838
  %v4352 = vunpack.c.l.b16 %v3839
  %v4353 = vunpack.c.l.b16 %v3840
  %v4354 = vunpack.c.l.b16 %v3841
  %v4355 = vunpack.c.l.b16 %v3842
  %v4356 = vunpack.c.l.b16 %v3843
  %v4357 = vunpack.c.l.b16 %v3844
  %v4358 = vunpack.c.l.b16 %v3845
  %v4359 = vunpack.c.l.b16 %v3846
  %v4360 = vunpack.c.l.b16 %v3847
  %v4361 = vunpack.c.l.b16 %v3848
  %v4362 = vunpack.c.l.b16 %v3849
  %v4363 = vunpack.c.l.b16 %v3850
  %v4364 = vunpack.c.l.b16 %v3851
  %v4365 = vunpack.c.l.b16 %v3852
  %v4366 = vunpack.c.l.b16 %v3853
  %v4367 = vunpack.c.l.b16 %v3854
  %v4368 = vunpack.c.l.b16 %v3855
  %v4369 = vunpack.c.l.b16 %v3856
  %v4370 = vunpack.c.l.b16 %v3857
  %v4371 = vunpack.c.l.b16 %v3858
  %v4372 = vunpack.c.l.b16 %v3859
  %v4373 = vunpack.c.l.b16 %v3860
  %v4374 = vunpack.c.l.b16 %v3861
  %v4375 = vunpack.c.l.b16 %v3862
  %v4376 = vunpack.c.l.b16 %v3863
  %v4377 = vunpack.c.l.b16 %v3864
  %v4378 = vunpack.c.l.b16 %v3865
  %v4379 = vunpack.c.l.b16 %v3866
  %v4380 = vunpack.c.l.b16 %v3867
  %v4381 = vunpack.c.l.b16 %v3868
  %v4382 = vunpack.c.l.b16 %v3869
  %v4383 = vunpack.c.l.b16 %v3870
  %v4384 = vunpack.c.l.b16 %v3871
  %v4385 = vunpack.c.l.b16 %v3872
  %v4386 = vunpack.c.l.b16 %v3873
  %v4387 = vunpack.c.l.b16 %v3874
  %v4388 = vunpack.c.l.b16 %v3875
  %v4389 = vunpack.c.l.b16 %v3876
  %v4390 = vunpack.c.l.b16 %v3877
  %v4391 = vunpack.c.l.b16 %v3878
  %v4392 = vunpack.c.l.b16 %v3879
  %v4393 = vunpack.c.l.b16 %v3880
  %v4394 = vunpack.c.l.b16 %v3881
  %v4395 = vunpack.c.l.b16 %v3882
  %v4396 = vunpack.c.l.b16 %v3883
  %v4397 = vunpack.c.l.b16 %v3884
  %v4398 = vunpack.c.l.b16 %v3885
  %v4399 = vunpack.c.l.b16 %v3886
  %v4400 = vunpack.c.l.b16 %v3887
  %v4401 = vunpack.c.l.b16 %v3888
  %v4402 = vunpack.c.l.b16 %v3889
  %v4403 = vunpack.c.l.b16 %v3890
  %v4404 = vunpack.c.l.b16 %v3891
  %v4405 = vunpack.c.l.b16 %v3892
  %v4406 = vunpack.c.l.b16 %v3893
  %v4407 = vunpack.c.l.b16 %v3894
  %v4408 = vunpack.c.l.b16 %v3895
  %v4409 = vunpack.c.l.b16 %v3896
  %v4410 = vunpack.c.l.b16 %v3897
  %v4411 = vunpack.c.l.b16 %v3898
  %v4412 = vunpack.c.l.b16 %v3899
  %v4413 = vunpack.c.l.b16 %v3900
  %v4414 = vunpack.c.l.b16 %v3901
  %v4415 = vunpack.c.l.b16 %v3902
  %v4416 = vunpack.c.l.b16 %v3903
  %v4417 = vunpack.c.l.b16 %v3904
  %v4418 = vunpack.c.l.b16 %v3905
  %v4419 = vunpack.c.l.b16 %v3906
  %v4420 = vunpack.c.l.b16 %v3907
  %v4421 = vunpack.c.l.b16 %v3908
  %v4422 = vunpack.c.l.b16 %v3909
  %v4423 = vunpack.c.l.b16 %v3910
  %v4424 = vunpack.c.l.b16 %v3911
  %v4425 = vunpack.c.l.b16 %v3912
  %v4426 = vunpack.c.l.b16 %v3913
  %v4427 = vunpack.c.l.b16 %v3914
  %v4428 = vunpack.c.l.b16 %v3915
  %v4429 = vunpack.c.l.b16 %v3916
  %v4430 = vunpack.c.l.b16 %v3917
  %v4431 = vunpack.c.l.b16 %v3918
  %v4432 = vunpack.c.l.b16 %v3919
  %v4433 = vunpack.c.l.b16 %v3920
  %v4434 = vunpack.c.l.b16 %v3921
  %v4435 = vunpack.c.l.b16 %v3922
  %v4436 = vunpack.c.l.b16 %v3923
  %v4437 = vunpack.c.l.b16 %v3924
  %v4438 = vunpack.c.l.b16 %v3925
  %v4439 = vunpack.c.l.b16 %v3926
  %v4440 = vunpack.c.l.b16 %v3927
  %v4441 = vunpack.c.l.b16 %v3928
  %v4442 = vunpack.c.l.b16 %v3929
  %v4443 = vunpack.c.l.b16 %v3930
  %v4444 = vunpack.c.l.b16 %v3931
  %v4445 = vunpack.c.l.b16 %v3932
  %v4446 = vunpack.c.l.b16 %v3933
  %v4447 = vunpack.c.l.b16 %v3934
  %v4448 = vunpack.c.l.b16 %v3935
  %v4449 = vunpack.c.l.b16 %v3936
  %v4450 = vunpack.c.l.b16 %v3937
  %v4451 = vunpack.c.l.b16 %v3938
  %v4452 = vunpack.c.l.b16 %v3939
  %v4453 = vunpack.c.l.b16 %v3940
  %v4454 = vunpack.c.l.b16 %v3941
  %v4455 = vunpack.c.l.b16 %v3942
  %v4456 = vunpack.c.l.b16 %v3943
  %v4457 = vunpack.c.l.b16 %v3944
  %v4458 = vunpack.c.l.b16 %v3945
  %v4459 = vunpack.c.l.b16 %v3946
  %v4460 = vunpack.c.l.b16 %v3947
  %v4461 = vunpack.c.l.b16 %v3948
  %v4462 = vunpack.c.l.b16 %v3949
  %v4463 = vunpack.c.l.b16 %v3950
  %v4464 = vunpack.c.l.b16 %v3951
  %v4465 = vunpack.c.l.b16 %v3952
  %v4466 = vunpack.c.l.b16 %v3953
  %v4467 = vunpack.c.l.b16 %v3954
  %v4468 = vunpack.c.l.b16 %v3955
  %v4469 = vunpack.c.l.b16 %v3956
  %v4470 = vunpack.c.l.b16 %v3957
  %v4471 = vunpack.c.l.b16 %v3958
  %v4472 = vunpack.c.l.b16 %v3959
  %v4473 = vunpack.c.l.b16 %v3960
  %v4474 = vunpack.c.l.b16 %v3961
  %v4475 = vunpack.c.l.b16 %v3962
  %v4476 = vunpack.c.l.b16 %v3963
  %v4477 = vunpack.c.l.b16 %v3964
  %v4478 = vunpack.c.l.b16 %v3965
  %v4479 = vpack.c.b16 %v4224, %v4223
  %v4480 = vpack.c.b16 %v4226, %v4225
  %v4481 = vpack.c.b16 %v4228, %v4227
  %v4482 = vpack.c.b16 %v4230, %v4229
  %v4483 = vpack.c.b16 %v4232, %v4231
  %v4484 = vpack.c.b16 %v4234, %v4233
  %v4485 = vpack.c.b16 %v4236, %v4235
  %v4486 = vpack.c.b16 %v4238, %v4237
  %v4487 = vpack.c.b16 %v4240, %v4239
  %v4488 = vpack.c.b16 %v4242, %v4241
  %v4489 = vpack.c.b16 %v4244, %v4243
  %v4490 = vpack.c.b16 %v4246, %v4245
  %v4491 = vpack.c.b16 %v4248, %v4247
  %v4492 = vpack.c.b16 %v4250, %v4249
  %v4493 = vpack.c.b16 %v4252, %v4251
  %v4494 = vpack.c.b16 %v4254, %v4253
  %v4495 = vpack.c.b16 %v4256, %v4255
  %v4496 = vpack.c.b16 %v4258, %v4257
  %v4497 = vpack.c.b16 %v4260, %v4259
  %v4498 = vpack.c.b16 %v4262, %v4261
  %v4499 = vpack.c.b16 %v4264, %v4263
  %v4500 = vpack.c.b16 %v4266, %v4265
  %v4501 = vpack.c.b16 %v4268, %v4267
  %v4502 = vpack.c.b16 %v4270, %v4269
  %v4503 = vpack.c.b16 %v4272, %v4271
  %v4504 = vpack.c.b16 %v4274, %v4273
  %v4505 = vpack.c.b16 %v4276, %v4275
  %v4506 = vpack.c.b16 %v4278, %v4277
  %v4507 = vpack.c.b16 %v4280, %v4279
  %v4508 = vpack.c.b16 %v4282, %v4281
  %v4509 = vpack.c.b16 %v4284, %v4283
  %v4510 = vpack.c.b16 %v4286, %v4285
  %v4511 = vpack.c.b16 %v4288, %v4287
  %v4512 = vpack.c.b16 %v4290, %v4289
  %v4513 = vpack.c.b16 %v4292, %v4291
  %v4514 = vpack.c.b16 %v4294, %v4293
  %v4515 = vpack.c.b16 %v4296, %v4295
  %v4516 = vpack.c.b16 %v4298, %v4297
  %v4517 = vpack.c.b16 %v4300, %v4299
  %v4518 = vpack.c.b16 %v4302, %v4301
  %v4519 = vpack.c.b16 %v4304, %v4303
  %v4520 = vpack.c.b16 %v4306, %v4305
  %v4521 = vpack.c.b16 %v4308, %v4307
  %v4522 = vpack.c.b16 %v4310, %v4309
  %v4523 = vpack.c.b16 %v4312, %v4311
  %v4524 = vpack.c.b16 %v4314, %v4313
  %v4525 = vpack.c.b16 %v4316, %v4315
  %v4526 = vpack.c.b16 %v4318, %v4317
  %v4527 = vpack.c.b16 %v4320, %v4319
  %v4528 = vpack.c.b16 %v4322, %v4321
  %v4529 = vpack.c.b16 %v4324, %v4323
  %v4530 = vpack.c.b16 %v4326, %v4325
  %v4531 = vpack.c.b16 %v4328, %v4327
  %v4532 = vpack.c.b16 %v4330, %v4329
  %v4533 = vpack.c.b16 %v4332, %v4331
  %v4534 = vpack.c.b16 %v4334, %v4333
  %v4535 = vpack.c.b16 %v4336, %v4335
  %v4536 = vpack.c.b16 %v4338, %v4337
  %v4537 = vpack.c.b16 %v4340, %v4339
  %v4538 = vpack.c.b16 %v4342, %v4341
  %v4539 = vpack.c.b16 %v4344, %v4343
  %v4540 = vpack.c.b16 %v4346, %v4345
  %v4541 = vpack.c.b16 %v4348, %v4347
  %v4542 = vpack.c.b16 %v4350, %v4349
  %v4543 = vpack.c.b16 %v4352, %v4351
  %v4544 = vpack.c.b16 %v4354, %v4353
  %v4545 = vpack.c.b16 %v4356, %v4355
  %v4546 = vpack.c.b16 %v4358, %v4357
  %v4547 = vpack.c.b16 %v4360, %v4359
  %v4548 = vpack.c.b16 %v4362, %v4361
  %v4549 = vpack.c.b16 %v4364, %v4363
  %v4550 = vpack.c.b16 %v4366, %v4365
  %v4551 = vpack.c.b16 %v4368, %v4367
  %v4552 = vpack.c.b16 %v4370, %v4369
  %v4553 = vpack.c.b16 %v4372, %v4371
  %v4554 = vpack.c.b16 %v4374, %v4373
  %v4555 = vpack.c.b16 %v4376, %v4375
  %v4556 = vpack.c.b16 %v4378, %v4377
  %v4557 = vpack.c.b16 %v4380, %v4379
  %v4558 = vpack.c.b16 %v4382, %v4381
  %v4559 = vpack.c.b16 %v4384, %v4383
  %v4560 = vpack.c.b16 %v4386, %v4385
  %v4561 = vpack.c.b16 %v4388, %v4387
  %v4562 = vpack.c.b16 %v4390, %v4389
  %v4563 = vpack.c.b16 %v4392, %v4391
  %v4564 = vpack.c.b16 %v4394, %v4393
  %v4565 = vpack.c.b16 %v4396, %v4395
  %v4566 = vpack.c.b16 %v4398, %v4397
  %v4567 = vpack.c.b16 %v4400, %v4399
  %v4568 = vpack.c.b16 %v4402, %v4401
  %v4569 = vpack.c.b16 %v4404, %v4403
  %v4570 = vpack.c.b16 %v4406, %v4405
  %v4571 = vpack.c.b16 %v4408, %v4407
  %v4572 = vpack.c.b16 %v4410, %v4409
  %v4573 = vpack.c.b16 %v4412, %v4411
  %v4574 = vpack.c.b16 %v4414, %v4413
  %v4575 = vpack.c.b16 %v4416, %v4415
  %v4576 = vpack.c.b16 %v4418, %v4417
  %v4577 = vpack.c.b16 %v4420, %v4419
  %v4578 = vpack.c.b16 %v4422, %v4421
  %v4579 = vpack.c.b16 %v4424, %v4423
  %v4580 = vpack.c.b16 %v4426, %v4425
  %v4581 = vpack.c.b16 %v4428, %v4427
  %v4582 = vpack.c.b16 %v4430, %v4429
  %v4583 = vpack.c.b16 %v4432, %v4431
  %v4584 = vpack.c.b16 %v4434, %v4433
  %v4585 = vpack.c.b16 %v4436, %v4435
  %v4586 = vpack.c.b16 %v4438, %v4437
  %v4587 = vpack.c.b16 %v4440, %v4439
  %v4588 = vpack.c.b16 %v4442, %v4441
  %v4589 = vpack.c.b16 %v4444, %v4443
  %v4590 = vpack.c.b16 %v4446, %v4445
  %v4591 = vpack.c.b16 %v4448, %v4447
  %v4592 = vpack.c.b16 %v4450, %v4449
  %v4593 = vpack.c.b16 %v4452, %v4451
  %v4594 = vpack.c.b16 %v4454, %v4453
  %v4595 = vpack.c.b16 %v4456, %v4455
  %v4596 = vpack.c.b16 %v4458, %v4457
  %v4597 = vpack.c.b16 %v4460, %v4459
  %v4598 = vpack.c.b16 %v4462, %v4461
  %v4599 = vpack.c.b16 %v4464, %v4463
  %v4600 = vpack.c.b16 %v4466, %v4465
  %v4601 = vpack.c.b16 %v4468, %v4467
  %v4602 = vpack.c.b16 %v4470, %v4469
  %v4603 = vpack.c.b16 %v4472, %v4471
  %v4604 = vpack.c.b16 %v4474, %v4473
  %v4605 = vpack.c.b16 %v4476, %v4475
  %v4606 = vpack.c.b16 %v4478, %v4477
  %4735 = vmatpush.bf16.msra.mxu0 %v4486
  %4736 = vmatpush.bf16.msra.mxu0 %v4485
  %4737 = vmatpush.bf16.msra.mxu0 %v4484
  %4738 = vmatpush.bf16.msra.mxu0 %v4483
  %4739 = vmatpush.bf16.msra.mxu0 %v4482
  %4740 = vmatpush.bf16.msra.mxu0 %v4481
  %4741 = vmatpush.bf16.msra.mxu0 %v4480
  %4742 = vmatpush.bf16.msra.mxu0 %v4479
  %4743 = vmatmul.bf16.gmra.mxu0 %v3693
  %v4744 = vpop.f32.mrf.mxu0
  %v4745 = vadd.f32 %v3966, %v4744
  %v4746 = vpop.f32.mrf.mxu0
  %v4747 = vadd.f32 %v3966, %v4746
  %4748 = vdwg.mxu0
  %4749 = vmatpush.bf16.msra.mxu0 %v4494
  %4750 = vmatpush.bf16.msra.mxu0 %v4493
  %4751 = vmatpush.bf16.msra.mxu0 %v4492
  %4752 = vmatpush.bf16.msra.mxu0 %v4491
  %4753 = vmatpush.bf16.msra.mxu0 %v4490
  %4754 = vmatpush.bf16.msra.mxu0 %v4489
  %4755 = vmatpush.bf16.msra.mxu0 %v4488
  %4756 = vmatpush.bf16.msra.mxu0 %v4487
  %4757 = vmatmul.bf16.gmra.mxu0 %v3694
  %v4758 = vpop.f32.mrf.mxu0
  %v4759 = vadd.f32 %v4745, %v4758
  %v4760 = vpop.f32.mrf.mxu0
  %v4761 = vadd.f32 %v4747, %v4760
  %4762 = vdwg.mxu0
  %4763 = vmatpush.bf16.msra.mxu0 %v4502
  %4764 = vmatpush.bf16.msra.mxu0 %v4501
  %4765 = vmatpush.bf16.msra.mxu0 %v4500
  %4766 = vmatpush.bf16.msra.mxu0 %v4499
  %4767 = vmatpush.bf16.msra.mxu0 %v4498
  %4768 = vmatpush.bf16.msra.mxu0 %v4497
  %4769 = vmatpush.bf16.msra.mxu0 %v4496
  %4770 = vmatpush.bf16.msra.mxu0 %v4495
  %4771 = vmatmul.bf16.gmra.mxu0 %v3695
  %v4772 = vpop.f32.mrf.mxu0
  %v4773 = vadd.f32 %v4759, %v4772
  %v4774 = vpop.f32.mrf.mxu0
  %v4775 = vadd.f32 %v4761, %v4774
  %4776 = vdwg.mxu0
  %4777 = vmatpush.bf16.msra.mxu0 %v4510
  %4778 = vmatpush.bf16.msra.mxu0 %v4509
  %4779 = vmatpush.bf16.msra.mxu0 %v4508
  %4780 = vmatpush.bf16.msra.mxu0 %v4507
  %4781 = vmatpush.bf16.msra.mxu0 %v4506
  %4782 = vmatpush.bf16.msra.mxu0 %v4505
  %4783 = vmatpush.bf16.msra.mxu0 %v4504
  %4784 = vmatpush.bf16.msra.mxu0 %v4503
  %4785 = vmatmul.bf16.gmra.mxu0 %v3696
  %v4786 = vpop.f32.mrf.mxu0
  %v4787 = vadd.f32 %v4773, %v4786
  %v4788 = vpop.f32.mrf.mxu0
  %v4789 = vadd.f32 %v4775, %v4788
  %4790 = vdwg.mxu0
  %4791 = vmatpush.bf16.msra.mxu0 %v4518
  %4792 = vmatpush.bf16.msra.mxu0 %v4517
  %4793 = vmatpush.bf16.msra.mxu0 %v4516
  %4794 = vmatpush.bf16.msra.mxu0 %v4515
  %4795 = vmatpush.bf16.msra.mxu0 %v4514
  %4796 = vmatpush.bf16.msra.mxu0 %v4513
  %4797 = vmatpush.bf16.msra.mxu0 %v4512
  %4798 = vmatpush.bf16.msra.mxu0 %v4511
  %4799 = vmatmul.bf16.gmra.mxu0 %v3697
  %v4800 = vpop.f32.mrf.mxu0
  %v4801 = vadd.f32 %v4787, %v4800
  %v4802 = vpop.f32.mrf.mxu0
  %v4803 = vadd.f32 %v4789, %v4802
  %4804 = vdwg.mxu0
  %4805 = vmatpush.bf16.msra.mxu0 %v4526
  %4806 = vmatpush.bf16.msra.mxu0 %v4525
  %4807 = vmatpush.bf16.msra.mxu0 %v4524
  %4808 = vmatpush.bf16.msra.mxu0 %v4523
  %4809 = vmatpush.bf16.msra.mxu0 %v4522
  %4810 = vmatpush.bf16.msra.mxu0 %v4521
  %4811 = vmatpush.bf16.msra.mxu0 %v4520
  %4812 = vmatpush.bf16.msra.mxu0 %v4519
  %4813 = vmatmul.bf16.gmra.mxu0 %v3698
  %v4814 = vpop.f32.mrf.mxu0
  %v4815 = vadd.f32 %v4801, %v4814
  %v4816 = vpop.f32.mrf.mxu0
  %v4817 = vadd.f32 %v4803, %v4816
  %4818 = vdwg.mxu0
  %4819 = vmatpush.bf16.msra.mxu0 %v4534
  %4820 = vmatpush.bf16.msra.mxu0 %v4533
  %4821 = vmatpush.bf16.msra.mxu0 %v4532
  %4822 = vmatpush.bf16.msra.mxu0 %v4531
  %4823 = vmatpush.bf16.msra.mxu0 %v4530
  %4824 = vmatpush.bf16.msra.mxu0 %v4529
  %4825 = vmatpush.bf16.msra.mxu0 %v4528
  %4826 = vmatpush.bf16.msra.mxu0 %v4527
  %4827 = vmatmul.bf16.gmra.mxu0 %v3699
  %v4828 = vpop.f32.mrf.mxu0
  %v4829 = vadd.f32 %v4815, %v4828
  %v4830 = vpop.f32.mrf.mxu0
  %v4831 = vadd.f32 %v4817, %v4830
  %4832 = vdwg.mxu0
  %4833 = vmatpush.bf16.msra.mxu0 %v4542
  %4834 = vmatpush.bf16.msra.mxu0 %v4541
  %4835 = vmatpush.bf16.msra.mxu0 %v4540
  %4836 = vmatpush.bf16.msra.mxu0 %v4539
  %4837 = vmatpush.bf16.msra.mxu0 %v4538
  %4838 = vmatpush.bf16.msra.mxu0 %v4537
  %4839 = vmatpush.bf16.msra.mxu0 %v4536
  %4840 = vmatpush.bf16.msra.mxu0 %v4535
  %4841 = vmatmul.bf16.gmra.mxu0 %v3700
  %v4842 = vpop.f32.mrf.mxu0
  %v4843 = vadd.f32 %v4829, %v4842
  %v4844 = vpop.f32.mrf.mxu0
  %v4845 = vadd.f32 %v4831, %v4844
  %4846 = vdwg.mxu0
  %4847 = vmatpush.bf16.msra.mxu0 %v4550
  %4848 = vmatpush.bf16.msra.mxu0 %v4549
  %4849 = vmatpush.bf16.msra.mxu0 %v4548
  %4850 = vmatpush.bf16.msra.mxu0 %v4547
  %4851 = vmatpush.bf16.msra.mxu0 %v4546
  %4852 = vmatpush.bf16.msra.mxu0 %v4545
  %4853 = vmatpush.bf16.msra.mxu0 %v4544
  %4854 = vmatpush.bf16.msra.mxu0 %v4543
  %4855 = vmatmul.bf16.gmra.mxu0 %v3701
  %v4856 = vpop.f32.mrf.mxu0
  %v4857 = vadd.f32 %v4843, %v4856
  %v4858 = vpop.f32.mrf.mxu0
  %v4859 = vadd.f32 %v4845, %v4858
  %4860 = vdwg.mxu0
  %4861 = vmatpush.bf16.msra.mxu0 %v4558
  %4862 = vmatpush.bf16.msra.mxu0 %v4557
  %4863 = vmatpush.bf16.msra.mxu0 %v4556
  %4864 = vmatpush.bf16.msra.mxu0 %v4555
  %4865 = vmatpush.bf16.msra.mxu0 %v4554
  %4866 = vmatpush.bf16.msra.mxu0 %v4553
  %4867 = vmatpush.bf16.msra.mxu0 %v4552
  %4868 = vmatpush.bf16.msra.mxu0 %v4551
  %4869 = vmatmul.bf16.gmra.mxu0 %v3702
  %v4870 = vpop.f32.mrf.mxu0
  %v4871 = vadd.f32 %v4857, %v4870
  %v4872 = vpop.f32.mrf.mxu0
  %v4873 = vadd.f32 %v4859, %v4872
  %4874 = vdwg.mxu0
  %4875 = vmatpush.bf16.msra.mxu0 %v4566
  %4876 = vmatpush.bf16.msra.mxu0 %v4565
  %4877 = vmatpush.bf16.msra.mxu0 %v4564
  %4878 = vmatpush.bf16.msra.mxu0 %v4563
  %4879 = vmatpush.bf16.msra.mxu0 %v4562
  %4880 = vmatpush.bf16.msra.mxu0 %v4561
  %4881 = vmatpush.bf16.msra.mxu0 %v4560
  %4882 = vmatpush.bf16.msra.mxu0 %v4559
  %4883 = vmatmul.bf16.gmra.mxu0 %v3703
  %v4884 = vpop.f32.mrf.mxu0
  %v4885 = vadd.f32 %v4871, %v4884
  %v4886 = vpop.f32.mrf.mxu0
  %v4887 = vadd.f32 %v4873, %v4886
  %4888 = vdwg.mxu0
  %4889 = vmatpush.bf16.msra.mxu0 %v4574
  %4890 = vmatpush.bf16.msra.mxu0 %v4573
  %4891 = vmatpush.bf16.msra.mxu0 %v4572
  %4892 = vmatpush.bf16.msra.mxu0 %v4571
  %4893 = vmatpush.bf16.msra.mxu0 %v4570
  %4894 = vmatpush.bf16.msra.mxu0 %v4569
  %4895 = vmatpush.bf16.msra.mxu0 %v4568
  %4896 = vmatpush.bf16.msra.mxu0 %v4567
  %4897 = vmatmul.bf16.gmra.mxu0 %v3704
  %v4898 = vpop.f32.mrf.mxu0
  %v4899 = vadd.f32 %v4885, %v4898
  %v4900 = vpop.f32.mrf.mxu0
  %v4901 = vadd.f32 %v4887, %v4900
  %4902 = vdwg.mxu0
  %4903 = vmatpush.bf16.msra.mxu0 %v4582
  %4904 = vmatpush.bf16.msra.mxu0 %v4581
  %4905 = vmatpush.bf16.msra.mxu0 %v4580
  %4906 = vmatpush.bf16.msra.mxu0 %v4579
  %4907 = vmatpush.bf16.msra.mxu0 %v4578
  %4908 = vmatpush.bf16.msra.mxu0 %v4577
  %4909 = vmatpush.bf16.msra.mxu0 %v4576
  %4910 = vmatpush.bf16.msra.mxu0 %v4575
  %4911 = vmatmul.bf16.gmra.mxu0 %v3705
  %v4912 = vpop.f32.mrf.mxu0
  %v4913 = vadd.f32 %v4899, %v4912
  %v4914 = vpop.f32.mrf.mxu0
  %v4915 = vadd.f32 %v4901, %v4914
  %4916 = vdwg.mxu0
  %4917 = vmatpush.bf16.msra.mxu0 %v4590
  %4918 = vmatpush.bf16.msra.mxu0 %v4589
  %4919 = vmatpush.bf16.msra.mxu0 %v4588
  %4920 = vmatpush.bf16.msra.mxu0 %v4587
  %4921 = vmatpush.bf16.msra.mxu0 %v4586
  %4922 = vmatpush.bf16.msra.mxu0 %v4585
  %4923 = vmatpush.bf16.msra.mxu0 %v4584
  %4924 = vmatpush.bf16.msra.mxu0 %v4583
  %4925 = vmatmul.bf16.gmra.mxu0 %v3706
  %v4926 = vpop.f32.mrf.mxu0
  %v4927 = vadd.f32 %v4913, %v4926
  %v4928 = vpop.f32.mrf.mxu0
  %v4929 = vadd.f32 %v4915, %v4928
  %4930 = vdwg.mxu0
  %4931 = vmatpush.bf16.msra.mxu0 %v4598
  %4932 = vmatpush.bf16.msra.mxu0 %v4597
  %4933 = vmatpush.bf16.msra.mxu0 %v4596
  %4934 = vmatpush.bf16.msra.mxu0 %v4595
  %4935 = vmatpush.bf16.msra.mxu0 %v4594
  %4936 = vmatpush.bf16.msra.mxu0 %v4593
  %4937 = vmatpush.bf16.msra.mxu0 %v4592
  %4938 = vmatpush.bf16.msra.mxu0 %v4591
  %4939 = vmatmul.bf16.gmra.mxu0 %v3707
  %v4940 = vpop.f32.mrf.mxu0
  %v4941 = vadd.f32 %v4927, %v4940
  %v4942 = vpop.f32.mrf.mxu0
  %v4943 = vadd.f32 %v4929, %v4942
  %4944 = vdwg.mxu0
  %4945 = vmatpush.bf16.msra.mxu0 %v4606
  %4946 = vmatpush.bf16.msra.mxu0 %v4605
  %4947 = vmatpush.bf16.msra.mxu0 %v4604
  %4948 = vmatpush.bf16.msra.mxu0 %v4603
  %4949 = vmatpush.bf16.msra.mxu0 %v4602
  %4950 = vmatpush.bf16.msra.mxu0 %v4601
  %4951 = vmatpush.bf16.msra.mxu0 %v4600
  %4952 = vmatpush.bf16.msra.mxu0 %v4599
  %4953 = vmatmul.bf16.gmra.mxu0 %v3708
  %v4954 = vpop.f32.mrf.mxu0
  %v4955 = vadd.f32 %v4941, %v4954
  %v4956 = vpop.f32.mrf.mxu0
  %v4957 = vadd.f32 %v4943, %v4956
  %4958 = vdwg.mxu0
  %v4959 = vadd.f32 %v3201, %v4955
  %v4960 = vadd.f32 %v3202, %v4957
  %v4961 = vsel %vm57, %v4959, 0.0
  %4962 = vadd.xlane.f32.xlu0 %v4961
  %v4963 = vpop.xlane.xlu0 %4962
  %v4964 = vsel %vm57, %v4960, 0.0
  %4965 = vadd.xlane.f32.xlu0 %v4964
  %v4966 = vpop.xlane.xlu0 %4965
  %v4967 = vmul.f32 %v4963, %v675
  %v4968 = vmul.f32 %v4966, %v675
  %v4969 = vsub.f32 %v4959, %v4967
  %v4970 = vsub.f32 %v4960, %v4968
  %v4971 = vmul.f32 %v4969, %v4969
  %v4972 = vmul.f32 %v4970, %v4970
  %v4973 = vsel %vm57, %v4971, 0.0
  %4974 = vadd.xlane.f32.xlu0 %v4973
  %v4975 = vpop.xlane.xlu0 %4974
  %v4976 = vsel %vm57, %v4972, 0.0
  %4977 = vadd.xlane.f32.xlu0 %v4976
  %v4978 = vpop.xlane.xlu0 %4977
  %v4979 = vmul.f32 %v4975, %v675
  %v4980 = vmul.f32 %v4978, %v675
  %v4981 = vadd.f32 %v4979, 1e-05
  %v4982 = vadd.f32 %v4980, 1e-05
  %v4983 = vrsqrt.pop %v4981
  %v4984 = vmul.f32 %v4983, %v4981
  %v4985 = vmul.f32 %v4984, %v4983
  %v4986 = vmul.f32 0.5, %v4985
  %v4987 = vsub.f32 1.5, %v4986
  %v4988 = vmul.f32 %v4983, %v4987
  %vm4989 = vweird.f32 %v4981
  %vm4990 = vweird.f32 %v4983
  %vm4991 = vmor %vm4989, %vm4990
  %v4992 = vsel %vm4991, %v4983, %v4988
  %v4993 = vrsqrt.pop %v4982
  %v4994 = vmul.f32 %v4993, %v4982
  %v4995 = vmul.f32 %v4994, %v4993
  %v4996 = vmul.f32 0.5, %v4995
  %v4997 = vsub.f32 1.5, %v4996
  %v4998 = vmul.f32 %v4993, %v4997
  %vm4999 = vweird.f32 %v4982
  %vm5000 = vweird.f32 %v4993
  %vm5001 = vmor %vm4999, %vm5000
  %v5002 = vsel %vm5001, %v4993, %v4998
  %v5003 = vmul.f32 %v4969, %v4992
  %v5004 = vmul.f32 %v4970, %v5002
  %v5005 = vperm.slane %v2526, 4
  %v5006 = vmul.f32 %v5003, %v5005
  %v5007 = vmul.f32 %v5004, %v5005
  %v5008 = vperm.slane %v2526, 5
  %v5009 = vadd.f32 %v5006, %v5008
  %v5010 = vadd.f32 %v5007, %v5008
  %v5011 = vld [vmem:[%s8] sm:$0x3]
  %v5012 = vsel %vm57, %v5009, 0.0
  %5013 = vadd.xlane.f32.xlu0 %v5012
  %v5014 = vpop.xlane.xlu0 %5013
  %v5015 = vsel %vm57, %v5010, 0.0
  %5016 = vadd.xlane.f32.xlu0 %v5015
  %v5017 = vpop.xlane.xlu0 %5016
  %v5018 = vmul.f32 %v5014, %v675
  %v5019 = vmul.f32 %v5017, %v675
  %v5020 = vsub.f32 %v5009, %v5018
  %v5021 = vsub.f32 %v5010, %v5019
  %v5022 = vmul.f32 %v5020, %v5020
  %v5023 = vmul.f32 %v5021, %v5021
  %v5024 = vsel %vm57, %v5022, 0.0
  %5025 = vadd.xlane.f32.xlu0 %v5024
  %v5026 = vpop.xlane.xlu0 %5025
  %v5027 = vsel %vm57, %v5023, 0.0
  %5028 = vadd.xlane.f32.xlu0 %v5027
  %v5029 = vpop.xlane.xlu0 %5028
  %v5030 = vmul.f32 %v5026, %v675
  %v5031 = vmul.f32 %v5029, %v675
  %v5032 = vadd.f32 %v5030, 1e-05
  %v5033 = vadd.f32 %v5031, 1e-05
  %v5034 = vrsqrt.pop %v5032
  %v5035 = vmul.f32 %v5034, %v5032
  %v5036 = vmul.f32 %v5035, %v5034
  %v5037 = vmul.f32 0.5, %v5036
  %v5038 = vsub.f32 1.5, %v5037
  %v5039 = vmul.f32 %v5034, %v5038
  %vm5040 = vweird.f32 %v5032
  %vm5041 = vweird.f32 %v5034
  %vm5042 = vmor %vm5040, %vm5041
  %v5043 = vsel %vm5042, %v5034, %v5039
  %v5044 = vrsqrt.pop %v5033
  %v5045 = vmul.f32 %v5044, %v5033
  %v5046 = vmul.f32 %v5045, %v5044
  %v5047 = vmul.f32 0.5, %v5046
  %v5048 = vsub.f32 1.5, %v5047
  %v5049 = vmul.f32 %v5044, %v5048
  %vm5050 = vweird.f32 %v5033
  %vm5051 = vweird.f32 %v5044
  %vm5052 = vmor %vm5050, %vm5051
  %v5053 = vsel %vm5052, %v5044, %v5049
  %v5054 = vmul.f32 %v5020, %v5043
  %v5055 = vmul.f32 %v5021, %v5053
  %v5056 = vperm.slane %v5011, 0
  %v5057 = vmul.f32 %v5054, %v5056
  %v5058 = vmul.f32 %v5055, %v5056
  %v5059 = vperm.slane %v5011, 1
  %v5060 = vadd.f32 %v5057, %v5059
  %v5061 = vadd.f32 %v5058, %v5059
  %5062 = vst.msk [vmem:[%s9] sm:$0xff] %vm57, %v5060
  %5063 = vst.msk [vmem:[%s9 + $0x8] sm:$0xff] %vm57, %v5061
  // Predicated region
  $region38: #{transformer_forward.2} parent=0 // pred_check
    _
  $region39: #{transformer_forward.2} parent=0 // pred_check_branch
    %5065 = sbr.rel (0) target = $region41
  $region40: #{transformer_forward.2} parent=0 // pred_region
    _
  $region41: #{transformer_forward.2} parent=0 // pred_fallthru
    _
  // Predicated region
  $region42: #{transformer_forward.2} parent=0 // pred_check
    _
  $region43: #{transformer_forward.2} parent=0 // pred_check_branch
    %5067 = sbr.rel (0) target = $region45
  $region44: #{transformer_forward.2} parent=0 // pred_region
    _
  $region45: #{transformer_forward.2} parent=0 // pred_fallthru
    _

// kernel: transformer_forward.3
$region0: #{transformer_forward.3}
  #allocation0 [shape = 'u32[]', space=smem, size = 0x4, offset = 0x4, fixed_abs, tag = 'smem constant byte address 0x4 - core index']
  #allocation1 [shape = 'u32[72,128]{1,0:T(1,128)}', space=vmem, size = 0x9000, scoped, tag = 'internal scratch']
  %s0 = inlined_call_operand.vmem [shape: f32[16,32], index: 0, kind: input, shape index: {}]
  %s1 = inlined_call_operand.vmem [shape: f32[16,32], index: 1, kind: input, shape index: {}]
  %s2 = inlined_call_operand.vmem [shape: bf16[2,32,96], index: 2, kind: input, shape index: {}]
  %s3 = inlined_call_operand.vmem [shape: f32[2,1,96], index: 3, kind: input, shape index: {}]
  %s4 = inlined_call_operand.vmem [shape: bf16[2,32,32], index: 4, kind: input, shape index: {}]
  %s5 = inlined_call_operand.vmem [shape: bf16[2,32,32], index: 5, kind: input, shape index: {}]
  %s6 = inlined_call_operand.vmem [shape: bf16[2,32,64], index: 6, kind: input, shape index: {}]
  %s7 = inlined_call_operand.vmem [shape: f32[2,1,64], index: 7, kind: input, shape index: {}]
  %s8 = inlined_call_operand.vmem [shape: bf16[2,32,32], index: 8, kind: input, shape index: {}]
  %s9 = inlined_call_operand.vmem [shape: bf16[2,32,2048], index: 9, kind: input, shape index: {}]
  %s10 = inlined_call_operand.vmem [shape: f32[2,1,2048], index: 10, kind: input, shape index: {}]
  %s11 = inlined_call_operand.vmem [shape: bf16[2,2048,32], index: 11, kind: input, shape index: {}]
  %s12 = inlined_call_operand.vmem [shape: f32[2,10,32], index: 12, kind: input, shape index: {}]
  %s13 = inlined_call_operand.vmem [shape: f32[2,32], index: 13, kind: input, shape index: {}]
  %s14 = inlined_call_operand.vmem [shape: f32[32,128], index: 14, kind: input, shape index: {}]
  %s15 = inlined_call_operand.vmem [shape: f32[1,128], index: 15, kind: input, shape index: {}]
  %s16 = inlined_call_operand.vmem [shape: f32[16,128], index: 16, kind: output, shape index: {}]
  %s17 = sld [smem:[#allocation0]]
  $region74: #{transformer_forward.3} parent=0
    _
  %s19 = ssub.s32 1, %s17
  %s20 = scalar_select 0, %s19, %s17
  // Predicated region
  $region2: #{transformer_forward.3} parent=0 // pred_check
    _
  $region3: #{transformer_forward.3} parent=0 // pred_check_branch
    %22 = sbr.rel (0) target = $region5
  $region4: #{transformer_forward.3} parent=0 // pred_region
    _
  $region5: #{transformer_forward.3} parent=0 // pred_fallthru
    _
  // Predicated region
  $region6: #{transformer_forward.3} parent=0 // pred_check
    _
  $region7: #{transformer_forward.3} parent=0 // pred_check_branch
    %24 = sbr.rel (0) target = $region9
  $region8: #{transformer_forward.3} parent=0 // pred_region
    _
  $region9: #{transformer_forward.3} parent=0 // pred_fallthru
    _
  // Predicated region
  $region10: #{transformer_forward.3} parent=0 // pred_check
    _
  $region11: #{transformer_forward.3} parent=0 // pred_check_branch
    %26 = sbr.rel (0) target = $region13
  $region12: #{transformer_forward.3} parent=0 // pred_region
    _
  $region13: #{transformer_forward.3} parent=0 // pred_fallthru
    _
  // Predicated region
  $region14: #{transformer_forward.3} parent=0 // pred_check
    _
  $region15: #{transformer_forward.3} parent=0 // pred_check_branch
    %28 = sbr.rel (0) target = $region17
  $region16: #{transformer_forward.3} parent=0 // pred_region
    _
  $region17: #{transformer_forward.3} parent=0 // pred_fallthru
    _
  // Predicated region
  $region18: #{transformer_forward.3} parent=0 // pred_check
    _
  $region19: #{transformer_forward.3} parent=0 // pred_check_branch
    %30 = sbr.rel (0) target = $region21
  $region20: #{transformer_forward.3} parent=0 // pred_region
    _
  $region21: #{transformer_forward.3} parent=0 // pred_fallthru
    _
  // Predicated region
  $region22: #{transformer_forward.3} parent=0 // pred_check
    _
  $region23: #{transformer_forward.3} parent=0 // pred_check_branch
    %32 = sbr.rel (0) target = $region25
  $region24: #{transformer_forward.3} parent=0 // pred_region
    _
  $region25: #{transformer_forward.3} parent=0 // pred_fallthru
    _
  // Predicated region
  $region26: #{transformer_forward.3} parent=0 // pred_check
    _
  $region27: #{transformer_forward.3} parent=0 // pred_check_branch
    %34 = sbr.rel (0) target = $region29
  $region28: #{transformer_forward.3} parent=0 // pred_region
    _
  $region29: #{transformer_forward.3} parent=0 // pred_fallthru
    _
  // Predicated region
  $region30: #{transformer_forward.3} parent=0 // pred_check
    _
  $region31: #{transformer_forward.3} parent=0 // pred_check_branch
    %36 = sbr.rel (0) target = $region33
  $region32: #{transformer_forward.3} parent=0 // pred_region
    _
  $region33: #{transformer_forward.3} parent=0 // pred_fallthru
    _
  // Predicated region
  $region34: #{transformer_forward.3} parent=0 // pred_check
    _
  $region35: #{transformer_forward.3} parent=0 // pred_check_branch
    %38 = sbr.rel (0) target = $region37
  $region36: #{transformer_forward.3} parent=0 // pred_region
    _
  $region37: #{transformer_forward.3} parent=0 // pred_fallthru
    _
  // Predicated region
  $region38: #{transformer_forward.3} parent=0 // pred_check
    _
  $region39: #{transformer_forward.3} parent=0 // pred_check_branch
    %40 = sbr.rel (0) target = $region41
  $region40: #{transformer_forward.3} parent=0 // pred_region
    _
  $region41: #{transformer_forward.3} parent=0 // pred_fallthru
    _
  // Predicated region
  $region42: #{transformer_forward.3} parent=0 // pred_check
    _
  $region43: #{transformer_forward.3} parent=0 // pred_check_branch
    %42 = sbr.rel (0) target = $region45
  $region44: #{transformer_forward.3} parent=0 // pred_region
    _
  $region45: #{transformer_forward.3} parent=0 // pred_fallthru
    _
  // Predicated region
  $region46: #{transformer_forward.3} parent=0 // pred_check
    _
  $region47: #{transformer_forward.3} parent=0 // pred_check_branch
    %44 = sbr.rel (0) target = $region49
  $region48: #{transformer_forward.3} parent=0 // pred_region
    _
  $region49: #{transformer_forward.3} parent=0 // pred_fallthru
    _
  // Predicated region
  $region50: #{transformer_forward.3} parent=0 // pred_check
    _
  $region51: #{transformer_forward.3} parent=0 // pred_check_branch
    %46 = sbr.rel (0) target = $region53
  $region52: #{transformer_forward.3} parent=0 // pred_region
    _
  $region53: #{transformer_forward.3} parent=0 // pred_fallthru
    _
  // Predicated region
  $region54: #{transformer_forward.3} parent=0 // pred_check
    _
  $region55: #{transformer_forward.3} parent=0 // pred_check_branch
    %48 = sbr.rel (0) target = $region57
  $region56: #{transformer_forward.3} parent=0 // pred_region
    _
  $region57: #{transformer_forward.3} parent=0 // pred_fallthru
    _
  // Predicated region
  $region58: #{transformer_forward.3} parent=0 // pred_check
    _
  $region59: #{transformer_forward.3} parent=0 // pred_check_branch
    %50 = sbr.rel (0) target = $region61
  $region60: #{transformer_forward.3} parent=0 // pred_region
    _
  $region61: #{transformer_forward.3} parent=0 // pred_fallthru
    _
  // Predicated region
  $region62: #{transformer_forward.3} parent=0 // pred_check
    _
  $region63: #{transformer_forward.3} parent=0 // pred_check_branch
    %52 = sbr.rel (0) target = $region65
  $region64: #{transformer_forward.3} parent=0 // pred_region
    _
  $region65: #{transformer_forward.3} parent=0 // pred_fallthru
    _
  %v54 = vld [vmem:[%s0] sm:$0xff]
  %v55 = vld [vmem:[%s0 + $0x8] sm:$0xff]
  %v56 = vld [vmem:[%s1] sm:$0xff]
  %v57 = vld [vmem:[%s1 + $0x8] sm:$0xff]
  %v58 = vlaneseq
  %v59 = vshrl.u32 %v58, 7
  %v60 = vlaneseq
  %v61 = vand.u32 %v60, 127
  %vm62 = vcmp.ge.s32.totalorder %v59, %v61
  %v63 = vsel %vm62, 0.0, -1e+30
  %v64 = vld [vmem:[%s12] sm:$0xff]
  %v65 = vld [vmem:[%s12 + $0x8] sm:$0x3]
  %v66 = vpack.c.bf16 %v55, %v54
  %v67 = vld [vmem:[%s2] sm:$0xf]
  %v68 = vld [vmem:[%s2 + $0x4] sm:$0xf]
  %v69 = vld [vmem:[%s2 + $0x8] sm:$0xf]
  %v70 = vld [vmem:[%s2 + $0xc] sm:$0xf]
  %v71 = vld [vmem:[%s3] sm:$0x1]
  %v73 = vperm.slane %v71, 0
  %v79 = vunpack.c.l.b16 %v67
  %v80 = vunpack.c.l.b16 %v68
  %v81 = vunpack.c.l.b16 %v69
  %v82 = vunpack.c.l.b16 %v70
  %v83 = vpack.c.b16 %v80, %v79
  %v84 = vpack.c.b16 %v82, %v81
  %vm87 = vcmask 261120
  %v89 = vsel %vm87, %v66, 0
  %91 = vmatpush.bf16.msra.mxu0 0
  %92 = vmatpush.bf16.msra.mxu0 0
  %93 = vmatpush.bf16.msra.mxu0 0
  %94 = vmatpush.bf16.msra.mxu0 0
  %95 = vmatpush.bf16.msra.mxu0 0
  %96 = vmatpush.bf16.msra.mxu0 0
  %97 = vmatpush.bf16.msra.mxu0 %v84
  %98 = vmatpush.bf16.msra.mxu0 %v83
  %99 = vmatmul.bf16.gmra.mxu0 %v89
  %v100 = vpop.f32.mrf.mxu0
  %v101 = vadd.f32 %v73, %v100
  %v102 = vpop.f32.mrf.mxu0
  %v103 = vadd.f32 %v73, %v102
  %104 = vdwg.mxu0
  %106 = vrot.lane.b32.xlu0 %v101, 96
  %v107 = vpop.permute.xlu0 %106
  %vm108 = vcmask 64512
  %v109 = vsel %vm108, %v101, 0
  %v111 = vsel %vm108, %v107, 0
  %113 = vmatpush.xpose.msra.mxu0 0.0
  %114 = vmatpush.xpose.msra.mxu0 0.0
  %115 = vmatpush.xpose.msra.mxu0 0.0
  %116 = vmatpush.xpose.msra.mxu0 0.0
  %117 = vmatpush.xpose.msra.mxu0 0.0
  %118 = vmatpush.xpose.msra.mxu0 0.0
  %119 = vmatpush.xpose.msra.mxu0 0.0
  %120 = vmatpush.xpose.msra.mxu0 0.0
  %121 = vmatpush.xpose.msra.mxu0 0.0
  %122 = vmatpush.xpose.msra.mxu0 0.0
  %123 = vmatpush.xpose.msra.mxu0 0.0
  %124 = vmatpush.xpose.msra.mxu0 0.0
  %125 = vmatpush.xpose.msra.mxu0 0.0
  %126 = vmatpush.xpose.msra.mxu0 0.0
  %127 = vmatpush.xpose.msra.mxu0 0.0
  %128 = vmatpush.xpose.msra.mxu0 %v111
  %129 = vmatmul.f32.gmra.mxu0 %v109
  %v130 = vpop.f32.mrf.mxu0
  %v131 = vadd.f32 %v63, %v130
  %132 = vdwg.mxu0
  %134 = vrot.lane.b32.xlu0 %v103, 96
  %v135 = vpop.permute.xlu0 %134
  %v136 = vsel %vm108, %v103, 0
  %v138 = vsel %vm108, %v135, 0
  %140 = vmatpush.xpose.msra.mxu0 0.0
  %141 = vmatpush.xpose.msra.mxu0 0.0
  %142 = vmatpush.xpose.msra.mxu0 0.0
  %143 = vmatpush.xpose.msra.mxu0 0.0
  %144 = vmatpush.xpose.msra.mxu0 0.0
  %145 = vmatpush.xpose.msra.mxu0 0.0
  %146 = vmatpush.xpose.msra.mxu0 0.0
  %147 = vmatpush.xpose.msra.mxu0 0.0
  %148 = vmatpush.xpose.msra.mxu0 0.0
  %149 = vmatpush.xpose.msra.mxu0 0.0
  %150 = vmatpush.xpose.msra.mxu0 0.0
  %151 = vmatpush.xpose.msra.mxu0 0.0
  %152 = vmatpush.xpose.msra.mxu0 0.0
  %153 = vmatpush.xpose.msra.mxu0 0.0
  %154 = vmatpush.xpose.msra.mxu0 0.0
  %155 = vmatpush.xpose.msra.mxu0 %v138
  %156 = vmatmul.f32.gmra.mxu0 %v136
  %v157 = vpop.f32.mrf.mxu0
  %v158 = vadd.f32 %v63, %v157
  %159 = vdwg.mxu0
  %v160 = vsel %vm108, %v131, -inf
  %161 = vmax.xlane.f32.xlu0 %v160
  %v162 = vpop.xlane.xlu0 %161
  %v163 = vsel %vm108, %v158, -inf
  %164 = vmax.xlane.f32.xlu0 %v163
  %v165 = vpop.xlane.xlu0 %164
  %v166 = vsub.f32 %v131, %v162
  %v167 = vsub.f32 %v158, %v165
  %v168 = vmul.f32 %v166, 1.442695
  %v169 = vpow.pop %v168
  %v170 = vmul.f32 %v167, 1.442695
  %v171 = vpow.pop %v170
  %v172 = vsel %vm108, %v169, 0.0
  %173 = vadd.xlane.f32.xlu0 %v172
  %v174 = vpop.xlane.xlu0 %173
  %v175 = vsel %vm108, %v171, 0.0
  %176 = vadd.xlane.f32.xlu0 %v175
  %v177 = vpop.xlane.xlu0 %176
  %v178 = vrcp.pop %v174
  %v179 = vrcp.pop %v177
  %v180 = vmul.f32 %v169, %v178
  %v181 = vmul.f32 %v171, %v179
  %182 = vrot.lane.b32.xlu0 %v101, 64
  %v183 = vpop.permute.xlu0 %182
  %v186 = vsel %vm108, %v180, 0
  %188 = vmatpush.msra.mxu0 0.0
  %189 = vmatpush.msra.mxu0 0.0
  %190 = vmatpush.msra.mxu0 0.0
  %191 = vmatpush.msra.mxu0 0.0
  %192 = vmatpush.msra.mxu0 0.0
  %193 = vmatpush.msra.mxu0 0.0
  %194 = vmatpush.msra.mxu0 0.0
  %195 = vmatpush.msra.mxu0 0.0
  %196 = vmatpush.msra.mxu0 0.0
  %197 = vmatpush.msra.mxu0 0.0
  %198 = vmatpush.msra.mxu0 0.0
  %199 = vmatpush.msra.mxu0 0.0
  %200 = vmatpush.msra.mxu0 0.0
  %201 = vmatpush.msra.mxu0 0.0
  %202 = vmatpush.msra.mxu0 0.0
  %203 = vmatpush.msra.mxu0 %v183
  %204 = vmatmul.f32.gmra.mxu0 %v186
  %v205 = vpop.f32.mrf.mxu0
  %v206 = vadd.f32 0.0, %v205
  %207 = vdwg.mxu0
  %208 = vrot.lane.b32.xlu0 %v103, 64
  %v209 = vpop.permute.xlu0 %208
  %v212 = vsel %vm108, %v181, 0
  %214 = vmatpush.msra.mxu0 0.0
  %215 = vmatpush.msra.mxu0 0.0
  %216 = vmatpush.msra.mxu0 0.0
  %217 = vmatpush.msra.mxu0 0.0
  %218 = vmatpush.msra.mxu0 0.0
  %219 = vmatpush.msra.mxu0 0.0
  %220 = vmatpush.msra.mxu0 0.0
  %221 = vmatpush.msra.mxu0 0.0
  %222 = vmatpush.msra.mxu0 0.0
  %223 = vmatpush.msra.mxu0 0.0
  %224 = vmatpush.msra.mxu0 0.0
  %225 = vmatpush.msra.mxu0 0.0
  %226 = vmatpush.msra.mxu0 0.0
  %227 = vmatpush.msra.mxu0 0.0
  %228 = vmatpush.msra.mxu0 0.0
  %229 = vmatpush.msra.mxu0 %v209
  %230 = vmatmul.f32.gmra.mxu0 %v212
  %v231 = vpop.f32.mrf.mxu0
  %v232 = vadd.f32 0.0, %v231
  %233 = vdwg.mxu0
  %234 = vrot.lane.b32.xlu0 %v101, 120
  %v235 = vpop.permute.xlu0 %234
  %236 = vrot.lane.b32.xlu0 %v101, 88
  %v237 = vpop.permute.xlu0 %236
  %v238 = vsel %vm108, %v235, 0
  %v240 = vsel %vm108, %v237, 0
  %242 = vmatpush.xpose.msra.mxu0 0.0
  %243 = vmatpush.xpose.msra.mxu0 0.0
  %244 = vmatpush.xpose.msra.mxu0 0.0
  %245 = vmatpush.xpose.msra.mxu0 0.0
  %246 = vmatpush.xpose.msra.mxu0 0.0
  %247 = vmatpush.xpose.msra.mxu0 0.0
  %248 = vmatpush.xpose.msra.mxu0 0.0
  %249 = vmatpush.xpose.msra.mxu0 0.0
  %250 = vmatpush.xpose.msra.mxu0 0.0
  %251 = vmatpush.xpose.msra.mxu0 0.0
  %252 = vmatpush.xpose.msra.mxu0 0.0
  %253 = vmatpush.xpose.msra.mxu0 0.0
  %254 = vmatpush.xpose.msra.mxu0 0.0
  %255 = vmatpush.xpose.msra.mxu0 0.0
  %256 = vmatpush.xpose.msra.mxu0 0.0
  %257 = vmatpush.xpose.msra.mxu0 %v240
  %258 = vmatmul.f32.gmra.mxu0 %v238
  %v259 = vpop.f32.mrf.mxu0
  %v260 = vadd.f32 %v63, %v259
  %261 = vdwg.mxu0
  %262 = vrot.lane.b32.xlu0 %v103, 120
  %v263 = vpop.permute.xlu0 %262
  %264 = vrot.lane.b32.xlu0 %v103, 88
  %v265 = vpop.permute.xlu0 %264
  %v266 = vsel %vm108, %v263, 0
  %v268 = vsel %vm108, %v265, 0
  %270 = vmatpush.xpose.msra.mxu0 0.0
  %271 = vmatpush.xpose.msra.mxu0 0.0
  %272 = vmatpush.xpose.msra.mxu0 0.0
  %273 = vmatpush.xpose.msra.mxu0 0.0
  %274 = vmatpush.xpose.msra.mxu0 0.0
  %275 = vmatpush.xpose.msra.mxu0 0.0
  %276 = vmatpush.xpose.msra.mxu0 0.0
  %277 = vmatpush.xpose.msra.mxu0 0.0
  %278 = vmatpush.xpose.msra.mxu0 0.0
  %279 = vmatpush.xpose.msra.mxu0 0.0
  %280 = vmatpush.xpose.msra.mxu0 0.0
  %281 = vmatpush.xpose.msra.mxu0 0.0
  %282 = vmatpush.xpose.msra.mxu0 0.0
  %283 = vmatpush.xpose.msra.mxu0 0.0
  %284 = vmatpush.xpose.msra.mxu0 0.0
  %285 = vmatpush.xpose.msra.mxu0 %v268
  %286 = vmatmul.f32.gmra.mxu0 %v266
  %v287 = vpop.f32.mrf.mxu0
  %v288 = vadd.f32 %v63, %v287
  %289 = vdwg.mxu0
  %v290 = vsel %vm108, %v260, -inf
  %291 = vmax.xlane.f32.xlu0 %v290
  %v292 = vpop.xlane.xlu0 %291
  %v293 = vsel %vm108, %v288, -inf
  %294 = vmax.xlane.f32.xlu0 %v293
  %v295 = vpop.xlane.xlu0 %294
  %v296 = vsub.f32 %v260, %v292
  %v297 = vsub.f32 %v288, %v295
  %v298 = vmul.f32 %v296, 1.442695
  %v299 = vpow.pop %v298
  %v300 = vmul.f32 %v297, 1.442695
  %v301 = vpow.pop %v300
  %v302 = vsel %vm108, %v299, 0.0
  %303 = vadd.xlane.f32.xlu0 %v302
  %v304 = vpop.xlane.xlu0 %303
  %v305 = vsel %vm108, %v301, 0.0
  %306 = vadd.xlane.f32.xlu0 %v305
  %v307 = vpop.xlane.xlu0 %306
  %v308 = vrcp.pop %v304
  %v309 = vrcp.pop %v307
  %v310 = vmul.f32 %v299, %v308
  %v311 = vmul.f32 %v301, %v309
  %312 = vrot.lane.b32.xlu0 %v101, 56
  %v313 = vpop.permute.xlu0 %312
  %v316 = vsel %vm108, %v310, 0
  %318 = vmatpush.msra.mxu0 0.0
  %319 = vmatpush.msra.mxu0 0.0
  %320 = vmatpush.msra.mxu0 0.0
  %321 = vmatpush.msra.mxu0 0.0
  %322 = vmatpush.msra.mxu0 0.0
  %323 = vmatpush.msra.mxu0 0.0
  %324 = vmatpush.msra.mxu0 0.0
  %325 = vmatpush.msra.mxu0 0.0
  %326 = vmatpush.msra.mxu0 0.0
  %327 = vmatpush.msra.mxu0 0.0
  %328 = vmatpush.msra.mxu0 0.0
  %329 = vmatpush.msra.mxu0 0.0
  %330 = vmatpush.msra.mxu0 0.0
  %331 = vmatpush.msra.mxu0 0.0
  %332 = vmatpush.msra.mxu0 0.0
  %333 = vmatpush.msra.mxu0 %v313
  %334 = vmatmul.f32.gmra.mxu0 %v316
  %v335 = vpop.f32.mrf.mxu0
  %v336 = vadd.f32 0.0, %v335
  %337 = vdwg.mxu0
  %338 = vrot.lane.b32.xlu0 %v103, 56
  %v339 = vpop.permute.xlu0 %338
  %v342 = vsel %vm108, %v311, 0
  %344 = vmatpush.msra.mxu0 0.0
  %345 = vmatpush.msra.mxu0 0.0
  %346 = vmatpush.msra.mxu0 0.0
  %347 = vmatpush.msra.mxu0 0.0
  %348 = vmatpush.msra.mxu0 0.0
  %349 = vmatpush.msra.mxu0 0.0
  %350 = vmatpush.msra.mxu0 0.0
  %351 = vmatpush.msra.mxu0 0.0
  %352 = vmatpush.msra.mxu0 0.0
  %353 = vmatpush.msra.mxu0 0.0
  %354 = vmatpush.msra.mxu0 0.0
  %355 = vmatpush.msra.mxu0 0.0
  %356 = vmatpush.msra.mxu0 0.0
  %357 = vmatpush.msra.mxu0 0.0
  %358 = vmatpush.msra.mxu0 0.0
  %359 = vmatpush.msra.mxu0 %v339
  %360 = vmatmul.f32.gmra.mxu0 %v342
  %v361 = vpop.f32.mrf.mxu0
  %v362 = vadd.f32 0.0, %v361
  %363 = vdwg.mxu0
  %364 = vrot.lane.b32.xlu0 %v101, 112
  %v365 = vpop.permute.xlu0 %364
  %366 = vrot.lane.b32.xlu0 %v101, 80
  %v367 = vpop.permute.xlu0 %366
  %v368 = vsel %vm108, %v365, 0
  %v370 = vsel %vm108, %v367, 0
  %372 = vmatpush.xpose.msra.mxu0 0.0
  %373 = vmatpush.xpose.msra.mxu0 0.0
  %374 = vmatpush.xpose.msra.mxu0 0.0
  %375 = vmatpush.xpose.msra.mxu0 0.0
  %376 = vmatpush.xpose.msra.mxu0 0.0
  %377 = vmatpush.xpose.msra.mxu0 0.0
  %378 = vmatpush.xpose.msra.mxu0 0.0
  %379 = vmatpush.xpose.msra.mxu0 0.0
  %380 = vmatpush.xpose.msra.mxu0 0.0
  %381 = vmatpush.xpose.msra.mxu0 0.0
  %382 = vmatpush.xpose.msra.mxu0 0.0
  %383 = vmatpush.xpose.msra.mxu0 0.0
  %384 = vmatpush.xpose.msra.mxu0 0.0
  %385 = vmatpush.xpose.msra.mxu0 0.0
  %386 = vmatpush.xpose.msra.mxu0 0.0
  %387 = vmatpush.xpose.msra.mxu0 %v370
  %388 = vmatmul.f32.gmra.mxu0 %v368
  %v389 = vpop.f32.mrf.mxu0
  %v390 = vadd.f32 %v63, %v389
  %391 = vdwg.mxu0
  %392 = vrot.lane.b32.xlu0 %v103, 112
  %v393 = vpop.permute.xlu0 %392
  %394 = vrot.lane.b32.xlu0 %v103, 80
  %v395 = vpop.permute.xlu0 %394
  %v396 = vsel %vm108, %v393, 0
  %v398 = vsel %vm108, %v395, 0
  %400 = vmatpush.xpose.msra.mxu0 0.0
  %401 = vmatpush.xpose.msra.mxu0 0.0
  %402 = vmatpush.xpose.msra.mxu0 0.0
  %403 = vmatpush.xpose.msra.mxu0 0.0
  %404 = vmatpush.xpose.msra.mxu0 0.0
  %405 = vmatpush.xpose.msra.mxu0 0.0
  %406 = vmatpush.xpose.msra.mxu0 0.0
  %407 = vmatpush.xpose.msra.mxu0 0.0
  %408 = vmatpush.xpose.msra.mxu0 0.0
  %409 = vmatpush.xpose.msra.mxu0 0.0
  %410 = vmatpush.xpose.msra.mxu0 0.0
  %411 = vmatpush.xpose.msra.mxu0 0.0
  %412 = vmatpush.xpose.msra.mxu0 0.0
  %413 = vmatpush.xpose.msra.mxu0 0.0
  %414 = vmatpush.xpose.msra.mxu0 0.0
  %415 = vmatpush.xpose.msra.mxu0 %v398
  %416 = vmatmul.f32.gmra.mxu0 %v396
  %v417 = vpop.f32.mrf.mxu0
  %v418 = vadd.f32 %v63, %v417
  %419 = vdwg.mxu0
  %v420 = vsel %vm108, %v390, -inf
  %421 = vmax.xlane.f32.xlu0 %v420
  %v422 = vpop.xlane.xlu0 %421
  %v423 = vsel %vm108, %v418, -inf
  %424 = vmax.xlane.f32.xlu0 %v423
  %v425 = vpop.xlane.xlu0 %424
  %v426 = vsub.f32 %v390, %v422
  %v427 = vsub.f32 %v418, %v425
  %v428 = vmul.f32 %v426, 1.442695
  %v429 = vpow.pop %v428
  %v430 = vmul.f32 %v427, 1.442695
  %v431 = vpow.pop %v430
  %v432 = vsel %vm108, %v429, 0.0
  %433 = vadd.xlane.f32.xlu0 %v432
  %v434 = vpop.xlane.xlu0 %433
  %v435 = vsel %vm108, %v431, 0.0
  %436 = vadd.xlane.f32.xlu0 %v435
  %v437 = vpop.xlane.xlu0 %436
  %v438 = vrcp.pop %v434
  %v439 = vrcp.pop %v437
  %v440 = vmul.f32 %v429, %v438
  %v441 = vmul.f32 %v431, %v439
  %442 = vrot.lane.b32.xlu0 %v101, 48
  %v443 = vpop.permute.xlu0 %442
  %v446 = vsel %vm108, %v440, 0
  %448 = vmatpush.msra.mxu0 0.0
  %449 = vmatpush.msra.mxu0 0.0
  %450 = vmatpush.msra.mxu0 0.0
  %451 = vmatpush.msra.mxu0 0.0
  %452 = vmatpush.msra.mxu0 0.0
  %453 = vmatpush.msra.mxu0 0.0
  %454 = vmatpush.msra.mxu0 0.0
  %455 = vmatpush.msra.mxu0 0.0
  %456 = vmatpush.msra.mxu0 0.0
  %457 = vmatpush.msra.mxu0 0.0
  %458 = vmatpush.msra.mxu0 0.0
  %459 = vmatpush.msra.mxu0 0.0
  %460 = vmatpush.msra.mxu0 0.0
  %461 = vmatpush.msra.mxu0 0.0
  %462 = vmatpush.msra.mxu0 0.0
  %463 = vmatpush.msra.mxu0 %v443
  %464 = vmatmul.f32.gmra.mxu0 %v446
  %v465 = vpop.f32.mrf.mxu0
  %v466 = vadd.f32 0.0, %v465
  %467 = vdwg.mxu0
  %468 = vrot.lane.b32.xlu0 %v103, 48
  %v469 = vpop.permute.xlu0 %468
  %v472 = vsel %vm108, %v441, 0
  %474 = vmatpush.msra.mxu0 0.0
  %475 = vmatpush.msra.mxu0 0.0
  %476 = vmatpush.msra.mxu0 0.0
  %477 = vmatpush.msra.mxu0 0.0
  %478 = vmatpush.msra.mxu0 0.0
  %479 = vmatpush.msra.mxu0 0.0
  %480 = vmatpush.msra.mxu0 0.0
  %481 = vmatpush.msra.mxu0 0.0
  %482 = vmatpush.msra.mxu0 0.0
  %483 = vmatpush.msra.mxu0 0.0
  %484 = vmatpush.msra.mxu0 0.0
  %485 = vmatpush.msra.mxu0 0.0
  %486 = vmatpush.msra.mxu0 0.0
  %487 = vmatpush.msra.mxu0 0.0
  %488 = vmatpush.msra.mxu0 0.0
  %489 = vmatpush.msra.mxu0 %v469
  %490 = vmatmul.f32.gmra.mxu0 %v472
  %v491 = vpop.f32.mrf.mxu0
  %v492 = vadd.f32 0.0, %v491
  %493 = vdwg.mxu0
  %494 = vrot.lane.b32.xlu0 %v101, 104
  %v495 = vpop.permute.xlu0 %494
  %496 = vrot.lane.b32.xlu0 %v101, 72
  %v497 = vpop.permute.xlu0 %496
  %v498 = vsel %vm108, %v495, 0
  %v500 = vsel %vm108, %v497, 0
  %502 = vmatpush.xpose.msra.mxu0 0.0
  %503 = vmatpush.xpose.msra.mxu0 0.0
  %504 = vmatpush.xpose.msra.mxu0 0.0
  %505 = vmatpush.xpose.msra.mxu0 0.0
  %506 = vmatpush.xpose.msra.mxu0 0.0
  %507 = vmatpush.xpose.msra.mxu0 0.0
  %508 = vmatpush.xpose.msra.mxu0 0.0
  %509 = vmatpush.xpose.msra.mxu0 0.0
  %510 = vmatpush.xpose.msra.mxu0 0.0
  %511 = vmatpush.xpose.msra.mxu0 0.0
  %512 = vmatpush.xpose.msra.mxu0 0.0
  %513 = vmatpush.xpose.msra.mxu0 0.0
  %514 = vmatpush.xpose.msra.mxu0 0.0
  %515 = vmatpush.xpose.msra.mxu0 0.0
  %516 = vmatpush.xpose.msra.mxu0 0.0
  %517 = vmatpush.xpose.msra.mxu0 %v500
  %518 = vmatmul.f32.gmra.mxu0 %v498
  %v519 = vpop.f32.mrf.mxu0
  %v520 = vadd.f32 %v63, %v519
  %521 = vdwg.mxu0
  %522 = vrot.lane.b32.xlu0 %v103, 104
  %v523 = vpop.permute.xlu0 %522
  %524 = vrot.lane.b32.xlu0 %v103, 72
  %v525 = vpop.permute.xlu0 %524
  %v526 = vsel %vm108, %v523, 0
  %v528 = vsel %vm108, %v525, 0
  %530 = vmatpush.xpose.msra.mxu0 0.0
  %531 = vmatpush.xpose.msra.mxu0 0.0
  %532 = vmatpush.xpose.msra.mxu0 0.0
  %533 = vmatpush.xpose.msra.mxu0 0.0
  %534 = vmatpush.xpose.msra.mxu0 0.0
  %535 = vmatpush.xpose.msra.mxu0 0.0
  %536 = vmatpush.xpose.msra.mxu0 0.0
  %537 = vmatpush.xpose.msra.mxu0 0.0
  %538 = vmatpush.xpose.msra.mxu0 0.0
  %539 = vmatpush.xpose.msra.mxu0 0.0
  %540 = vmatpush.xpose.msra.mxu0 0.0
  %541 = vmatpush.xpose.msra.mxu0 0.0
  %542 = vmatpush.xpose.msra.mxu0 0.0
  %543 = vmatpush.xpose.msra.mxu0 0.0
  %544 = vmatpush.xpose.msra.mxu0 0.0
  %545 = vmatpush.xpose.msra.mxu0 %v528
  %546 = vmatmul.f32.gmra.mxu0 %v526
  %v547 = vpop.f32.mrf.mxu0
  %v548 = vadd.f32 %v63, %v547
  %549 = vdwg.mxu0
  %v550 = vsel %vm108, %v520, -inf
  %551 = vmax.xlane.f32.xlu0 %v550
  %v552 = vpop.xlane.xlu0 %551
  %v553 = vsel %vm108, %v548, -inf
  %554 = vmax.xlane.f32.xlu0 %v553
  %v555 = vpop.xlane.xlu0 %554
  %v556 = vsub.f32 %v520, %v552
  %v557 = vsub.f32 %v548, %v555
  %v558 = vmul.f32 %v556, 1.442695
  %v559 = vpow.pop %v558
  %v560 = vmul.f32 %v557, 1.442695
  %v561 = vpow.pop %v560
  %v562 = vsel %vm108, %v559, 0.0
  %563 = vadd.xlane.f32.xlu0 %v562
  %v564 = vpop.xlane.xlu0 %563
  %v565 = vsel %vm108, %v561, 0.0
  %566 = vadd.xlane.f32.xlu0 %v565
  %v567 = vpop.xlane.xlu0 %566
  %v568 = vrcp.pop %v564
  %v569 = vrcp.pop %v567
  %v570 = vmul.f32 %v559, %v568
  %v571 = vmul.f32 %v561, %v569
  %572 = vrot.lane.b32.xlu0 %v101, 40
  %v573 = vpop.permute.xlu0 %572
  %v576 = vsel %vm108, %v570, 0
  %578 = vmatpush.msra.mxu0 0.0
  %579 = vmatpush.msra.mxu0 0.0
  %580 = vmatpush.msra.mxu0 0.0
  %581 = vmatpush.msra.mxu0 0.0
  %582 = vmatpush.msra.mxu0 0.0
  %583 = vmatpush.msra.mxu0 0.0
  %584 = vmatpush.msra.mxu0 0.0
  %585 = vmatpush.msra.mxu0 0.0
  %586 = vmatpush.msra.mxu0 0.0
  %587 = vmatpush.msra.mxu0 0.0
  %588 = vmatpush.msra.mxu0 0.0
  %589 = vmatpush.msra.mxu0 0.0
  %590 = vmatpush.msra.mxu0 0.0
  %591 = vmatpush.msra.mxu0 0.0
  %592 = vmatpush.msra.mxu0 0.0
  %593 = vmatpush.msra.mxu0 %v573
  %594 = vmatmul.f32.gmra.mxu0 %v576
  %v595 = vpop.f32.mrf.mxu0
  %v596 = vadd.f32 0.0, %v595
  %597 = vdwg.mxu0
  %598 = vrot.lane.b32.xlu0 %v103, 40
  %v599 = vpop.permute.xlu0 %598
  %v602 = vsel %vm108, %v571, 0
  %604 = vmatpush.msra.mxu0 0.0
  %605 = vmatpush.msra.mxu0 0.0
  %606 = vmatpush.msra.mxu0 0.0
  %607 = vmatpush.msra.mxu0 0.0
  %608 = vmatpush.msra.mxu0 0.0
  %609 = vmatpush.msra.mxu0 0.0
  %610 = vmatpush.msra.mxu0 0.0
  %611 = vmatpush.msra.mxu0 0.0
  %612 = vmatpush.msra.mxu0 0.0
  %613 = vmatpush.msra.mxu0 0.0
  %614 = vmatpush.msra.mxu0 0.0
  %615 = vmatpush.msra.mxu0 0.0
  %616 = vmatpush.msra.mxu0 0.0
  %617 = vmatpush.msra.mxu0 0.0
  %618 = vmatpush.msra.mxu0 0.0
  %619 = vmatpush.msra.mxu0 %v599
  %620 = vmatmul.f32.gmra.mxu0 %v602
  %v621 = vpop.f32.mrf.mxu0
  %v622 = vadd.f32 0.0, %v621
  %623 = vdwg.mxu0
  %626 = vrot.lane.b32.xlu0 %v336, 8
  %v627 = vpop.permute.xlu0 %626
  %628 = vrot.lane.b32.xlu0 %v362, 8
  %v629 = vpop.permute.xlu0 %628
  %634 = vrot.lane.b32.xlu0 %v466, 16
  %v635 = vpop.permute.xlu0 %634
  %636 = vrot.lane.b32.xlu0 %v492, 16
  %v637 = vpop.permute.xlu0 %636
  %642 = vrot.lane.b32.xlu0 %v596, 24
  %v643 = vpop.permute.xlu0 %642
  %644 = vrot.lane.b32.xlu0 %v622, 24
  %v645 = vpop.permute.xlu0 %644
  %v648 = vsel %vm108, %v206, %v627
  %v649 = vsel %vm108, %v232, %v629
  %vm650 = vcmask 130048
  %v651 = vsel %vm650, %v648, %v635
  %v652 = vsel %vm650, %v649, %v637
  %vm653 = vcmask 195584
  %v654 = vsel %vm653, %v651, %v643
  %v655 = vsel %vm653, %v652, %v645
  %v656 = vpack.c.bf16 %v655, %v654
  %v657 = vld [vmem:[%s4] sm:$0xf]
  %v658 = vld [vmem:[%s4 + $0x4] sm:$0xf]
  %v659 = vld [vmem:[%s4 + $0x8] sm:$0xf]
  %v660 = vld [vmem:[%s4 + $0xc] sm:$0xf]
  %v661 = vperm.slane %v64, 0
  %v666 = vunpack.c.l.b16 %v657
  %v667 = vunpack.c.l.b16 %v658
  %v668 = vunpack.c.l.b16 %v659
  %v669 = vunpack.c.l.b16 %v660
  %v670 = vpack.c.b16 %v667, %v666
  %v671 = vpack.c.b16 %v669, %v668
  %v675 = vsel %vm87, %v656, 0
  %677 = vmatpush.bf16.msra.mxu0 0
  %678 = vmatpush.bf16.msra.mxu0 0
  %679 = vmatpush.bf16.msra.mxu0 0
  %680 = vmatpush.bf16.msra.mxu0 0
  %681 = vmatpush.bf16.msra.mxu0 0
  %682 = vmatpush.bf16.msra.mxu0 0
  %683 = vmatpush.bf16.msra.mxu0 %v671
  %684 = vmatpush.bf16.msra.mxu0 %v670
  %685 = vmatmul.bf16.gmra.mxu0 %v675
  %v686 = vpop.f32.mrf.mxu0
  %v687 = vadd.f32 %v661, %v686
  %v688 = vpop.f32.mrf.mxu0
  %v689 = vadd.f32 %v661, %v688
  %690 = vdwg.mxu0
  %v691 = vadd.f32 %v54, %v687
  %v692 = vadd.f32 %v55, %v689
  %v693 = vsel %vm87, %v691, 0.0
  %694 = vadd.xlane.f32.xlu0 %v693
  %v695 = vpop.xlane.xlu0 %694
  %v696 = vsel %vm87, %v692, 0.0
  %697 = vadd.xlane.f32.xlu0 %v696
  %v698 = vpop.xlane.xlu0 %697
  %v699 = vrcp.pop 32.0
  %v700 = vmul.f32 32.0, %v699
  %v701 = vsub.f32 1.0, %v700
  %v702 = vmul.f32 %v699, %v701
  %v703 = vadd.f32 %v699, %v702
  %vm704 = vweird.f32 %v699
  %v705 = vsel %vm704, %v699, %v703
  %v706 = vmul.f32 %v695, %v705
  %v707 = vmul.f32 %v698, %v705
  %v708 = vsub.f32 %v691, %v706
  %v709 = vsub.f32 %v692, %v707
  %v710 = vmul.f32 %v708, %v708
  %v711 = vmul.f32 %v709, %v709
  %v712 = vsel %vm87, %v710, 0.0
  %713 = vadd.xlane.f32.xlu0 %v712
  %v714 = vpop.xlane.xlu0 %713
  %v715 = vsel %vm87, %v711, 0.0
  %716 = vadd.xlane.f32.xlu0 %v715
  %v717 = vpop.xlane.xlu0 %716
  %v718 = vmul.f32 %v714, %v705
  %v719 = vmul.f32 %v717, %v705
  %v720 = vadd.f32 %v718, 1e-05
  %v721 = vadd.f32 %v719, 1e-05
  %v722 = vrsqrt.pop %v720
  %v723 = vmul.f32 %v722, %v720
  %v724 = vmul.f32 %v723, %v722
  %v725 = vmul.f32 0.5, %v724
  %v726 = vsub.f32 1.5, %v725
  %v727 = vmul.f32 %v722, %v726
  %vm728 = vweird.f32 %v720
  %vm729 = vweird.f32 %v722
  %vm730 = vmor %vm728, %vm729
  %v731 = vsel %vm730, %v722, %v727
  %v732 = vrsqrt.pop %v721
  %v733 = vmul.f32 %v732, %v721
  %v734 = vmul.f32 %v733, %v732
  %v735 = vmul.f32 0.5, %v734
  %v736 = vsub.f32 1.5, %v735
  %v737 = vmul.f32 %v732, %v736
  %vm738 = vweird.f32 %v721
  %vm739 = vweird.f32 %v732
  %vm740 = vmor %vm738, %vm739
  %v741 = vsel %vm740, %v732, %v737
  %v742 = vmul.f32 %v708, %v731
  %v743 = vmul.f32 %v709, %v741
  %v744 = vperm.slane %v64, 4
  %v745 = vmul.f32 %v742, %v744
  %v746 = vmul.f32 %v743, %v744
  %v747 = vperm.slane %v64, 5
  %v748 = vadd.f32 %v745, %v747
  %v749 = vadd.f32 %v746, %v747
  %v750 = vpack.c.bf16 %v749, %v748
  %v751 = vld [vmem:[%s5] sm:$0xf]
  %v752 = vld [vmem:[%s5 + $0x4] sm:$0xf]
  %v753 = vld [vmem:[%s5 + $0x8] sm:$0xf]
  %v754 = vld [vmem:[%s5 + $0xc] sm:$0xf]
  %v755 = vperm.slane %v64, 1
  %v760 = vunpack.c.l.b16 %v751
  %v761 = vunpack.c.l.b16 %v752
  %v762 = vunpack.c.l.b16 %v753
  %v763 = vunpack.c.l.b16 %v754
  %v764 = vpack.c.b16 %v761, %v760
  %v765 = vpack.c.b16 %v763, %v762
  %v769 = vsel %vm87, %v750, 0
  %771 = vmatpush.bf16.msra.mxu0 0
  %772 = vmatpush.bf16.msra.mxu0 0
  %773 = vmatpush.bf16.msra.mxu0 0
  %774 = vmatpush.bf16.msra.mxu0 0
  %775 = vmatpush.bf16.msra.mxu0 0
  %776 = vmatpush.bf16.msra.mxu0 0
  %777 = vmatpush.bf16.msra.mxu0 %v765
  %778 = vmatpush.bf16.msra.mxu0 %v764
  %779 = vmatmul.bf16.gmra.mxu0 %v769
  %v780 = vpop.f32.mrf.mxu0
  %v781 = vadd.f32 %v755, %v780
  %v782 = vpop.f32.mrf.mxu0
  %v783 = vadd.f32 %v755, %v782
  %784 = vdwg.mxu0
  %v785 = vpack.c.bf16 %v57, %v56
  %v786 = vld [vmem:[%s6] sm:$0xf]
  %v787 = vld [vmem:[%s6 + $0x4] sm:$0xf]
  %v788 = vld [vmem:[%s6 + $0x8] sm:$0xf]
  %v789 = vld [vmem:[%s6 + $0xc] sm:$0xf]
  %v790 = vld [vmem:[%s7] sm:$0x1]
  %v792 = vperm.slane %v790, 0
  %v798 = vunpack.c.l.b16 %v786
  %v799 = vunpack.c.l.b16 %v787
  %v800 = vunpack.c.l.b16 %v788
  %v801 = vunpack.c.l.b16 %v789
  %v802 = vpack.c.b16 %v799, %v798
  %v803 = vpack.c.b16 %v801, %v800
  %v807 = vsel %vm87, %v785, 0
  %809 = vmatpush.bf16.msra.mxu0 0
  %810 = vmatpush.bf16.msra.mxu0 0
  %811 = vmatpush.bf16.msra.mxu0 0
  %812 = vmatpush.bf16.msra.mxu0 0
  %813 = vmatpush.bf16.msra.mxu0 0
  %814 = vmatpush.bf16.msra.mxu0 0
  %815 = vmatpush.bf16.msra.mxu0 %v803
  %816 = vmatpush.bf16.msra.mxu0 %v802
  %817 = vmatmul.bf16.gmra.mxu0 %v807
  %v818 = vpop.f32.mrf.mxu0
  %v819 = vadd.f32 %v792, %v818
  %v820 = vpop.f32.mrf.mxu0
  %v821 = vadd.f32 %v792, %v820
  %822 = vdwg.mxu0
  %v824 = vsel %vm108, %v781, 0
  %v827 = vsel %vm108, %v819, 0
  %829 = vmatpush.xpose.msra.mxu0 0.0
  %830 = vmatpush.xpose.msra.mxu0 0.0
  %831 = vmatpush.xpose.msra.mxu0 0.0
  %832 = vmatpush.xpose.msra.mxu0 0.0
  %833 = vmatpush.xpose.msra.mxu0 0.0
  %834 = vmatpush.xpose.msra.mxu0 0.0
  %835 = vmatpush.xpose.msra.mxu0 0.0
  %836 = vmatpush.xpose.msra.mxu0 0.0
  %837 = vmatpush.xpose.msra.mxu0 0.0
  %838 = vmatpush.xpose.msra.mxu0 0.0
  %839 = vmatpush.xpose.msra.mxu0 0.0
  %840 = vmatpush.xpose.msra.mxu0 0.0
  %841 = vmatpush.xpose.msra.mxu0 0.0
  %842 = vmatpush.xpose.msra.mxu0 0.0
  %843 = vmatpush.xpose.msra.mxu0 0.0
  %844 = vmatpush.xpose.msra.mxu0 %v827
  %845 = vmatmul.f32.gmra.mxu0 %v824
  %v846 = vpop.f32.mrf.mxu0
  %v847 = vadd.f32 0.0, %v846
  %848 = vdwg.mxu0
  %v850 = vsel %vm108, %v783, 0
  %v853 = vsel %vm108, %v821, 0
  %855 = vmatpush.xpose.msra.mxu0 0.0
  %856 = vmatpush.xpose.msra.mxu0 0.0
  %857 = vmatpush.xpose.msra.mxu0 0.0
  %858 = vmatpush.xpose.msra.mxu0 0.0
  %859 = vmatpush.xpose.msra.mxu0 0.0
  %860 = vmatpush.xpose.msra.mxu0 0.0
  %861 = vmatpush.xpose.msra.mxu0 0.0
  %862 = vmatpush.xpose.msra.mxu0 0.0
  %863 = vmatpush.xpose.msra.mxu0 0.0
  %864 = vmatpush.xpose.msra.mxu0 0.0
  %865 = vmatpush.xpose.msra.mxu0 0.0
  %866 = vmatpush.xpose.msra.mxu0 0.0
  %867 = vmatpush.xpose.msra.mxu0 0.0
  %868 = vmatpush.xpose.msra.mxu0 0.0
  %869 = vmatpush.xpose.msra.mxu0 0.0
  %870 = vmatpush.xpose.msra.mxu0 %v853
  %871 = vmatmul.f32.gmra.mxu0 %v850
  %v872 = vpop.f32.mrf.mxu0
  %v873 = vadd.f32 0.0, %v872
  %874 = vdwg.mxu0
  %v875 = vsel %vm108, %v847, -inf
  %876 = vmax.xlane.f32.xlu0 %v875
  %v877 = vpop.xlane.xlu0 %876
  %v878 = vsel %vm108, %v873, -inf
  %879 = vmax.xlane.f32.xlu0 %v878
  %v880 = vpop.xlane.xlu0 %879
  %v881 = vsub.f32 %v847, %v877
  %v882 = vsub.f32 %v873, %v880
  %v883 = vmul.f32 %v881, 1.442695
  %v884 = vpow.pop %v883
  %v885 = vmul.f32 %v882, 1.442695
  %v886 = vpow.pop %v885
  %v887 = vsel %vm108, %v884, 0.0
  %888 = vadd.xlane.f32.xlu0 %v887
  %v889 = vpop.xlane.xlu0 %888
  %v890 = vsel %vm108, %v886, 0.0
  %891 = vadd.xlane.f32.xlu0 %v890
  %v892 = vpop.xlane.xlu0 %891
  %v893 = vrcp.pop %v889
  %v894 = vrcp.pop %v892
  %v895 = vmul.f32 %v884, %v893
  %v896 = vmul.f32 %v886, %v894
  %897 = vrot.lane.b32.xlu0 %v819, 96
  %v898 = vpop.permute.xlu0 %897
  %v901 = vsel %vm108, %v895, 0
  %903 = vmatpush.msra.mxu0 0.0
  %904 = vmatpush.msra.mxu0 0.0
  %905 = vmatpush.msra.mxu0 0.0
  %906 = vmatpush.msra.mxu0 0.0
  %907 = vmatpush.msra.mxu0 0.0
  %908 = vmatpush.msra.mxu0 0.0
  %909 = vmatpush.msra.mxu0 0.0
  %910 = vmatpush.msra.mxu0 0.0
  %911 = vmatpush.msra.mxu0 0.0
  %912 = vmatpush.msra.mxu0 0.0
  %913 = vmatpush.msra.mxu0 0.0
  %914 = vmatpush.msra.mxu0 0.0
  %915 = vmatpush.msra.mxu0 0.0
  %916 = vmatpush.msra.mxu0 0.0
  %917 = vmatpush.msra.mxu0 0.0
  %918 = vmatpush.msra.mxu0 %v898
  %919 = vmatmul.f32.gmra.mxu0 %v901
  %v920 = vpop.f32.mrf.mxu0
  %v921 = vadd.f32 0.0, %v920
  %922 = vdwg.mxu0
  %923 = vrot.lane.b32.xlu0 %v821, 96
  %v924 = vpop.permute.xlu0 %923
  %v927 = vsel %vm108, %v896, 0
  %929 = vmatpush.msra.mxu0 0.0
  %930 = vmatpush.msra.mxu0 0.0
  %931 = vmatpush.msra.mxu0 0.0
  %932 = vmatpush.msra.mxu0 0.0
  %933 = vmatpush.msra.mxu0 0.0
  %934 = vmatpush.msra.mxu0 0.0
  %935 = vmatpush.msra.mxu0 0.0
  %936 = vmatpush.msra.mxu0 0.0
  %937 = vmatpush.msra.mxu0 0.0
  %938 = vmatpush.msra.mxu0 0.0
  %939 = vmatpush.msra.mxu0 0.0
  %940 = vmatpush.msra.mxu0 0.0
  %941 = vmatpush.msra.mxu0 0.0
  %942 = vmatpush.msra.mxu0 0.0
  %943 = vmatpush.msra.mxu0 0.0
  %944 = vmatpush.msra.mxu0 %v924
  %945 = vmatmul.f32.gmra.mxu0 %v927
  %v946 = vpop.f32.mrf.mxu0
  %v947 = vadd.f32 0.0, %v946
  %948 = vdwg.mxu0
  %949 = vrot.lane.b32.xlu0 %v781, 120
  %v950 = vpop.permute.xlu0 %949
  %951 = vrot.lane.b32.xlu0 %v819, 120
  %v952 = vpop.permute.xlu0 %951
  %v953 = vsel %vm108, %v950, 0
  %v955 = vsel %vm108, %v952, 0
  %957 = vmatpush.xpose.msra.mxu0 0.0
  %958 = vmatpush.xpose.msra.mxu0 0.0
  %959 = vmatpush.xpose.msra.mxu0 0.0
  %960 = vmatpush.xpose.msra.mxu0 0.0
  %961 = vmatpush.xpose.msra.mxu0 0.0
  %962 = vmatpush.xpose.msra.mxu0 0.0
  %963 = vmatpush.xpose.msra.mxu0 0.0
  %964 = vmatpush.xpose.msra.mxu0 0.0
  %965 = vmatpush.xpose.msra.mxu0 0.0
  %966 = vmatpush.xpose.msra.mxu0 0.0
  %967 = vmatpush.xpose.msra.mxu0 0.0
  %968 = vmatpush.xpose.msra.mxu0 0.0
  %969 = vmatpush.xpose.msra.mxu0 0.0
  %970 = vmatpush.xpose.msra.mxu0 0.0
  %971 = vmatpush.xpose.msra.mxu0 0.0
  %972 = vmatpush.xpose.msra.mxu0 %v955
  %973 = vmatmul.f32.gmra.mxu0 %v953
  %v974 = vpop.f32.mrf.mxu0
  %v975 = vadd.f32 0.0, %v974
  %976 = vdwg.mxu0
  %977 = vrot.lane.b32.xlu0 %v783, 120
  %v978 = vpop.permute.xlu0 %977
  %979 = vrot.lane.b32.xlu0 %v821, 120
  %v980 = vpop.permute.xlu0 %979
  %v981 = vsel %vm108, %v978, 0
  %v983 = vsel %vm108, %v980, 0
  %985 = vmatpush.xpose.msra.mxu0 0.0
  %986 = vmatpush.xpose.msra.mxu0 0.0
  %987 = vmatpush.xpose.msra.mxu0 0.0
  %988 = vmatpush.xpose.msra.mxu0 0.0
  %989 = vmatpush.xpose.msra.mxu0 0.0
  %990 = vmatpush.xpose.msra.mxu0 0.0
  %991 = vmatpush.xpose.msra.mxu0 0.0
  %992 = vmatpush.xpose.msra.mxu0 0.0
  %993 = vmatpush.xpose.msra.mxu0 0.0
  %994 = vmatpush.xpose.msra.mxu0 0.0
  %995 = vmatpush.xpose.msra.mxu0 0.0
  %996 = vmatpush.xpose.msra.mxu0 0.0
  %997 = vmatpush.xpose.msra.mxu0 0.0
  %998 = vmatpush.xpose.msra.mxu0 0.0
  %999 = vmatpush.xpose.msra.mxu0 0.0
  %1000 = vmatpush.xpose.msra.mxu0 %v983
  %1001 = vmatmul.f32.gmra.mxu0 %v981
  %v1002 = vpop.f32.mrf.mxu0
  %v1003 = vadd.f32 0.0, %v1002
  %1004 = vdwg.mxu0
  %v1005 = vsel %vm108, %v975, -inf
  %1006 = vmax.xlane.f32.xlu0 %v1005
  %v1007 = vpop.xlane.xlu0 %1006
  %v1008 = vsel %vm108, %v1003, -inf
  %1009 = vmax.xlane.f32.xlu0 %v1008
  %v1010 = vpop.xlane.xlu0 %1009
  %v1011 = vsub.f32 %v975, %v1007
  %v1012 = vsub.f32 %v1003, %v1010
  %v1013 = vmul.f32 %v1011, 1.442695
  %v1014 = vpow.pop %v1013
  %v1015 = vmul.f32 %v1012, 1.442695
  %v1016 = vpow.pop %v1015
  %v1017 = vsel %vm108, %v1014, 0.0
  %1018 = vadd.xlane.f32.xlu0 %v1017
  %v1019 = vpop.xlane.xlu0 %1018
  %v1020 = vsel %vm108, %v1016, 0.0
  %1021 = vadd.xlane.f32.xlu0 %v1020
  %v1022 = vpop.xlane.xlu0 %1021
  %v1023 = vrcp.pop %v1019
  %v1024 = vrcp.pop %v1022
  %v1025 = vmul.f32 %v1014, %v1023
  %v1026 = vmul.f32 %v1016, %v1024
  %1027 = vrot.lane.b32.xlu0 %v819, 88
  %v1028 = vpop.permute.xlu0 %1027
  %v1031 = vsel %vm108, %v1025, 0
  %1033 = vmatpush.msra.mxu0 0.0
  %1034 = vmatpush.msra.mxu0 0.0
  %1035 = vmatpush.msra.mxu0 0.0
  %1036 = vmatpush.msra.mxu0 0.0
  %1037 = vmatpush.msra.mxu0 0.0
  %1038 = vmatpush.msra.mxu0 0.0
  %1039 = vmatpush.msra.mxu0 0.0
  %1040 = vmatpush.msra.mxu0 0.0
  %1041 = vmatpush.msra.mxu0 0.0
  %1042 = vmatpush.msra.mxu0 0.0
  %1043 = vmatpush.msra.mxu0 0.0
  %1044 = vmatpush.msra.mxu0 0.0
  %1045 = vmatpush.msra.mxu0 0.0
  %1046 = vmatpush.msra.mxu0 0.0
  %1047 = vmatpush.msra.mxu0 0.0
  %1048 = vmatpush.msra.mxu0 %v1028
  %1049 = vmatmul.f32.gmra.mxu0 %v1031
  %v1050 = vpop.f32.mrf.mxu0
  %v1051 = vadd.f32 0.0, %v1050
  %1052 = vdwg.mxu0
  %1053 = vrot.lane.b32.xlu0 %v821, 88
  %v1054 = vpop.permute.xlu0 %1053
  %v1057 = vsel %vm108, %v1026, 0
  %1059 = vmatpush.msra.mxu0 0.0
  %1060 = vmatpush.msra.mxu0 0.0
  %1061 = vmatpush.msra.mxu0 0.0
  %1062 = vmatpush.msra.mxu0 0.0
  %1063 = vmatpush.msra.mxu0 0.0
  %1064 = vmatpush.msra.mxu0 0.0
  %1065 = vmatpush.msra.mxu0 0.0
  %1066 = vmatpush.msra.mxu0 0.0
  %1067 = vmatpush.msra.mxu0 0.0
  %1068 = vmatpush.msra.mxu0 0.0
  %1069 = vmatpush.msra.mxu0 0.0
  %1070 = vmatpush.msra.mxu0 0.0
  %1071 = vmatpush.msra.mxu0 0.0
  %1072 = vmatpush.msra.mxu0 0.0
  %1073 = vmatpush.msra.mxu0 0.0
  %1074 = vmatpush.msra.mxu0 %v1054
  %1075 = vmatmul.f32.gmra.mxu0 %v1057
  %v1076 = vpop.f32.mrf.mxu0
  %v1077 = vadd.f32 0.0, %v1076
  %1078 = vdwg.mxu0
  %1079 = vrot.lane.b32.xlu0 %v781, 112
  %v1080 = vpop.permute.xlu0 %1079
  %1081 = vrot.lane.b32.xlu0 %v819, 112
  %v1082 = vpop.permute.xlu0 %1081
  %v1083 = vsel %vm108, %v1080, 0
  %v1085 = vsel %vm108, %v1082, 0
  %1087 = vmatpush.xpose.msra.mxu0 0.0
  %1088 = vmatpush.xpose.msra.mxu0 0.0
  %1089 = vmatpush.xpose.msra.mxu0 0.0
  %1090 = vmatpush.xpose.msra.mxu0 0.0
  %1091 = vmatpush.xpose.msra.mxu0 0.0
  %1092 = vmatpush.xpose.msra.mxu0 0.0
  %1093 = vmatpush.xpose.msra.mxu0 0.0
  %1094 = vmatpush.xpose.msra.mxu0 0.0
  %1095 = vmatpush.xpose.msra.mxu0 0.0
  %1096 = vmatpush.xpose.msra.mxu0 0.0
  %1097 = vmatpush.xpose.msra.mxu0 0.0
  %1098 = vmatpush.xpose.msra.mxu0 0.0
  %1099 = vmatpush.xpose.msra.mxu0 0.0
  %1100 = vmatpush.xpose.msra.mxu0 0.0
  %1101 = vmatpush.xpose.msra.mxu0 0.0
  %1102 = vmatpush.xpose.msra.mxu0 %v1085
  %1103 = vmatmul.f32.gmra.mxu0 %v1083
  %v1104 = vpop.f32.mrf.mxu0
  %v1105 = vadd.f32 0.0, %v1104
  %1106 = vdwg.mxu0
  %1107 = vrot.lane.b32.xlu0 %v783, 112
  %v1108 = vpop.permute.xlu0 %1107
  %1109 = vrot.lane.b32.xlu0 %v821, 112
  %v1110 = vpop.permute.xlu0 %1109
  %v1111 = vsel %vm108, %v1108, 0
  %v1113 = vsel %vm108, %v1110, 0
  %1115 = vmatpush.xpose.msra.mxu0 0.0
  %1116 = vmatpush.xpose.msra.mxu0 0.0
  %1117 = vmatpush.xpose.msra.mxu0 0.0
  %1118 = vmatpush.xpose.msra.mxu0 0.0
  %1119 = vmatpush.xpose.msra.mxu0 0.0
  %1120 = vmatpush.xpose.msra.mxu0 0.0
  %1121 = vmatpush.xpose.msra.mxu0 0.0
  %1122 = vmatpush.xpose.msra.mxu0 0.0
  %1123 = vmatpush.xpose.msra.mxu0 0.0
  %1124 = vmatpush.xpose.msra.mxu0 0.0
  %1125 = vmatpush.xpose.msra.mxu0 0.0
  %1126 = vmatpush.xpose.msra.mxu0 0.0
  %1127 = vmatpush.xpose.msra.mxu0 0.0
  %1128 = vmatpush.xpose.msra.mxu0 0.0
  %1129 = vmatpush.xpose.msra.mxu0 0.0
  %1130 = vmatpush.xpose.msra.mxu0 %v1113
  %1131 = vmatmul.f32.gmra.mxu0 %v1111
  %v1132 = vpop.f32.mrf.mxu0
  %v1133 = vadd.f32 0.0, %v1132
  %1134 = vdwg.mxu0
  %v1135 = vsel %vm108, %v1105, -inf
  %1136 = vmax.xlane.f32.xlu0 %v1135
  %v1137 = vpop.xlane.xlu0 %1136
  %v1138 = vsel %vm108, %v1133, -inf
  %1139 = vmax.xlane.f32.xlu0 %v1138
  %v1140 = vpop.xlane.xlu0 %1139
  %v1141 = vsub.f32 %v1105, %v1137
  %v1142 = vsub.f32 %v1133, %v1140
  %v1143 = vmul.f32 %v1141, 1.442695
  %v1144 = vpow.pop %v1143
  %v1145 = vmul.f32 %v1142, 1.442695
  %v1146 = vpow.pop %v1145
  %v1147 = vsel %vm108, %v1144, 0.0
  %1148 = vadd.xlane.f32.xlu0 %v1147
  %v1149 = vpop.xlane.xlu0 %1148
  %v1150 = vsel %vm108, %v1146, 0.0
  %1151 = vadd.xlane.f32.xlu0 %v1150
  %v1152 = vpop.xlane.xlu0 %1151
  %v1153 = vrcp.pop %v1149
  %v1154 = vrcp.pop %v1152
  %v1155 = vmul.f32 %v1144, %v1153
  %v1156 = vmul.f32 %v1146, %v1154
  %1157 = vrot.lane.b32.xlu0 %v819, 80
  %v1158 = vpop.permute.xlu0 %1157
  %v1161 = vsel %vm108, %v1155, 0
  %1163 = vmatpush.msra.mxu0 0.0
  %1164 = vmatpush.msra.mxu0 0.0
  %1165 = vmatpush.msra.mxu0 0.0
  %1166 = vmatpush.msra.mxu0 0.0
  %1167 = vmatpush.msra.mxu0 0.0
  %1168 = vmatpush.msra.mxu0 0.0
  %1169 = vmatpush.msra.mxu0 0.0
  %1170 = vmatpush.msra.mxu0 0.0
  %1171 = vmatpush.msra.mxu0 0.0
  %1172 = vmatpush.msra.mxu0 0.0
  %1173 = vmatpush.msra.mxu0 0.0
  %1174 = vmatpush.msra.mxu0 0.0
  %1175 = vmatpush.msra.mxu0 0.0
  %1176 = vmatpush.msra.mxu0 0.0
  %1177 = vmatpush.msra.mxu0 0.0
  %1178 = vmatpush.msra.mxu0 %v1158
  %1179 = vmatmul.f32.gmra.mxu0 %v1161
  %v1180 = vpop.f32.mrf.mxu0
  %v1181 = vadd.f32 0.0, %v1180
  %1182 = vdwg.mxu0
  %1183 = vrot.lane.b32.xlu0 %v821, 80
  %v1184 = vpop.permute.xlu0 %1183
  %v1187 = vsel %vm108, %v1156, 0
  %1189 = vmatpush.msra.mxu0 0.0
  %1190 = vmatpush.msra.mxu0 0.0
  %1191 = vmatpush.msra.mxu0 0.0
  %1192 = vmatpush.msra.mxu0 0.0
  %1193 = vmatpush.msra.mxu0 0.0
  %1194 = vmatpush.msra.mxu0 0.0
  %1195 = vmatpush.msra.mxu0 0.0
  %1196 = vmatpush.msra.mxu0 0.0
  %1197 = vmatpush.msra.mxu0 0.0
  %1198 = vmatpush.msra.mxu0 0.0
  %1199 = vmatpush.msra.mxu0 0.0
  %1200 = vmatpush.msra.mxu0 0.0
  %1201 = vmatpush.msra.mxu0 0.0
  %1202 = vmatpush.msra.mxu0 0.0
  %1203 = vmatpush.msra.mxu0 0.0
  %1204 = vmatpush.msra.mxu0 %v1184
  %1205 = vmatmul.f32.gmra.mxu0 %v1187
  %v1206 = vpop.f32.mrf.mxu0
  %v1207 = vadd.f32 0.0, %v1206
  %1208 = vdwg.mxu0
  %1209 = vrot.lane.b32.xlu0 %v781, 104
  %v1210 = vpop.permute.xlu0 %1209
  %1211 = vrot.lane.b32.xlu0 %v819, 104
  %v1212 = vpop.permute.xlu0 %1211
  %v1213 = vsel %vm108, %v1210, 0
  %v1215 = vsel %vm108, %v1212, 0
  %1217 = vmatpush.xpose.msra.mxu0 0.0
  %1218 = vmatpush.xpose.msra.mxu0 0.0
  %1219 = vmatpush.xpose.msra.mxu0 0.0
  %1220 = vmatpush.xpose.msra.mxu0 0.0
  %1221 = vmatpush.xpose.msra.mxu0 0.0
  %1222 = vmatpush.xpose.msra.mxu0 0.0
  %1223 = vmatpush.xpose.msra.mxu0 0.0
  %1224 = vmatpush.xpose.msra.mxu0 0.0
  %1225 = vmatpush.xpose.msra.mxu0 0.0
  %1226 = vmatpush.xpose.msra.mxu0 0.0
  %1227 = vmatpush.xpose.msra.mxu0 0.0
  %1228 = vmatpush.xpose.msra.mxu0 0.0
  %1229 = vmatpush.xpose.msra.mxu0 0.0
  %1230 = vmatpush.xpose.msra.mxu0 0.0
  %1231 = vmatpush.xpose.msra.mxu0 0.0
  %1232 = vmatpush.xpose.msra.mxu0 %v1215
  %1233 = vmatmul.f32.gmra.mxu0 %v1213
  %v1234 = vpop.f32.mrf.mxu0
  %v1235 = vadd.f32 0.0, %v1234
  %1236 = vdwg.mxu0
  %1237 = vrot.lane.b32.xlu0 %v783, 104
  %v1238 = vpop.permute.xlu0 %1237
  %1239 = vrot.lane.b32.xlu0 %v821, 104
  %v1240 = vpop.permute.xlu0 %1239
  %v1241 = vsel %vm108, %v1238, 0
  %v1243 = vsel %vm108, %v1240, 0
  %1245 = vmatpush.xpose.msra.mxu0 0.0
  %1246 = vmatpush.xpose.msra.mxu0 0.0
  %1247 = vmatpush.xpose.msra.mxu0 0.0
  %1248 = vmatpush.xpose.msra.mxu0 0.0
  %1249 = vmatpush.xpose.msra.mxu0 0.0
  %1250 = vmatpush.xpose.msra.mxu0 0.0
  %1251 = vmatpush.xpose.msra.mxu0 0.0
  %1252 = vmatpush.xpose.msra.mxu0 0.0
  %1253 = vmatpush.xpose.msra.mxu0 0.0
  %1254 = vmatpush.xpose.msra.mxu0 0.0
  %1255 = vmatpush.xpose.msra.mxu0 0.0
  %1256 = vmatpush.xpose.msra.mxu0 0.0
  %1257 = vmatpush.xpose.msra.mxu0 0.0
  %1258 = vmatpush.xpose.msra.mxu0 0.0
  %1259 = vmatpush.xpose.msra.mxu0 0.0
  %1260 = vmatpush.xpose.msra.mxu0 %v1243
  %1261 = vmatmul.f32.gmra.mxu0 %v1241
  %v1262 = vpop.f32.mrf.mxu0
  %v1263 = vadd.f32 0.0, %v1262
  %1264 = vdwg.mxu0
  %v1265 = vsel %vm108, %v1235, -inf
  %1266 = vmax.xlane.f32.xlu0 %v1265
  %v1267 = vpop.xlane.xlu0 %1266
  %v1268 = vsel %vm108, %v1263, -inf
  %1269 = vmax.xlane.f32.xlu0 %v1268
  %v1270 = vpop.xlane.xlu0 %1269
  %v1271 = vsub.f32 %v1235, %v1267
  %v1272 = vsub.f32 %v1263, %v1270
  %v1273 = vmul.f32 %v1271, 1.442695
  %v1274 = vpow.pop %v1273
  %v1275 = vmul.f32 %v1272, 1.442695
  %v1276 = vpow.pop %v1275
  %v1277 = vsel %vm108, %v1274, 0.0
  %1278 = vadd.xlane.f32.xlu0 %v1277
  %v1279 = vpop.xlane.xlu0 %1278
  %v1280 = vsel %vm108, %v1276, 0.0
  %1281 = vadd.xlane.f32.xlu0 %v1280
  %v1282 = vpop.xlane.xlu0 %1281
  %v1283 = vrcp.pop %v1279
  %v1284 = vrcp.pop %v1282
  %v1285 = vmul.f32 %v1274, %v1283
  %v1286 = vmul.f32 %v1276, %v1284
  %1287 = vrot.lane.b32.xlu0 %v819, 72
  %v1288 = vpop.permute.xlu0 %1287
  %v1291 = vsel %vm108, %v1285, 0
  %1293 = vmatpush.msra.mxu0 0.0
  %1294 = vmatpush.msra.mxu0 0.0
  %1295 = vmatpush.msra.mxu0 0.0
  %1296 = vmatpush.msra.mxu0 0.0
  %1297 = vmatpush.msra.mxu0 0.0
  %1298 = vmatpush.msra.mxu0 0.0
  %1299 = vmatpush.msra.mxu0 0.0
  %1300 = vmatpush.msra.mxu0 0.0
  %1301 = vmatpush.msra.mxu0 0.0
  %1302 = vmatpush.msra.mxu0 0.0
  %1303 = vmatpush.msra.mxu0 0.0
  %1304 = vmatpush.msra.mxu0 0.0
  %1305 = vmatpush.msra.mxu0 0.0
  %1306 = vmatpush.msra.mxu0 0.0
  %1307 = vmatpush.msra.mxu0 0.0
  %1308 = vmatpush.msra.mxu0 %v1288
  %1309 = vmatmul.f32.gmra.mxu0 %v1291
  %v1310 = vpop.f32.mrf.mxu0
  %v1311 = vadd.f32 0.0, %v1310
  %1312 = vdwg.mxu0
  %1313 = vrot.lane.b32.xlu0 %v821, 72
  %v1314 = vpop.permute.xlu0 %1313
  %v1317 = vsel %vm108, %v1286, 0
  %1319 = vmatpush.msra.mxu0 0.0
  %1320 = vmatpush.msra.mxu0 0.0
  %1321 = vmatpush.msra.mxu0 0.0
  %1322 = vmatpush.msra.mxu0 0.0
  %1323 = vmatpush.msra.mxu0 0.0
  %1324 = vmatpush.msra.mxu0 0.0
  %1325 = vmatpush.msra.mxu0 0.0
  %1326 = vmatpush.msra.mxu0 0.0
  %1327 = vmatpush.msra.mxu0 0.0
  %1328 = vmatpush.msra.mxu0 0.0
  %1329 = vmatpush.msra.mxu0 0.0
  %1330 = vmatpush.msra.mxu0 0.0
  %1331 = vmatpush.msra.mxu0 0.0
  %1332 = vmatpush.msra.mxu0 0.0
  %1333 = vmatpush.msra.mxu0 0.0
  %1334 = vmatpush.msra.mxu0 %v1314
  %1335 = vmatmul.f32.gmra.mxu0 %v1317
  %v1336 = vpop.f32.mrf.mxu0
  %v1337 = vadd.f32 0.0, %v1336
  %1338 = vdwg.mxu0
  %1341 = vrot.lane.b32.xlu0 %v1051, 8
  %v1342 = vpop.permute.xlu0 %1341
  %1343 = vrot.lane.b32.xlu0 %v1077, 8
  %v1344 = vpop.permute.xlu0 %1343
  %1349 = vrot.lane.b32.xlu0 %v1181, 16
  %v1350 = vpop.permute.xlu0 %1349
  %1351 = vrot.lane.b32.xlu0 %v1207, 16
  %v1352 = vpop.permute.xlu0 %1351
  %1357 = vrot.lane.b32.xlu0 %v1311, 24
  %v1358 = vpop.permute.xlu0 %1357
  %1359 = vrot.lane.b32.xlu0 %v1337, 24
  %v1360 = vpop.permute.xlu0 %1359
  %v1363 = vsel %vm108, %v921, %v1342
  %v1364 = vsel %vm108, %v947, %v1344
  %v1365 = vsel %vm650, %v1363, %v1350
  %v1366 = vsel %vm650, %v1364, %v1352
  %v1367 = vsel %vm653, %v1365, %v1358
  %v1368 = vsel %vm653, %v1366, %v1360
  %v1369 = vpack.c.bf16 %v1368, %v1367
  %v1370 = vld [vmem:[%s8] sm:$0xf]
  %v1371 = vld [vmem:[%s8 + $0x4] sm:$0xf]
  %v1372 = vld [vmem:[%s8 + $0x8] sm:$0xf]
  %v1373 = vld [vmem:[%s8 + $0xc] sm:$0xf]
  %v1374 = vperm.slane %v64, 2
  %v1379 = vunpack.c.l.b16 %v1370
  %v1380 = vunpack.c.l.b16 %v1371
  %v1381 = vunpack.c.l.b16 %v1372
  %v1382 = vunpack.c.l.b16 %v1373
  %v1383 = vpack.c.b16 %v1380, %v1379
  %v1384 = vpack.c.b16 %v1382, %v1381
  %v1388 = vsel %vm87, %v1369, 0
  %1390 = vmatpush.bf16.msra.mxu0 0
  %1391 = vmatpush.bf16.msra.mxu0 0
  %1392 = vmatpush.bf16.msra.mxu0 0
  %1393 = vmatpush.bf16.msra.mxu0 0
  %1394 = vmatpush.bf16.msra.mxu0 0
  %1395 = vmatpush.bf16.msra.mxu0 0
  %1396 = vmatpush.bf16.msra.mxu0 %v1384
  %1397 = vmatpush.bf16.msra.mxu0 %v1383
  %1398 = vmatmul.bf16.gmra.mxu0 %v1388
  %v1399 = vpop.f32.mrf.mxu0
  %v1400 = vadd.f32 %v1374, %v1399
  %v1401 = vpop.f32.mrf.mxu0
  %v1402 = vadd.f32 %v1374, %v1401
  %1403 = vdwg.mxu0
  %v1404 = vadd.f32 %v748, %v1400
  %v1405 = vadd.f32 %v749, %v1402
  %v1406 = vsel %vm87, %v1404, 0.0
  %1407 = vadd.xlane.f32.xlu0 %v1406
  %v1408 = vpop.xlane.xlu0 %1407
  %v1409 = vsel %vm87, %v1405, 0.0
  %1410 = vadd.xlane.f32.xlu0 %v1409
  %v1411 = vpop.xlane.xlu0 %1410
  %v1412 = vmul.f32 %v1408, %v705
  %v1413 = vmul.f32 %v1411, %v705
  %v1414 = vsub.f32 %v1404, %v1412
  %v1415 = vsub.f32 %v1405, %v1413
  %v1416 = vmul.f32 %v1414, %v1414
  %v1417 = vmul.f32 %v1415, %v1415
  %v1418 = vsel %vm87, %v1416, 0.0
  %1419 = vadd.xlane.f32.xlu0 %v1418
  %v1420 = vpop.xlane.xlu0 %1419
  %v1421 = vsel %vm87, %v1417, 0.0
  %1422 = vadd.xlane.f32.xlu0 %v1421
  %v1423 = vpop.xlane.xlu0 %1422
  %v1424 = vmul.f32 %v1420, %v705
  %v1425 = vmul.f32 %v1423, %v705
  %v1426 = vadd.f32 %v1424, 1e-05
  %v1427 = vadd.f32 %v1425, 1e-05
  %v1428 = vrsqrt.pop %v1426
  %v1429 = vmul.f32 %v1428, %v1426
  %v1430 = vmul.f32 %v1429, %v1428
  %v1431 = vmul.f32 0.5, %v1430
  %v1432 = vsub.f32 1.5, %v1431
  %v1433 = vmul.f32 %v1428, %v1432
  %vm1434 = vweird.f32 %v1426
  %vm1435 = vweird.f32 %v1428
  %vm1436 = vmor %vm1434, %vm1435
  %v1437 = vsel %vm1436, %v1428, %v1433
  %v1438 = vrsqrt.pop %v1427
  %v1439 = vmul.f32 %v1438, %v1427
  %v1440 = vmul.f32 %v1439, %v1438
  %v1441 = vmul.f32 0.5, %v1440
  %v1442 = vsub.f32 1.5, %v1441
  %v1443 = vmul.f32 %v1438, %v1442
  %vm1444 = vweird.f32 %v1427
  %vm1445 = vweird.f32 %v1438
  %vm1446 = vmor %vm1444, %vm1445
  %v1447 = vsel %vm1446, %v1438, %v1443
  %v1448 = vmul.f32 %v1414, %v1437
  %v1449 = vmul.f32 %v1415, %v1447
  %v1450 = vperm.slane %v64, 6
  %v1451 = vmul.f32 %v1448, %v1450
  %v1452 = vmul.f32 %v1449, %v1450
  %v1453 = vperm.slane %v64, 7
  %v1454 = vadd.f32 %v1451, %v1453
  %v1455 = vadd.f32 %v1452, %v1453
  %v1456 = vpack.c.bf16 %v1455, %v1454
  %v1457 = vld [vmem:[%s9] sm:$0xff]
  %v1458 = vld [vmem:[%s9 + $0x8] sm:$0xff]
  %v1459 = vld [vmem:[%s9 + $0x10] sm:$0xff]
  %v1460 = vld [vmem:[%s9 + $0x18] sm:$0xff]
  %v1461 = vld [vmem:[%s9 + $0x20] sm:$0xff]
  %v1462 = vld [vmem:[%s9 + $0x28] sm:$0xff]
  %v1463 = vld [vmem:[%s9 + $0x30] sm:$0xff]
  %v1464 = vld [vmem:[%s9 + $0x38] sm:$0xff]
  %v1465 = vld [vmem:[%s9 + $0x40] sm:$0xff]
  %v1466 = vld [vmem:[%s9 + $0x48] sm:$0xff]
  %v1467 = vld [vmem:[%s9 + $0x50] sm:$0xff]
  %v1468 = vld [vmem:[%s9 + $0x58] sm:$0xff]
  %v1469 = vld [vmem:[%s9 + $0x60] sm:$0xff]
  %v1470 = vld [vmem:[%s9 + $0x68] sm:$0xff]
  %v1471 = vld [vmem:[%s9 + $0x70] sm:$0xff]
  %v1472 = vld [vmem:[%s9 + $0x78] sm:$0xff]
  %v1473 = vld [vmem:[%s9 + $0x80] sm:$0xff]
  %v1474 = vld [vmem:[%s9 + $0x88] sm:$0xff]
  %v1475 = vld [vmem:[%s9 + $0x90] sm:$0xff]
  %v1476 = vld [vmem:[%s9 + $0x98] sm:$0xff]
  %v1477 = vld [vmem:[%s9 + $0xa0] sm:$0xff]
  %v1478 = vld [vmem:[%s9 + $0xa8] sm:$0xff]
  %v1479 = vld [vmem:[%s9 + $0xb0] sm:$0xff]
  %v1480 = vld [vmem:[%s9 + $0xb8] sm:$0xff]
  %v1481 = vld [vmem:[%s9 + $0xc0] sm:$0xff]
  %v1482 = vld [vmem:[%s9 + $0xc8] sm:$0xff]
  %v1483 = vld [vmem:[%s9 + $0xd0] sm:$0xff]
  %v1484 = vld [vmem:[%s9 + $0xd8] sm:$0xff]
  %v1485 = vld [vmem:[%s9 + $0xe0] sm:$0xff]
  %v1486 = vld [vmem:[%s9 + $0xe8] sm:$0xff]
  %v1487 = vld [vmem:[%s9 + $0xf0] sm:$0xff]
  %v1488 = vld [vmem:[%s9 + $0xf8] sm:$0xff]
  %v1489 = vld [vmem:[%s10] sm:$0xff]
  %v1490 = vld [vmem:[%s10 + $0x8] sm:$0xff]
  %v1493 = vperm.slane %v1489, 0
  %v1494 = vperm.slane %v1489, 1
  %v1495 = vperm.slane %v1489, 2
  %v1496 = vperm.slane %v1489, 3
  %v1497 = vperm.slane %v1489, 4
  %v1498 = vperm.slane %v1489, 5
  %v1499 = vperm.slane %v1489, 6
  %v1500 = vperm.slane %v1489, 7
  %v1501 = vperm.slane %v1490, 0
  %v1502 = vperm.slane %v1490, 1
  %v1503 = vperm.slane %v1490, 2
  %v1504 = vperm.slane %v1490, 3
  %v1505 = vperm.slane %v1490, 4
  %v1506 = vperm.slane %v1490, 5
  %v1507 = vperm.slane %v1490, 6
  %v1508 = vperm.slane %v1490, 7
  %v1557 = vunpack.c.l.b16 %v1457
  %v1558 = vunpack.c.h.b16 %v1457
  %v1559 = vunpack.c.l.b16 %v1458
  %v1560 = vunpack.c.h.b16 %v1458
  %v1561 = vunpack.c.l.b16 %v1459
  %v1562 = vunpack.c.h.b16 %v1459
  %v1563 = vunpack.c.l.b16 %v1460
  %v1564 = vunpack.c.h.b16 %v1460
  %v1565 = vunpack.c.l.b16 %v1461
  %v1566 = vunpack.c.h.b16 %v1461
  %v1567 = vunpack.c.l.b16 %v1462
  %v1568 = vunpack.c.h.b16 %v1462
  %v1569 = vunpack.c.l.b16 %v1463
  %v1570 = vunpack.c.h.b16 %v1463
  %v1571 = vunpack.c.l.b16 %v1464
  %v1572 = vunpack.c.h.b16 %v1464
  %v1573 = vunpack.c.l.b16 %v1465
  %v1574 = vunpack.c.h.b16 %v1465
  %v1575 = vunpack.c.l.b16 %v1466
  %v1576 = vunpack.c.h.b16 %v1466
  %v1577 = vunpack.c.l.b16 %v1467
  %v1578 = vunpack.c.h.b16 %v1467
  %v1579 = vunpack.c.l.b16 %v1468
  %v1580 = vunpack.c.h.b16 %v1468
  %v1581 = vunpack.c.l.b16 %v1469
  %v1582 = vunpack.c.h.b16 %v1469
  %v1583 = vunpack.c.l.b16 %v1470
  %v1584 = vunpack.c.h.b16 %v1470
  %v1585 = vunpack.c.l.b16 %v1471
  %v1586 = vunpack.c.h.b16 %v1471
  %v1587 = vunpack.c.l.b16 %v1472
  %v1588 = vunpack.c.h.b16 %v1472
  %v1589 = vunpack.c.l.b16 %v1473
  %v1590 = vunpack.c.h.b16 %v1473
  %v1591 = vunpack.c.l.b16 %v1474
  %v1592 = vunpack.c.h.b16 %v1474
  %v1593 = vunpack.c.l.b16 %v1475
  %v1594 = vunpack.c.h.b16 %v1475
  %v1595 = vunpack.c.l.b16 %v1476
  %v1596 = vunpack.c.h.b16 %v1476
  %v1597 = vunpack.c.l.b16 %v1477
  %v1598 = vunpack.c.h.b16 %v1477
  %v1599 = vunpack.c.l.b16 %v1478
  %v1600 = vunpack.c.h.b16 %v1478
  %v1601 = vunpack.c.l.b16 %v1479
  %v1602 = vunpack.c.h.b16 %v1479
  %v1603 = vunpack.c.l.b16 %v1480
  %v1604 = vunpack.c.h.b16 %v1480
  %v1605 = vunpack.c.l.b16 %v1481
  %v1606 = vunpack.c.h.b16 %v1481
  %v1607 = vunpack.c.l.b16 %v1482
  %v1608 = vunpack.c.h.b16 %v1482
  %v1609 = vunpack.c.l.b16 %v1483
  %v1610 = vunpack.c.h.b16 %v1483
  %v1611 = vunpack.c.l.b16 %v1484
  %v1612 = vunpack.c.h.b16 %v1484
  %v1613 = vunpack.c.l.b16 %v1485
  %v1614 = vunpack.c.h.b16 %v1485
  %v1615 = vunpack.c.l.b16 %v1486
  %v1616 = vunpack.c.h.b16 %v1486
  %v1617 = vunpack.c.l.b16 %v1487
  %v1618 = vunpack.c.h.b16 %v1487
  %v1619 = vunpack.c.l.b16 %v1488
  %v1620 = vunpack.c.h.b16 %v1488
  %v1621 = vpack.c.b16 %v1573, %v1557
  %v1622 = vpack.c.b16 %v1574, %v1558
  %v1623 = vpack.c.b16 %v1575, %v1559
  %v1624 = vpack.c.b16 %v1576, %v1560
  %v1625 = vpack.c.b16 %v1577, %v1561
  %v1626 = vpack.c.b16 %v1578, %v1562
  %v1627 = vpack.c.b16 %v1579, %v1563
  %v1628 = vpack.c.b16 %v1580, %v1564
  %v1629 = vpack.c.b16 %v1581, %v1565
  %v1630 = vpack.c.b16 %v1582, %v1566
  %v1631 = vpack.c.b16 %v1583, %v1567
  %v1632 = vpack.c.b16 %v1584, %v1568
  %v1633 = vpack.c.b16 %v1585, %v1569
  %v1634 = vpack.c.b16 %v1586, %v1570
  %v1635 = vpack.c.b16 %v1587, %v1571
  %v1636 = vpack.c.b16 %v1588, %v1572
  %v1637 = vpack.c.b16 %v1605, %v1589
  %v1638 = vpack.c.b16 %v1606, %v1590
  %v1639 = vpack.c.b16 %v1607, %v1591
  %v1640 = vpack.c.b16 %v1608, %v1592
  %v1641 = vpack.c.b16 %v1609, %v1593
  %v1642 = vpack.c.b16 %v1610, %v1594
  %v1643 = vpack.c.b16 %v1611, %v1595
  %v1644 = vpack.c.b16 %v1612, %v1596
  %v1645 = vpack.c.b16 %v1613, %v1597
  %v1646 = vpack.c.b16 %v1614, %v1598
  %v1647 = vpack.c.b16 %v1615, %v1599
  %v1648 = vpack.c.b16 %v1616, %v1600
  %v1649 = vpack.c.b16 %v1617, %v1601
  %v1650 = vpack.c.b16 %v1618, %v1602
  %v1651 = vpack.c.b16 %v1619, %v1603
  %v1652 = vpack.c.b16 %v1620, %v1604
  %v1686 = vsel %vm87, %v1456, 0
  %1688 = vmatpush.bf16.msra.mxu0 0
  %1689 = vmatpush.bf16.msra.mxu0 0
  %1690 = vmatpush.bf16.msra.mxu0 0
  %1691 = vmatpush.bf16.msra.mxu0 0
  %1692 = vmatpush.bf16.msra.mxu0 0
  %1693 = vmatpush.bf16.msra.mxu0 0
  %1694 = vmatpush.bf16.msra.mxu0 %v1637
  %1695 = vmatpush.bf16.msra.mxu0 %v1621
  %1696 = vmatmul.bf16.gmra.mxu0 %v1686
  %v1697 = vpop.f32.mrf.mxu0
  %v1698 = vadd.f32 %v1493, %v1697
  %v1699 = vpop.f32.mrf.mxu0
  %v1700 = vadd.f32 %v1493, %v1699
  %1701 = vdwg.mxu0
  %1702 = vmatpush.bf16.msra.mxu0 0
  %1703 = vmatpush.bf16.msra.mxu0 0
  %1704 = vmatpush.bf16.msra.mxu0 0
  %1705 = vmatpush.bf16.msra.mxu0 0
  %1706 = vmatpush.bf16.msra.mxu0 0
  %1707 = vmatpush.bf16.msra.mxu0 0
  %1708 = vmatpush.bf16.msra.mxu0 %v1638
  %1709 = vmatpush.bf16.msra.mxu0 %v1622
  %1710 = vmatmul.bf16.gmra.mxu0 %v1686
  %v1711 = vpop.f32.mrf.mxu0
  %v1712 = vadd.f32 %v1494, %v1711
  %v1713 = vpop.f32.mrf.mxu0
  %v1714 = vadd.f32 %v1494, %v1713
  %1715 = vdwg.mxu0
  %1716 = vmatpush.bf16.msra.mxu0 0
  %1717 = vmatpush.bf16.msra.mxu0 0
  %1718 = vmatpush.bf16.msra.mxu0 0
  %1719 = vmatpush.bf16.msra.mxu0 0
  %1720 = vmatpush.bf16.msra.mxu0 0
  %1721 = vmatpush.bf16.msra.mxu0 0
  %1722 = vmatpush.bf16.msra.mxu0 %v1639
  %1723 = vmatpush.bf16.msra.mxu0 %v1623
  %1724 = vmatmul.bf16.gmra.mxu0 %v1686
  %v1725 = vpop.f32.mrf.mxu0
  %v1726 = vadd.f32 %v1495, %v1725
  %v1727 = vpop.f32.mrf.mxu0
  %v1728 = vadd.f32 %v1495, %v1727
  %1729 = vdwg.mxu0
  %1730 = vmatpush.bf16.msra.mxu0 0
  %1731 = vmatpush.bf16.msra.mxu0 0
  %1732 = vmatpush.bf16.msra.mxu0 0
  %1733 = vmatpush.bf16.msra.mxu0 0
  %1734 = vmatpush.bf16.msra.mxu0 0
  %1735 = vmatpush.bf16.msra.mxu0 0
  %1736 = vmatpush.bf16.msra.mxu0 %v1640
  %1737 = vmatpush.bf16.msra.mxu0 %v1624
  %1738 = vmatmul.bf16.gmra.mxu0 %v1686
  %v1739 = vpop.f32.mrf.mxu0
  %v1740 = vadd.f32 %v1496, %v1739
  %v1741 = vpop.f32.mrf.mxu0
  %v1742 = vadd.f32 %v1496, %v1741
  %1743 = vdwg.mxu0
  %1744 = vmatpush.bf16.msra.mxu0 0
  %1745 = vmatpush.bf16.msra.mxu0 0
  %1746 = vmatpush.bf16.msra.mxu0 0
  %1747 = vmatpush.bf16.msra.mxu0 0
  %1748 = vmatpush.bf16.msra.mxu0 0
  %1749 = vmatpush.bf16.msra.mxu0 0
  %1750 = vmatpush.bf16.msra.mxu0 %v1641
  %1751 = vmatpush.bf16.msra.mxu0 %v1625
  %1752 = vmatmul.bf16.gmra.mxu0 %v1686
  %v1753 = vpop.f32.mrf.mxu0
  %v1754 = vadd.f32 %v1497, %v1753
  %v1755 = vpop.f32.mrf.mxu0
  %v1756 = vadd.f32 %v1497, %v1755
  %1757 = vdwg.mxu0
  %1758 = vmatpush.bf16.msra.mxu0 0
  %1759 = vmatpush.bf16.msra.mxu0 0
  %1760 = vmatpush.bf16.msra.mxu0 0
  %1761 = vmatpush.bf16.msra.mxu0 0
  %1762 = vmatpush.bf16.msra.mxu0 0
  %1763 = vmatpush.bf16.msra.mxu0 0
  %1764 = vmatpush.bf16.msra.mxu0 %v1642
  %1765 = vmatpush.bf16.msra.mxu0 %v1626
  %1766 = vmatmul.bf16.gmra.mxu0 %v1686
  %v1767 = vpop.f32.mrf.mxu0
  %v1768 = vadd.f32 %v1498, %v1767
  %v1769 = vpop.f32.mrf.mxu0
  %v1770 = vadd.f32 %v1498, %v1769
  %1771 = vdwg.mxu0
  %1772 = vmatpush.bf16.msra.mxu0 0
  %1773 = vmatpush.bf16.msra.mxu0 0
  %1774 = vmatpush.bf16.msra.mxu0 0
  %1775 = vmatpush.bf16.msra.mxu0 0
  %1776 = vmatpush.bf16.msra.mxu0 0
  %1777 = vmatpush.bf16.msra.mxu0 0
  %1778 = vmatpush.bf16.msra.mxu0 %v1643
  %1779 = vmatpush.bf16.msra.mxu0 %v1627
  %1780 = vmatmul.bf16.gmra.mxu0 %v1686
  %v1781 = vpop.f32.mrf.mxu0
  %v1782 = vadd.f32 %v1499, %v1781
  %v1783 = vpop.f32.mrf.mxu0
  %v1784 = vadd.f32 %v1499, %v1783
  %1785 = vdwg.mxu0
  %1786 = vmatpush.bf16.msra.mxu0 0
  %1787 = vmatpush.bf16.msra.mxu0 0
  %1788 = vmatpush.bf16.msra.mxu0 0
  %1789 = vmatpush.bf16.msra.mxu0 0
  %1790 = vmatpush.bf16.msra.mxu0 0
  %1791 = vmatpush.bf16.msra.mxu0 0
  %1792 = vmatpush.bf16.msra.mxu0 %v1644
  %1793 = vmatpush.bf16.msra.mxu0 %v1628
  %1794 = vmatmul.bf16.gmra.mxu0 %v1686
  %v1795 = vpop.f32.mrf.mxu0
  %v1796 = vadd.f32 %v1500, %v1795
  %v1797 = vpop.f32.mrf.mxu0
  %v1798 = vadd.f32 %v1500, %v1797
  %1799 = vdwg.mxu0
  %1800 = vmatpush.bf16.msra.mxu0 0
  %1801 = vmatpush.bf16.msra.mxu0 0
  %1802 = vmatpush.bf16.msra.mxu0 0
  %1803 = vmatpush.bf16.msra.mxu0 0
  %1804 = vmatpush.bf16.msra.mxu0 0
  %1805 = vmatpush.bf16.msra.mxu0 0
  %1806 = vmatpush.bf16.msra.mxu0 %v1645
  %1807 = vmatpush.bf16.msra.mxu0 %v1629
  %1808 = vmatmul.bf16.gmra.mxu0 %v1686
  %v1809 = vpop.f32.mrf.mxu0
  %v1810 = vadd.f32 %v1501, %v1809
  %v1811 = vpop.f32.mrf.mxu0
  %v1812 = vadd.f32 %v1501, %v1811
  %1813 = vdwg.mxu0
  %1814 = vmatpush.bf16.msra.mxu0 0
  %1815 = vmatpush.bf16.msra.mxu0 0
  %1816 = vmatpush.bf16.msra.mxu0 0
  %1817 = vmatpush.bf16.msra.mxu0 0
  %1818 = vmatpush.bf16.msra.mxu0 0
  %1819 = vmatpush.bf16.msra.mxu0 0
  %1820 = vmatpush.bf16.msra.mxu0 %v1646
  %1821 = vmatpush.bf16.msra.mxu0 %v1630
  %1822 = vmatmul.bf16.gmra.mxu0 %v1686
  %v1823 = vpop.f32.mrf.mxu0
  %v1824 = vadd.f32 %v1502, %v1823
  %v1825 = vpop.f32.mrf.mxu0
  %v1826 = vadd.f32 %v1502, %v1825
  %1827 = vdwg.mxu0
  %1828 = vmatpush.bf16.msra.mxu0 0
  %1829 = vmatpush.bf16.msra.mxu0 0
  %1830 = vmatpush.bf16.msra.mxu0 0
  %1831 = vmatpush.bf16.msra.mxu0 0
  %1832 = vmatpush.bf16.msra.mxu0 0
  %1833 = vmatpush.bf16.msra.mxu0 0
  %1834 = vmatpush.bf16.msra.mxu0 %v1647
  %1835 = vmatpush.bf16.msra.mxu0 %v1631
  %1836 = vmatmul.bf16.gmra.mxu0 %v1686
  %v1837 = vpop.f32.mrf.mxu0
  %v1838 = vadd.f32 %v1503, %v1837
  %v1839 = vpop.f32.mrf.mxu0
  %v1840 = vadd.f32 %v1503, %v1839
  %1841 = vdwg.mxu0
  %1842 = vmatpush.bf16.msra.mxu0 0
  %1843 = vmatpush.bf16.msra.mxu0 0
  %1844 = vmatpush.bf16.msra.mxu0 0
  %1845 = vmatpush.bf16.msra.mxu0 0
  %1846 = vmatpush.bf16.msra.mxu0 0
  %1847 = vmatpush.bf16.msra.mxu0 0
  %1848 = vmatpush.bf16.msra.mxu0 %v1648
  %1849 = vmatpush.bf16.msra.mxu0 %v1632
  %1850 = vmatmul.bf16.gmra.mxu0 %v1686
  %v1851 = vpop.f32.mrf.mxu0
  %v1852 = vadd.f32 %v1504, %v1851
  %v1853 = vpop.f32.mrf.mxu0
  %v1854 = vadd.f32 %v1504, %v1853
  %1855 = vdwg.mxu0
  %1856 = vmatpush.bf16.msra.mxu0 0
  %1857 = vmatpush.bf16.msra.mxu0 0
  %1858 = vmatpush.bf16.msra.mxu0 0
  %1859 = vmatpush.bf16.msra.mxu0 0
  %1860 = vmatpush.bf16.msra.mxu0 0
  %1861 = vmatpush.bf16.msra.mxu0 0
  %1862 = vmatpush.bf16.msra.mxu0 %v1649
  %1863 = vmatpush.bf16.msra.mxu0 %v1633
  %1864 = vmatmul.bf16.gmra.mxu0 %v1686
  %v1865 = vpop.f32.mrf.mxu0
  %v1866 = vadd.f32 %v1505, %v1865
  %v1867 = vpop.f32.mrf.mxu0
  %v1868 = vadd.f32 %v1505, %v1867
  %1869 = vdwg.mxu0
  %1870 = vmatpush.bf16.msra.mxu0 0
  %1871 = vmatpush.bf16.msra.mxu0 0
  %1872 = vmatpush.bf16.msra.mxu0 0
  %1873 = vmatpush.bf16.msra.mxu0 0
  %1874 = vmatpush.bf16.msra.mxu0 0
  %1875 = vmatpush.bf16.msra.mxu0 0
  %1876 = vmatpush.bf16.msra.mxu0 %v1650
  %1877 = vmatpush.bf16.msra.mxu0 %v1634
  %1878 = vmatmul.bf16.gmra.mxu0 %v1686
  %v1879 = vpop.f32.mrf.mxu0
  %v1880 = vadd.f32 %v1506, %v1879
  %v1881 = vpop.f32.mrf.mxu0
  %v1882 = vadd.f32 %v1506, %v1881
  %1883 = vdwg.mxu0
  %1884 = vmatpush.bf16.msra.mxu0 0
  %1885 = vmatpush.bf16.msra.mxu0 0
  %1886 = vmatpush.bf16.msra.mxu0 0
  %1887 = vmatpush.bf16.msra.mxu0 0
  %1888 = vmatpush.bf16.msra.mxu0 0
  %1889 = vmatpush.bf16.msra.mxu0 0
  %1890 = vmatpush.bf16.msra.mxu0 %v1651
  %1891 = vmatpush.bf16.msra.mxu0 %v1635
  %1892 = vmatmul.bf16.gmra.mxu0 %v1686
  %v1893 = vpop.f32.mrf.mxu0
  %v1894 = vadd.f32 %v1507, %v1893
  %v1895 = vpop.f32.mrf.mxu0
  %v1896 = vadd.f32 %v1507, %v1895
  %1897 = vdwg.mxu0
  %1898 = vmatpush.bf16.msra.mxu0 0
  %1899 = vmatpush.bf16.msra.mxu0 0
  %1900 = vmatpush.bf16.msra.mxu0 0
  %1901 = vmatpush.bf16.msra.mxu0 0
  %1902 = vmatpush.bf16.msra.mxu0 0
  %1903 = vmatpush.bf16.msra.mxu0 0
  %1904 = vmatpush.bf16.msra.mxu0 %v1652
  %1905 = vmatpush.bf16.msra.mxu0 %v1636
  %1906 = vmatmul.bf16.gmra.mxu0 %v1686
  %v1907 = vpop.f32.mrf.mxu0
  %v1908 = vadd.f32 %v1508, %v1907
  %v1909 = vpop.f32.mrf.mxu0
  %v1910 = vadd.f32 %v1508, %v1909
  %1911 = vdwg.mxu0
  %v1912 = vmax.f32 %v1698, 0.0
  %v1913 = vmax.f32 %v1712, 0.0
  %v1914 = vmax.f32 %v1726, 0.0
  %v1915 = vmax.f32 %v1740, 0.0
  %v1916 = vmax.f32 %v1754, 0.0
  %v1917 = vmax.f32 %v1768, 0.0
  %v1918 = vmax.f32 %v1782, 0.0
  %v1919 = vmax.f32 %v1796, 0.0
  %v1920 = vmax.f32 %v1810, 0.0
  %v1921 = vmax.f32 %v1824, 0.0
  %v1922 = vmax.f32 %v1838, 0.0
  %v1923 = vmax.f32 %v1852, 0.0
  %v1924 = vmax.f32 %v1866, 0.0
  %v1925 = vmax.f32 %v1880, 0.0
  %v1926 = vmax.f32 %v1894, 0.0
  %v1927 = vmax.f32 %v1908, 0.0
  %v1928 = vmax.f32 %v1700, 0.0
  %v1929 = vmax.f32 %v1714, 0.0
  %v1930 = vmax.f32 %v1728, 0.0
  %v1931 = vmax.f32 %v1742, 0.0
  %v1932 = vmax.f32 %v1756, 0.0
  %v1933 = vmax.f32 %v1770, 0.0
  %v1934 = vmax.f32 %v1784, 0.0
  %v1935 = vmax.f32 %v1798, 0.0
  %v1936 = vmax.f32 %v1812, 0.0
  %v1937 = vmax.f32 %v1826, 0.0
  %v1938 = vmax.f32 %v1840, 0.0
  %v1939 = vmax.f32 %v1854, 0.0
  %v1940 = vmax.f32 %v1868, 0.0
  %v1941 = vmax.f32 %v1882, 0.0
  %v1942 = vmax.f32 %v1896, 0.0
  %v1943 = vmax.f32 %v1910, 0.0
  %v1944 = vpack.c.bf16 %v1928, %v1912
  %v1945 = vpack.c.bf16 %v1929, %v1913
  %v1946 = vpack.c.bf16 %v1930, %v1914
  %v1947 = vpack.c.bf16 %v1931, %v1915
  %v1948 = vpack.c.bf16 %v1932, %v1916
  %v1949 = vpack.c.bf16 %v1933, %v1917
  %v1950 = vpack.c.bf16 %v1934, %v1918
  %v1951 = vpack.c.bf16 %v1935, %v1919
  %v1952 = vpack.c.bf16 %v1936, %v1920
  %v1953 = vpack.c.bf16 %v1937, %v1921
  %v1954 = vpack.c.bf16 %v1938, %v1922
  %v1955 = vpack.c.bf16 %v1939, %v1923
  %v1956 = vpack.c.bf16 %v1940, %v1924
  %v1957 = vpack.c.bf16 %v1941, %v1925
  %v1958 = vpack.c.bf16 %v1942, %v1926
  %v1959 = vpack.c.bf16 %v1943, %v1927
  %v1960 = vld [vmem:[%s11] sm:$0xf]
  %v1961 = vld [vmem:[%s11 + $0x4] sm:$0xf]
  %v1962 = vld [vmem:[%s11 + $0x8] sm:$0xf]
  %v1963 = vld [vmem:[%s11 + $0xc] sm:$0xf]
  %v1964 = vld [vmem:[%s11 + $0x10] sm:$0xf]
  %v1965 = vld [vmem:[%s11 + $0x14] sm:$0xf]
  %v1966 = vld [vmem:[%s11 + $0x18] sm:$0xf]
  %v1967 = vld [vmem:[%s11 + $0x1c] sm:$0xf]
  %v1968 = vld [vmem:[%s11 + $0x20] sm:$0xf]
  %v1969 = vld [vmem:[%s11 + $0x24] sm:$0xf]
  %v1970 = vld [vmem:[%s11 + $0x28] sm:$0xf]
  %v1971 = vld [vmem:[%s11 + $0x2c] sm:$0xf]
  %v1972 = vld [vmem:[%s11 + $0x30] sm:$0xf]
  %v1973 = vld [vmem:[%s11 + $0x34] sm:$0xf]
  %v1974 = vld [vmem:[%s11 + $0x38] sm:$0xf]
  %v1975 = vld [vmem:[%s11 + $0x3c] sm:$0xf]
  %v1976 = vld [vmem:[%s11 + $0x40] sm:$0xf]
  %v1977 = vld [vmem:[%s11 + $0x44] sm:$0xf]
  %v1978 = vld [vmem:[%s11 + $0x48] sm:$0xf]
  %v1979 = vld [vmem:[%s11 + $0x4c] sm:$0xf]
  %v1980 = vld [vmem:[%s11 + $0x50] sm:$0xf]
  %v1981 = vld [vmem:[%s11 + $0x54] sm:$0xf]
  %v1982 = vld [vmem:[%s11 + $0x58] sm:$0xf]
  %v1983 = vld [vmem:[%s11 + $0x5c] sm:$0xf]
  %v1984 = vld [vmem:[%s11 + $0x60] sm:$0xf]
  %v1985 = vld [vmem:[%s11 + $0x64] sm:$0xf]
  %v1986 = vld [vmem:[%s11 + $0x68] sm:$0xf]
  %v1987 = vld [vmem:[%s11 + $0x6c] sm:$0xf]
  %v1988 = vld [vmem:[%s11 + $0x70] sm:$0xf]
  %v1989 = vld [vmem:[%s11 + $0x74] sm:$0xf]
  %v1990 = vld [vmem:[%s11 + $0x78] sm:$0xf]
  %v1991 = vld [vmem:[%s11 + $0x7c] sm:$0xf]
  %v1992 = vld [vmem:[%s11 + $0x80] sm:$0xf]
  %v1993 = vld [vmem:[%s11 + $0x84] sm:$0xf]
  %v1994 = vld [vmem:[%s11 + $0x88] sm:$0xf]
  %v1995 = vld [vmem:[%s11 + $0x8c] sm:$0xf]
  %v1996 = vld [vmem:[%s11 + $0x90] sm:$0xf]
  %v1997 = vld [vmem:[%s11 + $0x94] sm:$0xf]
  %v1998 = vld [vmem:[%s11 + $0x98] sm:$0xf]
  %v1999 = vld [vmem:[%s11 + $0x9c] sm:$0xf]
  %v2000 = vld [vmem:[%s11 + $0xa0] sm:$0xf]
  %v2001 = vld [vmem:[%s11 + $0xa4] sm:$0xf]
  %v2002 = vld [vmem:[%s11 + $0xa8] sm:$0xf]
  %v2003 = vld [vmem:[%s11 + $0xac] sm:$0xf]
  %v2004 = vld [vmem:[%s11 + $0xb0] sm:$0xf]
  %v2005 = vld [vmem:[%s11 + $0xb4] sm:$0xf]
  %v2006 = vld [vmem:[%s11 + $0xb8] sm:$0xf]
  %v2007 = vld [vmem:[%s11 + $0xbc] sm:$0xf]
  %v2008 = vld [vmem:[%s11 + $0xc0] sm:$0xf]
  %v2009 = vld [vmem:[%s11 + $0xc4] sm:$0xf]
  %v2010 = vld [vmem:[%s11 + $0xc8] sm:$0xf]
  %v2011 = vld [vmem:[%s11 + $0xcc] sm:$0xf]
  %v2012 = vld [vmem:[%s11 + $0xd0] sm:$0xf]
  %v2013 = vld [vmem:[%s11 + $0xd4] sm:$0xf]
  %v2014 = vld [vmem:[%s11 + $0xd8] sm:$0xf]
  %v2015 = vld [vmem:[%s11 + $0xdc] sm:$0xf]
  %v2016 = vld [vmem:[%s11 + $0xe0] sm:$0xf]
  %v2017 = vld [vmem:[%s11 + $0xe4] sm:$0xf]
  %v2018 = vld [vmem:[%s11 + $0xe8] sm:$0xf]
  %v2019 = vld [vmem:[%s11 + $0xec] sm:$0xf]
  %v2020 = vld [vmem:[%s11 + $0xf0] sm:$0xf]
  %v2021 = vld [vmem:[%s11 + $0xf4] sm:$0xf]
  %v2022 = vld [vmem:[%s11 + $0xf8] sm:$0xf]
  %v2023 = vld [vmem:[%s11 + $0xfc] sm:$0xf]
  %v2024 = vld [vmem:[%s11 + $0x100] sm:$0xf]
  %v2025 = vld [vmem:[%s11 + $0x104] sm:$0xf]
  %v2026 = vld [vmem:[%s11 + $0x108] sm:$0xf]
  %v2027 = vld [vmem:[%s11 + $0x10c] sm:$0xf]
  %v2028 = vld [vmem:[%s11 + $0x110] sm:$0xf]
  %v2029 = vld [vmem:[%s11 + $0x114] sm:$0xf]
  %v2030 = vld [vmem:[%s11 + $0x118] sm:$0xf]
  %v2031 = vld [vmem:[%s11 + $0x11c] sm:$0xf]
  %v2032 = vld [vmem:[%s11 + $0x120] sm:$0xf]
  %v2033 = vld [vmem:[%s11 + $0x124] sm:$0xf]
  %v2034 = vld [vmem:[%s11 + $0x128] sm:$0xf]
  %v2035 = vld [vmem:[%s11 + $0x12c] sm:$0xf]
  %v2036 = vld [vmem:[%s11 + $0x130] sm:$0xf]
  %v2037 = vld [vmem:[%s11 + $0x134] sm:$0xf]
  %v2038 = vld [vmem:[%s11 + $0x138] sm:$0xf]
  %v2039 = vld [vmem:[%s11 + $0x13c] sm:$0xf]
  %v2040 = vld [vmem:[%s11 + $0x140] sm:$0xf]
  %v2041 = vld [vmem:[%s11 + $0x144] sm:$0xf]
  %v2042 = vld [vmem:[%s11 + $0x148] sm:$0xf]
  %v2043 = vld [vmem:[%s11 + $0x14c] sm:$0xf]
  %v2044 = vld [vmem:[%s11 + $0x150] sm:$0xf]
  %v2045 = vld [vmem:[%s11 + $0x154] sm:$0xf]
  %v2046 = vld [vmem:[%s11 + $0x158] sm:$0xf]
  %v2047 = vld [vmem:[%s11 + $0x15c] sm:$0xf]
  %v2048 = vld [vmem:[%s11 + $0x160] sm:$0xf]
  %v2049 = vld [vmem:[%s11 + $0x164] sm:$0xf]
  %v2050 = vld [vmem:[%s11 + $0x168] sm:$0xf]
  %v2051 = vld [vmem:[%s11 + $0x16c] sm:$0xf]
  %v2052 = vld [vmem:[%s11 + $0x170] sm:$0xf]
  %v2053 = vld [vmem:[%s11 + $0x174] sm:$0xf]
  %v2054 = vld [vmem:[%s11 + $0x178] sm:$0xf]
  %v2055 = vld [vmem:[%s11 + $0x17c] sm:$0xf]
  %v2056 = vld [vmem:[%s11 + $0x180] sm:$0xf]
  %v2057 = vld [vmem:[%s11 + $0x184] sm:$0xf]
  %v2058 = vld [vmem:[%s11 + $0x188] sm:$0xf]
  %v2059 = vld [vmem:[%s11 + $0x18c] sm:$0xf]
  %v2060 = vld [vmem:[%s11 + $0x190] sm:$0xf]
  %v2061 = vld [vmem:[%s11 + $0x194] sm:$0xf]
  %v2062 = vld [vmem:[%s11 + $0x198] sm:$0xf]
  %v2063 = vld [vmem:[%s11 + $0x19c] sm:$0xf]
  %v2064 = vld [vmem:[%s11 + $0x1a0] sm:$0xf]
  %v2065 = vld [vmem:[%s11 + $0x1a4] sm:$0xf]
  %v2066 = vld [vmem:[%s11 + $0x1a8] sm:$0xf]
  %v2067 = vld [vmem:[%s11 + $0x1ac] sm:$0xf]
  %v2068 = vld [vmem:[%s11 + $0x1b0] sm:$0xf]
  %v2069 = vld [vmem:[%s11 + $0x1b4] sm:$0xf]
  %v2070 = vld [vmem:[%s11 + $0x1b8] sm:$0xf]
  %v2071 = vld [vmem:[%s11 + $0x1bc] sm:$0xf]
  %v2072 = vld [vmem:[%s11 + $0x1c0] sm:$0xf]
  %v2073 = vld [vmem:[%s11 + $0x1c4] sm:$0xf]
  %v2074 = vld [vmem:[%s11 + $0x1c8] sm:$0xf]
  %v2075 = vld [vmem:[%s11 + $0x1cc] sm:$0xf]
  %v2076 = vld [vmem:[%s11 + $0x1d0] sm:$0xf]
  %v2077 = vld [vmem:[%s11 + $0x1d4] sm:$0xf]
  %v2078 = vld [vmem:[%s11 + $0x1d8] sm:$0xf]
  %v2079 = vld [vmem:[%s11 + $0x1dc] sm:$0xf]
  %v2080 = vld [vmem:[%s11 + $0x1e0] sm:$0xf]
  %v2081 = vld [vmem:[%s11 + $0x1e4] sm:$0xf]
  %v2082 = vld [vmem:[%s11 + $0x1e8] sm:$0xf]
  %v2083 = vld [vmem:[%s11 + $0x1ec] sm:$0xf]
  %v2084 = vld [vmem:[%s11 + $0x1f0] sm:$0xf]
  %v2085 = vld [vmem:[%s11 + $0x1f4] sm:$0xf]
  %v2086 = vld [vmem:[%s11 + $0x1f8] sm:$0xf]
  %v2087 = vld [vmem:[%s11 + $0x1fc] sm:$0xf]
  %v2088 = vld [vmem:[%s11 + $0x200] sm:$0xf]
  %v2089 = vld [vmem:[%s11 + $0x204] sm:$0xf]
  %v2090 = vld [vmem:[%s11 + $0x208] sm:$0xf]
  %v2091 = vld [vmem:[%s11 + $0x20c] sm:$0xf]
  %v2092 = vld [vmem:[%s11 + $0x210] sm:$0xf]
  %v2093 = vld [vmem:[%s11 + $0x214] sm:$0xf]
  %v2094 = vld [vmem:[%s11 + $0x218] sm:$0xf]
  %v2095 = vld [vmem:[%s11 + $0x21c] sm:$0xf]
  %v2096 = vld [vmem:[%s11 + $0x220] sm:$0xf]
  %v2097 = vld [vmem:[%s11 + $0x224] sm:$0xf]
  %v2098 = vld [vmem:[%s11 + $0x228] sm:$0xf]
  %v2099 = vld [vmem:[%s11 + $0x22c] sm:$0xf]
  %v2100 = vld [vmem:[%s11 + $0x230] sm:$0xf]
  %v2101 = vld [vmem:[%s11 + $0x234] sm:$0xf]
  %v2102 = vld [vmem:[%s11 + $0x238] sm:$0xf]
  %v2103 = vld [vmem:[%s11 + $0x23c] sm:$0xf]
  %v2104 = vld [vmem:[%s11 + $0x240] sm:$0xf]
  %v2105 = vld [vmem:[%s11 + $0x244] sm:$0xf]
  %v2106 = vld [vmem:[%s11 + $0x248] sm:$0xf]
  %v2107 = vld [vmem:[%s11 + $0x24c] sm:$0xf]
  %v2108 = vld [vmem:[%s11 + $0x250] sm:$0xf]
  %v2109 = vld [vmem:[%s11 + $0x254] sm:$0xf]
  %v2110 = vld [vmem:[%s11 + $0x258] sm:$0xf]
  %v2111 = vld [vmem:[%s11 + $0x25c] sm:$0xf]
  %v2112 = vld [vmem:[%s11 + $0x260] sm:$0xf]
  %v2113 = vld [vmem:[%s11 + $0x264] sm:$0xf]
  %v2114 = vld [vmem:[%s11 + $0x268] sm:$0xf]
  %v2115 = vld [vmem:[%s11 + $0x26c] sm:$0xf]
  %v2116 = vld [vmem:[%s11 + $0x270] sm:$0xf]
  %v2117 = vld [vmem:[%s11 + $0x274] sm:$0xf]
  %v2118 = vld [vmem:[%s11 + $0x278] sm:$0xf]
  %v2119 = vld [vmem:[%s11 + $0x27c] sm:$0xf]
  %v2120 = vld [vmem:[%s11 + $0x280] sm:$0xf]
  %v2121 = vld [vmem:[%s11 + $0x284] sm:$0xf]
  %v2122 = vld [vmem:[%s11 + $0x288] sm:$0xf]
  %v2123 = vld [vmem:[%s11 + $0x28c] sm:$0xf]
  %v2124 = vld [vmem:[%s11 + $0x290] sm:$0xf]
  %v2125 = vld [vmem:[%s11 + $0x294] sm:$0xf]
  %v2126 = vld [vmem:[%s11 + $0x298] sm:$0xf]
  %v2127 = vld [vmem:[%s11 + $0x29c] sm:$0xf]
  %v2128 = vld [vmem:[%s11 + $0x2a0] sm:$0xf]
  %v2129 = vld [vmem:[%s11 + $0x2a4] sm:$0xf]
  %v2130 = vld [vmem:[%s11 + $0x2a8] sm:$0xf]
  %v2131 = vld [vmem:[%s11 + $0x2ac] sm:$0xf]
  %v2132 = vld [vmem:[%s11 + $0x2b0] sm:$0xf]
  %v2133 = vld [vmem:[%s11 + $0x2b4] sm:$0xf]
  %v2134 = vld [vmem:[%s11 + $0x2b8] sm:$0xf]
  %v2135 = vld [vmem:[%s11 + $0x2bc] sm:$0xf]
  %v2136 = vld [vmem:[%s11 + $0x2c0] sm:$0xf]
  %v2137 = vld [vmem:[%s11 + $0x2c4] sm:$0xf]
  %v2138 = vld [vmem:[%s11 + $0x2c8] sm:$0xf]
  %v2139 = vld [vmem:[%s11 + $0x2cc] sm:$0xf]
  %v2140 = vld [vmem:[%s11 + $0x2d0] sm:$0xf]
  %v2141 = vld [vmem:[%s11 + $0x2d4] sm:$0xf]
  %v2142 = vld [vmem:[%s11 + $0x2d8] sm:$0xf]
  %v2143 = vld [vmem:[%s11 + $0x2dc] sm:$0xf]
  %v2144 = vld [vmem:[%s11 + $0x2e0] sm:$0xf]
  %v2145 = vld [vmem:[%s11 + $0x2e4] sm:$0xf]
  %v2146 = vld [vmem:[%s11 + $0x2e8] sm:$0xf]
  %v2147 = vld [vmem:[%s11 + $0x2ec] sm:$0xf]
  %v2148 = vld [vmem:[%s11 + $0x2f0] sm:$0xf]
  %v2149 = vld [vmem:[%s11 + $0x2f4] sm:$0xf]
  %v2150 = vld [vmem:[%s11 + $0x2f8] sm:$0xf]
  %v2151 = vld [vmem:[%s11 + $0x2fc] sm:$0xf]
  %v2152 = vld [vmem:[%s11 + $0x300] sm:$0xf]
  %v2153 = vld [vmem:[%s11 + $0x304] sm:$0xf]
  %v2154 = vld [vmem:[%s11 + $0x308] sm:$0xf]
  %v2155 = vld [vmem:[%s11 + $0x30c] sm:$0xf]
  %v2156 = vld [vmem:[%s11 + $0x310] sm:$0xf]
  %v2157 = vld [vmem:[%s11 + $0x314] sm:$0xf]
  %v2158 = vld [vmem:[%s11 + $0x318] sm:$0xf]
  %v2159 = vld [vmem:[%s11 + $0x31c] sm:$0xf]
  %v2160 = vld [vmem:[%s11 + $0x320] sm:$0xf]
  %v2161 = vld [vmem:[%s11 + $0x324] sm:$0xf]
  %v2162 = vld [vmem:[%s11 + $0x328] sm:$0xf]
  %v2163 = vld [vmem:[%s11 + $0x32c] sm:$0xf]
  %v2164 = vld [vmem:[%s11 + $0x330] sm:$0xf]
  %v2165 = vld [vmem:[%s11 + $0x334] sm:$0xf]
  %v2166 = vld [vmem:[%s11 + $0x338] sm:$0xf]
  %v2167 = vld [vmem:[%s11 + $0x33c] sm:$0xf]
  %v2168 = vld [vmem:[%s11 + $0x340] sm:$0xf]
  %v2169 = vld [vmem:[%s11 + $0x344] sm:$0xf]
  %v2170 = vld [vmem:[%s11 + $0x348] sm:$0xf]
  %v2171 = vld [vmem:[%s11 + $0x34c] sm:$0xf]
  %v2172 = vld [vmem:[%s11 + $0x350] sm:$0xf]
  %v2173 = vld [vmem:[%s11 + $0x354] sm:$0xf]
  %v2174 = vld [vmem:[%s11 + $0x358] sm:$0xf]
  %v2175 = vld [vmem:[%s11 + $0x35c] sm:$0xf]
  %v2176 = vld [vmem:[%s11 + $0x360] sm:$0xf]
  %v2177 = vld [vmem:[%s11 + $0x364] sm:$0xf]
  %v2178 = vld [vmem:[%s11 + $0x368] sm:$0xf]
  %v2179 = vld [vmem:[%s11 + $0x36c] sm:$0xf]
  %v2180 = vld [vmem:[%s11 + $0x370] sm:$0xf]
  %v2181 = vld [vmem:[%s11 + $0x374] sm:$0xf]
  %v2182 = vld [vmem:[%s11 + $0x378] sm:$0xf]
  %v2183 = vld [vmem:[%s11 + $0x37c] sm:$0xf]
  %v2184 = vld [vmem:[%s11 + $0x380] sm:$0xf]
  %v2185 = vld [vmem:[%s11 + $0x384] sm:$0xf]
  %v2186 = vld [vmem:[%s11 + $0x388] sm:$0xf]
  %v2187 = vld [vmem:[%s11 + $0x38c] sm:$0xf]
  %v2188 = vld [vmem:[%s11 + $0x390] sm:$0xf]
  %v2189 = vld [vmem:[%s11 + $0x394] sm:$0xf]
  %v2190 = vld [vmem:[%s11 + $0x398] sm:$0xf]
  %v2191 = vld [vmem:[%s11 + $0x39c] sm:$0xf]
  %v2192 = vld [vmem:[%s11 + $0x3a0] sm:$0xf]
  %v2193 = vld [vmem:[%s11 + $0x3a4] sm:$0xf]
  %v2194 = vld [vmem:[%s11 + $0x3a8] sm:$0xf]
  %v2195 = vld [vmem:[%s11 + $0x3ac] sm:$0xf]
  %v2196 = vld [vmem:[%s11 + $0x3b0] sm:$0xf]
  %v2197 = vld [vmem:[%s11 + $0x3b4] sm:$0xf]
  %v2198 = vld [vmem:[%s11 + $0x3b8] sm:$0xf]
  %v2199 = vld [vmem:[%s11 + $0x3bc] sm:$0xf]
  %v2200 = vld [vmem:[%s11 + $0x3c0] sm:$0xf]
  %v2201 = vld [vmem:[%s11 + $0x3c4] sm:$0xf]
  %v2202 = vld [vmem:[%s11 + $0x3c8] sm:$0xf]
  %v2203 = vld [vmem:[%s11 + $0x3cc] sm:$0xf]
  %v2204 = vld [vmem:[%s11 + $0x3d0] sm:$0xf]
  %v2205 = vld [vmem:[%s11 + $0x3d4] sm:$0xf]
  %v2206 = vld [vmem:[%s11 + $0x3d8] sm:$0xf]
  %v2207 = vld [vmem:[%s11 + $0x3dc] sm:$0xf]
  %v2208 = vld [vmem:[%s11 + $0x3e0] sm:$0xf]
  %v2209 = vld [vmem:[%s11 + $0x3e4] sm:$0xf]
  %v2210 = vld [vmem:[%s11 + $0x3e8] sm:$0xf]
  %v2211 = vld [vmem:[%s11 + $0x3ec] sm:$0xf]
  %v2212 = vld [vmem:[%s11 + $0x3f0] sm:$0xf]
  %v2213 = vld [vmem:[%s11 + $0x3f4] sm:$0xf]
  %v2214 = vld [vmem:[%s11 + $0x3f8] sm:$0xf]
  %v2215 = vld [vmem:[%s11 + $0x3fc] sm:$0xf]
  %v2216 = vperm.slane %v64, 3
  %v2473 = vunpack.c.l.b16 %v1960
  %v2474 = vunpack.c.l.b16 %v1961
  %v2475 = vunpack.c.l.b16 %v1962
  %v2476 = vunpack.c.l.b16 %v1963
  %v2477 = vunpack.c.l.b16 %v1964
  %v2478 = vunpack.c.l.b16 %v1965
  %v2479 = vunpack.c.l.b16 %v1966
  %v2480 = vunpack.c.l.b16 %v1967
  %v2481 = vunpack.c.l.b16 %v1968
  %v2482 = vunpack.c.l.b16 %v1969
  %v2483 = vunpack.c.l.b16 %v1970
  %v2484 = vunpack.c.l.b16 %v1971
  %v2485 = vunpack.c.l.b16 %v1972
  %v2486 = vunpack.c.l.b16 %v1973
  %v2487 = vunpack.c.l.b16 %v1974
  %v2488 = vunpack.c.l.b16 %v1975
  %v2489 = vunpack.c.l.b16 %v1976
  %v2490 = vunpack.c.l.b16 %v1977
  %v2491 = vunpack.c.l.b16 %v1978
  %v2492 = vunpack.c.l.b16 %v1979
  %v2493 = vunpack.c.l.b16 %v1980
  %v2494 = vunpack.c.l.b16 %v1981
  %v2495 = vunpack.c.l.b16 %v1982
  %v2496 = vunpack.c.l.b16 %v1983
  %v2497 = vunpack.c.l.b16 %v1984
  %v2498 = vunpack.c.l.b16 %v1985
  %v2499 = vunpack.c.l.b16 %v1986
  %v2500 = vunpack.c.l.b16 %v1987
  %v2501 = vunpack.c.l.b16 %v1988
  %v2502 = vunpack.c.l.b16 %v1989
  %v2503 = vunpack.c.l.b16 %v1990
  %v2504 = vunpack.c.l.b16 %v1991
  %v2505 = vunpack.c.l.b16 %v1992
  %v2506 = vunpack.c.l.b16 %v1993
  %v2507 = vunpack.c.l.b16 %v1994
  %v2508 = vunpack.c.l.b16 %v1995
  %v2509 = vunpack.c.l.b16 %v1996
  %v2510 = vunpack.c.l.b16 %v1997
  %v2511 = vunpack.c.l.b16 %v1998
  %v2512 = vunpack.c.l.b16 %v1999
  %v2513 = vunpack.c.l.b16 %v2000
  %v2514 = vunpack.c.l.b16 %v2001
  %v2515 = vunpack.c.l.b16 %v2002
  %v2516 = vunpack.c.l.b16 %v2003
  %v2517 = vunpack.c.l.b16 %v2004
  %v2518 = vunpack.c.l.b16 %v2005
  %v2519 = vunpack.c.l.b16 %v2006
  %v2520 = vunpack.c.l.b16 %v2007
  %v2521 = vunpack.c.l.b16 %v2008
  %v2522 = vunpack.c.l.b16 %v2009
  %v2523 = vunpack.c.l.b16 %v2010
  %v2524 = vunpack.c.l.b16 %v2011
  %v2525 = vunpack.c.l.b16 %v2012
  %v2526 = vunpack.c.l.b16 %v2013
  %v2527 = vunpack.c.l.b16 %v2014
  %v2528 = vunpack.c.l.b16 %v2015
  %v2529 = vunpack.c.l.b16 %v2016
  %v2530 = vunpack.c.l.b16 %v2017
  %v2531 = vunpack.c.l.b16 %v2018
  %v2532 = vunpack.c.l.b16 %v2019
  %v2533 = vunpack.c.l.b16 %v2020
  %v2534 = vunpack.c.l.b16 %v2021
  %v2535 = vunpack.c.l.b16 %v2022
  %v2536 = vunpack.c.l.b16 %v2023
  %v2537 = vunpack.c.l.b16 %v2024
  %v2538 = vunpack.c.l.b16 %v2025
  %v2539 = vunpack.c.l.b16 %v2026
  %v2540 = vunpack.c.l.b16 %v2027
  %v2541 = vunpack.c.l.b16 %v2028
  %v2542 = vunpack.c.l.b16 %v2029
  %v2543 = vunpack.c.l.b16 %v2030
  %v2544 = vunpack.c.l.b16 %v2031
  %v2545 = vunpack.c.l.b16 %v2032
  %v2546 = vunpack.c.l.b16 %v2033
  %v2547 = vunpack.c.l.b16 %v2034
  %v2548 = vunpack.c.l.b16 %v2035
  %v2549 = vunpack.c.l.b16 %v2036
  %v2550 = vunpack.c.l.b16 %v2037
  %v2551 = vunpack.c.l.b16 %v2038
  %v2552 = vunpack.c.l.b16 %v2039
  %v2553 = vunpack.c.l.b16 %v2040
  %v2554 = vunpack.c.l.b16 %v2041
  %v2555 = vunpack.c.l.b16 %v2042
  %v2556 = vunpack.c.l.b16 %v2043
  %v2557 = vunpack.c.l.b16 %v2044
  %v2558 = vunpack.c.l.b16 %v2045
  %v2559 = vunpack.c.l.b16 %v2046
  %v2560 = vunpack.c.l.b16 %v2047
  %v2561 = vunpack.c.l.b16 %v2048
  %v2562 = vunpack.c.l.b16 %v2049
  %v2563 = vunpack.c.l.b16 %v2050
  %v2564 = vunpack.c.l.b16 %v2051
  %v2565 = vunpack.c.l.b16 %v2052
  %v2566 = vunpack.c.l.b16 %v2053
  %v2567 = vunpack.c.l.b16 %v2054
  %v2568 = vunpack.c.l.b16 %v2055
  %v2569 = vunpack.c.l.b16 %v2056
  %v2570 = vunpack.c.l.b16 %v2057
  %v2571 = vunpack.c.l.b16 %v2058
  %v2572 = vunpack.c.l.b16 %v2059
  %v2573 = vunpack.c.l.b16 %v2060
  %v2574 = vunpack.c.l.b16 %v2061
  %v2575 = vunpack.c.l.b16 %v2062
  %v2576 = vunpack.c.l.b16 %v2063
  %v2577 = vunpack.c.l.b16 %v2064
  %v2578 = vunpack.c.l.b16 %v2065
  %v2579 = vunpack.c.l.b16 %v2066
  %v2580 = vunpack.c.l.b16 %v2067
  %v2581 = vunpack.c.l.b16 %v2068
  %v2582 = vunpack.c.l.b16 %v2069
  %v2583 = vunpack.c.l.b16 %v2070
  %v2584 = vunpack.c.l.b16 %v2071
  %v2585 = vunpack.c.l.b16 %v2072
  %v2586 = vunpack.c.l.b16 %v2073
  %v2587 = vunpack.c.l.b16 %v2074
  %v2588 = vunpack.c.l.b16 %v2075
  %v2589 = vunpack.c.l.b16 %v2076
  %v2590 = vunpack.c.l.b16 %v2077
  %v2591 = vunpack.c.l.b16 %v2078
  %v2592 = vunpack.c.l.b16 %v2079
  %v2593 = vunpack.c.l.b16 %v2080
  %v2594 = vunpack.c.l.b16 %v2081
  %v2595 = vunpack.c.l.b16 %v2082
  %v2596 = vunpack.c.l.b16 %v2083
  %v2597 = vunpack.c.l.b16 %v2084
  %v2598 = vunpack.c.l.b16 %v2085
  %v2599 = vunpack.c.l.b16 %v2086
  %v2600 = vunpack.c.l.b16 %v2087
  %v2601 = vunpack.c.l.b16 %v2088
  %v2602 = vunpack.c.l.b16 %v2089
  %v2603 = vunpack.c.l.b16 %v2090
  %v2604 = vunpack.c.l.b16 %v2091
  %v2605 = vunpack.c.l.b16 %v2092
  %v2606 = vunpack.c.l.b16 %v2093
  %v2607 = vunpack.c.l.b16 %v2094
  %v2608 = vunpack.c.l.b16 %v2095
  %v2609 = vunpack.c.l.b16 %v2096
  %v2610 = vunpack.c.l.b16 %v2097
  %v2611 = vunpack.c.l.b16 %v2098
  %v2612 = vunpack.c.l.b16 %v2099
  %v2613 = vunpack.c.l.b16 %v2100
  %v2614 = vunpack.c.l.b16 %v2101
  %v2615 = vunpack.c.l.b16 %v2102
  %v2616 = vunpack.c.l.b16 %v2103
  %v2617 = vunpack.c.l.b16 %v2104
  %v2618 = vunpack.c.l.b16 %v2105
  %v2619 = vunpack.c.l.b16 %v2106
  %v2620 = vunpack.c.l.b16 %v2107
  %v2621 = vunpack.c.l.b16 %v2108
  %v2622 = vunpack.c.l.b16 %v2109
  %v2623 = vunpack.c.l.b16 %v2110
  %v2624 = vunpack.c.l.b16 %v2111
  %v2625 = vunpack.c.l.b16 %v2112
  %v2626 = vunpack.c.l.b16 %v2113
  %v2627 = vunpack.c.l.b16 %v2114
  %v2628 = vunpack.c.l.b16 %v2115
  %v2629 = vunpack.c.l.b16 %v2116
  %v2630 = vunpack.c.l.b16 %v2117
  %v2631 = vunpack.c.l.b16 %v2118
  %v2632 = vunpack.c.l.b16 %v2119
  %v2633 = vunpack.c.l.b16 %v2120
  %v2634 = vunpack.c.l.b16 %v2121
  %v2635 = vunpack.c.l.b16 %v2122
  %v2636 = vunpack.c.l.b16 %v2123
  %v2637 = vunpack.c.l.b16 %v2124
  %v2638 = vunpack.c.l.b16 %v2125
  %v2639 = vunpack.c.l.b16 %v2126
  %v2640 = vunpack.c.l.b16 %v2127
  %v2641 = vunpack.c.l.b16 %v2128
  %v2642 = vunpack.c.l.b16 %v2129
  %v2643 = vunpack.c.l.b16 %v2130
  %v2644 = vunpack.c.l.b16 %v2131
  %v2645 = vunpack.c.l.b16 %v2132
  %v2646 = vunpack.c.l.b16 %v2133
  %v2647 = vunpack.c.l.b16 %v2134
  %v2648 = vunpack.c.l.b16 %v2135
  %v2649 = vunpack.c.l.b16 %v2136
  %v2650 = vunpack.c.l.b16 %v2137
  %v2651 = vunpack.c.l.b16 %v2138
  %v2652 = vunpack.c.l.b16 %v2139
  %v2653 = vunpack.c.l.b16 %v2140
  %v2654 = vunpack.c.l.b16 %v2141
  %v2655 = vunpack.c.l.b16 %v2142
  %v2656 = vunpack.c.l.b16 %v2143
  %v2657 = vunpack.c.l.b16 %v2144
  %v2658 = vunpack.c.l.b16 %v2145
  %v2659 = vunpack.c.l.b16 %v2146
  %v2660 = vunpack.c.l.b16 %v2147
  %v2661 = vunpack.c.l.b16 %v2148
  %v2662 = vunpack.c.l.b16 %v2149
  %v2663 = vunpack.c.l.b16 %v2150
  %v2664 = vunpack.c.l.b16 %v2151
  %v2665 = vunpack.c.l.b16 %v2152
  %v2666 = vunpack.c.l.b16 %v2153
  %v2667 = vunpack.c.l.b16 %v2154
  %v2668 = vunpack.c.l.b16 %v2155
  %v2669 = vunpack.c.l.b16 %v2156
  %v2670 = vunpack.c.l.b16 %v2157
  %v2671 = vunpack.c.l.b16 %v2158
  %v2672 = vunpack.c.l.b16 %v2159
  %v2673 = vunpack.c.l.b16 %v2160
  %v2674 = vunpack.c.l.b16 %v2161
  %v2675 = vunpack.c.l.b16 %v2162
  %v2676 = vunpack.c.l.b16 %v2163
  %v2677 = vunpack.c.l.b16 %v2164
  %v2678 = vunpack.c.l.b16 %v2165
  %v2679 = vunpack.c.l.b16 %v2166
  %v2680 = vunpack.c.l.b16 %v2167
  %v2681 = vunpack.c.l.b16 %v2168
  %v2682 = vunpack.c.l.b16 %v2169
  %v2683 = vunpack.c.l.b16 %v2170
  %v2684 = vunpack.c.l.b16 %v2171
  %v2685 = vunpack.c.l.b16 %v2172
  %v2686 = vunpack.c.l.b16 %v2173
  %v2687 = vunpack.c.l.b16 %v2174
  %v2688 = vunpack.c.l.b16 %v2175
  %v2689 = vunpack.c.l.b16 %v2176
  %v2690 = vunpack.c.l.b16 %v2177
  %v2691 = vunpack.c.l.b16 %v2178
  %v2692 = vunpack.c.l.b16 %v2179
  %v2693 = vunpack.c.l.b16 %v2180
  %v2694 = vunpack.c.l.b16 %v2181
  %v2695 = vunpack.c.l.b16 %v2182
  %v2696 = vunpack.c.l.b16 %v2183
  %v2697 = vunpack.c.l.b16 %v2184
  %v2698 = vunpack.c.l.b16 %v2185
  %v2699 = vunpack.c.l.b16 %v2186
  %v2700 = vunpack.c.l.b16 %v2187
  %v2701 = vunpack.c.l.b16 %v2188
  %v2702 = vunpack.c.l.b16 %v2189
  %v2703 = vunpack.c.l.b16 %v2190
  %v2704 = vunpack.c.l.b16 %v2191
  %v2705 = vunpack.c.l.b16 %v2192
  %v2706 = vunpack.c.l.b16 %v2193
  %v2707 = vunpack.c.l.b16 %v2194
  %v2708 = vunpack.c.l.b16 %v2195
  %v2709 = vunpack.c.l.b16 %v2196
  %v2710 = vunpack.c.l.b16 %v2197
  %v2711 = vunpack.c.l.b16 %v2198
  %v2712 = vunpack.c.l.b16 %v2199
  %v2713 = vunpack.c.l.b16 %v2200
  %v2714 = vunpack.c.l.b16 %v2201
  %v2715 = vunpack.c.l.b16 %v2202
  %v2716 = vunpack.c.l.b16 %v2203
  %v2717 = vunpack.c.l.b16 %v2204
  %v2718 = vunpack.c.l.b16 %v2205
  %v2719 = vunpack.c.l.b16 %v2206
  %v2720 = vunpack.c.l.b16 %v2207
  %v2721 = vunpack.c.l.b16 %v2208
  %v2722 = vunpack.c.l.b16 %v2209
  %v2723 = vunpack.c.l.b16 %v2210
  %v2724 = vunpack.c.l.b16 %v2211
  %v2725 = vunpack.c.l.b16 %v2212
  %v2726 = vunpack.c.l.b16 %v2213
  %v2727 = vunpack.c.l.b16 %v2214
  %v2728 = vunpack.c.l.b16 %v2215
  %v2729 = vpack.c.b16 %v2474, %v2473
  %v2730 = vpack.c.b16 %v2476, %v2475
  %v2731 = vpack.c.b16 %v2478, %v2477
  %v2732 = vpack.c.b16 %v2480, %v2479
  %v2733 = vpack.c.b16 %v2482, %v2481
  %v2734 = vpack.c.b16 %v2484, %v2483
  %v2735 = vpack.c.b16 %v2486, %v2485
  %v2736 = vpack.c.b16 %v2488, %v2487
  %v2737 = vpack.c.b16 %v2490, %v2489
  %v2738 = vpack.c.b16 %v2492, %v2491
  %v2739 = vpack.c.b16 %v2494, %v2493
  %v2740 = vpack.c.b16 %v2496, %v2495
  %v2741 = vpack.c.b16 %v2498, %v2497
  %v2742 = vpack.c.b16 %v2500, %v2499
  %v2743 = vpack.c.b16 %v2502, %v2501
  %v2744 = vpack.c.b16 %v2504, %v2503
  %v2745 = vpack.c.b16 %v2506, %v2505
  %v2746 = vpack.c.b16 %v2508, %v2507
  %v2747 = vpack.c.b16 %v2510, %v2509
  %v2748 = vpack.c.b16 %v2512, %v2511
  %v2749 = vpack.c.b16 %v2514, %v2513
  %v2750 = vpack.c.b16 %v2516, %v2515
  %v2751 = vpack.c.b16 %v2518, %v2517
  %v2752 = vpack.c.b16 %v2520, %v2519
  %v2753 = vpack.c.b16 %v2522, %v2521
  %v2754 = vpack.c.b16 %v2524, %v2523
  %v2755 = vpack.c.b16 %v2526, %v2525
  %v2756 = vpack.c.b16 %v2528, %v2527
  %v2757 = vpack.c.b16 %v2530, %v2529
  %v2758 = vpack.c.b16 %v2532, %v2531
  %v2759 = vpack.c.b16 %v2534, %v2533
  %v2760 = vpack.c.b16 %v2536, %v2535
  %v2761 = vpack.c.b16 %v2538, %v2537
  %v2762 = vpack.c.b16 %v2540, %v2539
  %v2763 = vpack.c.b16 %v2542, %v2541
  %v2764 = vpack.c.b16 %v2544, %v2543
  %v2765 = vpack.c.b16 %v2546, %v2545
  %v2766 = vpack.c.b16 %v2548, %v2547
  %v2767 = vpack.c.b16 %v2550, %v2549
  %v2768 = vpack.c.b16 %v2552, %v2551
  %v2769 = vpack.c.b16 %v2554, %v2553
  %v2770 = vpack.c.b16 %v2556, %v2555
  %v2771 = vpack.c.b16 %v2558, %v2557
  %v2772 = vpack.c.b16 %v2560, %v2559
  %v2773 = vpack.c.b16 %v2562, %v2561
  %v2774 = vpack.c.b16 %v2564, %v2563
  %v2775 = vpack.c.b16 %v2566, %v2565
  %v2776 = vpack.c.b16 %v2568, %v2567
  %v2777 = vpack.c.b16 %v2570, %v2569
  %v2778 = vpack.c.b16 %v2572, %v2571
  %v2779 = vpack.c.b16 %v2574, %v2573
  %v2780 = vpack.c.b16 %v2576, %v2575
  %v2781 = vpack.c.b16 %v2578, %v2577
  %v2782 = vpack.c.b16 %v2580, %v2579
  %v2783 = vpack.c.b16 %v2582, %v2581
  %v2784 = vpack.c.b16 %v2584, %v2583
  %v2785 = vpack.c.b16 %v2586, %v2585
  %v2786 = vpack.c.b16 %v2588, %v2587
  %v2787 = vpack.c.b16 %v2590, %v2589
  %v2788 = vpack.c.b16 %v2592, %v2591
  %v2789 = vpack.c.b16 %v2594, %v2593
  %v2790 = vpack.c.b16 %v2596, %v2595
  %v2791 = vpack.c.b16 %v2598, %v2597
  %v2792 = vpack.c.b16 %v2600, %v2599
  %v2793 = vpack.c.b16 %v2602, %v2601
  %v2794 = vpack.c.b16 %v2604, %v2603
  %v2795 = vpack.c.b16 %v2606, %v2605
  %v2796 = vpack.c.b16 %v2608, %v2607
  %v2797 = vpack.c.b16 %v2610, %v2609
  %v2798 = vpack.c.b16 %v2612, %v2611
  %v2799 = vpack.c.b16 %v2614, %v2613
  %v2800 = vpack.c.b16 %v2616, %v2615
  %v2801 = vpack.c.b16 %v2618, %v2617
  %v2802 = vpack.c.b16 %v2620, %v2619
  %v2803 = vpack.c.b16 %v2622, %v2621
  %v2804 = vpack.c.b16 %v2624, %v2623
  %v2805 = vpack.c.b16 %v2626, %v2625
  %v2806 = vpack.c.b16 %v2628, %v2627
  %v2807 = vpack.c.b16 %v2630, %v2629
  %v2808 = vpack.c.b16 %v2632, %v2631
  %v2809 = vpack.c.b16 %v2634, %v2633
  %v2810 = vpack.c.b16 %v2636, %v2635
  %v2811 = vpack.c.b16 %v2638, %v2637
  %v2812 = vpack.c.b16 %v2640, %v2639
  %v2813 = vpack.c.b16 %v2642, %v2641
  %v2814 = vpack.c.b16 %v2644, %v2643
  %v2815 = vpack.c.b16 %v2646, %v2645
  %v2816 = vpack.c.b16 %v2648, %v2647
  %v2817 = vpack.c.b16 %v2650, %v2649
  %v2818 = vpack.c.b16 %v2652, %v2651
  %v2819 = vpack.c.b16 %v2654, %v2653
  %v2820 = vpack.c.b16 %v2656, %v2655
  %v2821 = vpack.c.b16 %v2658, %v2657
  %v2822 = vpack.c.b16 %v2660, %v2659
  %v2823 = vpack.c.b16 %v2662, %v2661
  %v2824 = vpack.c.b16 %v2664, %v2663
  %v2825 = vpack.c.b16 %v2666, %v2665
  %v2826 = vpack.c.b16 %v2668, %v2667
  %v2827 = vpack.c.b16 %v2670, %v2669
  %v2828 = vpack.c.b16 %v2672, %v2671
  %v2829 = vpack.c.b16 %v2674, %v2673
  %v2830 = vpack.c.b16 %v2676, %v2675
  %v2831 = vpack.c.b16 %v2678, %v2677
  %v2832 = vpack.c.b16 %v2680, %v2679
  %v2833 = vpack.c.b16 %v2682, %v2681
  %v2834 = vpack.c.b16 %v2684, %v2683
  %v2835 = vpack.c.b16 %v2686, %v2685
  %v2836 = vpack.c.b16 %v2688, %v2687
  %v2837 = vpack.c.b16 %v2690, %v2689
  %v2838 = vpack.c.b16 %v2692, %v2691
  %v2839 = vpack.c.b16 %v2694, %v2693
  %v2840 = vpack.c.b16 %v2696, %v2695
  %v2841 = vpack.c.b16 %v2698, %v2697
  %v2842 = vpack.c.b16 %v2700, %v2699
  %v2843 = vpack.c.b16 %v2702, %v2701
  %v2844 = vpack.c.b16 %v2704, %v2703
  %v2845 = vpack.c.b16 %v2706, %v2705
  %v2846 = vpack.c.b16 %v2708, %v2707
  %v2847 = vpack.c.b16 %v2710, %v2709
  %v2848 = vpack.c.b16 %v2712, %v2711
  %v2849 = vpack.c.b16 %v2714, %v2713
  %v2850 = vpack.c.b16 %v2716, %v2715
  %v2851 = vpack.c.b16 %v2718, %v2717
  %v2852 = vpack.c.b16 %v2720, %v2719
  %v2853 = vpack.c.b16 %v2722, %v2721
  %v2854 = vpack.c.b16 %v2724, %v2723
  %v2855 = vpack.c.b16 %v2726, %v2725
  %v2856 = vpack.c.b16 %v2728, %v2727
  %2985 = vmatpush.bf16.msra.mxu0 %v2736
  %2986 = vmatpush.bf16.msra.mxu0 %v2735
  %2987 = vmatpush.bf16.msra.mxu0 %v2734
  %2988 = vmatpush.bf16.msra.mxu0 %v2733
  %2989 = vmatpush.bf16.msra.mxu0 %v2732
  %2990 = vmatpush.bf16.msra.mxu0 %v2731
  %2991 = vmatpush.bf16.msra.mxu0 %v2730
  %2992 = vmatpush.bf16.msra.mxu0 %v2729
  %2993 = vmatmul.bf16.gmra.mxu0 %v1944
  %v2994 = vpop.f32.mrf.mxu0
  %v2995 = vadd.f32 %v2216, %v2994
  %v2996 = vpop.f32.mrf.mxu0
  %v2997 = vadd.f32 %v2216, %v2996
  %2998 = vdwg.mxu0
  %2999 = vmatpush.bf16.msra.mxu0 %v2744
  %3000 = vmatpush.bf16.msra.mxu0 %v2743
  %3001 = vmatpush.bf16.msra.mxu0 %v2742
  %3002 = vmatpush.bf16.msra.mxu0 %v2741
  %3003 = vmatpush.bf16.msra.mxu0 %v2740
  %3004 = vmatpush.bf16.msra.mxu0 %v2739
  %3005 = vmatpush.bf16.msra.mxu0 %v2738
  %3006 = vmatpush.bf16.msra.mxu0 %v2737
  %3007 = vmatmul.bf16.gmra.mxu0 %v1945
  %v3008 = vpop.f32.mrf.mxu0
  %v3009 = vadd.f32 %v2995, %v3008
  %v3010 = vpop.f32.mrf.mxu0
  %v3011 = vadd.f32 %v2997, %v3010
  %3012 = vdwg.mxu0
  %3013 = vmatpush.bf16.msra.mxu0 %v2752
  %3014 = vmatpush.bf16.msra.mxu0 %v2751
  %3015 = vmatpush.bf16.msra.mxu0 %v2750
  %3016 = vmatpush.bf16.msra.mxu0 %v2749
  %3017 = vmatpush.bf16.msra.mxu0 %v2748
  %3018 = vmatpush.bf16.msra.mxu0 %v2747
  %3019 = vmatpush.bf16.msra.mxu0 %v2746
  %3020 = vmatpush.bf16.msra.mxu0 %v2745
  %3021 = vmatmul.bf16.gmra.mxu0 %v1946
  %v3022 = vpop.f32.mrf.mxu0
  %v3023 = vadd.f32 %v3009, %v3022
  %v3024 = vpop.f32.mrf.mxu0
  %v3025 = vadd.f32 %v3011, %v3024
  %3026 = vdwg.mxu0
  %3027 = vmatpush.bf16.msra.mxu0 %v2760
  %3028 = vmatpush.bf16.msra.mxu0 %v2759
  %3029 = vmatpush.bf16.msra.mxu0 %v2758
  %3030 = vmatpush.bf16.msra.mxu0 %v2757
  %3031 = vmatpush.bf16.msra.mxu0 %v2756
  %3032 = vmatpush.bf16.msra.mxu0 %v2755
  %3033 = vmatpush.bf16.msra.mxu0 %v2754
  %3034 = vmatpush.bf16.msra.mxu0 %v2753
  %3035 = vmatmul.bf16.gmra.mxu0 %v1947
  %v3036 = vpop.f32.mrf.mxu0
  %v3037 = vadd.f32 %v3023, %v3036
  %v3038 = vpop.f32.mrf.mxu0
  %v3039 = vadd.f32 %v3025, %v3038
  %3040 = vdwg.mxu0
  %3041 = vmatpush.bf16.msra.mxu0 %v2768
  %3042 = vmatpush.bf16.msra.mxu0 %v2767
  %3043 = vmatpush.bf16.msra.mxu0 %v2766
  %3044 = vmatpush.bf16.msra.mxu0 %v2765
  %3045 = vmatpush.bf16.msra.mxu0 %v2764
  %3046 = vmatpush.bf16.msra.mxu0 %v2763
  %3047 = vmatpush.bf16.msra.mxu0 %v2762
  %3048 = vmatpush.bf16.msra.mxu0 %v2761
  %3049 = vmatmul.bf16.gmra.mxu0 %v1948
  %v3050 = vpop.f32.mrf.mxu0
  %v3051 = vadd.f32 %v3037, %v3050
  %v3052 = vpop.f32.mrf.mxu0
  %v3053 = vadd.f32 %v3039, %v3052
  %3054 = vdwg.mxu0
  %3055 = vmatpush.bf16.msra.mxu0 %v2776
  %3056 = vmatpush.bf16.msra.mxu0 %v2775
  %3057 = vmatpush.bf16.msra.mxu0 %v2774
  %3058 = vmatpush.bf16.msra.mxu0 %v2773
  %3059 = vmatpush.bf16.msra.mxu0 %v2772
  %3060 = vmatpush.bf16.msra.mxu0 %v2771
  %3061 = vmatpush.bf16.msra.mxu0 %v2770
  %3062 = vmatpush.bf16.msra.mxu0 %v2769
  %3063 = vmatmul.bf16.gmra.mxu0 %v1949
  %v3064 = vpop.f32.mrf.mxu0
  %v3065 = vadd.f32 %v3051, %v3064
  %v3066 = vpop.f32.mrf.mxu0
  %v3067 = vadd.f32 %v3053, %v3066
  %3068 = vdwg.mxu0
  %3069 = vmatpush.bf16.msra.mxu0 %v2784
  %3070 = vmatpush.bf16.msra.mxu0 %v2783
  %3071 = vmatpush.bf16.msra.mxu0 %v2782
  %3072 = vmatpush.bf16.msra.mxu0 %v2781
  %3073 = vmatpush.bf16.msra.mxu0 %v2780
  %3074 = vmatpush.bf16.msra.mxu0 %v2779
  %3075 = vmatpush.bf16.msra.mxu0 %v2778
  %3076 = vmatpush.bf16.msra.mxu0 %v2777
  %3077 = vmatmul.bf16.gmra.mxu0 %v1950
  %v3078 = vpop.f32.mrf.mxu0
  %v3079 = vadd.f32 %v3065, %v3078
  %v3080 = vpop.f32.mrf.mxu0
  %v3081 = vadd.f32 %v3067, %v3080
  %3082 = vdwg.mxu0
  %3083 = vmatpush.bf16.msra.mxu0 %v2792
  %3084 = vmatpush.bf16.msra.mxu0 %v2791
  %3085 = vmatpush.bf16.msra.mxu0 %v2790
  %3086 = vmatpush.bf16.msra.mxu0 %v2789
  %3087 = vmatpush.bf16.msra.mxu0 %v2788
  %3088 = vmatpush.bf16.msra.mxu0 %v2787
  %3089 = vmatpush.bf16.msra.mxu0 %v2786
  %3090 = vmatpush.bf16.msra.mxu0 %v2785
  %3091 = vmatmul.bf16.gmra.mxu0 %v1951
  %v3092 = vpop.f32.mrf.mxu0
  %v3093 = vadd.f32 %v3079, %v3092
  %v3094 = vpop.f32.mrf.mxu0
  %v3095 = vadd.f32 %v3081, %v3094
  %3096 = vdwg.mxu0
  %3097 = vmatpush.bf16.msra.mxu0 %v2800
  %3098 = vmatpush.bf16.msra.mxu0 %v2799
  %3099 = vmatpush.bf16.msra.mxu0 %v2798
  %3100 = vmatpush.bf16.msra.mxu0 %v2797
  %3101 = vmatpush.bf16.msra.mxu0 %v2796
  %3102 = vmatpush.bf16.msra.mxu0 %v2795
  %3103 = vmatpush.bf16.msra.mxu0 %v2794
  %3104 = vmatpush.bf16.msra.mxu0 %v2793
  %3105 = vmatmul.bf16.gmra.mxu0 %v1952
  %v3106 = vpop.f32.mrf.mxu0
  %v3107 = vadd.f32 %v3093, %v3106
  %v3108 = vpop.f32.mrf.mxu0
  %v3109 = vadd.f32 %v3095, %v3108
  %3110 = vdwg.mxu0
  %3111 = vmatpush.bf16.msra.mxu0 %v2808
  %3112 = vmatpush.bf16.msra.mxu0 %v2807
  %3113 = vmatpush.bf16.msra.mxu0 %v2806
  %3114 = vmatpush.bf16.msra.mxu0 %v2805
  %3115 = vmatpush.bf16.msra.mxu0 %v2804
  %3116 = vmatpush.bf16.msra.mxu0 %v2803
  %3117 = vmatpush.bf16.msra.mxu0 %v2802
  %3118 = vmatpush.bf16.msra.mxu0 %v2801
  %3119 = vmatmul.bf16.gmra.mxu0 %v1953
  %v3120 = vpop.f32.mrf.mxu0
  %v3121 = vadd.f32 %v3107, %v3120
  %v3122 = vpop.f32.mrf.mxu0
  %v3123 = vadd.f32 %v3109, %v3122
  %3124 = vdwg.mxu0
  %3125 = vmatpush.bf16.msra.mxu0 %v2816
  %3126 = vmatpush.bf16.msra.mxu0 %v2815
  %3127 = vmatpush.bf16.msra.mxu0 %v2814
  %3128 = vmatpush.bf16.msra.mxu0 %v2813
  %3129 = vmatpush.bf16.msra.mxu0 %v2812
  %3130 = vmatpush.bf16.msra.mxu0 %v2811
  %3131 = vmatpush.bf16.msra.mxu0 %v2810
  %3132 = vmatpush.bf16.msra.mxu0 %v2809
  %3133 = vmatmul.bf16.gmra.mxu0 %v1954
  %v3134 = vpop.f32.mrf.mxu0
  %v3135 = vadd.f32 %v3121, %v3134
  %v3136 = vpop.f32.mrf.mxu0
  %v3137 = vadd.f32 %v3123, %v3136
  %3138 = vdwg.mxu0
  %3139 = vmatpush.bf16.msra.mxu0 %v2824
  %3140 = vmatpush.bf16.msra.mxu0 %v2823
  %3141 = vmatpush.bf16.msra.mxu0 %v2822
  %3142 = vmatpush.bf16.msra.mxu0 %v2821
  %3143 = vmatpush.bf16.msra.mxu0 %v2820
  %3144 = vmatpush.bf16.msra.mxu0 %v2819
  %3145 = vmatpush.bf16.msra.mxu0 %v2818
  %3146 = vmatpush.bf16.msra.mxu0 %v2817
  %3147 = vmatmul.bf16.gmra.mxu0 %v1955
  %v3148 = vpop.f32.mrf.mxu0
  %v3149 = vadd.f32 %v3135, %v3148
  %v3150 = vpop.f32.mrf.mxu0
  %v3151 = vadd.f32 %v3137, %v3150
  %3152 = vdwg.mxu0
  %3153 = vmatpush.bf16.msra.mxu0 %v2832
  %3154 = vmatpush.bf16.msra.mxu0 %v2831
  %3155 = vmatpush.bf16.msra.mxu0 %v2830
  %3156 = vmatpush.bf16.msra.mxu0 %v2829
  %3157 = vmatpush.bf16.msra.mxu0 %v2828
  %3158 = vmatpush.bf16.msra.mxu0 %v2827
  %3159 = vmatpush.bf16.msra.mxu0 %v2826
  %3160 = vmatpush.bf16.msra.mxu0 %v2825
  %3161 = vmatmul.bf16.gmra.mxu0 %v1956
  %v3162 = vpop.f32.mrf.mxu0
  %v3163 = vadd.f32 %v3149, %v3162
  %v3164 = vpop.f32.mrf.mxu0
  %v3165 = vadd.f32 %v3151, %v3164
  %3166 = vdwg.mxu0
  %3167 = vmatpush.bf16.msra.mxu0 %v2840
  %3168 = vmatpush.bf16.msra.mxu0 %v2839
  %3169 = vmatpush.bf16.msra.mxu0 %v2838
  %3170 = vmatpush.bf16.msra.mxu0 %v2837
  %3171 = vmatpush.bf16.msra.mxu0 %v2836
  %3172 = vmatpush.bf16.msra.mxu0 %v2835
  %3173 = vmatpush.bf16.msra.mxu0 %v2834
  %3174 = vmatpush.bf16.msra.mxu0 %v2833
  %3175 = vmatmul.bf16.gmra.mxu0 %v1957
  %v3176 = vpop.f32.mrf.mxu0
  %v3177 = vadd.f32 %v3163, %v3176
  %v3178 = vpop.f32.mrf.mxu0
  %v3179 = vadd.f32 %v3165, %v3178
  %3180 = vdwg.mxu0
  %3181 = vmatpush.bf16.msra.mxu0 %v2848
  %3182 = vmatpush.bf16.msra.mxu0 %v2847
  %3183 = vmatpush.bf16.msra.mxu0 %v2846
  %3184 = vmatpush.bf16.msra.mxu0 %v2845
  %3185 = vmatpush.bf16.msra.mxu0 %v2844
  %3186 = vmatpush.bf16.msra.mxu0 %v2843
  %3187 = vmatpush.bf16.msra.mxu0 %v2842
  %3188 = vmatpush.bf16.msra.mxu0 %v2841
  %3189 = vmatmul.bf16.gmra.mxu0 %v1958
  %v3190 = vpop.f32.mrf.mxu0
  %v3191 = vadd.f32 %v3177, %v3190
  %v3192 = vpop.f32.mrf.mxu0
  %v3193 = vadd.f32 %v3179, %v3192
  %3194 = vdwg.mxu0
  %3195 = vmatpush.bf16.msra.mxu0 %v2856
  %3196 = vmatpush.bf16.msra.mxu0 %v2855
  %3197 = vmatpush.bf16.msra.mxu0 %v2854
  %3198 = vmatpush.bf16.msra.mxu0 %v2853
  %3199 = vmatpush.bf16.msra.mxu0 %v2852
  %3200 = vmatpush.bf16.msra.mxu0 %v2851
  %3201 = vmatpush.bf16.msra.mxu0 %v2850
  %3202 = vmatpush.bf16.msra.mxu0 %v2849
  %3203 = vmatmul.bf16.gmra.mxu0 %v1959
  %v3204 = vpop.f32.mrf.mxu0
  %v3205 = vadd.f32 %v3191, %v3204
  %v3206 = vpop.f32.mrf.mxu0
  %v3207 = vadd.f32 %v3193, %v3206
  %3208 = vdwg.mxu0
  %v3209 = vadd.f32 %v1454, %v3205
  %v3210 = vadd.f32 %v1455, %v3207
  %v3211 = vsel %vm87, %v3209, 0.0
  %3212 = vadd.xlane.f32.xlu0 %v3211
  %v3213 = vpop.xlane.xlu0 %3212
  %v3214 = vsel %vm87, %v3210, 0.0
  %3215 = vadd.xlane.f32.xlu0 %v3214
  %v3216 = vpop.xlane.xlu0 %3215
  %v3217 = vmul.f32 %v3213, %v705
  %v3218 = vmul.f32 %v3216, %v705
  %v3219 = vsub.f32 %v3209, %v3217
  %v3220 = vsub.f32 %v3210, %v3218
  %v3221 = vmul.f32 %v3219, %v3219
  %v3222 = vmul.f32 %v3220, %v3220
  %v3223 = vsel %vm87, %v3221, 0.0
  %3224 = vadd.xlane.f32.xlu0 %v3223
  %v3225 = vpop.xlane.xlu0 %3224
  %v3226 = vsel %vm87, %v3222, 0.0
  %3227 = vadd.xlane.f32.xlu0 %v3226
  %v3228 = vpop.xlane.xlu0 %3227
  %v3229 = vmul.f32 %v3225, %v705
  %v3230 = vmul.f32 %v3228, %v705
  %v3231 = vadd.f32 %v3229, 1e-05
  %v3232 = vadd.f32 %v3230, 1e-05
  %v3233 = vrsqrt.pop %v3231
  %v3234 = vmul.f32 %v3233, %v3231
  %v3235 = vmul.f32 %v3234, %v3233
  %v3236 = vmul.f32 0.5, %v3235
  %v3237 = vsub.f32 1.5, %v3236
  %v3238 = vmul.f32 %v3233, %v3237
  %vm3239 = vweird.f32 %v3231
  %vm3240 = vweird.f32 %v3233
  %vm3241 = vmor %vm3239, %vm3240
  %v3242 = vsel %vm3241, %v3233, %v3238
  %v3243 = vrsqrt.pop %v3232
  %v3244 = vmul.f32 %v3243, %v3232
  %v3245 = vmul.f32 %v3244, %v3243
  %v3246 = vmul.f32 0.5, %v3245
  %v3247 = vsub.f32 1.5, %v3246
  %v3248 = vmul.f32 %v3243, %v3247
  %vm3249 = vweird.f32 %v3232
  %vm3250 = vweird.f32 %v3243
  %vm3251 = vmor %vm3249, %vm3250
  %v3252 = vsel %vm3251, %v3243, %v3248
  %v3253 = vmul.f32 %v3219, %v3242
  %v3254 = vmul.f32 %v3220, %v3252
  %v3255 = vperm.slane %v65, 0
  %v3256 = vmul.f32 %v3253, %v3255
  %v3257 = vmul.f32 %v3254, %v3255
  %v3258 = vperm.slane %v65, 1
  %v3259 = vadd.f32 %v3256, %v3258
  %v3260 = vadd.f32 %v3257, %v3258
  %s3261 = scalar_lea.vmem %s12, 16
  %v3262 = vld [vmem:[%s3261] sm:$0xff]
  %v3263 = vld [vmem:[%s3261 + $0x8] sm:$0x3]
  %v3264 = vpack.c.bf16 %v3260, %v3259
  %s3265 = scalar_lea.vmem %s2, 16
  %v3266 = vld [vmem:[%s3265] sm:$0xf]
  %v3267 = vld [vmem:[%s3265 + $0x4] sm:$0xf]
  %v3268 = vld [vmem:[%s3265 + $0x8] sm:$0xf]
  %v3269 = vld [vmem:[%s3265 + $0xc] sm:$0xf]
  %s3270 = scalar_lea.vmem %s3, 1
  %v3271 = vld [vmem:[%s3270] sm:$0x1]
  %v3273 = vperm.slane %v3271, 0
  %v3279 = vunpack.c.l.b16 %v3266
  %v3280 = vunpack.c.l.b16 %v3267
  %v3281 = vunpack.c.l.b16 %v3268
  %v3282 = vunpack.c.l.b16 %v3269
  %v3283 = vpack.c.b16 %v3280, %v3279
  %v3284 = vpack.c.b16 %v3282, %v3281
  %v3288 = vsel %vm87, %v3264, 0
  %3290 = vmatpush.bf16.msra.mxu0 0
  %3291 = vmatpush.bf16.msra.mxu0 0
  %3292 = vmatpush.bf16.msra.mxu0 0
  %3293 = vmatpush.bf16.msra.mxu0 0
  %3294 = vmatpush.bf16.msra.mxu0 0
  %3295 = vmatpush.bf16.msra.mxu0 0
  %3296 = vmatpush.bf16.msra.mxu0 %v3284
  %3297 = vmatpush.bf16.msra.mxu0 %v3283
  %3298 = vmatmul.bf16.gmra.mxu0 %v3288
  %v3299 = vpop.f32.mrf.mxu0
  %v3300 = vadd.f32 %v3273, %v3299
  %v3301 = vpop.f32.mrf.mxu0
  %v3302 = vadd.f32 %v3273, %v3301
  %3303 = vdwg.mxu0
  %3305 = vrot.lane.b32.xlu0 %v3300, 96
  %v3306 = vpop.permute.xlu0 %3305
  %v3307 = vsel %vm108, %v3300, 0
  %v3309 = vsel %vm108, %v3306, 0
  %3311 = vmatpush.xpose.msra.mxu0 0.0
  %3312 = vmatpush.xpose.msra.mxu0 0.0
  %3313 = vmatpush.xpose.msra.mxu0 0.0
  %3314 = vmatpush.xpose.msra.mxu0 0.0
  %3315 = vmatpush.xpose.msra.mxu0 0.0
  %3316 = vmatpush.xpose.msra.mxu0 0.0
  %3317 = vmatpush.xpose.msra.mxu0 0.0
  %3318 = vmatpush.xpose.msra.mxu0 0.0
  %3319 = vmatpush.xpose.msra.mxu0 0.0
  %3320 = vmatpush.xpose.msra.mxu0 0.0
  %3321 = vmatpush.xpose.msra.mxu0 0.0
  %3322 = vmatpush.xpose.msra.mxu0 0.0
  %3323 = vmatpush.xpose.msra.mxu0 0.0
  %3324 = vmatpush.xpose.msra.mxu0 0.0
  %3325 = vmatpush.xpose.msra.mxu0 0.0
  %3326 = vmatpush.xpose.msra.mxu0 %v3309
  %3327 = vmatmul.f32.gmra.mxu0 %v3307
  %v3328 = vpop.f32.mrf.mxu0
  %v3329 = vadd.f32 %v63, %v3328
  %3330 = vdwg.mxu0
  %3332 = vrot.lane.b32.xlu0 %v3302, 96
  %v3333 = vpop.permute.xlu0 %3332
  %v3334 = vsel %vm108, %v3302, 0
  %v3336 = vsel %vm108, %v3333, 0
  %3338 = vmatpush.xpose.msra.mxu0 0.0
  %3339 = vmatpush.xpose.msra.mxu0 0.0
  %3340 = vmatpush.xpose.msra.mxu0 0.0
  %3341 = vmatpush.xpose.msra.mxu0 0.0
  %3342 = vmatpush.xpose.msra.mxu0 0.0
  %3343 = vmatpush.xpose.msra.mxu0 0.0
  %3344 = vmatpush.xpose.msra.mxu0 0.0
  %3345 = vmatpush.xpose.msra.mxu0 0.0
  %3346 = vmatpush.xpose.msra.mxu0 0.0
  %3347 = vmatpush.xpose.msra.mxu0 0.0
  %3348 = vmatpush.xpose.msra.mxu0 0.0
  %3349 = vmatpush.xpose.msra.mxu0 0.0
  %3350 = vmatpush.xpose.msra.mxu0 0.0
  %3351 = vmatpush.xpose.msra.mxu0 0.0
  %3352 = vmatpush.xpose.msra.mxu0 0.0
  %3353 = vmatpush.xpose.msra.mxu0 %v3336
  %3354 = vmatmul.f32.gmra.mxu0 %v3334
  %v3355 = vpop.f32.mrf.mxu0
  %v3356 = vadd.f32 %v63, %v3355
  %3357 = vdwg.mxu0
  %v3358 = vsel %vm108, %v3329, -inf
  %3359 = vmax.xlane.f32.xlu0 %v3358
  %v3360 = vpop.xlane.xlu0 %3359
  %v3361 = vsel %vm108, %v3356, -inf
  %3362 = vmax.xlane.f32.xlu0 %v3361
  %v3363 = vpop.xlane.xlu0 %3362
  %v3364 = vsub.f32 %v3329, %v3360
  %v3365 = vsub.f32 %v3356, %v3363
  %v3366 = vmul.f32 %v3364, 1.442695
  %v3367 = vpow.pop %v3366
  %v3368 = vmul.f32 %v3365, 1.442695
  %v3369 = vpow.pop %v3368
  %v3370 = vsel %vm108, %v3367, 0.0
  %3371 = vadd.xlane.f32.xlu0 %v3370
  %v3372 = vpop.xlane.xlu0 %3371
  %v3373 = vsel %vm108, %v3369, 0.0
  %3374 = vadd.xlane.f32.xlu0 %v3373
  %v3375 = vpop.xlane.xlu0 %3374
  %v3376 = vrcp.pop %v3372
  %v3377 = vrcp.pop %v3375
  %v3378 = vmul.f32 %v3367, %v3376
  %v3379 = vmul.f32 %v3369, %v3377
  %3380 = vrot.lane.b32.xlu0 %v3300, 64
  %v3381 = vpop.permute.xlu0 %3380
  %v3384 = vsel %vm108, %v3378, 0
  %3386 = vmatpush.msra.mxu0 0.0
  %3387 = vmatpush.msra.mxu0 0.0
  %3388 = vmatpush.msra.mxu0 0.0
  %3389 = vmatpush.msra.mxu0 0.0
  %3390 = vmatpush.msra.mxu0 0.0
  %3391 = vmatpush.msra.mxu0 0.0
  %3392 = vmatpush.msra.mxu0 0.0
  %3393 = vmatpush.msra.mxu0 0.0
  %3394 = vmatpush.msra.mxu0 0.0
  %3395 = vmatpush.msra.mxu0 0.0
  %3396 = vmatpush.msra.mxu0 0.0
  %3397 = vmatpush.msra.mxu0 0.0
  %3398 = vmatpush.msra.mxu0 0.0
  %3399 = vmatpush.msra.mxu0 0.0
  %3400 = vmatpush.msra.mxu0 0.0
  %3401 = vmatpush.msra.mxu0 %v3381
  %3402 = vmatmul.f32.gmra.mxu0 %v3384
  %v3403 = vpop.f32.mrf.mxu0
  %v3404 = vadd.f32 0.0, %v3403
  %3405 = vdwg.mxu0
  %3406 = vrot.lane.b32.xlu0 %v3302, 64
  %v3407 = vpop.permute.xlu0 %3406
  %v3410 = vsel %vm108, %v3379, 0
  %3412 = vmatpush.msra.mxu0 0.0
  %3413 = vmatpush.msra.mxu0 0.0
  %3414 = vmatpush.msra.mxu0 0.0
  %3415 = vmatpush.msra.mxu0 0.0
  %3416 = vmatpush.msra.mxu0 0.0
  %3417 = vmatpush.msra.mxu0 0.0
  %3418 = vmatpush.msra.mxu0 0.0
  %3419 = vmatpush.msra.mxu0 0.0
  %3420 = vmatpush.msra.mxu0 0.0
  %3421 = vmatpush.msra.mxu0 0.0
  %3422 = vmatpush.msra.mxu0 0.0
  %3423 = vmatpush.msra.mxu0 0.0
  %3424 = vmatpush.msra.mxu0 0.0
  %3425 = vmatpush.msra.mxu0 0.0
  %3426 = vmatpush.msra.mxu0 0.0
  %3427 = vmatpush.msra.mxu0 %v3407
  %3428 = vmatmul.f32.gmra.mxu0 %v3410
  %v3429 = vpop.f32.mrf.mxu0
  %v3430 = vadd.f32 0.0, %v3429
  %3431 = vdwg.mxu0
  %3432 = vrot.lane.b32.xlu0 %v3300, 120
  %v3433 = vpop.permute.xlu0 %3432
  %3434 = vrot.lane.b32.xlu0 %v3300, 88
  %v3435 = vpop.permute.xlu0 %3434
  %v3436 = vsel %vm108, %v3433, 0
  %v3438 = vsel %vm108, %v3435, 0
  %3440 = vmatpush.xpose.msra.mxu0 0.0
  %3441 = vmatpush.xpose.msra.mxu0 0.0
  %3442 = vmatpush.xpose.msra.mxu0 0.0
  %3443 = vmatpush.xpose.msra.mxu0 0.0
  %3444 = vmatpush.xpose.msra.mxu0 0.0
  %3445 = vmatpush.xpose.msra.mxu0 0.0
  %3446 = vmatpush.xpose.msra.mxu0 0.0
  %3447 = vmatpush.xpose.msra.mxu0 0.0
  %3448 = vmatpush.xpose.msra.mxu0 0.0
  %3449 = vmatpush.xpose.msra.mxu0 0.0
  %3450 = vmatpush.xpose.msra.mxu0 0.0
  %3451 = vmatpush.xpose.msra.mxu0 0.0
  %3452 = vmatpush.xpose.msra.mxu0 0.0
  %3453 = vmatpush.xpose.msra.mxu0 0.0
  %3454 = vmatpush.xpose.msra.mxu0 0.0
  %3455 = vmatpush.xpose.msra.mxu0 %v3438
  %3456 = vmatmul.f32.gmra.mxu0 %v3436
  %v3457 = vpop.f32.mrf.mxu0
  %v3458 = vadd.f32 %v63, %v3457
  %3459 = vdwg.mxu0
  %3460 = vrot.lane.b32.xlu0 %v3302, 120
  %v3461 = vpop.permute.xlu0 %3460
  %3462 = vrot.lane.b32.xlu0 %v3302, 88
  %v3463 = vpop.permute.xlu0 %3462
  %v3464 = vsel %vm108, %v3461, 0
  %v3466 = vsel %vm108, %v3463, 0
  %3468 = vmatpush.xpose.msra.mxu0 0.0
  %3469 = vmatpush.xpose.msra.mxu0 0.0
  %3470 = vmatpush.xpose.msra.mxu0 0.0
  %3471 = vmatpush.xpose.msra.mxu0 0.0
  %3472 = vmatpush.xpose.msra.mxu0 0.0
  %3473 = vmatpush.xpose.msra.mxu0 0.0
  %3474 = vmatpush.xpose.msra.mxu0 0.0
  %3475 = vmatpush.xpose.msra.mxu0 0.0
  %3476 = vmatpush.xpose.msra.mxu0 0.0
  %3477 = vmatpush.xpose.msra.mxu0 0.0
  %3478 = vmatpush.xpose.msra.mxu0 0.0
  %3479 = vmatpush.xpose.msra.mxu0 0.0
  %3480 = vmatpush.xpose.msra.mxu0 0.0
  %3481 = vmatpush.xpose.msra.mxu0 0.0
  %3482 = vmatpush.xpose.msra.mxu0 0.0
  %3483 = vmatpush.xpose.msra.mxu0 %v3466
  %3484 = vmatmul.f32.gmra.mxu0 %v3464
  %v3485 = vpop.f32.mrf.mxu0
  %v3486 = vadd.f32 %v63, %v3485
  %3487 = vdwg.mxu0
  %v3488 = vsel %vm108, %v3458, -inf
  %3489 = vmax.xlane.f32.xlu0 %v3488
  %v3490 = vpop.xlane.xlu0 %3489
  %v3491 = vsel %vm108, %v3486, -inf
  %3492 = vmax.xlane.f32.xlu0 %v3491
  %v3493 = vpop.xlane.xlu0 %3492
  %v3494 = vsub.f32 %v3458, %v3490
  %v3495 = vsub.f32 %v3486, %v3493
  %v3496 = vmul.f32 %v3494, 1.442695
  %v3497 = vpow.pop %v3496
  %v3498 = vmul.f32 %v3495, 1.442695
  %v3499 = vpow.pop %v3498
  %v3500 = vsel %vm108, %v3497, 0.0
  %3501 = vadd.xlane.f32.xlu0 %v3500
  %v3502 = vpop.xlane.xlu0 %3501
  %v3503 = vsel %vm108, %v3499, 0.0
  %3504 = vadd.xlane.f32.xlu0 %v3503
  %v3505 = vpop.xlane.xlu0 %3504
  %v3506 = vrcp.pop %v3502
  %v3507 = vrcp.pop %v3505
  %v3508 = vmul.f32 %v3497, %v3506
  %v3509 = vmul.f32 %v3499, %v3507
  %3510 = vrot.lane.b32.xlu0 %v3300, 56
  %v3511 = vpop.permute.xlu0 %3510
  %v3514 = vsel %vm108, %v3508, 0
  %3516 = vmatpush.msra.mxu0 0.0
  %3517 = vmatpush.msra.mxu0 0.0
  %3518 = vmatpush.msra.mxu0 0.0
  %3519 = vmatpush.msra.mxu0 0.0
  %3520 = vmatpush.msra.mxu0 0.0
  %3521 = vmatpush.msra.mxu0 0.0
  %3522 = vmatpush.msra.mxu0 0.0
  %3523 = vmatpush.msra.mxu0 0.0
  %3524 = vmatpush.msra.mxu0 0.0
  %3525 = vmatpush.msra.mxu0 0.0
  %3526 = vmatpush.msra.mxu0 0.0
  %3527 = vmatpush.msra.mxu0 0.0
  %3528 = vmatpush.msra.mxu0 0.0
  %3529 = vmatpush.msra.mxu0 0.0
  %3530 = vmatpush.msra.mxu0 0.0
  %3531 = vmatpush.msra.mxu0 %v3511
  %3532 = vmatmul.f32.gmra.mxu0 %v3514
  %v3533 = vpop.f32.mrf.mxu0
  %v3534 = vadd.f32 0.0, %v3533
  %3535 = vdwg.mxu0
  %3536 = vrot.lane.b32.xlu0 %v3302, 56
  %v3537 = vpop.permute.xlu0 %3536
  %v3540 = vsel %vm108, %v3509, 0
  %3542 = vmatpush.msra.mxu0 0.0
  %3543 = vmatpush.msra.mxu0 0.0
  %3544 = vmatpush.msra.mxu0 0.0
  %3545 = vmatpush.msra.mxu0 0.0
  %3546 = vmatpush.msra.mxu0 0.0
  %3547 = vmatpush.msra.mxu0 0.0
  %3548 = vmatpush.msra.mxu0 0.0
  %3549 = vmatpush.msra.mxu0 0.0
  %3550 = vmatpush.msra.mxu0 0.0
  %3551 = vmatpush.msra.mxu0 0.0
  %3552 = vmatpush.msra.mxu0 0.0
  %3553 = vmatpush.msra.mxu0 0.0
  %3554 = vmatpush.msra.mxu0 0.0
  %3555 = vmatpush.msra.mxu0 0.0
  %3556 = vmatpush.msra.mxu0 0.0
  %3557 = vmatpush.msra.mxu0 %v3537
  %3558 = vmatmul.f32.gmra.mxu0 %v3540
  %v3559 = vpop.f32.mrf.mxu0
  %v3560 = vadd.f32 0.0, %v3559
  %3561 = vdwg.mxu0
  %3562 = vrot.lane.b32.xlu0 %v3300, 112
  %v3563 = vpop.permute.xlu0 %3562
  %3564 = vrot.lane.b32.xlu0 %v3300, 80
  %v3565 = vpop.permute.xlu0 %3564
  %v3566 = vsel %vm108, %v3563, 0
  %v3568 = vsel %vm108, %v3565, 0
  %3570 = vmatpush.xpose.msra.mxu0 0.0
  %3571 = vmatpush.xpose.msra.mxu0 0.0
  %3572 = vmatpush.xpose.msra.mxu0 0.0
  %3573 = vmatpush.xpose.msra.mxu0 0.0
  %3574 = vmatpush.xpose.msra.mxu0 0.0
  %3575 = vmatpush.xpose.msra.mxu0 0.0
  %3576 = vmatpush.xpose.msra.mxu0 0.0
  %3577 = vmatpush.xpose.msra.mxu0 0.0
  %3578 = vmatpush.xpose.msra.mxu0 0.0
  %3579 = vmatpush.xpose.msra.mxu0 0.0
  %3580 = vmatpush.xpose.msra.mxu0 0.0
  %3581 = vmatpush.xpose.msra.mxu0 0.0
  %3582 = vmatpush.xpose.msra.mxu0 0.0
  %3583 = vmatpush.xpose.msra.mxu0 0.0
  %3584 = vmatpush.xpose.msra.mxu0 0.0
  %3585 = vmatpush.xpose.msra.mxu0 %v3568
  %3586 = vmatmul.f32.gmra.mxu0 %v3566
  %v3587 = vpop.f32.mrf.mxu0
  %v3588 = vadd.f32 %v63, %v3587
  %3589 = vdwg.mxu0
  %3590 = vrot.lane.b32.xlu0 %v3302, 112
  %v3591 = vpop.permute.xlu0 %3590
  %3592 = vrot.lane.b32.xlu0 %v3302, 80
  %v3593 = vpop.permute.xlu0 %3592
  %v3594 = vsel %vm108, %v3591, 0
  %v3596 = vsel %vm108, %v3593, 0
  %3598 = vmatpush.xpose.msra.mxu0 0.0
  %3599 = vmatpush.xpose.msra.mxu0 0.0
  %3600 = vmatpush.xpose.msra.mxu0 0.0
  %3601 = vmatpush.xpose.msra.mxu0 0.0
  %3602 = vmatpush.xpose.msra.mxu0 0.0
  %3603 = vmatpush.xpose.msra.mxu0 0.0
  %3604 = vmatpush.xpose.msra.mxu0 0.0
  %3605 = vmatpush.xpose.msra.mxu0 0.0
  %3606 = vmatpush.xpose.msra.mxu0 0.0
  %3607 = vmatpush.xpose.msra.mxu0 0.0
  %3608 = vmatpush.xpose.msra.mxu0 0.0
  %3609 = vmatpush.xpose.msra.mxu0 0.0
  %3610 = vmatpush.xpose.msra.mxu0 0.0
  %3611 = vmatpush.xpose.msra.mxu0 0.0
  %3612 = vmatpush.xpose.msra.mxu0 0.0
  %3613 = vmatpush.xpose.msra.mxu0 %v3596
  %3614 = vmatmul.f32.gmra.mxu0 %v3594
  %v3615 = vpop.f32.mrf.mxu0
  %v3616 = vadd.f32 %v63, %v3615
  %3617 = vdwg.mxu0
  %v3618 = vsel %vm108, %v3588, -inf
  %3619 = vmax.xlane.f32.xlu0 %v3618
  %v3620 = vpop.xlane.xlu0 %3619
  %v3621 = vsel %vm108, %v3616, -inf
  %3622 = vmax.xlane.f32.xlu0 %v3621
  %v3623 = vpop.xlane.xlu0 %3622
  %v3624 = vsub.f32 %v3588, %v3620
  %v3625 = vsub.f32 %v3616, %v3623
  %v3626 = vmul.f32 %v3624, 1.442695
  %v3627 = vpow.pop %v3626
  %v3628 = vmul.f32 %v3625, 1.442695
  %v3629 = vpow.pop %v3628
  %v3630 = vsel %vm108, %v3627, 0.0
  %3631 = vadd.xlane.f32.xlu0 %v3630
  %v3632 = vpop.xlane.xlu0 %3631
  %v3633 = vsel %vm108, %v3629, 0.0
  %3634 = vadd.xlane.f32.xlu0 %v3633
  %v3635 = vpop.xlane.xlu0 %3634
  %v3636 = vrcp.pop %v3632
  %v3637 = vrcp.pop %v3635
  %v3638 = vmul.f32 %v3627, %v3636
  %v3639 = vmul.f32 %v3629, %v3637
  %3640 = vrot.lane.b32.xlu0 %v3300, 48
  %v3641 = vpop.permute.xlu0 %3640
  %v3644 = vsel %vm108, %v3638, 0
  %3646 = vmatpush.msra.mxu0 0.0
  %3647 = vmatpush.msra.mxu0 0.0
  %3648 = vmatpush.msra.mxu0 0.0
  %3649 = vmatpush.msra.mxu0 0.0
  %3650 = vmatpush.msra.mxu0 0.0
  %3651 = vmatpush.msra.mxu0 0.0
  %3652 = vmatpush.msra.mxu0 0.0
  %3653 = vmatpush.msra.mxu0 0.0
  %3654 = vmatpush.msra.mxu0 0.0
  %3655 = vmatpush.msra.mxu0 0.0
  %3656 = vmatpush.msra.mxu0 0.0
  %3657 = vmatpush.msra.mxu0 0.0
  %3658 = vmatpush.msra.mxu0 0.0
  %3659 = vmatpush.msra.mxu0 0.0
  %3660 = vmatpush.msra.mxu0 0.0
  %3661 = vmatpush.msra.mxu0 %v3641
  %3662 = vmatmul.f32.gmra.mxu0 %v3644
  %v3663 = vpop.f32.mrf.mxu0
  %v3664 = vadd.f32 0.0, %v3663
  %3665 = vdwg.mxu0
  %3666 = vrot.lane.b32.xlu0 %v3302, 48
  %v3667 = vpop.permute.xlu0 %3666
  %v3670 = vsel %vm108, %v3639, 0
  %3672 = vmatpush.msra.mxu0 0.0
  %3673 = vmatpush.msra.mxu0 0.0
  %3674 = vmatpush.msra.mxu0 0.0
  %3675 = vmatpush.msra.mxu0 0.0
  %3676 = vmatpush.msra.mxu0 0.0
  %3677 = vmatpush.msra.mxu0 0.0
  %3678 = vmatpush.msra.mxu0 0.0
  %3679 = vmatpush.msra.mxu0 0.0
  %3680 = vmatpush.msra.mxu0 0.0
  %3681 = vmatpush.msra.mxu0 0.0
  %3682 = vmatpush.msra.mxu0 0.0
  %3683 = vmatpush.msra.mxu0 0.0
  %3684 = vmatpush.msra.mxu0 0.0
  %3685 = vmatpush.msra.mxu0 0.0
  %3686 = vmatpush.msra.mxu0 0.0
  %3687 = vmatpush.msra.mxu0 %v3667
  %3688 = vmatmul.f32.gmra.mxu0 %v3670
  %v3689 = vpop.f32.mrf.mxu0
  %v3690 = vadd.f32 0.0, %v3689
  %3691 = vdwg.mxu0
  %3692 = vrot.lane.b32.xlu0 %v3300, 104
  %v3693 = vpop.permute.xlu0 %3692
  %3694 = vrot.lane.b32.xlu0 %v3300, 72
  %v3695 = vpop.permute.xlu0 %3694
  %v3696 = vsel %vm108, %v3693, 0
  %v3698 = vsel %vm108, %v3695, 0
  %3700 = vmatpush.xpose.msra.mxu0 0.0
  %3701 = vmatpush.xpose.msra.mxu0 0.0
  %3702 = vmatpush.xpose.msra.mxu0 0.0
  %3703 = vmatpush.xpose.msra.mxu0 0.0
  %3704 = vmatpush.xpose.msra.mxu0 0.0
  %3705 = vmatpush.xpose.msra.mxu0 0.0
  %3706 = vmatpush.xpose.msra.mxu0 0.0
  %3707 = vmatpush.xpose.msra.mxu0 0.0
  %3708 = vmatpush.xpose.msra.mxu0 0.0
  %3709 = vmatpush.xpose.msra.mxu0 0.0
  %3710 = vmatpush.xpose.msra.mxu0 0.0
  %3711 = vmatpush.xpose.msra.mxu0 0.0
  %3712 = vmatpush.xpose.msra.mxu0 0.0
  %3713 = vmatpush.xpose.msra.mxu0 0.0
  %3714 = vmatpush.xpose.msra.mxu0 0.0
  %3715 = vmatpush.xpose.msra.mxu0 %v3698
  %3716 = vmatmul.f32.gmra.mxu0 %v3696
  %v3717 = vpop.f32.mrf.mxu0
  %v3718 = vadd.f32 %v63, %v3717
  %3719 = vdwg.mxu0
  %3720 = vrot.lane.b32.xlu0 %v3302, 104
  %v3721 = vpop.permute.xlu0 %3720
  %3722 = vrot.lane.b32.xlu0 %v3302, 72
  %v3723 = vpop.permute.xlu0 %3722
  %v3724 = vsel %vm108, %v3721, 0
  %v3726 = vsel %vm108, %v3723, 0
  %3728 = vmatpush.xpose.msra.mxu0 0.0
  %3729 = vmatpush.xpose.msra.mxu0 0.0
  %3730 = vmatpush.xpose.msra.mxu0 0.0
  %3731 = vmatpush.xpose.msra.mxu0 0.0
  %3732 = vmatpush.xpose.msra.mxu0 0.0
  %3733 = vmatpush.xpose.msra.mxu0 0.0
  %3734 = vmatpush.xpose.msra.mxu0 0.0
  %3735 = vmatpush.xpose.msra.mxu0 0.0
  %3736 = vmatpush.xpose.msra.mxu0 0.0
  %3737 = vmatpush.xpose.msra.mxu0 0.0
  %3738 = vmatpush.xpose.msra.mxu0 0.0
  %3739 = vmatpush.xpose.msra.mxu0 0.0
  %3740 = vmatpush.xpose.msra.mxu0 0.0
  %3741 = vmatpush.xpose.msra.mxu0 0.0
  %3742 = vmatpush.xpose.msra.mxu0 0.0
  %3743 = vmatpush.xpose.msra.mxu0 %v3726
  %3744 = vmatmul.f32.gmra.mxu0 %v3724
  %v3745 = vpop.f32.mrf.mxu0
  %v3746 = vadd.f32 %v63, %v3745
  %3747 = vdwg.mxu0
  %v3748 = vsel %vm108, %v3718, -inf
  %3749 = vmax.xlane.f32.xlu0 %v3748
  %v3750 = vpop.xlane.xlu0 %3749
  %v3751 = vsel %vm108, %v3746, -inf
  %3752 = vmax.xlane.f32.xlu0 %v3751
  %v3753 = vpop.xlane.xlu0 %3752
  %v3754 = vsub.f32 %v3718, %v3750
  %v3755 = vsub.f32 %v3746, %v3753
  %v3756 = vmul.f32 %v3754, 1.442695
  %v3757 = vpow.pop %v3756
  %v3758 = vmul.f32 %v3755, 1.442695
  %v3759 = vpow.pop %v3758
  %v3760 = vsel %vm108, %v3757, 0.0
  %3761 = vadd.xlane.f32.xlu0 %v3760
  %v3762 = vpop.xlane.xlu0 %3761
  %v3763 = vsel %vm108, %v3759, 0.0
  %3764 = vadd.xlane.f32.xlu0 %v3763
  %v3765 = vpop.xlane.xlu0 %3764
  %v3766 = vrcp.pop %v3762
  %v3767 = vrcp.pop %v3765
  %v3768 = vmul.f32 %v3757, %v3766
  %v3769 = vmul.f32 %v3759, %v3767
  %3770 = vrot.lane.b32.xlu0 %v3300, 40
  %v3771 = vpop.permute.xlu0 %3770
  %v3774 = vsel %vm108, %v3768, 0
  %3776 = vmatpush.msra.mxu0 0.0
  %3777 = vmatpush.msra.mxu0 0.0
  %3778 = vmatpush.msra.mxu0 0.0
  %3779 = vmatpush.msra.mxu0 0.0
  %3780 = vmatpush.msra.mxu0 0.0
  %3781 = vmatpush.msra.mxu0 0.0
  %3782 = vmatpush.msra.mxu0 0.0
  %3783 = vmatpush.msra.mxu0 0.0
  %3784 = vmatpush.msra.mxu0 0.0
  %3785 = vmatpush.msra.mxu0 0.0
  %3786 = vmatpush.msra.mxu0 0.0
  %3787 = vmatpush.msra.mxu0 0.0
  %3788 = vmatpush.msra.mxu0 0.0
  %3789 = vmatpush.msra.mxu0 0.0
  %3790 = vmatpush.msra.mxu0 0.0
  %3791 = vmatpush.msra.mxu0 %v3771
  %3792 = vmatmul.f32.gmra.mxu0 %v3774
  %v3793 = vpop.f32.mrf.mxu0
  %v3794 = vadd.f32 0.0, %v3793
  %3795 = vdwg.mxu0
  %3796 = vrot.lane.b32.xlu0 %v3302, 40
  %v3797 = vpop.permute.xlu0 %3796
  %v3800 = vsel %vm108, %v3769, 0
  %3802 = vmatpush.msra.mxu0 0.0
  %3803 = vmatpush.msra.mxu0 0.0
  %3804 = vmatpush.msra.mxu0 0.0
  %3805 = vmatpush.msra.mxu0 0.0
  %3806 = vmatpush.msra.mxu0 0.0
  %3807 = vmatpush.msra.mxu0 0.0
  %3808 = vmatpush.msra.mxu0 0.0
  %3809 = vmatpush.msra.mxu0 0.0
  %3810 = vmatpush.msra.mxu0 0.0
  %3811 = vmatpush.msra.mxu0 0.0
  %3812 = vmatpush.msra.mxu0 0.0
  %3813 = vmatpush.msra.mxu0 0.0
  %3814 = vmatpush.msra.mxu0 0.0
  %3815 = vmatpush.msra.mxu0 0.0
  %3816 = vmatpush.msra.mxu0 0.0
  %3817 = vmatpush.msra.mxu0 %v3797
  %3818 = vmatmul.f32.gmra.mxu0 %v3800
  %v3819 = vpop.f32.mrf.mxu0
  %v3820 = vadd.f32 0.0, %v3819
  %3821 = vdwg.mxu0
  %3824 = vrot.lane.b32.xlu0 %v3534, 8
  %v3825 = vpop.permute.xlu0 %3824
  %3826 = vrot.lane.b32.xlu0 %v3560, 8
  %v3827 = vpop.permute.xlu0 %3826
  %3832 = vrot.lane.b32.xlu0 %v3664, 16
  %v3833 = vpop.permute.xlu0 %3832
  %3834 = vrot.lane.b32.xlu0 %v3690, 16
  %v3835 = vpop.permute.xlu0 %3834
  %3840 = vrot.lane.b32.xlu0 %v3794, 24
  %v3841 = vpop.permute.xlu0 %3840
  %3842 = vrot.lane.b32.xlu0 %v3820, 24
  %v3843 = vpop.permute.xlu0 %3842
  %v3846 = vsel %vm108, %v3404, %v3825
  %v3847 = vsel %vm108, %v3430, %v3827
  %v3848 = vsel %vm650, %v3846, %v3833
  %v3849 = vsel %vm650, %v3847, %v3835
  %v3850 = vsel %vm653, %v3848, %v3841
  %v3851 = vsel %vm653, %v3849, %v3843
  %v3852 = vpack.c.bf16 %v3851, %v3850
  %s3853 = scalar_lea.vmem %s4, 16
  %v3854 = vld [vmem:[%s3853] sm:$0xf]
  %v3855 = vld [vmem:[%s3853 + $0x4] sm:$0xf]
  %v3856 = vld [vmem:[%s3853 + $0x8] sm:$0xf]
  %v3857 = vld [vmem:[%s3853 + $0xc] sm:$0xf]
  %v3858 = vperm.slane %v3262, 0
  %v3863 = vunpack.c.l.b16 %v3854
  %v3864 = vunpack.c.l.b16 %v3855
  %v3865 = vunpack.c.l.b16 %v3856
  %v3866 = vunpack.c.l.b16 %v3857
  %v3867 = vpack.c.b16 %v3864, %v3863
  %v3868 = vpack.c.b16 %v3866, %v3865
  %v3872 = vsel %vm87, %v3852, 0
  %3874 = vmatpush.bf16.msra.mxu0 0
  %3875 = vmatpush.bf16.msra.mxu0 0
  %3876 = vmatpush.bf16.msra.mxu0 0
  %3877 = vmatpush.bf16.msra.mxu0 0
  %3878 = vmatpush.bf16.msra.mxu0 0
  %3879 = vmatpush.bf16.msra.mxu0 0
  %3880 = vmatpush.bf16.msra.mxu0 %v3868
  %3881 = vmatpush.bf16.msra.mxu0 %v3867
  %3882 = vmatmul.bf16.gmra.mxu0 %v3872
  %v3883 = vpop.f32.mrf.mxu0
  %v3884 = vadd.f32 %v3858, %v3883
  %v3885 = vpop.f32.mrf.mxu0
  %v3886 = vadd.f32 %v3858, %v3885
  %3887 = vdwg.mxu0
  %v3888 = vadd.f32 %v3259, %v3884
  %v3889 = vadd.f32 %v3260, %v3886
  %v3890 = vsel %vm87, %v3888, 0.0
  %3891 = vadd.xlane.f32.xlu0 %v3890
  %v3892 = vpop.xlane.xlu0 %3891
  %v3893 = vsel %vm87, %v3889, 0.0
  %3894 = vadd.xlane.f32.xlu0 %v3893
  %v3895 = vpop.xlane.xlu0 %3894
  %v3896 = vmul.f32 %v3892, %v705
  %v3897 = vmul.f32 %v3895, %v705
  %v3898 = vsub.f32 %v3888, %v3896
  %v3899 = vsub.f32 %v3889, %v3897
  %v3900 = vmul.f32 %v3898, %v3898
  %v3901 = vmul.f32 %v3899, %v3899
  %v3902 = vsel %vm87, %v3900, 0.0
  %3903 = vadd.xlane.f32.xlu0 %v3902
  %v3904 = vpop.xlane.xlu0 %3903
  %v3905 = vsel %vm87, %v3901, 0.0
  %3906 = vadd.xlane.f32.xlu0 %v3905
  %v3907 = vpop.xlane.xlu0 %3906
  %v3908 = vmul.f32 %v3904, %v705
  %v3909 = vmul.f32 %v3907, %v705
  %v3910 = vadd.f32 %v3908, 1e-05
  %v3911 = vadd.f32 %v3909, 1e-05
  %v3912 = vrsqrt.pop %v3910
  %v3913 = vmul.f32 %v3912, %v3910
  %v3914 = vmul.f32 %v3913, %v3912
  %v3915 = vmul.f32 0.5, %v3914
  %v3916 = vsub.f32 1.5, %v3915
  %v3917 = vmul.f32 %v3912, %v3916
  %vm3918 = vweird.f32 %v3910
  %vm3919 = vweird.f32 %v3912
  %vm3920 = vmor %vm3918, %vm3919
  %v3921 = vsel %vm3920, %v3912, %v3917
  %v3922 = vrsqrt.pop %v3911
  %v3923 = vmul.f32 %v3922, %v3911
  %v3924 = vmul.f32 %v3923, %v3922
  %v3925 = vmul.f32 0.5, %v3924
  %v3926 = vsub.f32 1.5, %v3925
  %v3927 = vmul.f32 %v3922, %v3926
  %vm3928 = vweird.f32 %v3911
  %vm3929 = vweird.f32 %v3922
  %vm3930 = vmor %vm3928, %vm3929
  %v3931 = vsel %vm3930, %v3922, %v3927
  %v3932 = vmul.f32 %v3898, %v3921
  %v3933 = vmul.f32 %v3899, %v3931
  %v3934 = vperm.slane %v3262, 4
  %v3935 = vmul.f32 %v3932, %v3934
  %v3936 = vmul.f32 %v3933, %v3934
  %v3937 = vperm.slane %v3262, 5
  %v3938 = vadd.f32 %v3935, %v3937
  %v3939 = vadd.f32 %v3936, %v3937
  %v3940 = vpack.c.bf16 %v3939, %v3938
  %s3941 = scalar_lea.vmem %s5, 16
  %v3942 = vld [vmem:[%s3941] sm:$0xf]
  %v3943 = vld [vmem:[%s3941 + $0x4] sm:$0xf]
  %v3944 = vld [vmem:[%s3941 + $0x8] sm:$0xf]
  %v3945 = vld [vmem:[%s3941 + $0xc] sm:$0xf]
  %v3946 = vperm.slane %v3262, 1
  %v3951 = vunpack.c.l.b16 %v3942
  %v3952 = vunpack.c.l.b16 %v3943
  %v3953 = vunpack.c.l.b16 %v3944
  %v3954 = vunpack.c.l.b16 %v3945
  %v3955 = vpack.c.b16 %v3952, %v3951
  %v3956 = vpack.c.b16 %v3954, %v3953
  %v3960 = vsel %vm87, %v3940, 0
  %3962 = vmatpush.bf16.msra.mxu0 0
  %3963 = vmatpush.bf16.msra.mxu0 0
  %3964 = vmatpush.bf16.msra.mxu0 0
  %3965 = vmatpush.bf16.msra.mxu0 0
  %3966 = vmatpush.bf16.msra.mxu0 0
  %3967 = vmatpush.bf16.msra.mxu0 0
  %3968 = vmatpush.bf16.msra.mxu0 %v3956
  %3969 = vmatpush.bf16.msra.mxu0 %v3955
  %3970 = vmatmul.bf16.gmra.mxu0 %v3960
  %v3971 = vpop.f32.mrf.mxu0
  %v3972 = vadd.f32 %v3946, %v3971
  %v3973 = vpop.f32.mrf.mxu0
  %v3974 = vadd.f32 %v3946, %v3973
  %3975 = vdwg.mxu0
  %s3976 = scalar_lea.vmem %s6, 16
  %v3977 = vld [vmem:[%s3976] sm:$0xf]
  %v3978 = vld [vmem:[%s3976 + $0x4] sm:$0xf]
  %v3979 = vld [vmem:[%s3976 + $0x8] sm:$0xf]
  %v3980 = vld [vmem:[%s3976 + $0xc] sm:$0xf]
  %s3981 = scalar_lea.vmem %s7, 1
  %v3982 = vld [vmem:[%s3981] sm:$0x1]
  %v3984 = vperm.slane %v3982, 0
  %v3990 = vunpack.c.l.b16 %v3977
  %v3991 = vunpack.c.l.b16 %v3978
  %v3992 = vunpack.c.l.b16 %v3979
  %v3993 = vunpack.c.l.b16 %v3980
  %v3994 = vpack.c.b16 %v3991, %v3990
  %v3995 = vpack.c.b16 %v3993, %v3992
  %3998 = vmatpush.bf16.msra.mxu0 0
  %3999 = vmatpush.bf16.msra.mxu0 0
  %4000 = vmatpush.bf16.msra.mxu0 0
  %4001 = vmatpush.bf16.msra.mxu0 0
  %4002 = vmatpush.bf16.msra.mxu0 0
  %4003 = vmatpush.bf16.msra.mxu0 0
  %4004 = vmatpush.bf16.msra.mxu0 %v3995
  %4005 = vmatpush.bf16.msra.mxu0 %v3994
  %4006 = vmatmul.bf16.gmra.mxu0 %v807
  %v4007 = vpop.f32.mrf.mxu0
  %v4008 = vadd.f32 %v3984, %v4007
  %v4009 = vpop.f32.mrf.mxu0
  %v4010 = vadd.f32 %v3984, %v4009
  %4011 = vdwg.mxu0
  %v4013 = vsel %vm108, %v3972, 0
  %v4016 = vsel %vm108, %v4008, 0
  %4018 = vmatpush.xpose.msra.mxu0 0.0
  %4019 = vmatpush.xpose.msra.mxu0 0.0
  %4020 = vmatpush.xpose.msra.mxu0 0.0
  %4021 = vmatpush.xpose.msra.mxu0 0.0
  %4022 = vmatpush.xpose.msra.mxu0 0.0
  %4023 = vmatpush.xpose.msra.mxu0 0.0
  %4024 = vmatpush.xpose.msra.mxu0 0.0
  %4025 = vmatpush.xpose.msra.mxu0 0.0
  %4026 = vmatpush.xpose.msra.mxu0 0.0
  %4027 = vmatpush.xpose.msra.mxu0 0.0
  %4028 = vmatpush.xpose.msra.mxu0 0.0
  %4029 = vmatpush.xpose.msra.mxu0 0.0
  %4030 = vmatpush.xpose.msra.mxu0 0.0
  %4031 = vmatpush.xpose.msra.mxu0 0.0
  %4032 = vmatpush.xpose.msra.mxu0 0.0
  %4033 = vmatpush.xpose.msra.mxu0 %v4016
  %4034 = vmatmul.f32.gmra.mxu0 %v4013
  %v4035 = vpop.f32.mrf.mxu0
  %v4036 = vadd.f32 0.0, %v4035
  %4037 = vdwg.mxu0
  %v4039 = vsel %vm108, %v3974, 0
  %v4042 = vsel %vm108, %v4010, 0
  %4044 = vmatpush.xpose.msra.mxu0 0.0
  %4045 = vmatpush.xpose.msra.mxu0 0.0
  %4046 = vmatpush.xpose.msra.mxu0 0.0
  %4047 = vmatpush.xpose.msra.mxu0 0.0
  %4048 = vmatpush.xpose.msra.mxu0 0.0
  %4049 = vmatpush.xpose.msra.mxu0 0.0
  %4050 = vmatpush.xpose.msra.mxu0 0.0
  %4051 = vmatpush.xpose.msra.mxu0 0.0
  %4052 = vmatpush.xpose.msra.mxu0 0.0
  %4053 = vmatpush.xpose.msra.mxu0 0.0
  %4054 = vmatpush.xpose.msra.mxu0 0.0
  %4055 = vmatpush.xpose.msra.mxu0 0.0
  %4056 = vmatpush.xpose.msra.mxu0 0.0
  %4057 = vmatpush.xpose.msra.mxu0 0.0
  %4058 = vmatpush.xpose.msra.mxu0 0.0
  %4059 = vmatpush.xpose.msra.mxu0 %v4042
  %4060 = vmatmul.f32.gmra.mxu0 %v4039
  %v4061 = vpop.f32.mrf.mxu0
  %v4062 = vadd.f32 0.0, %v4061
  %4063 = vdwg.mxu0
  %v4064 = vsel %vm108, %v4036, -inf
  %4065 = vmax.xlane.f32.xlu0 %v4064
  %v4066 = vpop.xlane.xlu0 %4065
  %v4067 = vsel %vm108, %v4062, -inf
  %4068 = vmax.xlane.f32.xlu0 %v4067
  %v4069 = vpop.xlane.xlu0 %4068
  %v4070 = vsub.f32 %v4036, %v4066
  %v4071 = vsub.f32 %v4062, %v4069
  %v4072 = vmul.f32 %v4070, 1.442695
  %v4073 = vpow.pop %v4072
  %v4074 = vmul.f32 %v4071, 1.442695
  %v4075 = vpow.pop %v4074
  %v4076 = vsel %vm108, %v4073, 0.0
  %4077 = vadd.xlane.f32.xlu0 %v4076
  %v4078 = vpop.xlane.xlu0 %4077
  %v4079 = vsel %vm108, %v4075, 0.0
  %4080 = vadd.xlane.f32.xlu0 %v4079
  %v4081 = vpop.xlane.xlu0 %4080
  %v4082 = vrcp.pop %v4078
  %v4083 = vrcp.pop %v4081
  %v4084 = vmul.f32 %v4073, %v4082
  %v4085 = vmul.f32 %v4075, %v4083
  %4086 = vrot.lane.b32.xlu0 %v4008, 96
  %v4087 = vpop.permute.xlu0 %4086
  %v4090 = vsel %vm108, %v4084, 0
  %4092 = vmatpush.msra.mxu0 0.0
  %4093 = vmatpush.msra.mxu0 0.0
  %4094 = vmatpush.msra.mxu0 0.0
  %4095 = vmatpush.msra.mxu0 0.0
  %4096 = vmatpush.msra.mxu0 0.0
  %4097 = vmatpush.msra.mxu0 0.0
  %4098 = vmatpush.msra.mxu0 0.0
  %4099 = vmatpush.msra.mxu0 0.0
  %4100 = vmatpush.msra.mxu0 0.0
  %4101 = vmatpush.msra.mxu0 0.0
  %4102 = vmatpush.msra.mxu0 0.0
  %4103 = vmatpush.msra.mxu0 0.0
  %4104 = vmatpush.msra.mxu0 0.0
  %4105 = vmatpush.msra.mxu0 0.0
  %4106 = vmatpush.msra.mxu0 0.0
  %4107 = vmatpush.msra.mxu0 %v4087
  %4108 = vmatmul.f32.gmra.mxu0 %v4090
  %v4109 = vpop.f32.mrf.mxu0
  %v4110 = vadd.f32 0.0, %v4109
  %4111 = vdwg.mxu0
  %4112 = vrot.lane.b32.xlu0 %v4010, 96
  %v4113 = vpop.permute.xlu0 %4112
  %v4116 = vsel %vm108, %v4085, 0
  %4118 = vmatpush.msra.mxu0 0.0
  %4119 = vmatpush.msra.mxu0 0.0
  %4120 = vmatpush.msra.mxu0 0.0
  %4121 = vmatpush.msra.mxu0 0.0
  %4122 = vmatpush.msra.mxu0 0.0
  %4123 = vmatpush.msra.mxu0 0.0
  %4124 = vmatpush.msra.mxu0 0.0
  %4125 = vmatpush.msra.mxu0 0.0
  %4126 = vmatpush.msra.mxu0 0.0
  %4127 = vmatpush.msra.mxu0 0.0
  %4128 = vmatpush.msra.mxu0 0.0
  %4129 = vmatpush.msra.mxu0 0.0
  %4130 = vmatpush.msra.mxu0 0.0
  %4131 = vmatpush.msra.mxu0 0.0
  %4132 = vmatpush.msra.mxu0 0.0
  %4133 = vmatpush.msra.mxu0 %v4113
  %4134 = vmatmul.f32.gmra.mxu0 %v4116
  %v4135 = vpop.f32.mrf.mxu0
  %v4136 = vadd.f32 0.0, %v4135
  %4137 = vdwg.mxu0
  %4138 = vrot.lane.b32.xlu0 %v3972, 120
  %v4139 = vpop.permute.xlu0 %4138
  %4140 = vrot.lane.b32.xlu0 %v4008, 120
  %v4141 = vpop.permute.xlu0 %4140
  %v4142 = vsel %vm108, %v4139, 0
  %v4144 = vsel %vm108, %v4141, 0
  %4146 = vmatpush.xpose.msra.mxu0 0.0
  %4147 = vmatpush.xpose.msra.mxu0 0.0
  %4148 = vmatpush.xpose.msra.mxu0 0.0
  %4149 = vmatpush.xpose.msra.mxu0 0.0
  %4150 = vmatpush.xpose.msra.mxu0 0.0
  %4151 = vmatpush.xpose.msra.mxu0 0.0
  %4152 = vmatpush.xpose.msra.mxu0 0.0
  %4153 = vmatpush.xpose.msra.mxu0 0.0
  %4154 = vmatpush.xpose.msra.mxu0 0.0
  %4155 = vmatpush.xpose.msra.mxu0 0.0
  %4156 = vmatpush.xpose.msra.mxu0 0.0
  %4157 = vmatpush.xpose.msra.mxu0 0.0
  %4158 = vmatpush.xpose.msra.mxu0 0.0
  %4159 = vmatpush.xpose.msra.mxu0 0.0
  %4160 = vmatpush.xpose.msra.mxu0 0.0
  %4161 = vmatpush.xpose.msra.mxu0 %v4144
  %4162 = vmatmul.f32.gmra.mxu0 %v4142
  %v4163 = vpop.f32.mrf.mxu0
  %v4164 = vadd.f32 0.0, %v4163
  %4165 = vdwg.mxu0
  %4166 = vrot.lane.b32.xlu0 %v3974, 120
  %v4167 = vpop.permute.xlu0 %4166
  %4168 = vrot.lane.b32.xlu0 %v4010, 120
  %v4169 = vpop.permute.xlu0 %4168
  %v4170 = vsel %vm108, %v4167, 0
  %v4172 = vsel %vm108, %v4169, 0
  %4174 = vmatpush.xpose.msra.mxu0 0.0
  %4175 = vmatpush.xpose.msra.mxu0 0.0
  %4176 = vmatpush.xpose.msra.mxu0 0.0
  %4177 = vmatpush.xpose.msra.mxu0 0.0
  %4178 = vmatpush.xpose.msra.mxu0 0.0
  %4179 = vmatpush.xpose.msra.mxu0 0.0
  %4180 = vmatpush.xpose.msra.mxu0 0.0
  %4181 = vmatpush.xpose.msra.mxu0 0.0
  %4182 = vmatpush.xpose.msra.mxu0 0.0
  %4183 = vmatpush.xpose.msra.mxu0 0.0
  %4184 = vmatpush.xpose.msra.mxu0 0.0
  %4185 = vmatpush.xpose.msra.mxu0 0.0
  %4186 = vmatpush.xpose.msra.mxu0 0.0
  %4187 = vmatpush.xpose.msra.mxu0 0.0
  %4188 = vmatpush.xpose.msra.mxu0 0.0
  %4189 = vmatpush.xpose.msra.mxu0 %v4172
  %4190 = vmatmul.f32.gmra.mxu0 %v4170
  %v4191 = vpop.f32.mrf.mxu0
  %v4192 = vadd.f32 0.0, %v4191
  %4193 = vdwg.mxu0
  %v4194 = vsel %vm108, %v4164, -inf
  %4195 = vmax.xlane.f32.xlu0 %v4194
  %v4196 = vpop.xlane.xlu0 %4195
  %v4197 = vsel %vm108, %v4192, -inf
  %4198 = vmax.xlane.f32.xlu0 %v4197
  %v4199 = vpop.xlane.xlu0 %4198
  %v4200 = vsub.f32 %v4164, %v4196
  %v4201 = vsub.f32 %v4192, %v4199
  %v4202 = vmul.f32 %v4200, 1.442695
  %v4203 = vpow.pop %v4202
  %v4204 = vmul.f32 %v4201, 1.442695
  %v4205 = vpow.pop %v4204
  %v4206 = vsel %vm108, %v4203, 0.0
  %4207 = vadd.xlane.f32.xlu0 %v4206
  %v4208 = vpop.xlane.xlu0 %4207
  %v4209 = vsel %vm108, %v4205, 0.0
  %4210 = vadd.xlane.f32.xlu0 %v4209
  %v4211 = vpop.xlane.xlu0 %4210
  %v4212 = vrcp.pop %v4208
  %v4213 = vrcp.pop %v4211
  %v4214 = vmul.f32 %v4203, %v4212
  %v4215 = vmul.f32 %v4205, %v4213
  %4216 = vrot.lane.b32.xlu0 %v4008, 88
  %v4217 = vpop.permute.xlu0 %4216
  %v4220 = vsel %vm108, %v4214, 0
  %4222 = vmatpush.msra.mxu0 0.0
  %4223 = vmatpush.msra.mxu0 0.0
  %4224 = vmatpush.msra.mxu0 0.0
  %4225 = vmatpush.msra.mxu0 0.0
  %4226 = vmatpush.msra.mxu0 0.0
  %4227 = vmatpush.msra.mxu0 0.0
  %4228 = vmatpush.msra.mxu0 0.0
  %4229 = vmatpush.msra.mxu0 0.0
  %4230 = vmatpush.msra.mxu0 0.0
  %4231 = vmatpush.msra.mxu0 0.0
  %4232 = vmatpush.msra.mxu0 0.0
  %4233 = vmatpush.msra.mxu0 0.0
  %4234 = vmatpush.msra.mxu0 0.0
  %4235 = vmatpush.msra.mxu0 0.0
  %4236 = vmatpush.msra.mxu0 0.0
  %4237 = vmatpush.msra.mxu0 %v4217
  %4238 = vmatmul.f32.gmra.mxu0 %v4220
  %v4239 = vpop.f32.mrf.mxu0
  %v4240 = vadd.f32 0.0, %v4239
  %4241 = vdwg.mxu0
  %4242 = vrot.lane.b32.xlu0 %v4010, 88
  %v4243 = vpop.permute.xlu0 %4242
  %v4246 = vsel %vm108, %v4215, 0
  %4248 = vmatpush.msra.mxu0 0.0
  %4249 = vmatpush.msra.mxu0 0.0
  %4250 = vmatpush.msra.mxu0 0.0
  %4251 = vmatpush.msra.mxu0 0.0
  %4252 = vmatpush.msra.mxu0 0.0
  %4253 = vmatpush.msra.mxu0 0.0
  %4254 = vmatpush.msra.mxu0 0.0
  %4255 = vmatpush.msra.mxu0 0.0
  %4256 = vmatpush.msra.mxu0 0.0
  %4257 = vmatpush.msra.mxu0 0.0
  %4258 = vmatpush.msra.mxu0 0.0
  %4259 = vmatpush.msra.mxu0 0.0
  %4260 = vmatpush.msra.mxu0 0.0
  %4261 = vmatpush.msra.mxu0 0.0
  %4262 = vmatpush.msra.mxu0 0.0
  %4263 = vmatpush.msra.mxu0 %v4243
  %4264 = vmatmul.f32.gmra.mxu0 %v4246
  %v4265 = vpop.f32.mrf.mxu0
  %v4266 = vadd.f32 0.0, %v4265
  %4267 = vdwg.mxu0
  %4268 = vrot.lane.b32.xlu0 %v3972, 112
  %v4269 = vpop.permute.xlu0 %4268
  %4270 = vrot.lane.b32.xlu0 %v4008, 112
  %v4271 = vpop.permute.xlu0 %4270
  %v4272 = vsel %vm108, %v4269, 0
  %v4274 = vsel %vm108, %v4271, 0
  %4276 = vmatpush.xpose.msra.mxu0 0.0
  %4277 = vmatpush.xpose.msra.mxu0 0.0
  %4278 = vmatpush.xpose.msra.mxu0 0.0
  %4279 = vmatpush.xpose.msra.mxu0 0.0
  %4280 = vmatpush.xpose.msra.mxu0 0.0
  %4281 = vmatpush.xpose.msra.mxu0 0.0
  %4282 = vmatpush.xpose.msra.mxu0 0.0
  %4283 = vmatpush.xpose.msra.mxu0 0.0
  %4284 = vmatpush.xpose.msra.mxu0 0.0
  %4285 = vmatpush.xpose.msra.mxu0 0.0
  %4286 = vmatpush.xpose.msra.mxu0 0.0
  %4287 = vmatpush.xpose.msra.mxu0 0.0
  %4288 = vmatpush.xpose.msra.mxu0 0.0
  %4289 = vmatpush.xpose.msra.mxu0 0.0
  %4290 = vmatpush.xpose.msra.mxu0 0.0
  %4291 = vmatpush.xpose.msra.mxu0 %v4274
  %4292 = vmatmul.f32.gmra.mxu0 %v4272
  %v4293 = vpop.f32.mrf.mxu0
  %v4294 = vadd.f32 0.0, %v4293
  %4295 = vdwg.mxu0
  %4296 = vrot.lane.b32.xlu0 %v3974, 112
  %v4297 = vpop.permute.xlu0 %4296
  %4298 = vrot.lane.b32.xlu0 %v4010, 112
  %v4299 = vpop.permute.xlu0 %4298
  %v4300 = vsel %vm108, %v4297, 0
  %v4302 = vsel %vm108, %v4299, 0
  %4304 = vmatpush.xpose.msra.mxu0 0.0
  %4305 = vmatpush.xpose.msra.mxu0 0.0
  %4306 = vmatpush.xpose.msra.mxu0 0.0
  %4307 = vmatpush.xpose.msra.mxu0 0.0
  %4308 = vmatpush.xpose.msra.mxu0 0.0
  %4309 = vmatpush.xpose.msra.mxu0 0.0
  %4310 = vmatpush.xpose.msra.mxu0 0.0
  %4311 = vmatpush.xpose.msra.mxu0 0.0
  %4312 = vmatpush.xpose.msra.mxu0 0.0
  %4313 = vmatpush.xpose.msra.mxu0 0.0
  %4314 = vmatpush.xpose.msra.mxu0 0.0
  %4315 = vmatpush.xpose.msra.mxu0 0.0
  %4316 = vmatpush.xpose.msra.mxu0 0.0
  %4317 = vmatpush.xpose.msra.mxu0 0.0
  %4318 = vmatpush.xpose.msra.mxu0 0.0
  %4319 = vmatpush.xpose.msra.mxu0 %v4302
  %4320 = vmatmul.f32.gmra.mxu0 %v4300
  %v4321 = vpop.f32.mrf.mxu0
  %v4322 = vadd.f32 0.0, %v4321
  %4323 = vdwg.mxu0
  %v4324 = vsel %vm108, %v4294, -inf
  %4325 = vmax.xlane.f32.xlu0 %v4324
  %v4326 = vpop.xlane.xlu0 %4325
  %v4327 = vsel %vm108, %v4322, -inf
  %4328 = vmax.xlane.f32.xlu0 %v4327
  %v4329 = vpop.xlane.xlu0 %4328
  %v4330 = vsub.f32 %v4294, %v4326
  %v4331 = vsub.f32 %v4322, %v4329
  %v4332 = vmul.f32 %v4330, 1.442695
  %v4333 = vpow.pop %v4332
  %v4334 = vmul.f32 %v4331, 1.442695
  %v4335 = vpow.pop %v4334
  %v4336 = vsel %vm108, %v4333, 0.0
  %4337 = vadd.xlane.f32.xlu0 %v4336
  %v4338 = vpop.xlane.xlu0 %4337
  %v4339 = vsel %vm108, %v4335, 0.0
  %4340 = vadd.xlane.f32.xlu0 %v4339
  %v4341 = vpop.xlane.xlu0 %4340
  %v4342 = vrcp.pop %v4338
  %v4343 = vrcp.pop %v4341
  %v4344 = vmul.f32 %v4333, %v4342
  %v4345 = vmul.f32 %v4335, %v4343
  %4346 = vrot.lane.b32.xlu0 %v4008, 80
  %v4347 = vpop.permute.xlu0 %4346
  %v4350 = vsel %vm108, %v4344, 0
  %4352 = vmatpush.msra.mxu0 0.0
  %4353 = vmatpush.msra.mxu0 0.0
  %4354 = vmatpush.msra.mxu0 0.0
  %4355 = vmatpush.msra.mxu0 0.0
  %4356 = vmatpush.msra.mxu0 0.0
  %4357 = vmatpush.msra.mxu0 0.0
  %4358 = vmatpush.msra.mxu0 0.0
  %4359 = vmatpush.msra.mxu0 0.0
  %4360 = vmatpush.msra.mxu0 0.0
  %4361 = vmatpush.msra.mxu0 0.0
  %4362 = vmatpush.msra.mxu0 0.0
  %4363 = vmatpush.msra.mxu0 0.0
  %4364 = vmatpush.msra.mxu0 0.0
  %4365 = vmatpush.msra.mxu0 0.0
  %4366 = vmatpush.msra.mxu0 0.0
  %4367 = vmatpush.msra.mxu0 %v4347
  %4368 = vmatmul.f32.gmra.mxu0 %v4350
  %v4369 = vpop.f32.mrf.mxu0
  %v4370 = vadd.f32 0.0, %v4369
  %4371 = vdwg.mxu0
  %4372 = vrot.lane.b32.xlu0 %v4010, 80
  %v4373 = vpop.permute.xlu0 %4372
  %v4376 = vsel %vm108, %v4345, 0
  %4378 = vmatpush.msra.mxu0 0.0
  %4379 = vmatpush.msra.mxu0 0.0
  %4380 = vmatpush.msra.mxu0 0.0
  %4381 = vmatpush.msra.mxu0 0.0
  %4382 = vmatpush.msra.mxu0 0.0
  %4383 = vmatpush.msra.mxu0 0.0
  %4384 = vmatpush.msra.mxu0 0.0
  %4385 = vmatpush.msra.mxu0 0.0
  %4386 = vmatpush.msra.mxu0 0.0
  %4387 = vmatpush.msra.mxu0 0.0
  %4388 = vmatpush.msra.mxu0 0.0
  %4389 = vmatpush.msra.mxu0 0.0
  %4390 = vmatpush.msra.mxu0 0.0
  %4391 = vmatpush.msra.mxu0 0.0
  %4392 = vmatpush.msra.mxu0 0.0
  %4393 = vmatpush.msra.mxu0 %v4373
  %4394 = vmatmul.f32.gmra.mxu0 %v4376
  %v4395 = vpop.f32.mrf.mxu0
  %v4396 = vadd.f32 0.0, %v4395
  %4397 = vdwg.mxu0
  %4398 = vrot.lane.b32.xlu0 %v3972, 104
  %v4399 = vpop.permute.xlu0 %4398
  %4400 = vrot.lane.b32.xlu0 %v4008, 104
  %v4401 = vpop.permute.xlu0 %4400
  %v4402 = vsel %vm108, %v4399, 0
  %v4404 = vsel %vm108, %v4401, 0
  %4406 = vmatpush.xpose.msra.mxu0 0.0
  %4407 = vmatpush.xpose.msra.mxu0 0.0
  %4408 = vmatpush.xpose.msra.mxu0 0.0
  %4409 = vmatpush.xpose.msra.mxu0 0.0
  %4410 = vmatpush.xpose.msra.mxu0 0.0
  %4411 = vmatpush.xpose.msra.mxu0 0.0
  %4412 = vmatpush.xpose.msra.mxu0 0.0
  %4413 = vmatpush.xpose.msra.mxu0 0.0
  %4414 = vmatpush.xpose.msra.mxu0 0.0
  %4415 = vmatpush.xpose.msra.mxu0 0.0
  %4416 = vmatpush.xpose.msra.mxu0 0.0
  %4417 = vmatpush.xpose.msra.mxu0 0.0
  %4418 = vmatpush.xpose.msra.mxu0 0.0
  %4419 = vmatpush.xpose.msra.mxu0 0.0
  %4420 = vmatpush.xpose.msra.mxu0 0.0
  %4421 = vmatpush.xpose.msra.mxu0 %v4404
  %4422 = vmatmul.f32.gmra.mxu0 %v4402
  %v4423 = vpop.f32.mrf.mxu0
  %v4424 = vadd.f32 0.0, %v4423
  %4425 = vdwg.mxu0
  %4426 = vrot.lane.b32.xlu0 %v3974, 104
  %v4427 = vpop.permute.xlu0 %4426
  %4428 = vrot.lane.b32.xlu0 %v4010, 104
  %v4429 = vpop.permute.xlu0 %4428
  %v4430 = vsel %vm108, %v4427, 0
  %v4432 = vsel %vm108, %v4429, 0
  %4434 = vmatpush.xpose.msra.mxu0 0.0
  %4435 = vmatpush.xpose.msra.mxu0 0.0
  %4436 = vmatpush.xpose.msra.mxu0 0.0
  %4437 = vmatpush.xpose.msra.mxu0 0.0
  %4438 = vmatpush.xpose.msra.mxu0 0.0
  %4439 = vmatpush.xpose.msra.mxu0 0.0
  %4440 = vmatpush.xpose.msra.mxu0 0.0
  %4441 = vmatpush.xpose.msra.mxu0 0.0
  %4442 = vmatpush.xpose.msra.mxu0 0.0
  %4443 = vmatpush.xpose.msra.mxu0 0.0
  %4444 = vmatpush.xpose.msra.mxu0 0.0
  %4445 = vmatpush.xpose.msra.mxu0 0.0
  %4446 = vmatpush.xpose.msra.mxu0 0.0
  %4447 = vmatpush.xpose.msra.mxu0 0.0
  %4448 = vmatpush.xpose.msra.mxu0 0.0
  %4449 = vmatpush.xpose.msra.mxu0 %v4432
  %4450 = vmatmul.f32.gmra.mxu0 %v4430
  %v4451 = vpop.f32.mrf.mxu0
  %v4452 = vadd.f32 0.0, %v4451
  %4453 = vdwg.mxu0
  %v4454 = vsel %vm108, %v4424, -inf
  %4455 = vmax.xlane.f32.xlu0 %v4454
  %v4456 = vpop.xlane.xlu0 %4455
  %v4457 = vsel %vm108, %v4452, -inf
  %4458 = vmax.xlane.f32.xlu0 %v4457
  %v4459 = vpop.xlane.xlu0 %4458
  %v4460 = vsub.f32 %v4424, %v4456
  %v4461 = vsub.f32 %v4452, %v4459
  %v4462 = vmul.f32 %v4460, 1.442695
  %v4463 = vpow.pop %v4462
  %v4464 = vmul.f32 %v4461, 1.442695
  %v4465 = vpow.pop %v4464
  %v4466 = vsel %vm108, %v4463, 0.0
  %4467 = vadd.xlane.f32.xlu0 %v4466
  %v4468 = vpop.xlane.xlu0 %4467
  %v4469 = vsel %vm108, %v4465, 0.0
  %4470 = vadd.xlane.f32.xlu0 %v4469
  %v4471 = vpop.xlane.xlu0 %4470
  %v4472 = vrcp.pop %v4468
  %v4473 = vrcp.pop %v4471
  %v4474 = vmul.f32 %v4463, %v4472
  %v4475 = vmul.f32 %v4465, %v4473
  %4476 = vrot.lane.b32.xlu0 %v4008, 72
  %v4477 = vpop.permute.xlu0 %4476
  %v4480 = vsel %vm108, %v4474, 0
  %4482 = vmatpush.msra.mxu0 0.0
  %4483 = vmatpush.msra.mxu0 0.0
  %4484 = vmatpush.msra.mxu0 0.0
  %4485 = vmatpush.msra.mxu0 0.0
  %4486 = vmatpush.msra.mxu0 0.0
  %4487 = vmatpush.msra.mxu0 0.0
  %4488 = vmatpush.msra.mxu0 0.0
  %4489 = vmatpush.msra.mxu0 0.0
  %4490 = vmatpush.msra.mxu0 0.0
  %4491 = vmatpush.msra.mxu0 0.0
  %4492 = vmatpush.msra.mxu0 0.0
  %4493 = vmatpush.msra.mxu0 0.0
  %4494 = vmatpush.msra.mxu0 0.0
  %4495 = vmatpush.msra.mxu0 0.0
  %4496 = vmatpush.msra.mxu0 0.0
  %4497 = vmatpush.msra.mxu0 %v4477
  %4498 = vmatmul.f32.gmra.mxu0 %v4480
  %v4499 = vpop.f32.mrf.mxu0
  %v4500 = vadd.f32 0.0, %v4499
  %4501 = vdwg.mxu0
  %4502 = vrot.lane.b32.xlu0 %v4010, 72
  %v4503 = vpop.permute.xlu0 %4502
  %v4506 = vsel %vm108, %v4475, 0
  %4508 = vmatpush.msra.mxu0 0.0
  %4509 = vmatpush.msra.mxu0 0.0
  %4510 = vmatpush.msra.mxu0 0.0
  %4511 = vmatpush.msra.mxu0 0.0
  %4512 = vmatpush.msra.mxu0 0.0
  %4513 = vmatpush.msra.mxu0 0.0
  %4514 = vmatpush.msra.mxu0 0.0
  %4515 = vmatpush.msra.mxu0 0.0
  %4516 = vmatpush.msra.mxu0 0.0
  %4517 = vmatpush.msra.mxu0 0.0
  %4518 = vmatpush.msra.mxu0 0.0
  %4519 = vmatpush.msra.mxu0 0.0
  %4520 = vmatpush.msra.mxu0 0.0
  %4521 = vmatpush.msra.mxu0 0.0
  %4522 = vmatpush.msra.mxu0 0.0
  %4523 = vmatpush.msra.mxu0 %v4503
  %4524 = vmatmul.f32.gmra.mxu0 %v4506
  %v4525 = vpop.f32.mrf.mxu0
  %v4526 = vadd.f32 0.0, %v4525
  %4527 = vdwg.mxu0
  %4530 = vrot.lane.b32.xlu0 %v4240, 8
  %v4531 = vpop.permute.xlu0 %4530
  %4532 = vrot.lane.b32.xlu0 %v4266, 8
  %v4533 = vpop.permute.xlu0 %4532
  %4538 = vrot.lane.b32.xlu0 %v4370, 16
  %v4539 = vpop.permute.xlu0 %4538
  %4540 = vrot.lane.b32.xlu0 %v4396, 16
  %v4541 = vpop.permute.xlu0 %4540
  %4546 = vrot.lane.b32.xlu0 %v4500, 24
  %v4547 = vpop.permute.xlu0 %4546
  %4548 = vrot.lane.b32.xlu0 %v4526, 24
  %v4549 = vpop.permute.xlu0 %4548
  %v4552 = vsel %vm108, %v4110, %v4531
  %v4553 = vsel %vm108, %v4136, %v4533
  %v4554 = vsel %vm650, %v4552, %v4539
  %v4555 = vsel %vm650, %v4553, %v4541
  %v4556 = vsel %vm653, %v4554, %v4547
  %v4557 = vsel %vm653, %v4555, %v4549
  %v4558 = vpack.c.bf16 %v4557, %v4556
  %s4559 = scalar_lea.vmem %s8, 16
  %v4560 = vld [vmem:[%s4559] sm:$0xf]
  %v4561 = vld [vmem:[%s4559 + $0x4] sm:$0xf]
  %v4562 = vld [vmem:[%s4559 + $0x8] sm:$0xf]
  %v4563 = vld [vmem:[%s4559 + $0xc] sm:$0xf]
  %v4564 = vperm.slane %v3262, 2
  %v4569 = vunpack.c.l.b16 %v4560
  %v4570 = vunpack.c.l.b16 %v4561
  %v4571 = vunpack.c.l.b16 %v4562
  %v4572 = vunpack.c.l.b16 %v4563
  %v4573 = vpack.c.b16 %v4570, %v4569
  %v4574 = vpack.c.b16 %v4572, %v4571
  %v4578 = vsel %vm87, %v4558, 0
  %4580 = vmatpush.bf16.msra.mxu0 0
  %4581 = vmatpush.bf16.msra.mxu0 0
  %4582 = vmatpush.bf16.msra.mxu0 0
  %4583 = vmatpush.bf16.msra.mxu0 0
  %4584 = vmatpush.bf16.msra.mxu0 0
  %4585 = vmatpush.bf16.msra.mxu0 0
  %4586 = vmatpush.bf16.msra.mxu0 %v4574
  %4587 = vmatpush.bf16.msra.mxu0 %v4573
  %4588 = vmatmul.bf16.gmra.mxu0 %v4578
  %v4589 = vpop.f32.mrf.mxu0
  %v4590 = vadd.f32 %v4564, %v4589
  %v4591 = vpop.f32.mrf.mxu0
  %v4592 = vadd.f32 %v4564, %v4591
  %4593 = vdwg.mxu0
  %v4594 = vadd.f32 %v3938, %v4590
  %v4595 = vadd.f32 %v3939, %v4592
  %v4596 = vsel %vm87, %v4594, 0.0
  %4597 = vadd.xlane.f32.xlu0 %v4596
  %v4598 = vpop.xlane.xlu0 %4597
  %v4599 = vsel %vm87, %v4595, 0.0
  %4600 = vadd.xlane.f32.xlu0 %v4599
  %v4601 = vpop.xlane.xlu0 %4600
  %v4602 = vmul.f32 %v4598, %v705
  %v4603 = vmul.f32 %v4601, %v705
  %v4604 = vsub.f32 %v4594, %v4602
  %v4605 = vsub.f32 %v4595, %v4603
  %v4606 = vmul.f32 %v4604, %v4604
  %v4607 = vmul.f32 %v4605, %v4605
  %v4608 = vsel %vm87, %v4606, 0.0
  %4609 = vadd.xlane.f32.xlu0 %v4608
  %v4610 = vpop.xlane.xlu0 %4609
  %v4611 = vsel %vm87, %v4607, 0.0
  %4612 = vadd.xlane.f32.xlu0 %v4611
  %v4613 = vpop.xlane.xlu0 %4612
  %v4614 = vmul.f32 %v4610, %v705
  %v4615 = vmul.f32 %v4613, %v705
  %v4616 = vadd.f32 %v4614, 1e-05
  %v4617 = vadd.f32 %v4615, 1e-05
  %v4618 = vrsqrt.pop %v4616
  %v4619 = vmul.f32 %v4618, %v4616
  %v4620 = vmul.f32 %v4619, %v4618
  %v4621 = vmul.f32 0.5, %v4620
  %v4622 = vsub.f32 1.5, %v4621
  %v4623 = vmul.f32 %v4618, %v4622
  %vm4624 = vweird.f32 %v4616
  %vm4625 = vweird.f32 %v4618
  %vm4626 = vmor %vm4624, %vm4625
  %v4627 = vsel %vm4626, %v4618, %v4623
  %v4628 = vrsqrt.pop %v4617
  %v4629 = vmul.f32 %v4628, %v4617
  %v4630 = vmul.f32 %v4629, %v4628
  %v4631 = vmul.f32 0.5, %v4630
  %v4632 = vsub.f32 1.5, %v4631
  %v4633 = vmul.f32 %v4628, %v4632
  %vm4634 = vweird.f32 %v4617
  %vm4635 = vweird.f32 %v4628
  %vm4636 = vmor %vm4634, %vm4635
  %v4637 = vsel %vm4636, %v4628, %v4633
  %v4638 = vmul.f32 %v4604, %v4627
  %v4639 = vmul.f32 %v4605, %v4637
  %v4640 = vperm.slane %v3262, 6
  %v4641 = vmul.f32 %v4638, %v4640
  %v4642 = vmul.f32 %v4639, %v4640
  %v4643 = vperm.slane %v3262, 7
  %v4644 = vadd.f32 %v4641, %v4643
  %v4645 = vadd.f32 %v4642, %v4643
  %v4646 = vpack.c.bf16 %v4645, %v4644
  %s4647 = scalar_lea.vmem %s9, 256
  %v4648 = vld [vmem:[%s4647] sm:$0xff]
  %v4649 = vld [vmem:[%s4647 + $0x8] sm:$0xff]
  %v4650 = vld [vmem:[%s4647 + $0x10] sm:$0xff]
  %v4651 = vld [vmem:[%s4647 + $0x18] sm:$0xff]
  %v4652 = vld [vmem:[%s4647 + $0x20] sm:$0xff]
  %v4653 = vld [vmem:[%s4647 + $0x28] sm:$0xff]
  %v4654 = vld [vmem:[%s4647 + $0x30] sm:$0xff]
  %v4655 = vld [vmem:[%s4647 + $0x38] sm:$0xff]
  %v4656 = vld [vmem:[%s4647 + $0x40] sm:$0xff]
  %v4657 = vld [vmem:[%s4647 + $0x48] sm:$0xff]
  %v4658 = vld [vmem:[%s4647 + $0x50] sm:$0xff]
  %v4659 = vld [vmem:[%s4647 + $0x58] sm:$0xff]
  %v4660 = vld [vmem:[%s4647 + $0x60] sm:$0xff]
  %v4661 = vld [vmem:[%s4647 + $0x68] sm:$0xff]
  %v4662 = vld [vmem:[%s4647 + $0x70] sm:$0xff]
  %v4663 = vld [vmem:[%s4647 + $0x78] sm:$0xff]
  %v4664 = vld [vmem:[%s4647 + $0x80] sm:$0xff]
  %v4665 = vld [vmem:[%s4647 + $0x88] sm:$0xff]
  %v4666 = vld [vmem:[%s4647 + $0x90] sm:$0xff]
  %v4667 = vld [vmem:[%s4647 + $0x98] sm:$0xff]
  %v4668 = vld [vmem:[%s4647 + $0xa0] sm:$0xff]
  %v4669 = vld [vmem:[%s4647 + $0xa8] sm:$0xff]
  %v4670 = vld [vmem:[%s4647 + $0xb0] sm:$0xff]
  %v4671 = vld [vmem:[%s4647 + $0xb8] sm:$0xff]
  %v4672 = vld [vmem:[%s4647 + $0xc0] sm:$0xff]
  %v4673 = vld [vmem:[%s4647 + $0xc8] sm:$0xff]
  %v4674 = vld [vmem:[%s4647 + $0xd0] sm:$0xff]
  %v4675 = vld [vmem:[%s4647 + $0xd8] sm:$0xff]
  %v4676 = vld [vmem:[%s4647 + $0xe0] sm:$0xff]
  %v4677 = vld [vmem:[%s4647 + $0xe8] sm:$0xff]
  %v4678 = vld [vmem:[%s4647 + $0xf0] sm:$0xff]
  %v4679 = vld [vmem:[%s4647 + $0xf8] sm:$0xff]
  %s4680 = scalar_lea.vmem %s10, 16
  %v4681 = vld [vmem:[%s4680] sm:$0xff]
  %v4682 = vld [vmem:[%s4680 + $0x8] sm:$0xff]
  %v4685 = vperm.slane %v4681, 0
  %v4686 = vperm.slane %v4681, 1
  %v4687 = vperm.slane %v4681, 2
  %v4688 = vperm.slane %v4681, 3
  %v4689 = vperm.slane %v4681, 4
  %v4690 = vperm.slane %v4681, 5
  %v4691 = vperm.slane %v4681, 6
  %v4692 = vperm.slane %v4681, 7
  %v4693 = vperm.slane %v4682, 0
  %v4694 = vperm.slane %v4682, 1
  %v4695 = vperm.slane %v4682, 2
  %v4696 = vperm.slane %v4682, 3
  %v4697 = vperm.slane %v4682, 4
  %v4698 = vperm.slane %v4682, 5
  %v4699 = vperm.slane %v4682, 6
  %v4700 = vperm.slane %v4682, 7
  %v4749 = vunpack.c.l.b16 %v4648
  %v4750 = vunpack.c.h.b16 %v4648
  %v4751 = vunpack.c.l.b16 %v4649
  %v4752 = vunpack.c.h.b16 %v4649
  %v4753 = vunpack.c.l.b16 %v4650
  %v4754 = vunpack.c.h.b16 %v4650
  %v4755 = vunpack.c.l.b16 %v4651
  %v4756 = vunpack.c.h.b16 %v4651
  %v4757 = vunpack.c.l.b16 %v4652
  %v4758 = vunpack.c.h.b16 %v4652
  %v4759 = vunpack.c.l.b16 %v4653
  %v4760 = vunpack.c.h.b16 %v4653
  %v4761 = vunpack.c.l.b16 %v4654
  %v4762 = vunpack.c.h.b16 %v4654
  %v4763 = vunpack.c.l.b16 %v4655
  %v4764 = vunpack.c.h.b16 %v4655
  %v4765 = vunpack.c.l.b16 %v4656
  %v4766 = vunpack.c.h.b16 %v4656
  %v4767 = vunpack.c.l.b16 %v4657
  %v4768 = vunpack.c.h.b16 %v4657
  %v4769 = vunpack.c.l.b16 %v4658
  %v4770 = vunpack.c.h.b16 %v4658
  %v4771 = vunpack.c.l.b16 %v4659
  %v4772 = vunpack.c.h.b16 %v4659
  %v4773 = vunpack.c.l.b16 %v4660
  %v4774 = vunpack.c.h.b16 %v4660
  %v4775 = vunpack.c.l.b16 %v4661
  %v4776 = vunpack.c.h.b16 %v4661
  %v4777 = vunpack.c.l.b16 %v4662
  %v4778 = vunpack.c.h.b16 %v4662
  %v4779 = vunpack.c.l.b16 %v4663
  %v4780 = vunpack.c.h.b16 %v4663
  %v4781 = vunpack.c.l.b16 %v4664
  %v4782 = vunpack.c.h.b16 %v4664
  %v4783 = vunpack.c.l.b16 %v4665
  %v4784 = vunpack.c.h.b16 %v4665
  %v4785 = vunpack.c.l.b16 %v4666
  %v4786 = vunpack.c.h.b16 %v4666
  %v4787 = vunpack.c.l.b16 %v4667
  %v4788 = vunpack.c.h.b16 %v4667
  %v4789 = vunpack.c.l.b16 %v4668
  %v4790 = vunpack.c.h.b16 %v4668
  %v4791 = vunpack.c.l.b16 %v4669
  %v4792 = vunpack.c.h.b16 %v4669
  %v4793 = vunpack.c.l.b16 %v4670
  %v4794 = vunpack.c.h.b16 %v4670
  %v4795 = vunpack.c.l.b16 %v4671
  %v4796 = vunpack.c.h.b16 %v4671
  %v4797 = vunpack.c.l.b16 %v4672
  %v4798 = vunpack.c.h.b16 %v4672
  %v4799 = vunpack.c.l.b16 %v4673
  %v4800 = vunpack.c.h.b16 %v4673
  %v4801 = vunpack.c.l.b16 %v4674
  %v4802 = vunpack.c.h.b16 %v4674
  %v4803 = vunpack.c.l.b16 %v4675
  %v4804 = vunpack.c.h.b16 %v4675
  %v4805 = vunpack.c.l.b16 %v4676
  %v4806 = vunpack.c.h.b16 %v4676
  %v4807 = vunpack.c.l.b16 %v4677
  %v4808 = vunpack.c.h.b16 %v4677
  %v4809 = vunpack.c.l.b16 %v4678
  %v4810 = vunpack.c.h.b16 %v4678
  %v4811 = vunpack.c.l.b16 %v4679
  %v4812 = vunpack.c.h.b16 %v4679
  %v4813 = vpack.c.b16 %v4765, %v4749
  %v4814 = vpack.c.b16 %v4766, %v4750
  %v4815 = vpack.c.b16 %v4767, %v4751
  %v4816 = vpack.c.b16 %v4768, %v4752
  %v4817 = vpack.c.b16 %v4769, %v4753
  %v4818 = vpack.c.b16 %v4770, %v4754
  %v4819 = vpack.c.b16 %v4771, %v4755
  %v4820 = vpack.c.b16 %v4772, %v4756
  %v4821 = vpack.c.b16 %v4773, %v4757
  %v4822 = vpack.c.b16 %v4774, %v4758
  %v4823 = vpack.c.b16 %v4775, %v4759
  %v4824 = vpack.c.b16 %v4776, %v4760
  %v4825 = vpack.c.b16 %v4777, %v4761
  %v4826 = vpack.c.b16 %v4778, %v4762
  %v4827 = vpack.c.b16 %v4779, %v4763
  %v4828 = vpack.c.b16 %v4780, %v4764
  %v4829 = vpack.c.b16 %v4797, %v4781
  %v4830 = vpack.c.b16 %v4798, %v4782
  %v4831 = vpack.c.b16 %v4799, %v4783
  %v4832 = vpack.c.b16 %v4800, %v4784
  %v4833 = vpack.c.b16 %v4801, %v4785
  %v4834 = vpack.c.b16 %v4802, %v4786
  %v4835 = vpack.c.b16 %v4803, %v4787
  %v4836 = vpack.c.b16 %v4804, %v4788
  %v4837 = vpack.c.b16 %v4805, %v4789
  %v4838 = vpack.c.b16 %v4806, %v4790
  %v4839 = vpack.c.b16 %v4807, %v4791
  %v4840 = vpack.c.b16 %v4808, %v4792
  %v4841 = vpack.c.b16 %v4809, %v4793
  %v4842 = vpack.c.b16 %v4810, %v4794
  %v4843 = vpack.c.b16 %v4811, %v4795
  %v4844 = vpack.c.b16 %v4812, %v4796
  %v4878 = vsel %vm87, %v4646, 0
  %4880 = vmatpush.bf16.msra.mxu0 0
  %4881 = vmatpush.bf16.msra.mxu0 0
  %4882 = vmatpush.bf16.msra.mxu0 0
  %4883 = vmatpush.bf16.msra.mxu0 0
  %4884 = vmatpush.bf16.msra.mxu0 0
  %4885 = vmatpush.bf16.msra.mxu0 0
  %4886 = vmatpush.bf16.msra.mxu0 %v4829
  %4887 = vmatpush.bf16.msra.mxu0 %v4813
  %4888 = vmatmul.bf16.gmra.mxu0 %v4878
  %v4889 = vpop.f32.mrf.mxu0
  %v4890 = vadd.f32 %v4685, %v4889
  %v4891 = vpop.f32.mrf.mxu0
  %v4892 = vadd.f32 %v4685, %v4891
  %4893 = vdwg.mxu0
  %4894 = vmatpush.bf16.msra.mxu0 0
  %4895 = vmatpush.bf16.msra.mxu0 0
  %4896 = vmatpush.bf16.msra.mxu0 0
  %4897 = vmatpush.bf16.msra.mxu0 0
  %4898 = vmatpush.bf16.msra.mxu0 0
  %4899 = vmatpush.bf16.msra.mxu0 0
  %4900 = vmatpush.bf16.msra.mxu0 %v4830
  %4901 = vmatpush.bf16.msra.mxu0 %v4814
  %4902 = vmatmul.bf16.gmra.mxu0 %v4878
  %v4903 = vpop.f32.mrf.mxu0
  %v4904 = vadd.f32 %v4686, %v4903
  %v4905 = vpop.f32.mrf.mxu0
  %v4906 = vadd.f32 %v4686, %v4905
  %4907 = vdwg.mxu0
  %4908 = vmatpush.bf16.msra.mxu0 0
  %4909 = vmatpush.bf16.msra.mxu0 0
  %4910 = vmatpush.bf16.msra.mxu0 0
  %4911 = vmatpush.bf16.msra.mxu0 0
  %4912 = vmatpush.bf16.msra.mxu0 0
  %4913 = vmatpush.bf16.msra.mxu0 0
  %4914 = vmatpush.bf16.msra.mxu0 %v4831
  %4915 = vmatpush.bf16.msra.mxu0 %v4815
  %4916 = vmatmul.bf16.gmra.mxu0 %v4878
  %v4917 = vpop.f32.mrf.mxu0
  %v4918 = vadd.f32 %v4687, %v4917
  %v4919 = vpop.f32.mrf.mxu0
  %v4920 = vadd.f32 %v4687, %v4919
  %4921 = vdwg.mxu0
  %4922 = vmatpush.bf16.msra.mxu0 0
  %4923 = vmatpush.bf16.msra.mxu0 0
  %4924 = vmatpush.bf16.msra.mxu0 0
  %4925 = vmatpush.bf16.msra.mxu0 0
  %4926 = vmatpush.bf16.msra.mxu0 0
  %4927 = vmatpush.bf16.msra.mxu0 0
  %4928 = vmatpush.bf16.msra.mxu0 %v4832
  %4929 = vmatpush.bf16.msra.mxu0 %v4816
  %4930 = vmatmul.bf16.gmra.mxu0 %v4878
  %v4931 = vpop.f32.mrf.mxu0
  %v4932 = vadd.f32 %v4688, %v4931
  %v4933 = vpop.f32.mrf.mxu0
  %v4934 = vadd.f32 %v4688, %v4933
  %4935 = vdwg.mxu0
  %4936 = vmatpush.bf16.msra.mxu0 0
  %4937 = vmatpush.bf16.msra.mxu0 0
  %4938 = vmatpush.bf16.msra.mxu0 0
  %4939 = vmatpush.bf16.msra.mxu0 0
  %4940 = vmatpush.bf16.msra.mxu0 0
  %4941 = vmatpush.bf16.msra.mxu0 0
  %4942 = vmatpush.bf16.msra.mxu0 %v4833
  %4943 = vmatpush.bf16.msra.mxu0 %v4817
  %4944 = vmatmul.bf16.gmra.mxu0 %v4878
  %v4945 = vpop.f32.mrf.mxu0
  %v4946 = vadd.f32 %v4689, %v4945
  %v4947 = vpop.f32.mrf.mxu0
  %v4948 = vadd.f32 %v4689, %v4947
  %4949 = vdwg.mxu0
  %4950 = vmatpush.bf16.msra.mxu0 0
  %4951 = vmatpush.bf16.msra.mxu0 0
  %4952 = vmatpush.bf16.msra.mxu0 0
  %4953 = vmatpush.bf16.msra.mxu0 0
  %4954 = vmatpush.bf16.msra.mxu0 0
  %4955 = vmatpush.bf16.msra.mxu0 0
  %4956 = vmatpush.bf16.msra.mxu0 %v4834
  %4957 = vmatpush.bf16.msra.mxu0 %v4818
  %4958 = vmatmul.bf16.gmra.mxu0 %v4878
  %v4959 = vpop.f32.mrf.mxu0
  %v4960 = vadd.f32 %v4690, %v4959
  %v4961 = vpop.f32.mrf.mxu0
  %v4962 = vadd.f32 %v4690, %v4961
  %4963 = vdwg.mxu0
  %4964 = vmatpush.bf16.msra.mxu0 0
  %4965 = vmatpush.bf16.msra.mxu0 0
  %4966 = vmatpush.bf16.msra.mxu0 0
  %4967 = vmatpush.bf16.msra.mxu0 0
  %4968 = vmatpush.bf16.msra.mxu0 0
  %4969 = vmatpush.bf16.msra.mxu0 0
  %4970 = vmatpush.bf16.msra.mxu0 %v4835
  %4971 = vmatpush.bf16.msra.mxu0 %v4819
  %4972 = vmatmul.bf16.gmra.mxu0 %v4878
  %v4973 = vpop.f32.mrf.mxu0
  %v4974 = vadd.f32 %v4691, %v4973
  %v4975 = vpop.f32.mrf.mxu0
  %v4976 = vadd.f32 %v4691, %v4975
  %4977 = vdwg.mxu0
  %4978 = vmatpush.bf16.msra.mxu0 0
  %4979 = vmatpush.bf16.msra.mxu0 0
  %4980 = vmatpush.bf16.msra.mxu0 0
  %4981 = vmatpush.bf16.msra.mxu0 0
  %4982 = vmatpush.bf16.msra.mxu0 0
  %4983 = vmatpush.bf16.msra.mxu0 0
  %4984 = vmatpush.bf16.msra.mxu0 %v4836
  %4985 = vmatpush.bf16.msra.mxu0 %v4820
  %4986 = vmatmul.bf16.gmra.mxu0 %v4878
  %v4987 = vpop.f32.mrf.mxu0
  %v4988 = vadd.f32 %v4692, %v4987
  %v4989 = vpop.f32.mrf.mxu0
  %v4990 = vadd.f32 %v4692, %v4989
  %4991 = vdwg.mxu0
  %4992 = vmatpush.bf16.msra.mxu0 0
  %4993 = vmatpush.bf16.msra.mxu0 0
  %4994 = vmatpush.bf16.msra.mxu0 0
  %4995 = vmatpush.bf16.msra.mxu0 0
  %4996 = vmatpush.bf16.msra.mxu0 0
  %4997 = vmatpush.bf16.msra.mxu0 0
  %4998 = vmatpush.bf16.msra.mxu0 %v4837
  %4999 = vmatpush.bf16.msra.mxu0 %v4821
  %5000 = vmatmul.bf16.gmra.mxu0 %v4878
  %v5001 = vpop.f32.mrf.mxu0
  %v5002 = vadd.f32 %v4693, %v5001
  %v5003 = vpop.f32.mrf.mxu0
  %v5004 = vadd.f32 %v4693, %v5003
  %5005 = vdwg.mxu0
  %5006 = vmatpush.bf16.msra.mxu0 0
  %5007 = vmatpush.bf16.msra.mxu0 0
  %5008 = vmatpush.bf16.msra.mxu0 0
  %5009 = vmatpush.bf16.msra.mxu0 0
  %5010 = vmatpush.bf16.msra.mxu0 0
  %5011 = vmatpush.bf16.msra.mxu0 0
  %5012 = vmatpush.bf16.msra.mxu0 %v4838
  %5013 = vmatpush.bf16.msra.mxu0 %v4822
  %5014 = vmatmul.bf16.gmra.mxu0 %v4878
  %v5015 = vpop.f32.mrf.mxu0
  %v5016 = vadd.f32 %v4694, %v5015
  %v5017 = vpop.f32.mrf.mxu0
  %v5018 = vadd.f32 %v4694, %v5017
  %5019 = vdwg.mxu0
  %5020 = vmatpush.bf16.msra.mxu0 0
  %5021 = vmatpush.bf16.msra.mxu0 0
  %5022 = vmatpush.bf16.msra.mxu0 0
  %5023 = vmatpush.bf16.msra.mxu0 0
  %5024 = vmatpush.bf16.msra.mxu0 0
  %5025 = vmatpush.bf16.msra.mxu0 0
  %5026 = vmatpush.bf16.msra.mxu0 %v4839
  %5027 = vmatpush.bf16.msra.mxu0 %v4823
  %5028 = vmatmul.bf16.gmra.mxu0 %v4878
  %v5029 = vpop.f32.mrf.mxu0
  %v5030 = vadd.f32 %v4695, %v5029
  %v5031 = vpop.f32.mrf.mxu0
  %v5032 = vadd.f32 %v4695, %v5031
  %5033 = vdwg.mxu0
  %5034 = vmatpush.bf16.msra.mxu0 0
  %5035 = vmatpush.bf16.msra.mxu0 0
  %5036 = vmatpush.bf16.msra.mxu0 0
  %5037 = vmatpush.bf16.msra.mxu0 0
  %5038 = vmatpush.bf16.msra.mxu0 0
  %5039 = vmatpush.bf16.msra.mxu0 0
  %5040 = vmatpush.bf16.msra.mxu0 %v4840
  %5041 = vmatpush.bf16.msra.mxu0 %v4824
  %5042 = vmatmul.bf16.gmra.mxu0 %v4878
  %v5043 = vpop.f32.mrf.mxu0
  %v5044 = vadd.f32 %v4696, %v5043
  %v5045 = vpop.f32.mrf.mxu0
  %v5046 = vadd.f32 %v4696, %v5045
  %5047 = vdwg.mxu0
  %5048 = vmatpush.bf16.msra.mxu0 0
  %5049 = vmatpush.bf16.msra.mxu0 0
  %5050 = vmatpush.bf16.msra.mxu0 0
  %5051 = vmatpush.bf16.msra.mxu0 0
  %5052 = vmatpush.bf16.msra.mxu0 0
  %5053 = vmatpush.bf16.msra.mxu0 0
  %5054 = vmatpush.bf16.msra.mxu0 %v4841
  %5055 = vmatpush.bf16.msra.mxu0 %v4825
  %5056 = vmatmul.bf16.gmra.mxu0 %v4878
  %v5057 = vpop.f32.mrf.mxu0
  %v5058 = vadd.f32 %v4697, %v5057
  %v5059 = vpop.f32.mrf.mxu0
  %v5060 = vadd.f32 %v4697, %v5059
  %5061 = vdwg.mxu0
  %5062 = vmatpush.bf16.msra.mxu0 0
  %5063 = vmatpush.bf16.msra.mxu0 0
  %5064 = vmatpush.bf16.msra.mxu0 0
  %5065 = vmatpush.bf16.msra.mxu0 0
  %5066 = vmatpush.bf16.msra.mxu0 0
  %5067 = vmatpush.bf16.msra.mxu0 0
  %5068 = vmatpush.bf16.msra.mxu0 %v4842
  %5069 = vmatpush.bf16.msra.mxu0 %v4826
  %5070 = vmatmul.bf16.gmra.mxu0 %v4878
  %v5071 = vpop.f32.mrf.mxu0
  %v5072 = vadd.f32 %v4698, %v5071
  %v5073 = vpop.f32.mrf.mxu0
  %v5074 = vadd.f32 %v4698, %v5073
  %5075 = vdwg.mxu0
  %5076 = vmatpush.bf16.msra.mxu0 0
  %5077 = vmatpush.bf16.msra.mxu0 0
  %5078 = vmatpush.bf16.msra.mxu0 0
  %5079 = vmatpush.bf16.msra.mxu0 0
  %5080 = vmatpush.bf16.msra.mxu0 0
  %5081 = vmatpush.bf16.msra.mxu0 0
  %5082 = vmatpush.bf16.msra.mxu0 %v4843
  %5083 = vmatpush.bf16.msra.mxu0 %v4827
  %5084 = vmatmul.bf16.gmra.mxu0 %v4878
  %v5085 = vpop.f32.mrf.mxu0
  %v5086 = vadd.f32 %v4699, %v5085
  %v5087 = vpop.f32.mrf.mxu0
  %v5088 = vadd.f32 %v4699, %v5087
  %5089 = vdwg.mxu0
  %5090 = vmatpush.bf16.msra.mxu0 0
  %5091 = vmatpush.bf16.msra.mxu0 0
  %5092 = vmatpush.bf16.msra.mxu0 0
  %5093 = vmatpush.bf16.msra.mxu0 0
  %5094 = vmatpush.bf16.msra.mxu0 0
  %5095 = vmatpush.bf16.msra.mxu0 0
  %5096 = vmatpush.bf16.msra.mxu0 %v4844
  %5097 = vmatpush.bf16.msra.mxu0 %v4828
  %5098 = vmatmul.bf16.gmra.mxu0 %v4878
  %v5099 = vpop.f32.mrf.mxu0
  %v5100 = vadd.f32 %v4700, %v5099
  %v5101 = vpop.f32.mrf.mxu0
  %v5102 = vadd.f32 %v4700, %v5101
  %5103 = vdwg.mxu0
  %v5104 = vmax.f32 %v4890, 0.0
  %v5105 = vmax.f32 %v4904, 0.0
  %v5106 = vmax.f32 %v4918, 0.0
  %v5107 = vmax.f32 %v4932, 0.0
  %v5108 = vmax.f32 %v4946, 0.0
  %v5109 = vmax.f32 %v4960, 0.0
  %v5110 = vmax.f32 %v4974, 0.0
  %v5111 = vmax.f32 %v4988, 0.0
  %v5112 = vmax.f32 %v5002, 0.0
  %v5113 = vmax.f32 %v5016, 0.0
  %v5114 = vmax.f32 %v5030, 0.0
  %v5115 = vmax.f32 %v5044, 0.0
  %v5116 = vmax.f32 %v5058, 0.0
  %v5117 = vmax.f32 %v5072, 0.0
  %v5118 = vmax.f32 %v5086, 0.0
  %v5119 = vmax.f32 %v5100, 0.0
  %v5120 = vmax.f32 %v4892, 0.0
  %v5121 = vmax.f32 %v4906, 0.0
  %v5122 = vmax.f32 %v4920, 0.0
  %v5123 = vmax.f32 %v4934, 0.0
  %v5124 = vmax.f32 %v4948, 0.0
  %v5125 = vmax.f32 %v4962, 0.0
  %v5126 = vmax.f32 %v4976, 0.0
  %v5127 = vmax.f32 %v4990, 0.0
  %v5128 = vmax.f32 %v5004, 0.0
  %v5129 = vmax.f32 %v5018, 0.0
  %v5130 = vmax.f32 %v5032, 0.0
  %v5131 = vmax.f32 %v5046, 0.0
  %v5132 = vmax.f32 %v5060, 0.0
  %v5133 = vmax.f32 %v5074, 0.0
  %v5134 = vmax.f32 %v5088, 0.0
  %v5135 = vmax.f32 %v5102, 0.0
  %v5136 = vpack.c.bf16 %v5120, %v5104
  %v5137 = vpack.c.bf16 %v5121, %v5105
  %v5138 = vpack.c.bf16 %v5122, %v5106
  %v5139 = vpack.c.bf16 %v5123, %v5107
  %v5140 = vpack.c.bf16 %v5124, %v5108
  %v5141 = vpack.c.bf16 %v5125, %v5109
  %v5142 = vpack.c.bf16 %v5126, %v5110
  %v5143 = vpack.c.bf16 %v5127, %v5111
  %v5144 = vpack.c.bf16 %v5128, %v5112
  %v5145 = vpack.c.bf16 %v5129, %v5113
  %v5146 = vpack.c.bf16 %v5130, %v5114
  %v5147 = vpack.c.bf16 %v5131, %v5115
  %v5148 = vpack.c.bf16 %v5132, %v5116
  %v5149 = vpack.c.bf16 %v5133, %v5117
  %v5150 = vpack.c.bf16 %v5134, %v5118
  %v5151 = vpack.c.bf16 %v5135, %v5119
  %s5152 = scalar_lea.vmem %s11, 1024
  %v5153 = vld [vmem:[%s5152] sm:$0xf]
  %v5154 = vld [vmem:[%s5152 + $0x4] sm:$0xf]
  %v5155 = vld [vmem:[%s5152 + $0x8] sm:$0xf]
  %v5156 = vld [vmem:[%s5152 + $0xc] sm:$0xf]
  %v5157 = vld [vmem:[%s5152 + $0x10] sm:$0xf]
  %v5158 = vld [vmem:[%s5152 + $0x14] sm:$0xf]
  %v5159 = vld [vmem:[%s5152 + $0x18] sm:$0xf]
  %v5160 = vld [vmem:[%s5152 + $0x1c] sm:$0xf]
  %v5161 = vld [vmem:[%s5152 + $0x20] sm:$0xf]
  %v5162 = vld [vmem:[%s5152 + $0x24] sm:$0xf]
  %v5163 = vld [vmem:[%s5152 + $0x28] sm:$0xf]
  %v5164 = vld [vmem:[%s5152 + $0x2c] sm:$0xf]
  %v5165 = vld [vmem:[%s5152 + $0x30] sm:$0xf]
  %v5166 = vld [vmem:[%s5152 + $0x34] sm:$0xf]
  %v5167 = vld [vmem:[%s5152 + $0x38] sm:$0xf]
  %v5168 = vld [vmem:[%s5152 + $0x3c] sm:$0xf]
  %v5169 = vld [vmem:[%s5152 + $0x40] sm:$0xf]
  %v5170 = vld [vmem:[%s5152 + $0x44] sm:$0xf]
  %v5171 = vld [vmem:[%s5152 + $0x48] sm:$0xf]
  %v5172 = vld [vmem:[%s5152 + $0x4c] sm:$0xf]
  %v5173 = vld [vmem:[%s5152 + $0x50] sm:$0xf]
  %v5174 = vld [vmem:[%s5152 + $0x54] sm:$0xf]
  %v5175 = vld [vmem:[%s5152 + $0x58] sm:$0xf]
  %v5176 = vld [vmem:[%s5152 + $0x5c] sm:$0xf]
  %v5177 = vld [vmem:[%s5152 + $0x60] sm:$0xf]
  %v5178 = vld [vmem:[%s5152 + $0x64] sm:$0xf]
  %v5179 = vld [vmem:[%s5152 + $0x68] sm:$0xf]
  %v5180 = vld [vmem:[%s5152 + $0x6c] sm:$0xf]
  %v5181 = vld [vmem:[%s5152 + $0x70] sm:$0xf]
  %v5182 = vld [vmem:[%s5152 + $0x74] sm:$0xf]
  %v5183 = vld [vmem:[%s5152 + $0x78] sm:$0xf]
  %v5184 = vld [vmem:[%s5152 + $0x7c] sm:$0xf]
  %v5185 = vld [vmem:[%s5152 + $0x80] sm:$0xf]
  %v5186 = vld [vmem:[%s5152 + $0x84] sm:$0xf]
  %v5187 = vld [vmem:[%s5152 + $0x88] sm:$0xf]
  %v5188 = vld [vmem:[%s5152 + $0x8c] sm:$0xf]
  %v5189 = vld [vmem:[%s5152 + $0x90] sm:$0xf]
  %v5190 = vld [vmem:[%s5152 + $0x94] sm:$0xf]
  %v5191 = vld [vmem:[%s5152 + $0x98] sm:$0xf]
  %v5192 = vld [vmem:[%s5152 + $0x9c] sm:$0xf]
  %v5193 = vld [vmem:[%s5152 + $0xa0] sm:$0xf]
  %v5194 = vld [vmem:[%s5152 + $0xa4] sm:$0xf]
  %v5195 = vld [vmem:[%s5152 + $0xa8] sm:$0xf]
  %v5196 = vld [vmem:[%s5152 + $0xac] sm:$0xf]
  %v5197 = vld [vmem:[%s5152 + $0xb0] sm:$0xf]
  %v5198 = vld [vmem:[%s5152 + $0xb4] sm:$0xf]
  %v5199 = vld [vmem:[%s5152 + $0xb8] sm:$0xf]
  %v5200 = vld [vmem:[%s5152 + $0xbc] sm:$0xf]
  %v5201 = vld [vmem:[%s5152 + $0xc0] sm:$0xf]
  %v5202 = vld [vmem:[%s5152 + $0xc4] sm:$0xf]
  %v5203 = vld [vmem:[%s5152 + $0xc8] sm:$0xf]
  %v5204 = vld [vmem:[%s5152 + $0xcc] sm:$0xf]
  %v5205 = vld [vmem:[%s5152 + $0xd0] sm:$0xf]
  %v5206 = vld [vmem:[%s5152 + $0xd4] sm:$0xf]
  %v5207 = vld [vmem:[%s5152 + $0xd8] sm:$0xf]
  %v5208 = vld [vmem:[%s5152 + $0xdc] sm:$0xf]
  %v5209 = vld [vmem:[%s5152 + $0xe0] sm:$0xf]
  %v5210 = vld [vmem:[%s5152 + $0xe4] sm:$0xf]
  %v5211 = vld [vmem:[%s5152 + $0xe8] sm:$0xf]
  %v5212 = vld [vmem:[%s5152 + $0xec] sm:$0xf]
  %v5213 = vld [vmem:[%s5152 + $0xf0] sm:$0xf]
  %v5214 = vld [vmem:[%s5152 + $0xf4] sm:$0xf]
  %v5215 = vld [vmem:[%s5152 + $0xf8] sm:$0xf]
  %v5216 = vld [vmem:[%s5152 + $0xfc] sm:$0xf]
  %v5217 = vld [vmem:[%s5152 + $0x100] sm:$0xf]
  %v5218 = vld [vmem:[%s5152 + $0x104] sm:$0xf]
  %v5219 = vld [vmem:[%s5152 + $0x108] sm:$0xf]
  %v5220 = vld [vmem:[%s5152 + $0x10c] sm:$0xf]
  %v5221 = vld [vmem:[%s5152 + $0x110] sm:$0xf]
  %v5222 = vld [vmem:[%s5152 + $0x114] sm:$0xf]
  %v5223 = vld [vmem:[%s5152 + $0x118] sm:$0xf]
  %v5224 = vld [vmem:[%s5152 + $0x11c] sm:$0xf]
  %v5225 = vld [vmem:[%s5152 + $0x120] sm:$0xf]
  %v5226 = vld [vmem:[%s5152 + $0x124] sm:$0xf]
  %v5227 = vld [vmem:[%s5152 + $0x128] sm:$0xf]
  %v5228 = vld [vmem:[%s5152 + $0x12c] sm:$0xf]
  %v5229 = vld [vmem:[%s5152 + $0x130] sm:$0xf]
  %v5230 = vld [vmem:[%s5152 + $0x134] sm:$0xf]
  %v5231 = vld [vmem:[%s5152 + $0x138] sm:$0xf]
  %v5232 = vld [vmem:[%s5152 + $0x13c] sm:$0xf]
  %v5233 = vld [vmem:[%s5152 + $0x140] sm:$0xf]
  %v5234 = vld [vmem:[%s5152 + $0x144] sm:$0xf]
  %v5235 = vld [vmem:[%s5152 + $0x148] sm:$0xf]
  %v5236 = vld [vmem:[%s5152 + $0x14c] sm:$0xf]
  %v5237 = vld [vmem:[%s5152 + $0x150] sm:$0xf]
  %v5238 = vld [vmem:[%s5152 + $0x154] sm:$0xf]
  %v5239 = vld [vmem:[%s5152 + $0x158] sm:$0xf]
  %v5240 = vld [vmem:[%s5152 + $0x15c] sm:$0xf]
  %v5241 = vld [vmem:[%s5152 + $0x160] sm:$0xf]
  %v5242 = vld [vmem:[%s5152 + $0x164] sm:$0xf]
  %v5243 = vld [vmem:[%s5152 + $0x168] sm:$0xf]
  %v5244 = vld [vmem:[%s5152 + $0x16c] sm:$0xf]
  %v5245 = vld [vmem:[%s5152 + $0x170] sm:$0xf]
  %v5246 = vld [vmem:[%s5152 + $0x174] sm:$0xf]
  %v5247 = vld [vmem:[%s5152 + $0x178] sm:$0xf]
  %v5248 = vld [vmem:[%s5152 + $0x17c] sm:$0xf]
  %v5249 = vld [vmem:[%s5152 + $0x180] sm:$0xf]
  %v5250 = vld [vmem:[%s5152 + $0x184] sm:$0xf]
  %v5251 = vld [vmem:[%s5152 + $0x188] sm:$0xf]
  %v5252 = vld [vmem:[%s5152 + $0x18c] sm:$0xf]
  %v5253 = vld [vmem:[%s5152 + $0x190] sm:$0xf]
  %v5254 = vld [vmem:[%s5152 + $0x194] sm:$0xf]
  %v5255 = vld [vmem:[%s5152 + $0x198] sm:$0xf]
  %v5256 = vld [vmem:[%s5152 + $0x19c] sm:$0xf]
  %v5257 = vld [vmem:[%s5152 + $0x1a0] sm:$0xf]
  %v5258 = vld [vmem:[%s5152 + $0x1a4] sm:$0xf]
  %v5259 = vld [vmem:[%s5152 + $0x1a8] sm:$0xf]
  %v5260 = vld [vmem:[%s5152 + $0x1ac] sm:$0xf]
  %v5261 = vld [vmem:[%s5152 + $0x1b0] sm:$0xf]
  %v5262 = vld [vmem:[%s5152 + $0x1b4] sm:$0xf]
  %v5263 = vld [vmem:[%s5152 + $0x1b8] sm:$0xf]
  %v5264 = vld [vmem:[%s5152 + $0x1bc] sm:$0xf]
  %v5265 = vld [vmem:[%s5152 + $0x1c0] sm:$0xf]
  %v5266 = vld [vmem:[%s5152 + $0x1c4] sm:$0xf]
  %v5267 = vld [vmem:[%s5152 + $0x1c8] sm:$0xf]
  %v5268 = vld [vmem:[%s5152 + $0x1cc] sm:$0xf]
  %v5269 = vld [vmem:[%s5152 + $0x1d0] sm:$0xf]
  %v5270 = vld [vmem:[%s5152 + $0x1d4] sm:$0xf]
  %v5271 = vld [vmem:[%s5152 + $0x1d8] sm:$0xf]
  %v5272 = vld [vmem:[%s5152 + $0x1dc] sm:$0xf]
  %v5273 = vld [vmem:[%s5152 + $0x1e0] sm:$0xf]
  %v5274 = vld [vmem:[%s5152 + $0x1e4] sm:$0xf]
  %v5275 = vld [vmem:[%s5152 + $0x1e8] sm:$0xf]
  %v5276 = vld [vmem:[%s5152 + $0x1ec] sm:$0xf]
  %v5277 = vld [vmem:[%s5152 + $0x1f0] sm:$0xf]
  %v5278 = vld [vmem:[%s5152 + $0x1f4] sm:$0xf]
  %v5279 = vld [vmem:[%s5152 + $0x1f8] sm:$0xf]
  %v5280 = vld [vmem:[%s5152 + $0x1fc] sm:$0xf]
  %v5281 = vld [vmem:[%s5152 + $0x200] sm:$0xf]
  %v5282 = vld [vmem:[%s5152 + $0x204] sm:$0xf]
  %v5283 = vld [vmem:[%s5152 + $0x208] sm:$0xf]
  %v5284 = vld [vmem:[%s5152 + $0x20c] sm:$0xf]
  %v5285 = vld [vmem:[%s5152 + $0x210] sm:$0xf]
  %v5286 = vld [vmem:[%s5152 + $0x214] sm:$0xf]
  %v5287 = vld [vmem:[%s5152 + $0x218] sm:$0xf]
  %v5288 = vld [vmem:[%s5152 + $0x21c] sm:$0xf]
  %v5289 = vld [vmem:[%s5152 + $0x220] sm:$0xf]
  %v5290 = vld [vmem:[%s5152 + $0x224] sm:$0xf]
  %v5291 = vld [vmem:[%s5152 + $0x228] sm:$0xf]
  %v5292 = vld [vmem:[%s5152 + $0x22c] sm:$0xf]
  %v5293 = vld [vmem:[%s5152 + $0x230] sm:$0xf]
  %v5294 = vld [vmem:[%s5152 + $0x234] sm:$0xf]
  %v5295 = vld [vmem:[%s5152 + $0x238] sm:$0xf]
  %v5296 = vld [vmem:[%s5152 + $0x23c] sm:$0xf]
  %v5297 = vld [vmem:[%s5152 + $0x240] sm:$0xf]
  %v5298 = vld [vmem:[%s5152 + $0x244] sm:$0xf]
  %v5299 = vld [vmem:[%s5152 + $0x248] sm:$0xf]
  %v5300 = vld [vmem:[%s5152 + $0x24c] sm:$0xf]
  %v5301 = vld [vmem:[%s5152 + $0x250] sm:$0xf]
  %v5302 = vld [vmem:[%s5152 + $0x254] sm:$0xf]
  %v5303 = vld [vmem:[%s5152 + $0x258] sm:$0xf]
  %v5304 = vld [vmem:[%s5152 + $0x25c] sm:$0xf]
  %v5305 = vld [vmem:[%s5152 + $0x260] sm:$0xf]
  %v5306 = vld [vmem:[%s5152 + $0x264] sm:$0xf]
  %v5307 = vld [vmem:[%s5152 + $0x268] sm:$0xf]
  %v5308 = vld [vmem:[%s5152 + $0x26c] sm:$0xf]
  %v5309 = vld [vmem:[%s5152 + $0x270] sm:$0xf]
  %v5310 = vld [vmem:[%s5152 + $0x274] sm:$0xf]
  %v5311 = vld [vmem:[%s5152 + $0x278] sm:$0xf]
  %v5312 = vld [vmem:[%s5152 + $0x27c] sm:$0xf]
  %v5313 = vld [vmem:[%s5152 + $0x280] sm:$0xf]
  %v5314 = vld [vmem:[%s5152 + $0x284] sm:$0xf]
  %v5315 = vld [vmem:[%s5152 + $0x288] sm:$0xf]
  %v5316 = vld [vmem:[%s5152 + $0x28c] sm:$0xf]
  %v5317 = vld [vmem:[%s5152 + $0x290] sm:$0xf]
  %v5318 = vld [vmem:[%s5152 + $0x294] sm:$0xf]
  %v5319 = vld [vmem:[%s5152 + $0x298] sm:$0xf]
  %v5320 = vld [vmem:[%s5152 + $0x29c] sm:$0xf]
  %v5321 = vld [vmem:[%s5152 + $0x2a0] sm:$0xf]
  %v5322 = vld [vmem:[%s5152 + $0x2a4] sm:$0xf]
  %v5323 = vld [vmem:[%s5152 + $0x2a8] sm:$0xf]
  %v5324 = vld [vmem:[%s5152 + $0x2ac] sm:$0xf]
  %v5325 = vld [vmem:[%s5152 + $0x2b0] sm:$0xf]
  %v5326 = vld [vmem:[%s5152 + $0x2b4] sm:$0xf]
  %v5327 = vld [vmem:[%s5152 + $0x2b8] sm:$0xf]
  %v5328 = vld [vmem:[%s5152 + $0x2bc] sm:$0xf]
  %v5329 = vld [vmem:[%s5152 + $0x2c0] sm:$0xf]
  %v5330 = vld [vmem:[%s5152 + $0x2c4] sm:$0xf]
  %v5331 = vld [vmem:[%s5152 + $0x2c8] sm:$0xf]
  %v5332 = vld [vmem:[%s5152 + $0x2cc] sm:$0xf]
  %v5333 = vld [vmem:[%s5152 + $0x2d0] sm:$0xf]
  %v5334 = vld [vmem:[%s5152 + $0x2d4] sm:$0xf]
  %v5335 = vld [vmem:[%s5152 + $0x2d8] sm:$0xf]
  %v5336 = vld [vmem:[%s5152 + $0x2dc] sm:$0xf]
  %v5337 = vld [vmem:[%s5152 + $0x2e0] sm:$0xf]
  %v5338 = vld [vmem:[%s5152 + $0x2e4] sm:$0xf]
  %v5339 = vld [vmem:[%s5152 + $0x2e8] sm:$0xf]
  %v5340 = vld [vmem:[%s5152 + $0x2ec] sm:$0xf]
  %v5341 = vld [vmem:[%s5152 + $0x2f0] sm:$0xf]
  %v5342 = vld [vmem:[%s5152 + $0x2f4] sm:$0xf]
  %v5343 = vld [vmem:[%s5152 + $0x2f8] sm:$0xf]
  %v5344 = vld [vmem:[%s5152 + $0x2fc] sm:$0xf]
  %v5345 = vld [vmem:[%s5152 + $0x300] sm:$0xf]
  %v5346 = vld [vmem:[%s5152 + $0x304] sm:$0xf]
  %v5347 = vld [vmem:[%s5152 + $0x308] sm:$0xf]
  %v5348 = vld [vmem:[%s5152 + $0x30c] sm:$0xf]
  %v5349 = vld [vmem:[%s5152 + $0x310] sm:$0xf]
  %v5350 = vld [vmem:[%s5152 + $0x314] sm:$0xf]
  %v5351 = vld [vmem:[%s5152 + $0x318] sm:$0xf]
  %v5352 = vld [vmem:[%s5152 + $0x31c] sm:$0xf]
  %v5353 = vld [vmem:[%s5152 + $0x320] sm:$0xf]
  %v5354 = vld [vmem:[%s5152 + $0x324] sm:$0xf]
  %v5355 = vld [vmem:[%s5152 + $0x328] sm:$0xf]
  %v5356 = vld [vmem:[%s5152 + $0x32c] sm:$0xf]
  %v5357 = vld [vmem:[%s5152 + $0x330] sm:$0xf]
  %v5358 = vld [vmem:[%s5152 + $0x334] sm:$0xf]
  %v5359 = vld [vmem:[%s5152 + $0x338] sm:$0xf]
  %v5360 = vld [vmem:[%s5152 + $0x33c] sm:$0xf]
  %v5361 = vld [vmem:[%s5152 + $0x340] sm:$0xf]
  %v5362 = vld [vmem:[%s5152 + $0x344] sm:$0xf]
  %v5363 = vld [vmem:[%s5152 + $0x348] sm:$0xf]
  %v5364 = vld [vmem:[%s5152 + $0x34c] sm:$0xf]
  %v5365 = vld [vmem:[%s5152 + $0x350] sm:$0xf]
  %v5366 = vld [vmem:[%s5152 + $0x354] sm:$0xf]
  %v5367 = vld [vmem:[%s5152 + $0x358] sm:$0xf]
  %v5368 = vld [vmem:[%s5152 + $0x35c] sm:$0xf]
  %v5369 = vld [vmem:[%s5152 + $0x360] sm:$0xf]
  %v5370 = vld [vmem:[%s5152 + $0x364] sm:$0xf]
  %v5371 = vld [vmem:[%s5152 + $0x368] sm:$0xf]
  %v5372 = vld [vmem:[%s5152 + $0x36c] sm:$0xf]
  %v5373 = vld [vmem:[%s5152 + $0x370] sm:$0xf]
  %v5374 = vld [vmem:[%s5152 + $0x374] sm:$0xf]
  %v5375 = vld [vmem:[%s5152 + $0x378] sm:$0xf]
  %v5376 = vld [vmem:[%s5152 + $0x37c] sm:$0xf]
  %v5377 = vld [vmem:[%s5152 + $0x380] sm:$0xf]
  %v5378 = vld [vmem:[%s5152 + $0x384] sm:$0xf]
  %v5379 = vld [vmem:[%s5152 + $0x388] sm:$0xf]
  %v5380 = vld [vmem:[%s5152 + $0x38c] sm:$0xf]
  %v5381 = vld [vmem:[%s5152 + $0x390] sm:$0xf]
  %v5382 = vld [vmem:[%s5152 + $0x394] sm:$0xf]
  %v5383 = vld [vmem:[%s5152 + $0x398] sm:$0xf]
  %v5384 = vld [vmem:[%s5152 + $0x39c] sm:$0xf]
  %v5385 = vld [vmem:[%s5152 + $0x3a0] sm:$0xf]
  %v5386 = vld [vmem:[%s5152 + $0x3a4] sm:$0xf]
  %v5387 = vld [vmem:[%s5152 + $0x3a8] sm:$0xf]
  %v5388 = vld [vmem:[%s5152 + $0x3ac] sm:$0xf]
  %v5389 = vld [vmem:[%s5152 + $0x3b0] sm:$0xf]
  %v5390 = vld [vmem:[%s5152 + $0x3b4] sm:$0xf]
  %v5391 = vld [vmem:[%s5152 + $0x3b8] sm:$0xf]
  %v5392 = vld [vmem:[%s5152 + $0x3bc] sm:$0xf]
  %v5393 = vld [vmem:[%s5152 + $0x3c0] sm:$0xf]
  %v5394 = vld [vmem:[%s5152 + $0x3c4] sm:$0xf]
  %v5395 = vld [vmem:[%s5152 + $0x3c8] sm:$0xf]
  %v5396 = vld [vmem:[%s5152 + $0x3cc] sm:$0xf]
  %v5397 = vld [vmem:[%s5152 + $0x3d0] sm:$0xf]
  %v5398 = vld [vmem:[%s5152 + $0x3d4] sm:$0xf]
  %v5399 = vld [vmem:[%s5152 + $0x3d8] sm:$0xf]
  %v5400 = vld [vmem:[%s5152 + $0x3dc] sm:$0xf]
  %v5401 = vld [vmem:[%s5152 + $0x3e0] sm:$0xf]
  %v5402 = vld [vmem:[%s5152 + $0x3e4] sm:$0xf]
  %v5403 = vld [vmem:[%s5152 + $0x3e8] sm:$0xf]
  %v5404 = vld [vmem:[%s5152 + $0x3ec] sm:$0xf]
  %v5405 = vld [vmem:[%s5152 + $0x3f0] sm:$0xf]
  %v5406 = vld [vmem:[%s5152 + $0x3f4] sm:$0xf]
  %v5407 = vld [vmem:[%s5152 + $0x3f8] sm:$0xf]
  %v5408 = vld [vmem:[%s5152 + $0x3fc] sm:$0xf]
  %v5409 = vperm.slane %v3262, 3
  %v5666 = vunpack.c.l.b16 %v5153
  %v5667 = vunpack.c.l.b16 %v5154
  %v5668 = vunpack.c.l.b16 %v5155
  %v5669 = vunpack.c.l.b16 %v5156
  %v5670 = vunpack.c.l.b16 %v5157
  %v5671 = vunpack.c.l.b16 %v5158
  %v5672 = vunpack.c.l.b16 %v5159
  %v5673 = vunpack.c.l.b16 %v5160
  %v5674 = vunpack.c.l.b16 %v5161
  %v5675 = vunpack.c.l.b16 %v5162
  %v5676 = vunpack.c.l.b16 %v5163
  %v5677 = vunpack.c.l.b16 %v5164
  %v5678 = vunpack.c.l.b16 %v5165
  %v5679 = vunpack.c.l.b16 %v5166
  %v5680 = vunpack.c.l.b16 %v5167
  %v5681 = vunpack.c.l.b16 %v5168
  %v5682 = vunpack.c.l.b16 %v5169
  %v5683 = vunpack.c.l.b16 %v5170
  %v5684 = vunpack.c.l.b16 %v5171
  %v5685 = vunpack.c.l.b16 %v5172
  %v5686 = vunpack.c.l.b16 %v5173
  %v5687 = vunpack.c.l.b16 %v5174
  %v5688 = vunpack.c.l.b16 %v5175
  %v5689 = vunpack.c.l.b16 %v5176
  %v5690 = vunpack.c.l.b16 %v5177
  %v5691 = vunpack.c.l.b16 %v5178
  %v5692 = vunpack.c.l.b16 %v5179
  %v5693 = vunpack.c.l.b16 %v5180
  %v5694 = vunpack.c.l.b16 %v5181
  %v5695 = vunpack.c.l.b16 %v5182
  %v5696 = vunpack.c.l.b16 %v5183
  %v5697 = vunpack.c.l.b16 %v5184
  %v5698 = vunpack.c.l.b16 %v5185
  %v5699 = vunpack.c.l.b16 %v5186
  %v5700 = vunpack.c.l.b16 %v5187
  %v5701 = vunpack.c.l.b16 %v5188
  %v5702 = vunpack.c.l.b16 %v5189
  %v5703 = vunpack.c.l.b16 %v5190
  %v5704 = vunpack.c.l.b16 %v5191
  %v5705 = vunpack.c.l.b16 %v5192
  %v5706 = vunpack.c.l.b16 %v5193
  %v5707 = vunpack.c.l.b16 %v5194
  %v5708 = vunpack.c.l.b16 %v5195
  %v5709 = vunpack.c.l.b16 %v5196
  %v5710 = vunpack.c.l.b16 %v5197
  %v5711 = vunpack.c.l.b16 %v5198
  %v5712 = vunpack.c.l.b16 %v5199
  %v5713 = vunpack.c.l.b16 %v5200
  %v5714 = vunpack.c.l.b16 %v5201
  %v5715 = vunpack.c.l.b16 %v5202
  %v5716 = vunpack.c.l.b16 %v5203
  %v5717 = vunpack.c.l.b16 %v5204
  %v5718 = vunpack.c.l.b16 %v5205
  %v5719 = vunpack.c.l.b16 %v5206
  %v5720 = vunpack.c.l.b16 %v5207
  %v5721 = vunpack.c.l.b16 %v5208
  %v5722 = vunpack.c.l.b16 %v5209
  %v5723 = vunpack.c.l.b16 %v5210
  %v5724 = vunpack.c.l.b16 %v5211
  %v5725 = vunpack.c.l.b16 %v5212
  %v5726 = vunpack.c.l.b16 %v5213
  %v5727 = vunpack.c.l.b16 %v5214
  %v5728 = vunpack.c.l.b16 %v5215
  %v5729 = vunpack.c.l.b16 %v5216
  %v5730 = vunpack.c.l.b16 %v5217
  %v5731 = vunpack.c.l.b16 %v5218
  %v5732 = vunpack.c.l.b16 %v5219
  %v5733 = vunpack.c.l.b16 %v5220
  %v5734 = vunpack.c.l.b16 %v5221
  %v5735 = vunpack.c.l.b16 %v5222
  %v5736 = vunpack.c.l.b16 %v5223
  %v5737 = vunpack.c.l.b16 %v5224
  %v5738 = vunpack.c.l.b16 %v5225
  %v5739 = vunpack.c.l.b16 %v5226
  %v5740 = vunpack.c.l.b16 %v5227
  %v5741 = vunpack.c.l.b16 %v5228
  %v5742 = vunpack.c.l.b16 %v5229
  %v5743 = vunpack.c.l.b16 %v5230
  %v5744 = vunpack.c.l.b16 %v5231
  %v5745 = vunpack.c.l.b16 %v5232
  %v5746 = vunpack.c.l.b16 %v5233
  %v5747 = vunpack.c.l.b16 %v5234
  %v5748 = vunpack.c.l.b16 %v5235
  %v5749 = vunpack.c.l.b16 %v5236
  %v5750 = vunpack.c.l.b16 %v5237
  %v5751 = vunpack.c.l.b16 %v5238
  %v5752 = vunpack.c.l.b16 %v5239
  %v5753 = vunpack.c.l.b16 %v5240
  %v5754 = vunpack.c.l.b16 %v5241
  %v5755 = vunpack.c.l.b16 %v5242
  %v5756 = vunpack.c.l.b16 %v5243
  %v5757 = vunpack.c.l.b16 %v5244
  %v5758 = vunpack.c.l.b16 %v5245
  %v5759 = vunpack.c.l.b16 %v5246
  %v5760 = vunpack.c.l.b16 %v5247
  %v5761 = vunpack.c.l.b16 %v5248
  %v5762 = vunpack.c.l.b16 %v5249
  %v5763 = vunpack.c.l.b16 %v5250
  %v5764 = vunpack.c.l.b16 %v5251
  %v5765 = vunpack.c.l.b16 %v5252
  %v5766 = vunpack.c.l.b16 %v5253
  %v5767 = vunpack.c.l.b16 %v5254
  %v5768 = vunpack.c.l.b16 %v5255
  %v5769 = vunpack.c.l.b16 %v5256
  %v5770 = vunpack.c.l.b16 %v5257
  %v5771 = vunpack.c.l.b16 %v5258
  %v5772 = vunpack.c.l.b16 %v5259
  %v5773 = vunpack.c.l.b16 %v5260
  %v5774 = vunpack.c.l.b16 %v5261
  %v5775 = vunpack.c.l.b16 %v5262
  %v5776 = vunpack.c.l.b16 %v5263
  %v5777 = vunpack.c.l.b16 %v5264
  %v5778 = vunpack.c.l.b16 %v5265
  %v5779 = vunpack.c.l.b16 %v5266
  %v5780 = vunpack.c.l.b16 %v5267
  %v5781 = vunpack.c.l.b16 %v5268
  %v5782 = vunpack.c.l.b16 %v5269
  %v5783 = vunpack.c.l.b16 %v5270
  %v5784 = vunpack.c.l.b16 %v5271
  %v5785 = vunpack.c.l.b16 %v5272
  %v5786 = vunpack.c.l.b16 %v5273
  %v5787 = vunpack.c.l.b16 %v5274
  %v5788 = vunpack.c.l.b16 %v5275
  %v5789 = vunpack.c.l.b16 %v5276
  %v5790 = vunpack.c.l.b16 %v5277
  %v5791 = vunpack.c.l.b16 %v5278
  %v5792 = vunpack.c.l.b16 %v5279
  %v5793 = vunpack.c.l.b16 %v5280
  %v5794 = vunpack.c.l.b16 %v5281
  %v5795 = vunpack.c.l.b16 %v5282
  %v5796 = vunpack.c.l.b16 %v5283
  %v5797 = vunpack.c.l.b16 %v5284
  %v5798 = vunpack.c.l.b16 %v5285
  %v5799 = vunpack.c.l.b16 %v5286
  %v5800 = vunpack.c.l.b16 %v5287
  %v5801 = vunpack.c.l.b16 %v5288
  %v5802 = vunpack.c.l.b16 %v5289
  %v5803 = vunpack.c.l.b16 %v5290
  %v5804 = vunpack.c.l.b16 %v5291
  %v5805 = vunpack.c.l.b16 %v5292
  %v5806 = vunpack.c.l.b16 %v5293
  %v5807 = vunpack.c.l.b16 %v5294
  %v5808 = vunpack.c.l.b16 %v5295
  %v5809 = vunpack.c.l.b16 %v5296
  %v5810 = vunpack.c.l.b16 %v5297
  %v5811 = vunpack.c.l.b16 %v5298
  %v5812 = vunpack.c.l.b16 %v5299
  %v5813 = vunpack.c.l.b16 %v5300
  %v5814 = vunpack.c.l.b16 %v5301
  %v5815 = vunpack.c.l.b16 %v5302
  %v5816 = vunpack.c.l.b16 %v5303
  %v5817 = vunpack.c.l.b16 %v5304
  %v5818 = vunpack.c.l.b16 %v5305
  %v5819 = vunpack.c.l.b16 %v5306
  %v5820 = vunpack.c.l.b16 %v5307
  %v5821 = vunpack.c.l.b16 %v5308
  %v5822 = vunpack.c.l.b16 %v5309
  %v5823 = vunpack.c.l.b16 %v5310
  %v5824 = vunpack.c.l.b16 %v5311
  %v5825 = vunpack.c.l.b16 %v5312
  %v5826 = vunpack.c.l.b16 %v5313
  %v5827 = vunpack.c.l.b16 %v5314
  %v5828 = vunpack.c.l.b16 %v5315
  %v5829 = vunpack.c.l.b16 %v5316
  %v5830 = vunpack.c.l.b16 %v5317
  %v5831 = vunpack.c.l.b16 %v5318
  %v5832 = vunpack.c.l.b16 %v5319
  %v5833 = vunpack.c.l.b16 %v5320
  %v5834 = vunpack.c.l.b16 %v5321
  %v5835 = vunpack.c.l.b16 %v5322
  %v5836 = vunpack.c.l.b16 %v5323
  %v5837 = vunpack.c.l.b16 %v5324
  %v5838 = vunpack.c.l.b16 %v5325
  %v5839 = vunpack.c.l.b16 %v5326
  %v5840 = vunpack.c.l.b16 %v5327
  %v5841 = vunpack.c.l.b16 %v5328
  %v5842 = vunpack.c.l.b16 %v5329
  %v5843 = vunpack.c.l.b16 %v5330
  %v5844 = vunpack.c.l.b16 %v5331
  %v5845 = vunpack.c.l.b16 %v5332
  %v5846 = vunpack.c.l.b16 %v5333
  %v5847 = vunpack.c.l.b16 %v5334
  %v5848 = vunpack.c.l.b16 %v5335
  %v5849 = vunpack.c.l.b16 %v5336
  %v5850 = vunpack.c.l.b16 %v5337
  %v5851 = vunpack.c.l.b16 %v5338
  %v5852 = vunpack.c.l.b16 %v5339
  %v5853 = vunpack.c.l.b16 %v5340
  %v5854 = vunpack.c.l.b16 %v5341
  %v5855 = vunpack.c.l.b16 %v5342
  %v5856 = vunpack.c.l.b16 %v5343
  %v5857 = vunpack.c.l.b16 %v5344
  %v5858 = vunpack.c.l.b16 %v5345
  %v5859 = vunpack.c.l.b16 %v5346
  %v5860 = vunpack.c.l.b16 %v5347
  %v5861 = vunpack.c.l.b16 %v5348
  %v5862 = vunpack.c.l.b16 %v5349
  %v5863 = vunpack.c.l.b16 %v5350
  %v5864 = vunpack.c.l.b16 %v5351
  %v5865 = vunpack.c.l.b16 %v5352
  %v5866 = vunpack.c.l.b16 %v5353
  %v5867 = vunpack.c.l.b16 %v5354
  %v5868 = vunpack.c.l.b16 %v5355
  %v5869 = vunpack.c.l.b16 %v5356
  %v5870 = vunpack.c.l.b16 %v5357
  %v5871 = vunpack.c.l.b16 %v5358
  %v5872 = vunpack.c.l.b16 %v5359
  %v5873 = vunpack.c.l.b16 %v5360
  %v5874 = vunpack.c.l.b16 %v5361
  %v5875 = vunpack.c.l.b16 %v5362
  %v5876 = vunpack.c.l.b16 %v5363
  %v5877 = vunpack.c.l.b16 %v5364
  %v5878 = vunpack.c.l.b16 %v5365
  %v5879 = vunpack.c.l.b16 %v5366
  %v5880 = vunpack.c.l.b16 %v5367
  %v5881 = vunpack.c.l.b16 %v5368
  %v5882 = vunpack.c.l.b16 %v5369
  %v5883 = vunpack.c.l.b16 %v5370
  %v5884 = vunpack.c.l.b16 %v5371
  %v5885 = vunpack.c.l.b16 %v5372
  %v5886 = vunpack.c.l.b16 %v5373
  %v5887 = vunpack.c.l.b16 %v5374
  %v5888 = vunpack.c.l.b16 %v5375
  %v5889 = vunpack.c.l.b16 %v5376
  %v5890 = vunpack.c.l.b16 %v5377
  %v5891 = vunpack.c.l.b16 %v5378
  %v5892 = vunpack.c.l.b16 %v5379
  %v5893 = vunpack.c.l.b16 %v5380
  %v5894 = vunpack.c.l.b16 %v5381
  %v5895 = vunpack.c.l.b16 %v5382
  %v5896 = vunpack.c.l.b16 %v5383
  %v5897 = vunpack.c.l.b16 %v5384
  %v5898 = vunpack.c.l.b16 %v5385
  %v5899 = vunpack.c.l.b16 %v5386
  %v5900 = vunpack.c.l.b16 %v5387
  %v5901 = vunpack.c.l.b16 %v5388
  %v5902 = vunpack.c.l.b16 %v5389
  %v5903 = vunpack.c.l.b16 %v5390
  %v5904 = vunpack.c.l.b16 %v5391
  %v5905 = vunpack.c.l.b16 %v5392
  %v5906 = vunpack.c.l.b16 %v5393
  %v5907 = vunpack.c.l.b16 %v5394
  %v5908 = vunpack.c.l.b16 %v5395
  %v5909 = vunpack.c.l.b16 %v5396
  %v5910 = vunpack.c.l.b16 %v5397
  %v5911 = vunpack.c.l.b16 %v5398
  %v5912 = vunpack.c.l.b16 %v5399
  %v5913 = vunpack.c.l.b16 %v5400
  %v5914 = vunpack.c.l.b16 %v5401
  %v5915 = vunpack.c.l.b16 %v5402
  %v5916 = vunpack.c.l.b16 %v5403
  %v5917 = vunpack.c.l.b16 %v5404
  %v5918 = vunpack.c.l.b16 %v5405
  %v5919 = vunpack.c.l.b16 %v5406
  %v5920 = vunpack.c.l.b16 %v5407
  %v5921 = vunpack.c.l.b16 %v5408
  %v5922 = vpack.c.b16 %v5667, %v5666
  %v5923 = vpack.c.b16 %v5669, %v5668
  %v5924 = vpack.c.b16 %v5671, %v5670
  %v5925 = vpack.c.b16 %v5673, %v5672
  %v5926 = vpack.c.b16 %v5675, %v5674
  %v5927 = vpack.c.b16 %v5677, %v5676
  %v5928 = vpack.c.b16 %v5679, %v5678
  %v5929 = vpack.c.b16 %v5681, %v5680
  %v5930 = vpack.c.b16 %v5683, %v5682
  %v5931 = vpack.c.b16 %v5685, %v5684
  %v5932 = vpack.c.b16 %v5687, %v5686
  %v5933 = vpack.c.b16 %v5689, %v5688
  %v5934 = vpack.c.b16 %v5691, %v5690
  %v5935 = vpack.c.b16 %v5693, %v5692
  %v5936 = vpack.c.b16 %v5695, %v5694
  %v5937 = vpack.c.b16 %v5697, %v5696
  %v5938 = vpack.c.b16 %v5699, %v5698
  %v5939 = vpack.c.b16 %v5701, %v5700
  %v5940 = vpack.c.b16 %v5703, %v5702
  %v5941 = vpack.c.b16 %v5705, %v5704
  %v5942 = vpack.c.b16 %v5707, %v5706
  %v5943 = vpack.c.b16 %v5709, %v5708
  %v5944 = vpack.c.b16 %v5711, %v5710
  %v5945 = vpack.c.b16 %v5713, %v5712
  %v5946 = vpack.c.b16 %v5715, %v5714
  %v5947 = vpack.c.b16 %v5717, %v5716
  %v5948 = vpack.c.b16 %v5719, %v5718
  %v5949 = vpack.c.b16 %v5721, %v5720
  %v5950 = vpack.c.b16 %v5723, %v5722
  %v5951 = vpack.c.b16 %v5725, %v5724
  %v5952 = vpack.c.b16 %v5727, %v5726
  %v5953 = vpack.c.b16 %v5729, %v5728
  %v5954 = vpack.c.b16 %v5731, %v5730
  %v5955 = vpack.c.b16 %v5733, %v5732
  %v5956 = vpack.c.b16 %v5735, %v5734
  %v5957 = vpack.c.b16 %v5737, %v5736
  %v5958 = vpack.c.b16 %v5739, %v5738
  %v5959 = vpack.c.b16 %v5741, %v5740
  %v5960 = vpack.c.b16 %v5743, %v5742
  %v5961 = vpack.c.b16 %v5745, %v5744
  %v5962 = vpack.c.b16 %v5747, %v5746
  %v5963 = vpack.c.b16 %v5749, %v5748
  %v5964 = vpack.c.b16 %v5751, %v5750
  %v5965 = vpack.c.b16 %v5753, %v5752
  %v5966 = vpack.c.b16 %v5755, %v5754
  %v5967 = vpack.c.b16 %v5757, %v5756
  %v5968 = vpack.c.b16 %v5759, %v5758
  %v5969 = vpack.c.b16 %v5761, %v5760
  %v5970 = vpack.c.b16 %v5763, %v5762
  %v5971 = vpack.c.b16 %v5765, %v5764
  %v5972 = vpack.c.b16 %v5767, %v5766
  %v5973 = vpack.c.b16 %v5769, %v5768
  %v5974 = vpack.c.b16 %v5771, %v5770
  %v5975 = vpack.c.b16 %v5773, %v5772
  %v5976 = vpack.c.b16 %v5775, %v5774
  %v5977 = vpack.c.b16 %v5777, %v5776
  %v5978 = vpack.c.b16 %v5779, %v5778
  %v5979 = vpack.c.b16 %v5781, %v5780
  %v5980 = vpack.c.b16 %v5783, %v5782
  %v5981 = vpack.c.b16 %v5785, %v5784
  %v5982 = vpack.c.b16 %v5787, %v5786
  %v5983 = vpack.c.b16 %v5789, %v5788
  %v5984 = vpack.c.b16 %v5791, %v5790
  %v5985 = vpack.c.b16 %v5793, %v5792
  %v5986 = vpack.c.b16 %v5795, %v5794
  %v5987 = vpack.c.b16 %v5797, %v5796
  %v5988 = vpack.c.b16 %v5799, %v5798
  %v5989 = vpack.c.b16 %v5801, %v5800
  %v5990 = vpack.c.b16 %v5803, %v5802
  %v5991 = vpack.c.b16 %v5805, %v5804
  %v5992 = vpack.c.b16 %v5807, %v5806
  %v5993 = vpack.c.b16 %v5809, %v5808
  %v5994 = vpack.c.b16 %v5811, %v5810
  %v5995 = vpack.c.b16 %v5813, %v5812
  %v5996 = vpack.c.b16 %v5815, %v5814
  %v5997 = vpack.c.b16 %v5817, %v5816
  %v5998 = vpack.c.b16 %v5819, %v5818
  %v5999 = vpack.c.b16 %v5821, %v5820
  %v6000 = vpack.c.b16 %v5823, %v5822
  %v6001 = vpack.c.b16 %v5825, %v5824
  %v6002 = vpack.c.b16 %v5827, %v5826
  %v6003 = vpack.c.b16 %v5829, %v5828
  %v6004 = vpack.c.b16 %v5831, %v5830
  %v6005 = vpack.c.b16 %v5833, %v5832
  %v6006 = vpack.c.b16 %v5835, %v5834
  %v6007 = vpack.c.b16 %v5837, %v5836
  %v6008 = vpack.c.b16 %v5839, %v5838
  %v6009 = vpack.c.b16 %v5841, %v5840
  %v6010 = vpack.c.b16 %v5843, %v5842
  %v6011 = vpack.c.b16 %v5845, %v5844
  %v6012 = vpack.c.b16 %v5847, %v5846
  %v6013 = vpack.c.b16 %v5849, %v5848
  %v6014 = vpack.c.b16 %v5851, %v5850
  %v6015 = vpack.c.b16 %v5853, %v5852
  %v6016 = vpack.c.b16 %v5855, %v5854
  %v6017 = vpack.c.b16 %v5857, %v5856
  %v6018 = vpack.c.b16 %v5859, %v5858
  %v6019 = vpack.c.b16 %v5861, %v5860
  %v6020 = vpack.c.b16 %v5863, %v5862
  %v6021 = vpack.c.b16 %v5865, %v5864
  %v6022 = vpack.c.b16 %v5867, %v5866
  %v6023 = vpack.c.b16 %v5869, %v5868
  %v6024 = vpack.c.b16 %v5871, %v5870
  %v6025 = vpack.c.b16 %v5873, %v5872
  %v6026 = vpack.c.b16 %v5875, %v5874
  %v6027 = vpack.c.b16 %v5877, %v5876
  %v6028 = vpack.c.b16 %v5879, %v5878
  %v6029 = vpack.c.b16 %v5881, %v5880
  %v6030 = vpack.c.b16 %v5883, %v5882
  %v6031 = vpack.c.b16 %v5885, %v5884
  %v6032 = vpack.c.b16 %v5887, %v5886
  %v6033 = vpack.c.b16 %v5889, %v5888
  %v6034 = vpack.c.b16 %v5891, %v5890
  %v6035 = vpack.c.b16 %v5893, %v5892
  %v6036 = vpack.c.b16 %v5895, %v5894
  %v6037 = vpack.c.b16 %v5897, %v5896
  %v6038 = vpack.c.b16 %v5899, %v5898
  %v6039 = vpack.c.b16 %v5901, %v5900
  %v6040 = vpack.c.b16 %v5903, %v5902
  %v6041 = vpack.c.b16 %v5905, %v5904
  %v6042 = vpack.c.b16 %v5907, %v5906
  %v6043 = vpack.c.b16 %v5909, %v5908
  %v6044 = vpack.c.b16 %v5911, %v5910
  %v6045 = vpack.c.b16 %v5913, %v5912
  %v6046 = vpack.c.b16 %v5915, %v5914
  %v6047 = vpack.c.b16 %v5917, %v5916
  %v6048 = vpack.c.b16 %v5919, %v5918
  %v6049 = vpack.c.b16 %v5921, %v5920
  %6178 = vmatpush.bf16.msra.mxu0 %v5929
  %6179 = vmatpush.bf16.msra.mxu0 %v5928
  %6180 = vmatpush.bf16.msra.mxu0 %v5927
  %6181 = vmatpush.bf16.msra.mxu0 %v5926
  %6182 = vmatpush.bf16.msra.mxu0 %v5925
  %6183 = vmatpush.bf16.msra.mxu0 %v5924
  %6184 = vmatpush.bf16.msra.mxu0 %v5923
  %6185 = vmatpush.bf16.msra.mxu0 %v5922
  %6186 = vmatmul.bf16.gmra.mxu0 %v5136
  %v6187 = vpop.f32.mrf.mxu0
  %v6188 = vadd.f32 %v5409, %v6187
  %v6189 = vpop.f32.mrf.mxu0
  %v6190 = vadd.f32 %v5409, %v6189
  %6191 = vdwg.mxu0
  %6192 = vmatpush.bf16.msra.mxu0 %v5937
  %6193 = vmatpush.bf16.msra.mxu0 %v5936
  %6194 = vmatpush.bf16.msra.mxu0 %v5935
  %6195 = vmatpush.bf16.msra.mxu0 %v5934
  %6196 = vmatpush.bf16.msra.mxu0 %v5933
  %6197 = vmatpush.bf16.msra.mxu0 %v5932
  %6198 = vmatpush.bf16.msra.mxu0 %v5931
  %6199 = vmatpush.bf16.msra.mxu0 %v5930
  %6200 = vmatmul.bf16.gmra.mxu0 %v5137
  %v6201 = vpop.f32.mrf.mxu0
  %v6202 = vadd.f32 %v6188, %v6201
  %v6203 = vpop.f32.mrf.mxu0
  %v6204 = vadd.f32 %v6190, %v6203
  %6205 = vdwg.mxu0
  %6206 = vmatpush.bf16.msra.mxu0 %v5945
  %6207 = vmatpush.bf16.msra.mxu0 %v5944
  %6208 = vmatpush.bf16.msra.mxu0 %v5943
  %6209 = vmatpush.bf16.msra.mxu0 %v5942
  %6210 = vmatpush.bf16.msra.mxu0 %v5941
  %6211 = vmatpush.bf16.msra.mxu0 %v5940
  %6212 = vmatpush.bf16.msra.mxu0 %v5939
  %6213 = vmatpush.bf16.msra.mxu0 %v5938
  %6214 = vmatmul.bf16.gmra.mxu0 %v5138
  %v6215 = vpop.f32.mrf.mxu0
  %v6216 = vadd.f32 %v6202, %v6215
  %v6217 = vpop.f32.mrf.mxu0
  %v6218 = vadd.f32 %v6204, %v6217
  %6219 = vdwg.mxu0
  %6220 = vmatpush.bf16.msra.mxu0 %v5953
  %6221 = vmatpush.bf16.msra.mxu0 %v5952
  %6222 = vmatpush.bf16.msra.mxu0 %v5951
  %6223 = vmatpush.bf16.msra.mxu0 %v5950
  %6224 = vmatpush.bf16.msra.mxu0 %v5949
  %6225 = vmatpush.bf16.msra.mxu0 %v5948
  %6226 = vmatpush.bf16.msra.mxu0 %v5947
  %6227 = vmatpush.bf16.msra.mxu0 %v5946
  %6228 = vmatmul.bf16.gmra.mxu0 %v5139
  %v6229 = vpop.f32.mrf.mxu0
  %v6230 = vadd.f32 %v6216, %v6229
  %v6231 = vpop.f32.mrf.mxu0
  %v6232 = vadd.f32 %v6218, %v6231
  %6233 = vdwg.mxu0
  %6234 = vmatpush.bf16.msra.mxu0 %v5961
  %6235 = vmatpush.bf16.msra.mxu0 %v5960
  %6236 = vmatpush.bf16.msra.mxu0 %v5959
  %6237 = vmatpush.bf16.msra.mxu0 %v5958
  %6238 = vmatpush.bf16.msra.mxu0 %v5957
  %6239 = vmatpush.bf16.msra.mxu0 %v5956
  %6240 = vmatpush.bf16.msra.mxu0 %v5955
  %6241 = vmatpush.bf16.msra.mxu0 %v5954
  %6242 = vmatmul.bf16.gmra.mxu0 %v5140
  %v6243 = vpop.f32.mrf.mxu0
  %v6244 = vadd.f32 %v6230, %v6243
  %v6245 = vpop.f32.mrf.mxu0
  %v6246 = vadd.f32 %v6232, %v6245
  %6247 = vdwg.mxu0
  %6248 = vmatpush.bf16.msra.mxu0 %v5969
  %6249 = vmatpush.bf16.msra.mxu0 %v5968
  %6250 = vmatpush.bf16.msra.mxu0 %v5967
  %6251 = vmatpush.bf16.msra.mxu0 %v5966
  %6252 = vmatpush.bf16.msra.mxu0 %v5965
  %6253 = vmatpush.bf16.msra.mxu0 %v5964
  %6254 = vmatpush.bf16.msra.mxu0 %v5963
  %6255 = vmatpush.bf16.msra.mxu0 %v5962
  %6256 = vmatmul.bf16.gmra.mxu0 %v5141
  %v6257 = vpop.f32.mrf.mxu0
  %v6258 = vadd.f32 %v6244, %v6257
  %v6259 = vpop.f32.mrf.mxu0
  %v6260 = vadd.f32 %v6246, %v6259
  %6261 = vdwg.mxu0
  %6262 = vmatpush.bf16.msra.mxu0 %v5977
  %6263 = vmatpush.bf16.msra.mxu0 %v5976
  %6264 = vmatpush.bf16.msra.mxu0 %v5975
  %6265 = vmatpush.bf16.msra.mxu0 %v5974
  %6266 = vmatpush.bf16.msra.mxu0 %v5973
  %6267 = vmatpush.bf16.msra.mxu0 %v5972
  %6268 = vmatpush.bf16.msra.mxu0 %v5971
  %6269 = vmatpush.bf16.msra.mxu0 %v5970
  %6270 = vmatmul.bf16.gmra.mxu0 %v5142
  %v6271 = vpop.f32.mrf.mxu0
  %v6272 = vadd.f32 %v6258, %v6271
  %v6273 = vpop.f32.mrf.mxu0
  %v6274 = vadd.f32 %v6260, %v6273
  %6275 = vdwg.mxu0
  %6276 = vmatpush.bf16.msra.mxu0 %v5985
  %6277 = vmatpush.bf16.msra.mxu0 %v5984
  %6278 = vmatpush.bf16.msra.mxu0 %v5983
  %6279 = vmatpush.bf16.msra.mxu0 %v5982
  %6280 = vmatpush.bf16.msra.mxu0 %v5981
  %6281 = vmatpush.bf16.msra.mxu0 %v5980
  %6282 = vmatpush.bf16.msra.mxu0 %v5979
  %6283 = vmatpush.bf16.msra.mxu0 %v5978
  %6284 = vmatmul.bf16.gmra.mxu0 %v5143
  %v6285 = vpop.f32.mrf.mxu0
  %v6286 = vadd.f32 %v6272, %v6285
  %v6287 = vpop.f32.mrf.mxu0
  %v6288 = vadd.f32 %v6274, %v6287
  %6289 = vdwg.mxu0
  %6290 = vmatpush.bf16.msra.mxu0 %v5993
  %6291 = vmatpush.bf16.msra.mxu0 %v5992
  %6292 = vmatpush.bf16.msra.mxu0 %v5991
  %6293 = vmatpush.bf16.msra.mxu0 %v5990
  %6294 = vmatpush.bf16.msra.mxu0 %v5989
  %6295 = vmatpush.bf16.msra.mxu0 %v5988
  %6296 = vmatpush.bf16.msra.mxu0 %v5987
  %6297 = vmatpush.bf16.msra.mxu0 %v5986
  %6298 = vmatmul.bf16.gmra.mxu0 %v5144
  %v6299 = vpop.f32.mrf.mxu0
  %v6300 = vadd.f32 %v6286, %v6299
  %v6301 = vpop.f32.mrf.mxu0
  %v6302 = vadd.f32 %v6288, %v6301
  %6303 = vdwg.mxu0
  %6304 = vmatpush.bf16.msra.mxu0 %v6001
  %6305 = vmatpush.bf16.msra.mxu0 %v6000
  %6306 = vmatpush.bf16.msra.mxu0 %v5999
  %6307 = vmatpush.bf16.msra.mxu0 %v5998
  %6308 = vmatpush.bf16.msra.mxu0 %v5997
  %6309 = vmatpush.bf16.msra.mxu0 %v5996
  %6310 = vmatpush.bf16.msra.mxu0 %v5995
  %6311 = vmatpush.bf16.msra.mxu0 %v5994
  %6312 = vmatmul.bf16.gmra.mxu0 %v5145
  %v6313 = vpop.f32.mrf.mxu0
  %v6314 = vadd.f32 %v6300, %v6313
  %v6315 = vpop.f32.mrf.mxu0
  %v6316 = vadd.f32 %v6302, %v6315
  %6317 = vdwg.mxu0
  %6318 = vmatpush.bf16.msra.mxu0 %v6009
  %6319 = vmatpush.bf16.msra.mxu0 %v6008
  %6320 = vmatpush.bf16.msra.mxu0 %v6007
  %6321 = vmatpush.bf16.msra.mxu0 %v6006
  %6322 = vmatpush.bf16.msra.mxu0 %v6005
  %6323 = vmatpush.bf16.msra.mxu0 %v6004
  %6324 = vmatpush.bf16.msra.mxu0 %v6003
  %6325 = vmatpush.bf16.msra.mxu0 %v6002
  %6326 = vmatmul.bf16.gmra.mxu0 %v5146
  %v6327 = vpop.f32.mrf.mxu0
  %v6328 = vadd.f32 %v6314, %v6327
  %v6329 = vpop.f32.mrf.mxu0
  %v6330 = vadd.f32 %v6316, %v6329
  %6331 = vdwg.mxu0
  %6332 = vmatpush.bf16.msra.mxu0 %v6017
  %6333 = vmatpush.bf16.msra.mxu0 %v6016
  %6334 = vmatpush.bf16.msra.mxu0 %v6015
  %6335 = vmatpush.bf16.msra.mxu0 %v6014
  %6336 = vmatpush.bf16.msra.mxu0 %v6013
  %6337 = vmatpush.bf16.msra.mxu0 %v6012
  %6338 = vmatpush.bf16.msra.mxu0 %v6011
  %6339 = vmatpush.bf16.msra.mxu0 %v6010
  %6340 = vmatmul.bf16.gmra.mxu0 %v5147
  %v6341 = vpop.f32.mrf.mxu0
  %v6342 = vadd.f32 %v6328, %v6341
  %v6343 = vpop.f32.mrf.mxu0
  %v6344 = vadd.f32 %v6330, %v6343
  %6345 = vdwg.mxu0
  %6346 = vmatpush.bf16.msra.mxu0 %v6025
  %6347 = vmatpush.bf16.msra.mxu0 %v6024
  %6348 = vmatpush.bf16.msra.mxu0 %v6023
  %6349 = vmatpush.bf16.msra.mxu0 %v6022
  %6350 = vmatpush.bf16.msra.mxu0 %v6021
  %6351 = vmatpush.bf16.msra.mxu0 %v6020
  %6352 = vmatpush.bf16.msra.mxu0 %v6019
  %6353 = vmatpush.bf16.msra.mxu0 %v6018
  %6354 = vmatmul.bf16.gmra.mxu0 %v5148
  %v6355 = vpop.f32.mrf.mxu0
  %v6356 = vadd.f32 %v6342, %v6355
  %v6357 = vpop.f32.mrf.mxu0
  %v6358 = vadd.f32 %v6344, %v6357
  %6359 = vdwg.mxu0
  %6360 = vmatpush.bf16.msra.mxu0 %v6033
  %6361 = vmatpush.bf16.msra.mxu0 %v6032
  %6362 = vmatpush.bf16.msra.mxu0 %v6031
  %6363 = vmatpush.bf16.msra.mxu0 %v6030
  %6364 = vmatpush.bf16.msra.mxu0 %v6029
  %6365 = vmatpush.bf16.msra.mxu0 %v6028
  %6366 = vmatpush.bf16.msra.mxu0 %v6027
  %6367 = vmatpush.bf16.msra.mxu0 %v6026
  %6368 = vmatmul.bf16.gmra.mxu0 %v5149
  %v6369 = vpop.f32.mrf.mxu0
  %v6370 = vadd.f32 %v6356, %v6369
  %v6371 = vpop.f32.mrf.mxu0
  %v6372 = vadd.f32 %v6358, %v6371
  %6373 = vdwg.mxu0
  %6374 = vmatpush.bf16.msra.mxu0 %v6041
  %6375 = vmatpush.bf16.msra.mxu0 %v6040
  %6376 = vmatpush.bf16.msra.mxu0 %v6039
  %6377 = vmatpush.bf16.msra.mxu0 %v6038
  %6378 = vmatpush.bf16.msra.mxu0 %v6037
  %6379 = vmatpush.bf16.msra.mxu0 %v6036
  %6380 = vmatpush.bf16.msra.mxu0 %v6035
  %6381 = vmatpush.bf16.msra.mxu0 %v6034
  %6382 = vmatmul.bf16.gmra.mxu0 %v5150
  %v6383 = vpop.f32.mrf.mxu0
  %v6384 = vadd.f32 %v6370, %v6383
  %v6385 = vpop.f32.mrf.mxu0
  %v6386 = vadd.f32 %v6372, %v6385
  %6387 = vdwg.mxu0
  %6388 = vmatpush.bf16.msra.mxu0 %v6049
  %6389 = vmatpush.bf16.msra.mxu0 %v6048
  %6390 = vmatpush.bf16.msra.mxu0 %v6047
  %6391 = vmatpush.bf16.msra.mxu0 %v6046
  %6392 = vmatpush.bf16.msra.mxu0 %v6045
  %6393 = vmatpush.bf16.msra.mxu0 %v6044
  %6394 = vmatpush.bf16.msra.mxu0 %v6043
  %6395 = vmatpush.bf16.msra.mxu0 %v6042
  %6396 = vmatmul.bf16.gmra.mxu0 %v5151
  %v6397 = vpop.f32.mrf.mxu0
  %v6398 = vadd.f32 %v6384, %v6397
  %v6399 = vpop.f32.mrf.mxu0
  %v6400 = vadd.f32 %v6386, %v6399
  %6401 = vdwg.mxu0
  %v6402 = vadd.f32 %v4644, %v6398
  %v6403 = vadd.f32 %v4645, %v6400
  %v6404 = vsel %vm87, %v6402, 0.0
  %6405 = vadd.xlane.f32.xlu0 %v6404
  %v6406 = vpop.xlane.xlu0 %6405
  %v6407 = vsel %vm87, %v6403, 0.0
  %6408 = vadd.xlane.f32.xlu0 %v6407
  %v6409 = vpop.xlane.xlu0 %6408
  %v6410 = vmul.f32 %v6406, %v705
  %v6411 = vmul.f32 %v6409, %v705
  %v6412 = vsub.f32 %v6402, %v6410
  %v6413 = vsub.f32 %v6403, %v6411
  %v6414 = vmul.f32 %v6412, %v6412
  %v6415 = vmul.f32 %v6413, %v6413
  %v6416 = vsel %vm87, %v6414, 0.0
  %6417 = vadd.xlane.f32.xlu0 %v6416
  %v6418 = vpop.xlane.xlu0 %6417
  %v6419 = vsel %vm87, %v6415, 0.0
  %6420 = vadd.xlane.f32.xlu0 %v6419
  %v6421 = vpop.xlane.xlu0 %6420
  %v6422 = vmul.f32 %v6418, %v705
  %v6423 = vmul.f32 %v6421, %v705
  %v6424 = vadd.f32 %v6422, 1e-05
  %v6425 = vadd.f32 %v6423, 1e-05
  %v6426 = vrsqrt.pop %v6424
  %v6427 = vmul.f32 %v6426, %v6424
  %v6428 = vmul.f32 %v6427, %v6426
  %v6429 = vmul.f32 0.5, %v6428
  %v6430 = vsub.f32 1.5, %v6429
  %v6431 = vmul.f32 %v6426, %v6430
  %vm6432 = vweird.f32 %v6424
  %vm6433 = vweird.f32 %v6426
  %vm6434 = vmor %vm6432, %vm6433
  %v6435 = vsel %vm6434, %v6426, %v6431
  %v6436 = vrsqrt.pop %v6425
  %v6437 = vmul.f32 %v6436, %v6425
  %v6438 = vmul.f32 %v6437, %v6436
  %v6439 = vmul.f32 0.5, %v6438
  %v6440 = vsub.f32 1.5, %v6439
  %v6441 = vmul.f32 %v6436, %v6440
  %vm6442 = vweird.f32 %v6425
  %vm6443 = vweird.f32 %v6436
  %vm6444 = vmor %vm6442, %vm6443
  %v6445 = vsel %vm6444, %v6436, %v6441
  %v6446 = vmul.f32 %v6412, %v6435
  %v6447 = vmul.f32 %v6413, %v6445
  %v6448 = vperm.slane %v3263, 0
  %v6449 = vmul.f32 %v6446, %v6448
  %v6450 = vmul.f32 %v6447, %v6448
  %v6451 = vperm.slane %v3263, 1
  %v6452 = vadd.f32 %v6449, %v6451
  %v6453 = vadd.f32 %v6450, %v6451
  %v6454 = vld [vmem:[%s13] sm:$0x3]
  %v6455 = vsel %vm87, %v6452, 0.0
  %6456 = vadd.xlane.f32.xlu0 %v6455
  %v6457 = vpop.xlane.xlu0 %6456
  %v6458 = vsel %vm87, %v6453, 0.0
  %6459 = vadd.xlane.f32.xlu0 %v6458
  %v6460 = vpop.xlane.xlu0 %6459
  %v6461 = vmul.f32 %v6457, %v705
  %v6462 = vmul.f32 %v6460, %v705
  %v6463 = vsub.f32 %v6452, %v6461
  %v6464 = vsub.f32 %v6453, %v6462
  %v6465 = vmul.f32 %v6463, %v6463
  %v6466 = vmul.f32 %v6464, %v6464
  %v6467 = vsel %vm87, %v6465, 0.0
  %6468 = vadd.xlane.f32.xlu0 %v6467
  %v6469 = vpop.xlane.xlu0 %6468
  %v6470 = vsel %vm87, %v6466, 0.0
  %6471 = vadd.xlane.f32.xlu0 %v6470
  %v6472 = vpop.xlane.xlu0 %6471
  %v6473 = vmul.f32 %v6469, %v705
  %v6474 = vmul.f32 %v6472, %v705
  %v6475 = vadd.f32 %v6473, 1e-05
  %v6476 = vadd.f32 %v6474, 1e-05
  %v6477 = vrsqrt.pop %v6475
  %v6478 = vmul.f32 %v6477, %v6475
  %v6479 = vmul.f32 %v6478, %v6477
  %v6480 = vmul.f32 0.5, %v6479
  %v6481 = vsub.f32 1.5, %v6480
  %v6482 = vmul.f32 %v6477, %v6481
  %vm6483 = vweird.f32 %v6475
  %vm6484 = vweird.f32 %v6477
  %vm6485 = vmor %vm6483, %vm6484
  %v6486 = vsel %vm6485, %v6477, %v6482
  %v6487 = vrsqrt.pop %v6476
  %v6488 = vmul.f32 %v6487, %v6476
  %v6489 = vmul.f32 %v6488, %v6487
  %v6490 = vmul.f32 0.5, %v6489
  %v6491 = vsub.f32 1.5, %v6490
  %v6492 = vmul.f32 %v6487, %v6491
  %vm6493 = vweird.f32 %v6476
  %vm6494 = vweird.f32 %v6487
  %vm6495 = vmor %vm6493, %vm6494
  %v6496 = vsel %vm6495, %v6487, %v6492
  %v6497 = vmul.f32 %v6463, %v6486
  %v6498 = vmul.f32 %v6464, %v6496
  %v6499 = vperm.slane %v6454, 0
  %v6500 = vmul.f32 %v6497, %v6499
  %v6501 = vmul.f32 %v6498, %v6499
  %v6502 = vperm.slane %v6454, 1
  %v6503 = vadd.f32 %v6500, %v6502
  %v6504 = vadd.f32 %v6501, %v6502
  %v6505 = vld [vmem:[%s14] sm:$0xff]
  %v6506 = vld [vmem:[%s14 + $0x8] sm:$0xff]
  %v6507 = vld [vmem:[%s14 + $0x10] sm:$0xff]
  %v6508 = vld [vmem:[%s14 + $0x18] sm:$0xff]
  %v6509 = vld [vmem:[%s15] sm:$0x1]
  %v6511 = vperm.slane %v6509, 0
  %v6514 = vsel %vm87, %v6503, 0
  %v6517 = vsel %vm87, %v6504, 0
  %6519 = vmatpush.msra.mxu0 0.0
  %6520 = vmatpush.msra.mxu0 0.0
  %6521 = vmatpush.msra.mxu0 0.0
  %6522 = vmatpush.msra.mxu0 0.0
  %6523 = vmatpush.msra.mxu0 0.0
  %6524 = vmatpush.msra.mxu0 0.0
  %6525 = vmatpush.msra.mxu0 0.0
  %6526 = vmatpush.msra.mxu0 0.0
  %6527 = vmatpush.msra.mxu0 0.0
  %6528 = vmatpush.msra.mxu0 0.0
  %6529 = vmatpush.msra.mxu0 0.0
  %6530 = vmatpush.msra.mxu0 0.0
  %6531 = vmatpush.msra.mxu0 %v6508
  %6532 = vmatpush.msra.mxu0 %v6507
  %6533 = vmatpush.msra.mxu0 %v6506
  %6534 = vmatpush.msra.mxu0 %v6505
  %6535 = vmatmul.f32.gmra.mxu0 %v6514
  %v6536 = vpop.f32.mrf.mxu0
  %v6537 = vadd.f32 %v6511, %v6536
  %6538 = vmatmul.f32.gmra.mxu0 %v6517
  %v6539 = vpop.f32.mrf.mxu0
  %v6540 = vadd.f32 %v6511, %v6539
  %6541 = vdwg.mxu0
  %6542 = vst [vmem:[%s16] sm:$0xff] %v6537
  %6543 = vst [vmem:[%s16 + $0x8] sm:$0xff] %v6540
  // Predicated region
  $region66: #{transformer_forward.3} parent=0 // pred_check
    _
  $region67: #{transformer_forward.3} parent=0 // pred_check_branch
    %6545 = sbr.rel (0) target = $region69
  $region68: #{transformer_forward.3} parent=0 // pred_region
    _
  $region69: #{transformer_forward.3} parent=0 // pred_fallthru
    _
  // Predicated region
  $region70: #{transformer_forward.3} parent=0 // pred_check
    _
  $region71: #{transformer_forward.3} parent=0 // pred_check_branch
    %6547 = sbr.rel (0) target = $region73
  $region72: #{transformer_forward.3} parent=0 // pred_region
    _
  $region73: #{transformer_forward.3} parent=0 // pred_fallthru
    _

</llo_original>
